<compile_context>
chip_gen: v6e
topology: v6e:2x2x1
jax: 0.10.0
libtpu: 0.0.40
codegen_flags: <defaults>
</compile_context>

<pallas_src>
import functools
import math

import jax
import jax.numpy as jnp
from jax.experimental import pallas as pl
from jax.experimental.pallas import tpu as pltpu

BN_EPS = 1e-5


def _silu(x):
    return x * jax.nn.sigmoid(x)


def _round_up(x, m):
    return ((x + m - 1) // m) * m


# ---------------------------------------------------------------------------
# The fused kernel: one grid step == one batch sample (full H x W tile).
# ---------------------------------------------------------------------------
def _octconv_kernel(hf_ref, lf_ref,
                    w_hf_ref, b_hf_ref,        # merged [H2H | H2L], 128-aligned col blocks
                    w_lf_ref, b_lf_ref,        # merged [L2L | L2H]
                    w_comp_ref, b_comp_ref,    # CARAFE comp, BN folded      (c_hi, c_mid)
                    w_enc_ref, b_enc_ref,      # CARAFE enc (k_enc^2, c_mid, 4*g_stride)
                    w_hwd_ref, b_hwd_ref,      # HWD conv, BN + Haar combos folded (4,c_hi,c_lo)
                    hf_out_ref, lf_out_ref,
                    comp_pad_ref, h2h_pad_ref,
                    *, k_up, k_enc):
    H, W, _ = hf_ref.shape
    N = H * W
    c_hi, c_mid = w_comp_ref.shape
    c_lo = w_hwd_ref.shape[2]
    kk = k_up * k_up
    pad_u = k_up // 2                       # CARAFE tap radius on the low-res map
    pad_e = k_enc // 2                      # enc 'same' conv padding
    g_stride = b_enc_ref.shape[1] // 4      # enc columns per sub-pixel group (kk padded to 32)
    f32, bf16 = jnp.float32, jnp.bfloat16

    hf = hf_ref[...].reshape(N, hf_ref.shape[-1])          # bf16
    lf = lf_ref[...].reshape(N, lf_ref.shape[-1])          # bf16

    # ---- four OctConv 1x1 convs: shared-input pairs merged into one MXU pass each ----
    t_hf = jnp.dot(hf, w_hf_ref[...], preferred_element_type=f32) + b_hf_ref[...]
    t_lf = jnp.dot(lf, w_lf_ref[...], preferred_element_type=f32) + b_lf_ref[...]
    h2h = t_hf[:, :c_hi]                                   # (N, c_hi)
    h2l = t_hf[:, t_hf.shape[1] - c_lo:]                   # 128-aligned column offset
    l2l = t_lf[:, :c_lo]
    l2h = t_lf[:, t_lf.shape[1] - c_hi:]

    # ---- low-frequency output: l2l + h2l (plain convs, no BN / activation) ----
    lf_out_ref[...] = (l2l + h2l).reshape(H, W, c_lo).astype(lf_out_ref.dtype)

    # ---- CARAFE comp: 1x1 conv + folded BN + SiLU (c_hi -> c_mid) ----
    comp = _silu(jnp.dot(h2h.astype(bf16), w_comp_ref[...],
                         preferred_element_type=f32) + b_comp_ref[...])

    # stage comp (bf16) in a zero-padded scratch; only the thin pad rings are cleared.
    Hp_e, Wp_e = H + 2 * pad_e, W + 2 * pad_e
    comp_pad_ref[0:pad_e, :, :] = jnp.zeros((pad_e, Wp_e, c_mid), bf16)
    comp_pad_ref[pad_e + H:Hp_e, :, :] = jnp.zeros((pad_e, Wp_e, c_mid), bf16)
    comp_pad_ref[:, 0:pad_e, :] = jnp.zeros((Hp_e, pad_e, c_mid), bf16)
    comp_pad_ref[:, pad_e + W:Wp_e, :] = jnp.zeros((Hp_e, pad_e, c_mid), bf16)
    comp_pad_ref[pad_e:pad_e + H, pad_e:pad_e + W, :] = comp.astype(bf16).reshape(H, W, c_mid)

    # ---- CARAFE enc: 3x3 'same' conv + folded BN as k_enc^2 accumulating dots (no im2col) ----
    enc = None
    for t in range(k_enc * k_enc):
        kh, kw = t // k_enc, t % k_enc
        tap = comp_pad_ref[kh:kh + H, kw:kw + W, :].reshape(N, c_mid)       # bf16
        d = jnp.dot(tap, w_enc_ref[t], preferred_element_type=f32)
        enc = d if enc is None else enc + d
    enc = enc + b_enc_ref[...]                                              # (N, 4*g_stride)

    # ---- per-sub-pixel softmax over the kk reassembly logits (columns grouped/padded) ----
    probs = []
    for g in range(4):
        logits = enc[:, g * g_stride:g * g_stride + kk]
        m = jnp.max(logits, axis=-1, keepdims=True)
        e = jnp.exp(logits - m)
        inv = pl.reciprocal(jnp.sum(e, axis=-1, keepdims=True), approx=True)
        probs.append((e * inv).reshape(H, W, kk))

    # ---- CARAFE reassembly: for scale=2 / dilation=2 the unfold of the nearest-upsampled
    # map reduces to k_up x k_up taps on the low-res map padded by k_up//2, shared by all
    # four output sub-pixels of each low-res pixel.
    Hp_u, Wp_u = H + 2 * pad_u, W + 2 * pad_u
    h2h_pad_ref[0:pad_u, :, :] = jnp.zeros((pad_u, Wp_u, c_hi), f32)
    h2h_pad_ref[pad_u + H:Hp_u, :, :] = jnp.zeros((pad_u, Wp_u, c_hi), f32)
    h2h_pad_ref[:, 0:pad_u, :] = jnp.zeros((Hp_u, pad_u, c_hi), f32)
    h2h_pad_ref[:, pad_u + W:Wp_u, :] = jnp.zeros((Hp_u, pad_u, c_hi), f32)
    h2h_pad_ref[pad_u:pad_u + H, pad_u:pad_u + W, :] = h2h.reshape(H, W, c_hi)

    l2h4 = l2h.reshape(H, W, c_hi)
    # accumulators start at the nearest-upsampled l2h residual (same value at all 4 sub-pixels)
    accs = [l2h4, l2h4, l2h4, l2h4]
    # TODO(synk): for large spatial tiles, bound live ranges with a fori_loop over taps and a
    # tap-major prob scratch instead of this fully unrolled loop.
    for ky in range(k_up):
        for kx in range(k_up):
            tap = h2h_pad_ref[ky:ky + H, kx:kx + W, :]                      # (H, W, c_hi)
            k = ky * k_up + kx
            for g in range(4):
                accs[g] = accs[g] + probs[g][:, :, k:k + 1] * tap

    # ---- HWD: Haar DWT of the virtual (2H, 2W) map.  The DWT sub-band combinations were
    # folded into w_hwd (wrapper), so the output is just 4 chained dots + bias + SiLU.
    y = jnp.dot(accs[0].reshape(N, c_hi).astype(bf16), w_hwd_ref[0],
                preferred_element_type=f32)
    for g in range(1, 4):
        y = y + jnp.dot(accs[g].reshape(N, c_hi).astype(bf16), w_hwd_ref[g],
                        preferred_element_type=f32)
    y = y + b_hwd_ref[...]
    hf_out_ref[...] = _silu(y).reshape(H, W, c_lo).astype(hf_out_ref.dtype)


# ---------------------------------------------------------------------------
# Wrapper-side glue: BN folding, weight packing (bf16, 128-aligned), pallas_call
# ---------------------------------------------------------------------------
def _fold_bn(w, bn, eps=BN_EPS):
    gamma, beta, mean, var = bn
    scale = gamma / jnp.sqrt(var + eps)
    return w * scale, beta - mean * scale


def prepare_weights(p, *, k_up=5, k_enc=3):
    """One-time BN folding + layout packing (hoisted out of the forward)."""
    c_mid = p["comp_w"].shape[1]
    c_hi = p["h2h_w"].shape[1]
    kk = k_up * k_up
    bf16 = jnp.bfloat16

    def pack2(w0, b0, w1, b1):
        # place the second column block at a 128-aligned offset so both kernel slices are
        # lane-aligned views; the merged matmul still fits a single MXU column pass.
        k = w0.shape[0]
        off1 = _round_up(w0.shape[1], 128)
        total = off1 + w1.shape[1]
        w = jnp.zeros((k, total), jnp.float32)
        w = w.at[:, :w0.shape[1]].set(w0).at[:, off1:off1 + w1.shape[1]].set(w1)
        b = jnp.zeros((total,), jnp.float32)
        b = b.at[:w0.shape[1]].set(b0).at[off1:off1 + w1.shape[1]].set(b1)
        return w.astype(bf16), b[None, :]

    # merged shared-input 1x1 convs (plain nn.Conv2d, bias=True)
    w_hf, b_hf = pack2(p["h2h_w"], p["h2h_b"], p["h2l_w"], p["h2l_b"])
    w_lf, b_lf = pack2(p["l2l_w"], p["l2l_b"], p["l2h_w"], p["l2h_b"])

    # CARAFE comp (Conv+BN+SiLU)
    w_comp, b_comp = _fold_bn(p["comp_w"], p["comp_bn"])

    # CARAFE enc (Conv 3x3 + BN, no act): fold BN, group output channels by sub-pixel
    # g = 2*i + j (PixelShuffle channel 4*k + g -> group-g column k), pad each group to a
    # 32-column stride, reshape rows tap-major for the per-tap accumulating dots.
    w_enc, b_enc = _fold_bn(p["enc_w"], p["enc_bn"])
    w_enc = w_enc.reshape(k_enc * k_enc * c_mid, 4 * kk)
    g_stride = _round_up(kk, 32)
    w_enc_p = jnp.zeros((k_enc * k_enc * c_mid, 4 * g_stride), jnp.float32)
    b_enc_p = jnp.zeros((4 * g_stride,), jnp.float32)
    for g in range(4):
        cols = g + 4 * jnp.arange(kk)
        w_enc_p = w_enc_p.at[:, g * g_stride:g * g_stride + kk].set(w_enc[:, cols])
        b_enc_p = b_enc_p.at[g * g_stride:g * g_stride + kk].set(b_enc[cols])
    w_enc_p = w_enc_p.reshape(k_enc * k_enc, c_mid, 4 * g_stride).astype(bf16)

    # HWD 1x1 conv (Conv+BN+SiLU): fold BN, then fold the Haar (J=1, 'zero') sub-band
    # combinations so y = sum_g dot(s_g, V_g) over the four 2x sub-pixel maps s_g.
    w_hwd, b_hwd = _fold_bn(p["hwd_w"], p["hwd_bn"])        # (4*c_hi, c_lo)
    w0, w1, w2, w3 = (w_hwd[j * c_hi:(j + 1) * c_hi] for j in range(4))
    v_hwd = 0.5 * jnp.stack([w0 + w1 + w2 + w3,             # s00: pixel (2h,   2w)
                             w0 + w1 - w2 - w3,             # s01: pixel (2h,   2w+1)
                             w0 - w1 + w2 - w3,             # s10: pixel (2h+1, 2w)
                             w0 - w1 - w2 + w3])            # s11: pixel (2h+1, 2w+1)

    return dict(w_hf=w_hf, b_hf=b_hf, w_lf=w_lf, b_lf=b_lf,
                w_comp=w_comp.astype(bf16), b_comp=b_comp[None, :],
                w_enc=w_enc_p, b_enc=b_enc_p[None, :],
                w_hwd=v_hwd.astype(bf16), b_hwd=b_hwd[None, :])


@functools.partial(jax.jit, static_argnames=("k_up", "k_enc"))
def octconv_carafe_hwd_forward(hf_nchw, lf_nchw, fw, *, k_up=5, k_enc=3):
    """Forward of OctConv_CARAFE_HWD (kernel_size=1).  Returns (hf_out, lf_out) in NCHW."""
    # TODO(synk): NCHW<->NHWC transposes kept in the wrapper; a channel-major in-kernel layout
    # (lane dim = H*W) would remove them and improve lane density at very small channel counts.
    hf = jnp.transpose(hf_nchw, (0, 2, 3, 1)).astype(jnp.bfloat16)
    lf = jnp.transpose(lf_nchw, (0, 2, 3, 1)).astype(jnp.bfloat16)
    B, H, W, c_hf_in = hf.shape
    c_lf_in = lf.shape[-1]
    c_hi, c_mid = fw["w_comp"].shape
    c_lo = fw["w_hwd"].shape[2]
    pad_u, pad_e = k_up // 2, k_enc // 2

    def wspec(a):
        return pl.BlockSpec(a.shape, lambda b, _n=a.ndim: (0,) * _n)

    def act_spec(c):
        return pl.BlockSpec((None, H, W, c), lambda b: (b, 0, 0, 0))

    # TODO(synk): spatial (row-block) tiling with explicit halos for the 3x3 / k_up taps is
    # not implemented; the grid is over the batch dimension only.
    kernel = functools.partial(_octconv_kernel, k_up=k_up, k_enc=k_enc)
    hf_out, lf_out = pl.pallas_call(
        kernel,
        grid=(B,),
        out_shape=(jax.ShapeDtypeStruct((B, H, W, c_lo), jnp.float32),
                   jax.ShapeDtypeStruct((B, H, W, c_lo), jnp.float32)),
        in_specs=[act_spec(c_hf_in), act_spec(c_lf_in),
                  wspec(fw["w_hf"]), wspec(fw["b_hf"]),
                  wspec(fw["w_lf"]), wspec(fw["b_lf"]),
                  wspec(fw["w_comp"]), wspec(fw["b_comp"]),
                  wspec(fw["w_enc"]), wspec(fw["b_enc"]),
                  wspec(fw["w_hwd"]), wspec(fw["b_hwd"])],
        out_specs=(act_spec(c_lo), act_spec(c_lo)),
        scratch_shapes=[
            pltpu.VMEM((H + 2 * pad_e, W + 2 * pad_e, c_mid), jnp.bfloat16),   # padded comp
            pltpu.VMEM((H + 2 * pad_u, W + 2 * pad_u, c_hi), jnp.float32),     # padded h2h
        ],
        compiler_params=pltpu.CompilerParams(
            dimension_semantics=("parallel",),
            vmem_limit_bytes=48 * 1024 * 1024),
    )(hf, lf, fw["w_hf"], fw["b_hf"], fw["w_lf"], fw["b_lf"],
      fw["w_comp"], fw["b_comp"], fw["w_enc"], fw["b_enc"],
      fw["w_hwd"], fw["b_hwd"])
    return jnp.transpose(hf_out, (0, 3, 1, 2)), jnp.transpose(lf_out, (0, 3, 1, 2))


# ---------------------------------------------------------------------------
# Plain-JAX reference (f32, un-fused) mirroring the PyTorch module in eval mode
# ---------------------------------------------------------------------------
def reference_forward(hf_nchw, lf_nchw, p, *, k_up=5):
    hp = jax.lax.Precision.HIGHEST
    hf = jnp.transpose(hf_nchw, (0, 2, 3, 1))
    lf = jnp.transpose(lf_nchw, (0, 2, 3, 1))
    B, H, W, _ = hf.shape
    kk = k_up * k_up

    def conv1x1(x, w, b=0.0):
        return jnp.einsum('bhwc,cd->bhwd', x, w, precision=hp) + b

    def bn(x, bnp):
        g, b_, m, v = bnp
        return (x - m) / jnp.sqrt(v + BN_EPS) * g + b_

    h2h = conv1x1(hf, p["h2h_w"], p["h2h_b"])
    h2l = conv1x1(hf, p["h2l_w"], p["h2l_b"])
    l2l = conv1x1(lf, p["l2l_w"], p["l2l_b"])
    l2h = conv1x1(lf, p["l2h_w"], p["l2h_b"])
    lf_out = l2l + h2l                                     # avg_pool(k=1) == identity

    # CARAFE(h2h): comp -> enc -> pixel-shuffle -> softmax -> unfold/einsum on the 2x map
    comp = jax.nn.silu(bn(conv1x1(h2h, p["comp_w"]), p["comp_bn"]))
    enc = jax.lax.conv_general_dilated(
        comp, p["enc_w"], window_strides=(1, 1), padding='SAME',
        dimension_numbers=('NHWC', 'HWIO', 'NHWC'), precision=hp)
    enc = bn(enc, p["enc_bn"])                             # channel = 4*k + 2*i + j
    enc = enc.reshape(B, H, W, kk, 2, 2)
    enc = jnp.transpose(enc, (0, 1, 4, 2, 5, 3)).reshape(B, 2 * H, 2 * W, kk)
    w_up = jax.nn.softmax(enc, axis=-1)

    x_up = jnp.repeat(jnp.repeat(h2h, 2, axis=1), 2, axis=2)      # nearest 2x upsample
    pad = (k_up // 2) * 2                                          # unfold pad (dilation=2)
    x_pad = jnp.pad(x_up, ((0, 0), (pad, pad), (pad, pad), (0, 0)))
    out_up = jnp.zeros_like(x_up)
    for ky in range(k_up):
        for kx in range(k_up):
            k = ky * k_up + kx
            tap = x_pad[:, 2 * ky:2 * ky + 2 * H, 2 * kx:2 * kx + 2 * W, :]
            out_up = out_up + w_up[..., k:k + 1] * tap

    hf_sum = out_up + jnp.repeat(jnp.repeat(l2h, 2, axis=1), 2, axis=2)

    # HWD: Haar DWT (J=1, 'zero') of the 2x map, then 1x1 Conv+BN+SiLU.
    a = hf_sum[:, 0::2, 0::2, :]
    b_ = hf_sum[:, 0::2, 1::2, :]
    c_ = hf_sum[:, 1::2, 0::2, :]
    d_ = hf_sum[:, 1::2, 1::2, :]
    ll = (a + b_ + c_ + d_) * 0.5
    d0 = (a + b_ - c_ - d_) * 0.5
    d1 = (a - b_ + c_ - d_) * 0.5
    d2 = (a - b_ - c_ + d_) * 0.5
    cat = jnp.concatenate([ll, d0, d1, d2], axis=-1)
    hf_out = jax.nn.silu(bn(conv1x1(cat, p["hwd_w"]), p["hwd_bn"]))
    return jnp.transpose(hf_out, (0, 3, 1, 2)), jnp.transpose(lf_out, (0, 3, 1, 2))


# ---------------------------------------------------------------------------
# Deterministic synthetic parameters for OctConv_CARAFE_HWD(in_c, out_c, kernel_size=1)
# ---------------------------------------------------------------------------
def make_params(key, in_channels, out_channels, *, alpha_in=0.5, alpha_out=0.5,
                k_up=5, k_enc=3, c_mid=64):
    c_hf_in = in_channels - int(alpha_in * in_channels)
    c_hf_out = out_channels - int(alpha_out * out_channels)
    c_lf_in = int(alpha_in * in_channels)
    c_lf_out = int(alpha_out * out_channels)
    # HWD's Conv expects 4*(c_hf_in // 4) input channels == 4*c_hf_out
    assert c_hf_in // 4 == c_hf_out, "reference module is only shape-consistent when out = in // 4"

    ks = iter(jax.random.split(key, 16))

    def conv_w(k, cin, cout, kh=1, kw=1):
        w = jax.random.normal(k, (kh, kw, cin, cout), jnp.float32) / math.sqrt(cin * kh * kw)
        return w.reshape(cin, cout) if kh == kw == 1 else w

    def bn_p(k, c):
        k1, k2, k3, k4 = jax.random.split(k, 4)
        return (1.0 + 0.1 * jax.random.normal(k1, (c,), jnp.float32),
                0.1 * jax.random.normal(k2, (c,), jnp.float32),
                0.1 * jax.random.normal(k3, (c,), jnp.float32),
                jnp.abs(1.0 + 0.1 * jax.random.normal(k4, (c,), jnp.float32)))

    def bias(k, c):
        return 0.1 * jax.random.normal(k, (c,), jnp.float32)

    return {
        "h2h_w": conv_w(next(ks), c_hf_in, c_hf_out), "h2h_b": bias(next(ks), c_hf_out),
        "h2l_w": conv_w(next(ks), c_hf_in, c_lf_out), "h2l_b": bias(next(ks), c_lf_out),
        "l2l_w": conv_w(next(ks), c_lf_in, c_lf_out), "l2l_b": bias(next(ks), c_lf_out),
        "l2h_w": conv_w(next(ks), c_lf_in, c_hf_out), "l2h_b": bias(next(ks), c_hf_out),
        "comp_w": conv_w(next(ks), c_hf_out, c_mid), "comp_bn": bn_p(next(ks), c_mid),
        "enc_w": conv_w(next(ks), c_mid, (2 * k_up) ** 2, k_enc, k_enc),
        "enc_bn": bn_p(next(ks), (2 * k_up) ** 2),
        "hwd_w": conv_w(next(ks), 4 * c_hf_out, c_lf_out), "hwd_bn": bn_p(next(ks), c_lf_out),
    }


if __name__ == "__main__":
    key = jax.random.PRNGKey(0)
    k_hf, k_lf, k_p = jax.random.split(key, 3)

    # OctConv_CARAFE_HWD(in_channels=32, out_channels=8, kernel_size=1), alpha=0.5.
    # kernel_size=1 (avg_pool k=1 == identity) and equal hf/lf spatial sizes are the
    # configuration under which the reference forward is shape-consistent.
    B, IN_C, OUT_C, H, W = 2, 32, 8, 8, 8
    c_hf_in = IN_C - int(0.5 * IN_C)
    c_lf_in = int(0.5 * IN_C)
    hf = jax.random.normal(k_hf, (B, c_hf_in, H, W), jnp.float32)
    lf = jax.random.normal(k_lf, (B, c_lf_in, H, W), jnp.float32)

    params = make_params(k_p, IN_C, OUT_C)
    fw = prepare_weights(params)           # BN folding / packing hoisted out of the forward

    hf_out, lf_out = octconv_carafe_hwd_forward(hf, lf, fw)
    jax.block_until_ready((hf_out, lf_out))

    assert hf_out.shape == (B, int(0.5 * OUT_C), H, W), hf_out.shape
    assert lf_out.shape == (B, int(0.5 * OUT_C), H, W), lf_out.shape
    assert bool(jnp.all(jnp.isfinite(hf_out))) and bool(jnp.all(jnp.isfinite(lf_out)))

    # Validate the fused bf16 kernel against a plain-JAX f32 reference of the module.
    hf_ref, lf_ref = reference_forward(hf, lf, params)
    assert float(jnp.max(jnp.abs(hf_out - hf_ref))) < 0.15
    assert float(jnp.max(jnp.abs(lf_out - lf_ref))) < 0.15

    print("KERNEL_OK")
</pallas_src>

<mosaic_0001>
module attributes {stable_mosaic.version = 11 : i64} {
  func.func @_octconv_kernel(%arg0: i32, %arg1: memref<1x8x8x16xbf16, #tpu.memory_space<vmem>>, %arg2: memref<1x8x8x16xbf16, #tpu.memory_space<vmem>>, %arg3: memref<16x132xbf16, #tpu.memory_space<vmem>>, %arg4: memref<1x132xf32, #tpu.memory_space<vmem>>, %arg5: memref<16x132xbf16, #tpu.memory_space<vmem>>, %arg6: memref<1x132xf32, #tpu.memory_space<vmem>>, %arg7: memref<4x64xbf16, #tpu.memory_space<vmem>>, %arg8: memref<1x64xf32, #tpu.memory_space<vmem>>, %arg9: memref<9x64x128xbf16, #tpu.memory_space<vmem>>, %arg10: memref<1x128xf32, #tpu.memory_space<vmem>>, %arg11: memref<4x4x4xbf16, #tpu.memory_space<vmem>>, %arg12: memref<1x4xf32, #tpu.memory_space<vmem>>, %arg13: memref<1x8x8x4xf32, #tpu.memory_space<vmem>>, %arg14: memref<1x8x8x4xf32, #tpu.memory_space<vmem>>, %arg15: memref<10x10x64xbf16, #tpu.memory_space<vmem>>, %arg16: memref<12x12x4xf32, #tpu.memory_space<vmem>>) attributes {dimension_semantics = [#tpu.dimension_semantics<parallel>], iteration_bounds = array<i64: 2>, scalar_prefetch = 0 : i64, scratch_operands = 2 : i64, tpu.core_type = #tpu.core_type<tc>, window_params = [{transform_indices = @transform_0, window_bounds = array<i64: 1, 8, 8, 16>}, {transform_indices = @transform_1, window_bounds = array<i64: 1, 8, 8, 16>}, {pipeline_mode = #tpu.pipeline_mode<synchronous>, transform_indices = @transform_2, window_bounds = array<i64: 16, 132>}, {pipeline_mode = #tpu.pipeline_mode<synchronous>, transform_indices = @transform_3, window_bounds = array<i64: 1, 132>}, {pipeline_mode = #tpu.pipeline_mode<synchronous>, transform_indices = @transform_4, window_bounds = array<i64: 16, 132>}, {pipeline_mode = #tpu.pipeline_mode<synchronous>, transform_indices = @transform_5, window_bounds = array<i64: 1, 132>}, {pipeline_mode = #tpu.pipeline_mode<synchronous>, transform_indices = @transform_6, window_bounds = array<i64: 4, 64>}, {pipeline_mode = #tpu.pipeline_mode<synchronous>, transform_indices = @transform_7, window_bounds = array<i64: 1, 64>}, {pipeline_mode = #tpu.pipeline_mode<synchronous>, transform_indices = @transform_8, window_bounds = array<i64: 9, 64, 128>}, {pipeline_mode = #tpu.pipeline_mode<synchronous>, transform_indices = @transform_9, window_bounds = array<i64: 1, 128>}, {pipeline_mode = #tpu.pipeline_mode<synchronous>, transform_indices = @transform_10, window_bounds = array<i64: 4, 4, 4>}, {pipeline_mode = #tpu.pipeline_mode<synchronous>, transform_indices = @transform_11, window_bounds = array<i64: 1, 4>}, {transform_indices = @transform_12, window_bounds = array<i64: 1, 8, 8, 4>}, {transform_indices = @transform_13, window_bounds = array<i64: 1, 8, 8, 4>}]} {
    %c0 = arith.constant 0 : index
    %c0_0 = arith.constant 0 : index
    %c0_1 = arith.constant 0 : index
    %c0_2 = arith.constant 0 : index
    %0 = vector.load %arg1[%c0, %c0_0, %c0_1, %c0_2] : memref<1x8x8x16xbf16, #tpu.memory_space<vmem>>, vector<1x8x8x16xbf16>
    %1 = vector.shape_cast %0 : vector<1x8x8x16xbf16> to vector<8x8x16xbf16>
    %2 = vector.shape_cast %1 : vector<8x8x16xbf16> to vector<64x16xbf16>
    %c0_3 = arith.constant 0 : index
    %c0_4 = arith.constant 0 : index
    %c0_5 = arith.constant 0 : index
    %c0_6 = arith.constant 0 : index
    %3 = vector.load %arg2[%c0_3, %c0_4, %c0_5, %c0_6] : memref<1x8x8x16xbf16, #tpu.memory_space<vmem>>, vector<1x8x8x16xbf16>
    %4 = vector.shape_cast %3 : vector<1x8x8x16xbf16> to vector<8x8x16xbf16>
    %5 = vector.shape_cast %4 : vector<8x8x16xbf16> to vector<64x16xbf16>
    %c0_7 = arith.constant 0 : index
    %c0_8 = arith.constant 0 : index
    %6 = vector.load %arg3[%c0_7, %c0_8] : memref<16x132xbf16, #tpu.memory_space<vmem>>, vector<16x132xbf16>
    %cst = arith.constant dense<0.000000e+00> : vector<64x132xf32>
    %7 = tpu.matmul %2, %6, %cst {dimension_numbers = #tpu.dot_dimension_numbers<[1], [0], [0], [1], [0, 0, 1, 1], [], []>} : vector<64x16xbf16>, vector<16x132xbf16>, vector<64x132xf32> -> vector<64x132xf32>
    %c0_9 = arith.constant 0 : index
    %c0_10 = arith.constant 0 : index
    %8 = vector.load %arg4[%c0_9, %c0_10] : memref<1x132xf32, #tpu.memory_space<vmem>>, vector<1x132xf32>
    %9 = vector.broadcast %8 : vector<1x132xf32> to vector<64x132xf32>
    %10 = arith.addf %7, %9 : vector<64x132xf32>
    %c0_11 = arith.constant 0 : index
    %c0_12 = arith.constant 0 : index
    %11 = vector.load %arg5[%c0_11, %c0_12] : memref<16x132xbf16, #tpu.memory_space<vmem>>, vector<16x132xbf16>
    %cst_13 = arith.constant dense<0.000000e+00> : vector<64x132xf32>
    %12 = tpu.matmul %5, %11, %cst_13 {dimension_numbers = #tpu.dot_dimension_numbers<[1], [0], [0], [1], [0, 0, 1, 1], [], []>} : vector<64x16xbf16>, vector<16x132xbf16>, vector<64x132xf32> -> vector<64x132xf32>
    %c0_14 = arith.constant 0 : index
    %c0_15 = arith.constant 0 : index
    %13 = vector.load %arg6[%c0_14, %c0_15] : memref<1x132xf32, #tpu.memory_space<vmem>>, vector<1x132xf32>
    %14 = vector.broadcast %13 : vector<1x132xf32> to vector<64x132xf32>
    %15 = arith.addf %12, %14 : vector<64x132xf32>
    %16 = vector.extract_strided_slice %10 {offsets = [0, 0], sizes = [64, 4], strides = [1, 1]} : vector<64x132xf32> to vector<64x4xf32>
    %17 = vector.extract_strided_slice %10 {offsets = [0, 128], sizes = [64, 4], strides = [1, 1]} : vector<64x132xf32> to vector<64x4xf32>
    %18 = vector.extract_strided_slice %15 {offsets = [0, 0], sizes = [64, 4], strides = [1, 1]} : vector<64x132xf32> to vector<64x4xf32>
    %19 = vector.extract_strided_slice %15 {offsets = [0, 128], sizes = [64, 4], strides = [1, 1]} : vector<64x132xf32> to vector<64x4xf32>
    %20 = arith.addf %18, %17 : vector<64x4xf32>
    %21 = vector.shape_cast %20 : vector<64x4xf32> to vector<8x8x4xf32>
    %c0_16 = arith.constant 0 : index
    %c0_17 = arith.constant 0 : index
    %c0_18 = arith.constant 0 : index
    %c0_19 = arith.constant 0 : index
    %22 = vector.load %arg14[%c0_16, %c0_17, %c0_18, %c0_19] : memref<1x8x8x4xf32, #tpu.memory_space<vmem>>, vector<1x8x8x4xf32>
    %23 = vector.shape_cast %22 : vector<1x8x8x4xf32> to vector<8x8x4xf32>
    %24 = vector.shape_cast %21 : vector<8x8x4xf32> to vector<1x8x8x4xf32>
    tpu.vector_store %arg14[%c0_16, %c0_17, %c0_18, %c0_19], %24 {strides = array<i32>} : memref<1x8x8x4xf32, #tpu.memory_space<vmem>>, vector<1x8x8x4xf32>,
    %25 = arith.truncf %16 : vector<64x4xf32> to vector<64x4xbf16>
    %c0_20 = arith.constant 0 : index
    %c0_21 = arith.constant 0 : index
    %26 = vector.load %arg7[%c0_20, %c0_21] : memref<4x64xbf16, #tpu.memory_space<vmem>>, vector<4x64xbf16>
    %cst_22 = arith.constant dense<0.000000e+00> : vector<64x64xf32>
    %27 = tpu.matmul %25, %26, %cst_22 {dimension_numbers = #tpu.dot_dimension_numbers<[1], [0], [0], [1], [0, 0, 1, 1], [], []>} : vector<64x4xbf16>, vector<4x64xbf16>, vector<64x64xf32> -> vector<64x64xf32>
    %c0_23 = arith.constant 0 : index
    %c0_24 = arith.constant 0 : index
    %28 = vector.load %arg8[%c0_23, %c0_24] : memref<1x64xf32, #tpu.memory_space<vmem>>, vector<1x64xf32>
    %29 = vector.broadcast %28 : vector<1x64xf32> to vector<64x64xf32>
    %30 = arith.addf %27, %29 : vector<64x64xf32>
    %31 = arith.negf %30 : vector<64x64xf32>
    %32 = math.exp %31 : vector<64x64xf32>
    %cst_25 = arith.constant 1.000000e+00 : f32
    %33 = vector.broadcast %cst_25 : f32 to vector<64x64xf32>
    %34 = arith.addf %33, %32 : vector<64x64xf32>
    %35 = arith.divf %33, %34 : vector<64x64xf32>
    %36 = arith.mulf %30, %35 : vector<64x64xf32>
    %cst_26 = arith.constant 0.000000e+00 : bf16
    %37 = vector.broadcast %cst_26 : bf16 to vector<1x10x64xbf16>
    %c0_27 = arith.constant 0 : index
    %c0_28 = arith.constant 0 : index
    %c0_29 = arith.constant 0 : index
    %38 = vector.load %arg15[%c0_27, %c0_28, %c0_29] : memref<10x10x64xbf16, #tpu.memory_space<vmem>>, vector<1x10x64xbf16>
    tpu.vector_store %arg15[%c0_27, %c0_28, %c0_29], %37 {strides = array<i32>} : memref<10x10x64xbf16, #tpu.memory_space<vmem>>, vector<1x10x64xbf16>,
    %cst_30 = arith.constant 0.000000e+00 : bf16
    %39 = vector.broadcast %cst_30 : bf16 to vector<1x10x64xbf16>
    %c9 = arith.constant 9 : index
    %c0_31 = arith.constant 0 : index
    %c0_32 = arith.constant 0 : index
    %40 = vector.load %arg15[%c9, %c0_31, %c0_32] : memref<10x10x64xbf16, #tpu.memory_space<vmem>>, vector<1x10x64xbf16>
    tpu.vector_store %arg15[%c9, %c0_31, %c0_32], %39 {strides = array<i32>} : memref<10x10x64xbf16, #tpu.memory_space<vmem>>, vector<1x10x64xbf16>,
    %cst_33 = arith.constant 0.000000e+00 : bf16
    %41 = vector.broadcast %cst_33 : bf16 to vector<10x1x64xbf16>
    %c0_34 = arith.constant 0 : index
    %c0_35 = arith.constant 0 : index
    %c0_36 = arith.constant 0 : index
    %42 = vector.load %arg15[%c0_34, %c0_35, %c0_36] : memref<10x10x64xbf16, #tpu.memory_space<vmem>>, vector<10x1x64xbf16>
    tpu.vector_store %arg15[%c0_34, %c0_35, %c0_36], %41 {strides = array<i32>} : memref<10x10x64xbf16, #tpu.memory_space<vmem>>, vector<10x1x64xbf16>,
    %cst_37 = arith.constant 0.000000e+00 : bf16
    %43 = vector.broadcast %cst_37 : bf16 to vector<10x1x64xbf16>
    %c0_38 = arith.constant 0 : index
    %c9_39 = arith.constant 9 : index
    %c0_40 = arith.constant 0 : index
    %44 = vector.load %arg15[%c0_38, %c9_39, %c0_40] : memref<10x10x64xbf16, #tpu.memory_space<vmem>>, vector<10x1x64xbf16>
    tpu.vector_store %arg15[%c0_38, %c9_39, %c0_40], %43 {strides = array<i32>} : memref<10x10x64xbf16, #tpu.memory_space<vmem>>, vector<10x1x64xbf16>,
    %45 = arith.truncf %36 : vector<64x64xf32> to vector<64x64xbf16>
    %46 = vector.shape_cast %45 : vector<64x64xbf16> to vector<8x8x64xbf16>
    %c1 = arith.constant 1 : index
    %c1_41 = arith.constant 1 : index
    %c0_42 = arith.constant 0 : index
    %47 = vector.load %arg15[%c1, %c1_41, %c0_42] : memref<10x10x64xbf16, #tpu.memory_space<vmem>>, vector<8x8x64xbf16>
    tpu.vector_store %arg15[%c1, %c1_41, %c0_42], %46 {strides = array<i32>} : memref<10x10x64xbf16, #tpu.memory_space<vmem>>, vector<8x8x64xbf16>,
    %c0_43 = arith.constant 0 : index
    %c0_44 = arith.constant 0 : index
    %c0_45 = arith.constant 0 : index
    %48 = vector.load %arg15[%c0_43, %c0_44, %c0_45] : memref<10x10x64xbf16, #tpu.memory_space<vmem>>, vector<8x8x64xbf16>
    %49 = vector.shape_cast %48 : vector<8x8x64xbf16> to vector<64x64xbf16>
    %c0_46 = arith.constant 0 : index
    %c0_47 = arith.constant 0 : index
    %c0_48 = arith.constant 0 : index
    %50 = vector.load %arg9[%c0_46, %c0_47, %c0_48] : memref<9x64x128xbf16, #tpu.memory_space<vmem>>, vector<1x64x128xbf16>
    %51 = vector.shape_cast %50 : vector<1x64x128xbf16> to vector<64x128xbf16>
    %cst_49 = arith.constant dense<0.000000e+00> : vector<64x128xf32>
    %52 = tpu.matmul %49, %51, %cst_49 {dimension_numbers = #tpu.dot_dimension_numbers<[1], [0], [0], [1], [0, 0, 1, 1], [], []>} : vector<64x64xbf16>, vector<64x128xbf16>, vector<64x128xf32> -> vector<64x128xf32>
    %c0_50 = arith.constant 0 : index
    %c1_51 = arith.constant 1 : index
    %c0_52 = arith.constant 0 : index
    %53 = vector.load %arg15[%c0_50, %c1_51, %c0_52] : memref<10x10x64xbf16, #tpu.memory_space<vmem>>, vector<8x8x64xbf16>
    %54 = vector.shape_cast %53 : vector<8x8x64xbf16> to vector<64x64xbf16>
    %c1_53 = arith.constant 1 : index
    %c0_54 = arith.constant 0 : index
    %c0_55 = arith.constant 0 : index
    %55 = vector.load %arg9[%c1_53, %c0_54, %c0_55] : memref<9x64x128xbf16, #tpu.memory_space<vmem>>, vector<1x64x128xbf16>
    %56 = vector.shape_cast %55 : vector<1x64x128xbf16> to vector<64x128xbf16>
    %cst_56 = arith.constant dense<0.000000e+00> : vector<64x128xf32>
    %57 = tpu.matmul %54, %56, %cst_56 {dimension_numbers = #tpu.dot_dimension_numbers<[1], [0], [0], [1], [0, 0, 1, 1], [], []>} : vector<64x64xbf16>, vector<64x128xbf16>, vector<64x128xf32> -> vector<64x128xf32>
    %58 = arith.addf %52, %57 : vector<64x128xf32>
    %c0_57 = arith.constant 0 : index
    %c2 = arith.constant 2 : index
    %c0_58 = arith.constant 0 : index
    %59 = vector.load %arg15[%c0_57, %c2, %c0_58] : memref<10x10x64xbf16, #tpu.memory_space<vmem>>, vector<8x8x64xbf16>
    %60 = vector.shape_cast %59 : vector<8x8x64xbf16> to vector<64x64xbf16>
    %c2_59 = arith.constant 2 : index
    %c0_60 = arith.constant 0 : index
    %c0_61 = arith.constant 0 : index
    %61 = vector.load %arg9[%c2_59, %c0_60, %c0_61] : memref<9x64x128xbf16, #tpu.memory_space<vmem>>, vector<1x64x128xbf16>
    %62 = vector.shape_cast %61 : vector<1x64x128xbf16> to vector<64x128xbf16>
    %cst_62 = arith.constant dense<0.000000e+00> : vector<64x128xf32>
    %63 = tpu.matmul %60, %62, %cst_62 {dimension_numbers = #tpu.dot_dimension_numbers<[1], [0], [0], [1], [0, 0, 1, 1], [], []>} : vector<64x64xbf16>, vector<64x128xbf16>, vector<64x128xf32> -> vector<64x128xf32>
    %64 = arith.addf %58, %63 : vector<64x128xf32>
    %c1_63 = arith.constant 1 : index
    %c0_64 = arith.constant 0 : index
    %c0_65 = arith.constant 0 : index
    %65 = vector.load %arg15[%c1_63, %c0_64, %c0_65] : memref<10x10x64xbf16, #tpu.memory_space<vmem>>, vector<8x8x64xbf16>
    %66 = vector.shape_cast %65 : vector<8x8x64xbf16> to vector<64x64xbf16>
    %c3 = arith.constant 3 : index
    %c0_66 = arith.constant 0 : index
    %c0_67 = arith.constant 0 : index
    %67 = vector.load %arg9[%c3, %c0_66, %c0_67] : memref<9x64x128xbf16, #tpu.memory_space<vmem>>, vector<1x64x128xbf16>
    %68 = vector.shape_cast %67 : vector<1x64x128xbf16> to vector<64x128xbf16>
    %cst_68 = arith.constant dense<0.000000e+00> : vector<64x128xf32>
    %69 = tpu.matmul %66, %68, %cst_68 {dimension_numbers = #tpu.dot_dimension_numbers<[1], [0], [0], [1], [0, 0, 1, 1], [], []>} : vector<64x64xbf16>, vector<64x128xbf16>, vector<64x128xf32> -> vector<64x128xf32>
    %70 = arith.addf %64, %69 : vector<64x128xf32>
    %c1_69 = arith.constant 1 : index
    %c1_70 = arith.constant 1 : index
    %c0_71 = arith.constant 0 : index
    %71 = vector.load %arg15[%c1_69, %c1_70, %c0_71] : memref<10x10x64xbf16, #tpu.memory_space<vmem>>, vector<8x8x64xbf16>
    %72 = vector.shape_cast %71 : vector<8x8x64xbf16> to vector<64x64xbf16>
    %c4 = arith.constant 4 : index
    %c0_72 = arith.constant 0 : index
    %c0_73 = arith.constant 0 : index
    %73 = vector.load %arg9[%c4, %c0_72, %c0_73] : memref<9x64x128xbf16, #tpu.memory_space<vmem>>, vector<1x64x128xbf16>
    %74 = vector.shape_cast %73 : vector<1x64x128xbf16> to vector<64x128xbf16>
    %cst_74 = arith.constant dense<0.000000e+00> : vector<64x128xf32>
    %75 = tpu.matmul %72, %74, %cst_74 {dimension_numbers = #tpu.dot_dimension_numbers<[1], [0], [0], [1], [0, 0, 1, 1], [], []>} : vector<64x64xbf16>, vector<64x128xbf16>, vector<64x128xf32> -> vector<64x128xf32>
    %76 = arith.addf %70, %75 : vector<64x128xf32>
    %c1_75 = arith.constant 1 : index
    %c2_76 = arith.constant 2 : index
    %c0_77 = arith.constant 0 : index
    %77 = vector.load %arg15[%c1_75, %c2_76, %c0_77] : memref<10x10x64xbf16, #tpu.memory_space<vmem>>, vector<8x8x64xbf16>
    %78 = vector.shape_cast %77 : vector<8x8x64xbf16> to vector<64x64xbf16>
    %c5 = arith.constant 5 : index
    %c0_78 = arith.constant 0 : index
    %c0_79 = arith.constant 0 : index
    %79 = vector.load %arg9[%c5, %c0_78, %c0_79] : memref<9x64x128xbf16, #tpu.memory_space<vmem>>, vector<1x64x128xbf16>
    %80 = vector.shape_cast %79 : vector<1x64x128xbf16> to vector<64x128xbf16>
    %cst_80 = arith.constant dense<0.000000e+00> : vector<64x128xf32>
    %81 = tpu.matmul %78, %80, %cst_80 {dimension_numbers = #tpu.dot_dimension_numbers<[1], [0], [0], [1], [0, 0, 1, 1], [], []>} : vector<64x64xbf16>, vector<64x128xbf16>, vector<64x128xf32> -> vector<64x128xf32>
    %82 = arith.addf %76, %81 : vector<64x128xf32>
    %c2_81 = arith.constant 2 : index
    %c0_82 = arith.constant 0 : index
    %c0_83 = arith.constant 0 : index
    %83 = vector.load %arg15[%c2_81, %c0_82, %c0_83] : memref<10x10x64xbf16, #tpu.memory_space<vmem>>, vector<8x8x64xbf16>
    %84 = vector.shape_cast %83 : vector<8x8x64xbf16> to vector<64x64xbf16>
    %c6 = arith.constant 6 : index
    %c0_84 = arith.constant 0 : index
    %c0_85 = arith.constant 0 : index
    %85 = vector.load %arg9[%c6, %c0_84, %c0_85] : memref<9x64x128xbf16, #tpu.memory_space<vmem>>, vector<1x64x128xbf16>
    %86 = vector.shape_cast %85 : vector<1x64x128xbf16> to vector<64x128xbf16>
    %cst_86 = arith.constant dense<0.000000e+00> : vector<64x128xf32>
    %87 = tpu.matmul %84, %86, %cst_86 {dimension_numbers = #tpu.dot_dimension_numbers<[1], [0], [0], [1], [0, 0, 1, 1], [], []>} : vector<64x64xbf16>, vector<64x128xbf16>, vector<64x128xf32> -> vector<64x128xf32>
    %88 = arith.addf %82, %87 : vector<64x128xf32>
    %c2_87 = arith.constant 2 : index
    %c1_88 = arith.constant 1 : index
    %c0_89 = arith.constant 0 : index
    %89 = vector.load %arg15[%c2_87, %c1_88, %c0_89] : memref<10x10x64xbf16, #tpu.memory_space<vmem>>, vector<8x8x64xbf16>
    %90 = vector.shape_cast %89 : vector<8x8x64xbf16> to vector<64x64xbf16>
    %c7 = arith.constant 7 : index
    %c0_90 = arith.constant 0 : index
    %c0_91 = arith.constant 0 : index
    %91 = vector.load %arg9[%c7, %c0_90, %c0_91] : memref<9x64x128xbf16, #tpu.memory_space<vmem>>, vector<1x64x128xbf16>
    %92 = vector.shape_cast %91 : vector<1x64x128xbf16> to vector<64x128xbf16>
    %cst_92 = arith.constant dense<0.000000e+00> : vector<64x128xf32>
    %93 = tpu.matmul %90, %92, %cst_92 {dimension_numbers = #tpu.dot_dimension_numbers<[1], [0], [0], [1], [0, 0, 1, 1], [], []>} : vector<64x64xbf16>, vector<64x128xbf16>, vector<64x128xf32> -> vector<64x128xf32>
    %94 = arith.addf %88, %93 : vector<64x128xf32>
    %c2_93 = arith.constant 2 : index
    %c2_94 = arith.constant 2 : index
    %c0_95 = arith.constant 0 : index
    %95 = vector.load %arg15[%c2_93, %c2_94, %c0_95] : memref<10x10x64xbf16, #tpu.memory_space<vmem>>, vector<8x8x64xbf16>
    %96 = vector.shape_cast %95 : vector<8x8x64xbf16> to vector<64x64xbf16>
    %c8 = arith.constant 8 : index
    %c0_96 = arith.constant 0 : index
    %c0_97 = arith.constant 0 : index
    %97 = vector.load %arg9[%c8, %c0_96, %c0_97] : memref<9x64x128xbf16, #tpu.memory_space<vmem>>, vector<1x64x128xbf16>
    %98 = vector.shape_cast %97 : vector<1x64x128xbf16> to vector<64x128xbf16>
    %cst_98 = arith.constant dense<0.000000e+00> : vector<64x128xf32>
    %99 = tpu.matmul %96, %98, %cst_98 {dimension_numbers = #tpu.dot_dimension_numbers<[1], [0], [0], [1], [0, 0, 1, 1], [], []>} : vector<64x64xbf16>, vector<64x128xbf16>, vector<64x128xf32> -> vector<64x128xf32>
    %100 = arith.addf %94, %99 : vector<64x128xf32>
    %c0_99 = arith.constant 0 : index
    %c0_100 = arith.constant 0 : index
    %101 = vector.load %arg10[%c0_99, %c0_100] : memref<1x128xf32, #tpu.memory_space<vmem>>, vector<1x128xf32>
    %102 = vector.broadcast %101 : vector<1x128xf32> to vector<64x128xf32>
    %103 = arith.addf %100, %102 : vector<64x128xf32>
    %104 = vector.extract_strided_slice %103 {offsets = [0, 0], sizes = [64, 25], strides = [1, 1]} : vector<64x128xf32> to vector<64x25xf32>
    %cst_101 = arith.constant dense<0xFF800000> : vector<64xf32>
    %105 = vector.multi_reduction <maximumf>, %104, %cst_101 [1] : vector<64x25xf32> to vector<64xf32>
    %106 = vector.shape_cast %105 : vector<64xf32> to vector<64x1xf32>
    %107 = vector.broadcast %106 : vector<64x1xf32> to vector<64x25xf32>
    %108 = arith.subf %104, %107 : vector<64x25xf32>
    %109 = math.exp %108 : vector<64x25xf32>
    %cst_102 = arith.constant dense<0.000000e+00> : vector<64xf32>
    %110 = vector.multi_reduction <add>, %109, %cst_102 [1] : vector<64x25xf32> to vector<64xf32>
    %111 = vector.shape_cast %110 : vector<64xf32> to vector<64x1xf32>
    %112 = tpu.reciprocal %111 {approx = true} : vector<64x1xf32> -> vector<64x1xf32>
    %113 = vector.broadcast %112 : vector<64x1xf32> to vector<64x25xf32>
    %114 = arith.mulf %109, %113 : vector<64x25xf32>
    %115 = vector.shape_cast %114 : vector<64x25xf32> to vector<8x8x25xf32>
    %116 = vector.extract_strided_slice %103 {offsets = [0, 32], sizes = [64, 25], strides = [1, 1]} : vector<64x128xf32> to vector<64x25xf32>
    %cst_103 = arith.constant dense<0xFF800000> : vector<64xf32>
    %117 = vector.multi_reduction <maximumf>, %116, %cst_103 [1] : vector<64x25xf32> to vector<64xf32>
    %118 = vector.shape_cast %117 : vector<64xf32> to vector<64x1xf32>
    %119 = vector.broadcast %118 : vector<64x1xf32> to vector<64x25xf32>
    %120 = arith.subf %116, %119 : vector<64x25xf32>
    %121 = math.exp %120 : vector<64x25xf32>
    %cst_104 = arith.constant dense<0.000000e+00> : vector<64xf32>
    %122 = vector.multi_reduction <add>, %121, %cst_104 [1] : vector<64x25xf32> to vector<64xf32>
    %123 = vector.shape_cast %122 : vector<64xf32> to vector<64x1xf32>
    %124 = tpu.reciprocal %123 {approx = true} : vector<64x1xf32> -> vector<64x1xf32>
    %125 = vector.broadcast %124 : vector<64x1xf32> to vector<64x25xf32>
    %126 = arith.mulf %121, %125 : vector<64x25xf32>
    %127 = vector.shape_cast %126 : vector<64x25xf32> to vector<8x8x25xf32>
    %128 = vector.extract_strided_slice %103 {offsets = [0, 64], sizes = [64, 25], strides = [1, 1]} : vector<64x128xf32> to vector<64x25xf32>
    %cst_105 = arith.constant dense<0xFF800000> : vector<64xf32>
    %129 = vector.multi_reduction <maximumf>, %128, %cst_105 [1] : vector<64x25xf32> to vector<64xf32>
    %130 = vector.shape_cast %129 : vector<64xf32> to vector<64x1xf32>
    %131 = vector.broadcast %130 : vector<64x1xf32> to vector<64x25xf32>
    %132 = arith.subf %128, %131 : vector<64x25xf32>
    %133 = math.exp %132 : vector<64x25xf32>
    %cst_106 = arith.constant dense<0.000000e+00> : vector<64xf32>
    %134 = vector.multi_reduction <add>, %133, %cst_106 [1] : vector<64x25xf32> to vector<64xf32>
    %135 = vector.shape_cast %134 : vector<64xf32> to vector<64x1xf32>
    %136 = tpu.reciprocal %135 {approx = true} : vector<64x1xf32> -> vector<64x1xf32>
    %137 = vector.broadcast %136 : vector<64x1xf32> to vector<64x25xf32>
    %138 = arith.mulf %133, %137 : vector<64x25xf32>
    %139 = vector.shape_cast %138 : vector<64x25xf32> to vector<8x8x25xf32>
    %140 = vector.extract_strided_slice %103 {offsets = [0, 96], sizes = [64, 25], strides = [1, 1]} : vector<64x128xf32> to vector<64x25xf32>
    %cst_107 = arith.constant dense<0xFF800000> : vector<64xf32>
    %141 = vector.multi_reduction <maximumf>, %140, %cst_107 [1] : vector<64x25xf32> to vector<64xf32>
    %142 = vector.shape_cast %141 : vector<64xf32> to vector<64x1xf32>
    %143 = vector.broadcast %142 : vector<64x1xf32> to vector<64x25xf32>
    %144 = arith.subf %140, %143 : vector<64x25xf32>
    %145 = math.exp %144 : vector<64x25xf32>
    %cst_108 = arith.constant dense<0.000000e+00> : vector<64xf32>
    %146 = vector.multi_reduction <add>, %145, %cst_108 [1] : vector<64x25xf32> to vector<64xf32>
    %147 = vector.shape_cast %146 : vector<64xf32> to vector<64x1xf32>
    %148 = tpu.reciprocal %147 {approx = true} : vector<64x1xf32> -> vector<64x1xf32>
    %149 = vector.broadcast %148 : vector<64x1xf32> to vector<64x25xf32>
    %150 = arith.mulf %145, %149 : vector<64x25xf32>
    %151 = vector.shape_cast %150 : vector<64x25xf32> to vector<8x8x25xf32>
    %cst_109 = arith.constant 0.000000e+00 : f32
    %152 = vector.broadcast %cst_109 : f32 to vector<2x12x4xf32>
    %c0_110 = arith.constant 0 : index
    %c0_111 = arith.constant 0 : index
    %c0_112 = arith.constant 0 : index
    %153 = vector.load %arg16[%c0_110, %c0_111, %c0_112] : memref<12x12x4xf32, #tpu.memory_space<vmem>>, vector<2x12x4xf32>
    tpu.vector_store %arg16[%c0_110, %c0_111, %c0_112], %152 {strides = array<i32>} : memref<12x12x4xf32, #tpu.memory_space<vmem>>, vector<2x12x4xf32>,
    %cst_113 = arith.constant 0.000000e+00 : f32
    %154 = vector.broadcast %cst_113 : f32 to vector<2x12x4xf32>
    %c10 = arith.constant 10 : index
    %c0_114 = arith.constant 0 : index
    %c0_115 = arith.constant 0 : index
    %155 = vector.load %arg16[%c10, %c0_114, %c0_115] : memref<12x12x4xf32, #tpu.memory_space<vmem>>, vector<2x12x4xf32>
    tpu.vector_store %arg16[%c10, %c0_114, %c0_115], %154 {strides = array<i32>} : memref<12x12x4xf32, #tpu.memory_space<vmem>>, vector<2x12x4xf32>,
    %cst_116 = arith.constant 0.000000e+00 : f32
    %156 = vector.broadcast %cst_116 : f32 to vector<12x2x4xf32>
    %c0_117 = arith.constant 0 : index
    %c0_118 = arith.constant 0 : index
    %c0_119 = arith.constant 0 : index
    %157 = vector.load %arg16[%c0_117, %c0_118, %c0_119] : memref<12x12x4xf32, #tpu.memory_space<vmem>>, vector<12x2x4xf32>
    tpu.vector_store %arg16[%c0_117, %c0_118, %c0_119], %156 {strides = array<i32>} : memref<12x12x4xf32, #tpu.memory_space<vmem>>, vector<12x2x4xf32>,
    %cst_120 = arith.constant 0.000000e+00 : f32
    %158 = vector.broadcast %cst_120 : f32 to vector<12x2x4xf32>
    %c0_121 = arith.constant 0 : index
    %c10_122 = arith.constant 10 : index
    %c0_123 = arith.constant 0 : index
    %159 = vector.load %arg16[%c0_121, %c10_122, %c0_123] : memref<12x12x4xf32, #tpu.memory_space<vmem>>, vector<12x2x4xf32>
    tpu.vector_store %arg16[%c0_121, %c10_122, %c0_123], %158 {strides = array<i32>} : memref<12x12x4xf32, #tpu.memory_space<vmem>>, vector<12x2x4xf32>,
    %160 = vector.shape_cast %16 : vector<64x4xf32> to vector<8x8x4xf32>
    %c2_124 = arith.constant 2 : index
    %c2_125 = arith.constant 2 : index
    %c0_126 = arith.constant 0 : index
    %161 = vector.load %arg16[%c2_124, %c2_125, %c0_126] : memref<12x12x4xf32, #tpu.memory_space<vmem>>, vector<8x8x4xf32>
    tpu.vector_store %arg16[%c2_124, %c2_125, %c0_126], %160 {strides = array<i32>} : memref<12x12x4xf32, #tpu.memory_space<vmem>>, vector<8x8x4xf32>,
    %162 = vector.shape_cast %19 : vector<64x4xf32> to vector<8x8x4xf32>
    %c0_127 = arith.constant 0 : index
    %c0_128 = arith.constant 0 : index
    %c0_129 = arith.constant 0 : index
    %163 = vector.load %arg16[%c0_127, %c0_128, %c0_129] : memref<12x12x4xf32, #tpu.memory_space<vmem>>, vector<8x8x4xf32>
    %164 = vector.extract_strided_slice %115 {offsets = [0, 0, 0], sizes = [8, 8, 1], strides = [1, 1, 1]} : vector<8x8x25xf32> to vector<8x8x1xf32>
    %165 = vector.broadcast %164 : vector<8x8x1xf32> to vector<8x8x4xf32>
    %166 = arith.mulf %165, %163 : vector<8x8x4xf32>
    %167 = arith.addf %162, %166 : vector<8x8x4xf32>
    %168 = vector.extract_strided_slice %127 {offsets = [0, 0, 0], sizes = [8, 8, 1], strides = [1, 1, 1]} : vector<8x8x25xf32> to vector<8x8x1xf32>
    %169 = vector.broadcast %168 : vector<8x8x1xf32> to vector<8x8x4xf32>
    %170 = arith.mulf %169, %163 : vector<8x8x4xf32>
    %171 = arith.addf %162, %170 : vector<8x8x4xf32>
    %172 = vector.extract_strided_slice %139 {offsets = [0, 0, 0], sizes = [8, 8, 1], strides = [1, 1, 1]} : vector<8x8x25xf32> to vector<8x8x1xf32>
    %173 = vector.broadcast %172 : vector<8x8x1xf32> to vector<8x8x4xf32>
    %174 = arith.mulf %173, %163 : vector<8x8x4xf32>
    %175 = arith.addf %162, %174 : vector<8x8x4xf32>
    %176 = vector.extract_strided_slice %151 {offsets = [0, 0, 0], sizes = [8, 8, 1], strides = [1, 1, 1]} : vector<8x8x25xf32> to vector<8x8x1xf32>
    %177 = vector.broadcast %176 : vector<8x8x1xf32> to vector<8x8x4xf32>
    %178 = arith.mulf %177, %163 : vector<8x8x4xf32>
    %179 = arith.addf %162, %178 : vector<8x8x4xf32>
    %c0_130 = arith.constant 0 : index
    %c1_131 = arith.constant 1 : index
    %c0_132 = arith.constant 0 : index
    %180 = vector.load %arg16[%c0_130, %c1_131, %c0_132] : memref<12x12x4xf32, #tpu.memory_space<vmem>>, vector<8x8x4xf32>
    %181 = vector.extract_strided_slice %115 {offsets = [0, 0, 1], sizes = [8, 8, 1], strides = [1, 1, 1]} : vector<8x8x25xf32> to vector<8x8x1xf32>
    %182 = vector.broadcast %181 : vector<8x8x1xf32> to vector<8x8x4xf32>
    %183 = arith.mulf %182, %180 : vector<8x8x4xf32>
    %184 = arith.addf %167, %183 : vector<8x8x4xf32>
    %185 = vector.extract_strided_slice %127 {offsets = [0, 0, 1], sizes = [8, 8, 1], strides = [1, 1, 1]} : vector<8x8x25xf32> to vector<8x8x1xf32>
    %186 = vector.broadcast %185 : vector<8x8x1xf32> to vector<8x8x4xf32>
    %187 = arith.mulf %186, %180 : vector<8x8x4xf32>
    %188 = arith.addf %171, %187 : vector<8x8x4xf32>
    %189 = vector.extract_strided_slice %139 {offsets = [0, 0, 1], sizes = [8, 8, 1], strides = [1, 1, 1]} : vector<8x8x25xf32> to vector<8x8x1xf32>
    %190 = vector.broadcast %189 : vector<8x8x1xf32> to vector<8x8x4xf32>
    %191 = arith.mulf %190, %180 : vector<8x8x4xf32>
    %192 = arith.addf %175, %191 : vector<8x8x4xf32>
    %193 = vector.extract_strided_slice %151 {offsets = [0, 0, 1], sizes = [8, 8, 1], strides = [1, 1, 1]} : vector<8x8x25xf32> to vector<8x8x1xf32>
    %194 = vector.broadcast %193 : vector<8x8x1xf32> to vector<8x8x4xf32>
    %195 = arith.mulf %194, %180 : vector<8x8x4xf32>
    %196 = arith.addf %179, %195 : vector<8x8x4xf32>
    %c0_133 = arith.constant 0 : index
    %c2_134 = arith.constant 2 : index
    %c0_135 = arith.constant 0 : index
    %197 = vector.load %arg16[%c0_133, %c2_134, %c0_135] : memref<12x12x4xf32, #tpu.memory_space<vmem>>, vector<8x8x4xf32>
    %198 = vector.extract_strided_slice %115 {offsets = [0, 0, 2], sizes = [8, 8, 1], strides = [1, 1, 1]} : vector<8x8x25xf32> to vector<8x8x1xf32>
    %199 = vector.broadcast %198 : vector<8x8x1xf32> to vector<8x8x4xf32>
    %200 = arith.mulf %199, %197 : vector<8x8x4xf32>
    %201 = arith.addf %184, %200 : vector<8x8x4xf32>
    %202 = vector.extract_strided_slice %127 {offsets = [0, 0, 2], sizes = [8, 8, 1], strides = [1, 1, 1]} : vector<8x8x25xf32> to vector<8x8x1xf32>
    %203 = vector.broadcast %202 : vector<8x8x1xf32> to vector<8x8x4xf32>
    %204 = arith.mulf %203, %197 : vector<8x8x4xf32>
    %205 = arith.addf %188, %204 : vector<8x8x4xf32>
    %206 = vector.extract_strided_slice %139 {offsets = [0, 0, 2], sizes = [8, 8, 1], strides = [1, 1, 1]} : vector<8x8x25xf32> to vector<8x8x1xf32>
    %207 = vector.broadcast %206 : vector<8x8x1xf32> to vector<8x8x4xf32>
    %208 = arith.mulf %207, %197 : vector<8x8x4xf32>
    %209 = arith.addf %192, %208 : vector<8x8x4xf32>
    %210 = vector.extract_strided_slice %151 {offsets = [0, 0, 2], sizes = [8, 8, 1], strides = [1, 1, 1]} : vector<8x8x25xf32> to vector<8x8x1xf32>
    %211 = vector.broadcast %210 : vector<8x8x1xf32> to vector<8x8x4xf32>
    %212 = arith.mulf %211, %197 : vector<8x8x4xf32>
    %213 = arith.addf %196, %212 : vector<8x8x4xf32>
    %c0_136 = arith.constant 0 : index
    %c3_137 = arith.constant 3 : index
    %c0_138 = arith.constant 0 : index
    %214 = vector.load %arg16[%c0_136, %c3_137, %c0_138] : memref<12x12x4xf32, #tpu.memory_space<vmem>>, vector<8x8x4xf32>
    %215 = vector.extract_strided_slice %115 {offsets = [0, 0, 3], sizes = [8, 8, 1], strides = [1, 1, 1]} : vector<8x8x25xf32> to vector<8x8x1xf32>
    %216 = vector.broadcast %215 : vector<8x8x1xf32> to vector<8x8x4xf32>
    %217 = arith.mulf %216, %214 : vector<8x8x4xf32>
    %218 = arith.addf %201, %217 : vector<8x8x4xf32>
    %219 = vector.extract_strided_slice %127 {offsets = [0, 0, 3], sizes = [8, 8, 1], strides = [1, 1, 1]} : vector<8x8x25xf32> to vector<8x8x1xf32>
    %220 = vector.broadcast %219 : vector<8x8x1xf32> to vector<8x8x4xf32>
    %221 = arith.mulf %220, %214 : vector<8x8x4xf32>
    %222 = arith.addf %205, %221 : vector<8x8x4xf32>
    %223 = vector.extract_strided_slice %139 {offsets = [0, 0, 3], sizes = [8, 8, 1], strides = [1, 1, 1]} : vector<8x8x25xf32> to vector<8x8x1xf32>
    %224 = vector.broadcast %223 : vector<8x8x1xf32> to vector<8x8x4xf32>
    %225 = arith.mulf %224, %214 : vector<8x8x4xf32>
    %226 = arith.addf %209, %225 : vector<8x8x4xf32>
    %227 = vector.extract_strided_slice %151 {offsets = [0, 0, 3], sizes = [8, 8, 1], strides = [1, 1, 1]} : vector<8x8x25xf32> to vector<8x8x1xf32>
    %228 = vector.broadcast %227 : vector<8x8x1xf32> to vector<8x8x4xf32>
    %229 = arith.mulf %228, %214 : vector<8x8x4xf32>
    %230 = arith.addf %213, %229 : vector<8x8x4xf32>
    %c0_139 = arith.constant 0 : index
    %c4_140 = arith.constant 4 : index
    %c0_141 = arith.constant 0 : index
    %231 = vector.load %arg16[%c0_139, %c4_140, %c0_141] : memref<12x12x4xf32, #tpu.memory_space<vmem>>, vector<8x8x4xf32>
    %232 = vector.extract_strided_slice %115 {offsets = [0, 0, 4], sizes = [8, 8, 1], strides = [1, 1, 1]} : vector<8x8x25xf32> to vector<8x8x1xf32>
    %233 = vector.broadcast %232 : vector<8x8x1xf32> to vector<8x8x4xf32>
    %234 = arith.mulf %233, %231 : vector<8x8x4xf32>
    %235 = arith.addf %218, %234 : vector<8x8x4xf32>
    %236 = vector.extract_strided_slice %127 {offsets = [0, 0, 4], sizes = [8, 8, 1], strides = [1, 1, 1]} : vector<8x8x25xf32> to vector<8x8x1xf32>
    %237 = vector.broadcast %236 : vector<8x8x1xf32> to vector<8x8x4xf32>
    %238 = arith.mulf %237, %231 : vector<8x8x4xf32>
    %239 = arith.addf %222, %238 : vector<8x8x4xf32>
    %240 = vector.extract_strided_slice %139 {offsets = [0, 0, 4], sizes = [8, 8, 1], strides = [1, 1, 1]} : vector<8x8x25xf32> to vector<8x8x1xf32>
    %241 = vector.broadcast %240 : vector<8x8x1xf32> to vector<8x8x4xf32>
    %242 = arith.mulf %241, %231 : vector<8x8x4xf32>
    %243 = arith.addf %226, %242 : vector<8x8x4xf32>
    %244 = vector.extract_strided_slice %151 {offsets = [0, 0, 4], sizes = [8, 8, 1], strides = [1, 1, 1]} : vector<8x8x25xf32> to vector<8x8x1xf32>
    %245 = vector.broadcast %244 : vector<8x8x1xf32> to vector<8x8x4xf32>
    %246 = arith.mulf %245, %231 : vector<8x8x4xf32>
    %247 = arith.addf %230, %246 : vector<8x8x4xf32>
    %c1_142 = arith.constant 1 : index
    %c0_143 = arith.constant 0 : index
    %c0_144 = arith.constant 0 : index
    %248 = vector.load %arg16[%c1_142, %c0_143, %c0_144] : memref<12x12x4xf32, #tpu.memory_space<vmem>>, vector<8x8x4xf32>
    %249 = vector.extract_strided_slice %115 {offsets = [0, 0, 5], sizes = [8, 8, 1], strides = [1, 1, 1]} : vector<8x8x25xf32> to vector<8x8x1xf32>
    %250 = vector.broadcast %249 : vector<8x8x1xf32> to vector<8x8x4xf32>
    %251 = arith.mulf %250, %248 : vector<8x8x4xf32>
    %252 = arith.addf %235, %251 : vector<8x8x4xf32>
    %253 = vector.extract_strided_slice %127 {offsets = [0, 0, 5], sizes = [8, 8, 1], strides = [1, 1, 1]} : vector<8x8x25xf32> to vector<8x8x1xf32>
    %254 = vector.broadcast %253 : vector<8x8x1xf32> to vector<8x8x4xf32>
    %255 = arith.mulf %254, %248 : vector<8x8x4xf32>
    %256 = arith.addf %239, %255 : vector<8x8x4xf32>
    %257 = vector.extract_strided_slice %139 {offsets = [0, 0, 5], sizes = [8, 8, 1], strides = [1, 1, 1]} : vector<8x8x25xf32> to vector<8x8x1xf32>
    %258 = vector.broadcast %257 : vector<8x8x1xf32> to vector<8x8x4xf32>
    %259 = arith.mulf %258, %248 : vector<8x8x4xf32>
    %260 = arith.addf %243, %259 : vector<8x8x4xf32>
    %261 = vector.extract_strided_slice %151 {offsets = [0, 0, 5], sizes = [8, 8, 1], strides = [1, 1, 1]} : vector<8x8x25xf32> to vector<8x8x1xf32>
    %262 = vector.broadcast %261 : vector<8x8x1xf32> to vector<8x8x4xf32>
    %263 = arith.mulf %262, %248 : vector<8x8x4xf32>
    %264 = arith.addf %247, %263 : vector<8x8x4xf32>
    %c1_145 = arith.constant 1 : index
    %c1_146 = arith.constant 1 : index
    %c0_147 = arith.constant 0 : index
    %265 = vector.load %arg16[%c1_145, %c1_146, %c0_147] : memref<12x12x4xf32, #tpu.memory_space<vmem>>, vector<8x8x4xf32>
    %266 = vector.extract_strided_slice %115 {offsets = [0, 0, 6], sizes = [8, 8, 1], strides = [1, 1, 1]} : vector<8x8x25xf32> to vector<8x8x1xf32>
    %267 = vector.broadcast %266 : vector<8x8x1xf32> to vector<8x8x4xf32>
    %268 = arith.mulf %267, %265 : vector<8x8x4xf32>
    %269 = arith.addf %252, %268 : vector<8x8x4xf32>
    %270 = vector.extract_strided_slice %127 {offsets = [0, 0, 6], sizes = [8, 8, 1], strides = [1, 1, 1]} : vector<8x8x25xf32> to vector<8x8x1xf32>
    %271 = vector.broadcast %270 : vector<8x8x1xf32> to vector<8x8x4xf32>
    %272 = arith.mulf %271, %265 : vector<8x8x4xf32>
    %273 = arith.addf %256, %272 : vector<8x8x4xf32>
    %274 = vector.extract_strided_slice %139 {offsets = [0, 0, 6], sizes = [8, 8, 1], strides = [1, 1, 1]} : vector<8x8x25xf32> to vector<8x8x1xf32>
    %275 = vector.broadcast %274 : vector<8x8x1xf32> to vector<8x8x4xf32>
    %276 = arith.mulf %275, %265 : vector<8x8x4xf32>
    %277 = arith.addf %260, %276 : vector<8x8x4xf32>
    %278 = vector.extract_strided_slice %151 {offsets = [0, 0, 6], sizes = [8, 8, 1], strides = [1, 1, 1]} : vector<8x8x25xf32> to vector<8x8x1xf32>
    %279 = vector.broadcast %278 : vector<8x8x1xf32> to vector<8x8x4xf32>
    %280 = arith.mulf %279, %265 : vector<8x8x4xf32>
    %281 = arith.addf %264, %280 : vector<8x8x4xf32>
    %c1_148 = arith.constant 1 : index
    %c2_149 = arith.constant 2 : index
    %c0_150 = arith.constant 0 : index
    %282 = vector.load %arg16[%c1_148, %c2_149, %c0_150] : memref<12x12x4xf32, #tpu.memory_space<vmem>>, vector<8x8x4xf32>
    %283 = vector.extract_strided_slice %115 {offsets = [0, 0, 7], sizes = [8, 8, 1], strides = [1, 1, 1]} : vector<8x8x25xf32> to vector<8x8x1xf32>
    %284 = vector.broadcast %283 : vector<8x8x1xf32> to vector<8x8x4xf32>
    %285 = arith.mulf %284, %282 : vector<8x8x4xf32>
    %286 = arith.addf %269, %285 : vector<8x8x4xf32>
    %287 = vector.extract_strided_slice %127 {offsets = [0, 0, 7], sizes = [8, 8, 1], strides = [1, 1, 1]} : vector<8x8x25xf32> to vector<8x8x1xf32>
    %288 = vector.broadcast %287 : vector<8x8x1xf32> to vector<8x8x4xf32>
    %289 = arith.mulf %288, %282 : vector<8x8x4xf32>
    %290 = arith.addf %273, %289 : vector<8x8x4xf32>
    %291 = vector.extract_strided_slice %139 {offsets = [0, 0, 7], sizes = [8, 8, 1], strides = [1, 1, 1]} : vector<8x8x25xf32> to vector<8x8x1xf32>
    %292 = vector.broadcast %291 : vector<8x8x1xf32> to vector<8x8x4xf32>
    %293 = arith.mulf %292, %282 : vector<8x8x4xf32>
    %294 = arith.addf %277, %293 : vector<8x8x4xf32>
    %295 = vector.extract_strided_slice %151 {offsets = [0, 0, 7], sizes = [8, 8, 1], strides = [1, 1, 1]} : vector<8x8x25xf32> to vector<8x8x1xf32>
    %296 = vector.broadcast %295 : vector<8x8x1xf32> to vector<8x8x4xf32>
    %297 = arith.mulf %296, %282 : vector<8x8x4xf32>
    %298 = arith.addf %281, %297 : vector<8x8x4xf32>
    %c1_151 = arith.constant 1 : index
    %c3_152 = arith.constant 3 : index
    %c0_153 = arith.constant 0 : index
    %299 = vector.load %arg16[%c1_151, %c3_152, %c0_153] : memref<12x12x4xf32, #tpu.memory_space<vmem>>, vector<8x8x4xf32>
    %300 = vector.extract_strided_slice %115 {offsets = [0, 0, 8], sizes = [8, 8, 1], strides = [1, 1, 1]} : vector<8x8x25xf32> to vector<8x8x1xf32>
    %301 = vector.broadcast %300 : vector<8x8x1xf32> to vector<8x8x4xf32>
    %302 = arith.mulf %301, %299 : vector<8x8x4xf32>
    %303 = arith.addf %286, %302 : vector<8x8x4xf32>
    %304 = vector.extract_strided_slice %127 {offsets = [0, 0, 8], sizes = [8, 8, 1], strides = [1, 1, 1]} : vector<8x8x25xf32> to vector<8x8x1xf32>
    %305 = vector.broadcast %304 : vector<8x8x1xf32> to vector<8x8x4xf32>
    %306 = arith.mulf %305, %299 : vector<8x8x4xf32>
    %307 = arith.addf %290, %306 : vector<8x8x4xf32>
    %308 = vector.extract_strided_slice %139 {offsets = [0, 0, 8], sizes = [8, 8, 1], strides = [1, 1, 1]} : vector<8x8x25xf32> to vector<8x8x1xf32>
    %309 = vector.broadcast %308 : vector<8x8x1xf32> to vector<8x8x4xf32>
    %310 = arith.mulf %309, %299 : vector<8x8x4xf32>
    %311 = arith.addf %294, %310 : vector<8x8x4xf32>
    %312 = vector.extract_strided_slice %151 {offsets = [0, 0, 8], sizes = [8, 8, 1], strides = [1, 1, 1]} : vector<8x8x25xf32> to vector<8x8x1xf32>
    %313 = vector.broadcast %312 : vector<8x8x1xf32> to vector<8x8x4xf32>
    %314 = arith.mulf %313, %299 : vector<8x8x4xf32>
    %315 = arith.addf %298, %314 : vector<8x8x4xf32>
    %c1_154 = arith.constant 1 : index
    %c4_155 = arith.constant 4 : index
    %c0_156 = arith.constant 0 : index
    %316 = vector.load %arg16[%c1_154, %c4_155, %c0_156] : memref<12x12x4xf32, #tpu.memory_space<vmem>>, vector<8x8x4xf32>
    %317 = vector.extract_strided_slice %115 {offsets = [0, 0, 9], sizes = [8, 8, 1], strides = [1, 1, 1]} : vector<8x8x25xf32> to vector<8x8x1xf32>
    %318 = vector.broadcast %317 : vector<8x8x1xf32> to vector<8x8x4xf32>
    %319 = arith.mulf %318, %316 : vector<8x8x4xf32>
    %320 = arith.addf %303, %319 : vector<8x8x4xf32>
    %321 = vector.extract_strided_slice %127 {offsets = [0, 0, 9], sizes = [8, 8, 1], strides = [1, 1, 1]} : vector<8x8x25xf32> to vector<8x8x1xf32>
    %322 = vector.broadcast %321 : vector<8x8x1xf32> to vector<8x8x4xf32>
    %323 = arith.mulf %322, %316 : vector<8x8x4xf32>
    %324 = arith.addf %307, %323 : vector<8x8x4xf32>
    %325 = vector.extract_strided_slice %139 {offsets = [0, 0, 9], sizes = [8, 8, 1], strides = [1, 1, 1]} : vector<8x8x25xf32> to vector<8x8x1xf32>
    %326 = vector.broadcast %325 : vector<8x8x1xf32> to vector<8x8x4xf32>
    %327 = arith.mulf %326, %316 : vector<8x8x4xf32>
    %328 = arith.addf %311, %327 : vector<8x8x4xf32>
    %329 = vector.extract_strided_slice %151 {offsets = [0, 0, 9], sizes = [8, 8, 1], strides = [1, 1, 1]} : vector<8x8x25xf32> to vector<8x8x1xf32>
    %330 = vector.broadcast %329 : vector<8x8x1xf32> to vector<8x8x4xf32>
    %331 = arith.mulf %330, %316 : vector<8x8x4xf32>
    %332 = arith.addf %315, %331 : vector<8x8x4xf32>
    %c2_157 = arith.constant 2 : index
    %c0_158 = arith.constant 0 : index
    %c0_159 = arith.constant 0 : index
    %333 = vector.load %arg16[%c2_157, %c0_158, %c0_159] : memref<12x12x4xf32, #tpu.memory_space<vmem>>, vector<8x8x4xf32>
    %334 = vector.extract_strided_slice %115 {offsets = [0, 0, 10], sizes = [8, 8, 1], strides = [1, 1, 1]} : vector<8x8x25xf32> to vector<8x8x1xf32>
    %335 = vector.broadcast %334 : vector<8x8x1xf32> to vector<8x8x4xf32>
    %336 = arith.mulf %335, %333 : vector<8x8x4xf32>
    %337 = arith.addf %320, %336 : vector<8x8x4xf32>
    %338 = vector.extract_strided_slice %127 {offsets = [0, 0, 10], sizes = [8, 8, 1], strides = [1, 1, 1]} : vector<8x8x25xf32> to vector<8x8x1xf32>
    %339 = vector.broadcast %338 : vector<8x8x1xf32> to vector<8x8x4xf32>
    %340 = arith.mulf %339, %333 : vector<8x8x4xf32>
    %341 = arith.addf %324, %340 : vector<8x8x4xf32>
    %342 = vector.extract_strided_slice %139 {offsets = [0, 0, 10], sizes = [8, 8, 1], strides = [1, 1, 1]} : vector<8x8x25xf32> to vector<8x8x1xf32>
    %343 = vector.broadcast %342 : vector<8x8x1xf32> to vector<8x8x4xf32>
    %344 = arith.mulf %343, %333 : vector<8x8x4xf32>
    %345 = arith.addf %328, %344 : vector<8x8x4xf32>
    %346 = vector.extract_strided_slice %151 {offsets = [0, 0, 10], sizes = [8, 8, 1], strides = [1, 1, 1]} : vector<8x8x25xf32> to vector<8x8x1xf32>
    %347 = vector.broadcast %346 : vector<8x8x1xf32> to vector<8x8x4xf32>
    %348 = arith.mulf %347, %333 : vector<8x8x4xf32>
    %349 = arith.addf %332, %348 : vector<8x8x4xf32>
    %c2_160 = arith.constant 2 : index
    %c1_161 = arith.constant 1 : index
    %c0_162 = arith.constant 0 : index
    %350 = vector.load %arg16[%c2_160, %c1_161, %c0_162] : memref<12x12x4xf32, #tpu.memory_space<vmem>>, vector<8x8x4xf32>
    %351 = vector.extract_strided_slice %115 {offsets = [0, 0, 11], sizes = [8, 8, 1], strides = [1, 1, 1]} : vector<8x8x25xf32> to vector<8x8x1xf32>
    %352 = vector.broadcast %351 : vector<8x8x1xf32> to vector<8x8x4xf32>
    %353 = arith.mulf %352, %350 : vector<8x8x4xf32>
    %354 = arith.addf %337, %353 : vector<8x8x4xf32>
    %355 = vector.extract_strided_slice %127 {offsets = [0, 0, 11], sizes = [8, 8, 1], strides = [1, 1, 1]} : vector<8x8x25xf32> to vector<8x8x1xf32>
    %356 = vector.broadcast %355 : vector<8x8x1xf32> to vector<8x8x4xf32>
    %357 = arith.mulf %356, %350 : vector<8x8x4xf32>
    %358 = arith.addf %341, %357 : vector<8x8x4xf32>
    %359 = vector.extract_strided_slice %139 {offsets = [0, 0, 11], sizes = [8, 8, 1], strides = [1, 1, 1]} : vector<8x8x25xf32> to vector<8x8x1xf32>
    %360 = vector.broadcast %359 : vector<8x8x1xf32> to vector<8x8x4xf32>
    %361 = arith.mulf %360, %350 : vector<8x8x4xf32>
    %362 = arith.addf %345, %361 : vector<8x8x4xf32>
    %363 = vector.extract_strided_slice %151 {offsets = [0, 0, 11], sizes = [8, 8, 1], strides = [1, 1, 1]} : vector<8x8x25xf32> to vector<8x8x1xf32>
    %364 = vector.broadcast %363 : vector<8x8x1xf32> to vector<8x8x4xf32>
    %365 = arith.mulf %364, %350 : vector<8x8x4xf32>
    %366 = arith.addf %349, %365 : vector<8x8x4xf32>
    %c2_163 = arith.constant 2 : index
    %c2_164 = arith.constant 2 : index
    %c0_165 = arith.constant 0 : index
    %367 = vector.load %arg16[%c2_163, %c2_164, %c0_165] : memref<12x12x4xf32, #tpu.memory_space<vmem>>, vector<8x8x4xf32>
    %368 = vector.extract_strided_slice %115 {offsets = [0, 0, 12], sizes = [8, 8, 1], strides = [1, 1, 1]} : vector<8x8x25xf32> to vector<8x8x1xf32>
    %369 = vector.broadcast %368 : vector<8x8x1xf32> to vector<8x8x4xf32>
    %370 = arith.mulf %369, %367 : vector<8x8x4xf32>
    %371 = arith.addf %354, %370 : vector<8x8x4xf32>
    %372 = vector.extract_strided_slice %127 {offsets = [0, 0, 12], sizes = [8, 8, 1], strides = [1, 1, 1]} : vector<8x8x25xf32> to vector<8x8x1xf32>
    %373 = vector.broadcast %372 : vector<8x8x1xf32> to vector<8x8x4xf32>
    %374 = arith.mulf %373, %367 : vector<8x8x4xf32>
    %375 = arith.addf %358, %374 : vector<8x8x4xf32>
    %376 = vector.extract_strided_slice %139 {offsets = [0, 0, 12], sizes = [8, 8, 1], strides = [1, 1, 1]} : vector<8x8x25xf32> to vector<8x8x1xf32>
    %377 = vector.broadcast %376 : vector<8x8x1xf32> to vector<8x8x4xf32>
    %378 = arith.mulf %377, %367 : vector<8x8x4xf32>
    %379 = arith.addf %362, %378 : vector<8x8x4xf32>
    %380 = vector.extract_strided_slice %151 {offsets = [0, 0, 12], sizes = [8, 8, 1], strides = [1, 1, 1]} : vector<8x8x25xf32> to vector<8x8x1xf32>
    %381 = vector.broadcast %380 : vector<8x8x1xf32> to vector<8x8x4xf32>
    %382 = arith.mulf %381, %367 : vector<8x8x4xf32>
    %383 = arith.addf %366, %382 : vector<8x8x4xf32>
    %c2_166 = arith.constant 2 : index
    %c3_167 = arith.constant 3 : index
    %c0_168 = arith.constant 0 : index
    %384 = vector.load %arg16[%c2_166, %c3_167, %c0_168] : memref<12x12x4xf32, #tpu.memory_space<vmem>>, vector<8x8x4xf32>
    %385 = vector.extract_strided_slice %115 {offsets = [0, 0, 13], sizes = [8, 8, 1], strides = [1, 1, 1]} : vector<8x8x25xf32> to vector<8x8x1xf32>
    %386 = vector.broadcast %385 : vector<8x8x1xf32> to vector<8x8x4xf32>
    %387 = arith.mulf %386, %384 : vector<8x8x4xf32>
    %388 = arith.addf %371, %387 : vector<8x8x4xf32>
    %389 = vector.extract_strided_slice %127 {offsets = [0, 0, 13], sizes = [8, 8, 1], strides = [1, 1, 1]} : vector<8x8x25xf32> to vector<8x8x1xf32>
    %390 = vector.broadcast %389 : vector<8x8x1xf32> to vector<8x8x4xf32>
    %391 = arith.mulf %390, %384 : vector<8x8x4xf32>
    %392 = arith.addf %375, %391 : vector<8x8x4xf32>
    %393 = vector.extract_strided_slice %139 {offsets = [0, 0, 13], sizes = [8, 8, 1], strides = [1, 1, 1]} : vector<8x8x25xf32> to vector<8x8x1xf32>
    %394 = vector.broadcast %393 : vector<8x8x1xf32> to vector<8x8x4xf32>
    %395 = arith.mulf %394, %384 : vector<8x8x4xf32>
    %396 = arith.addf %379, %395 : vector<8x8x4xf32>
    %397 = vector.extract_strided_slice %151 {offsets = [0, 0, 13], sizes = [8, 8, 1], strides = [1, 1, 1]} : vector<8x8x25xf32> to vector<8x8x1xf32>
    %398 = vector.broadcast %397 : vector<8x8x1xf32> to vector<8x8x4xf32>
    %399 = arith.mulf %398, %384 : vector<8x8x4xf32>
    %400 = arith.addf %383, %399 : vector<8x8x4xf32>
    %c2_169 = arith.constant 2 : index
    %c4_170 = arith.constant 4 : index
    %c0_171 = arith.constant 0 : index
    %401 = vector.load %arg16[%c2_169, %c4_170, %c0_171] : memref<12x12x4xf32, #tpu.memory_space<vmem>>, vector<8x8x4xf32>
    %402 = vector.extract_strided_slice %115 {offsets = [0, 0, 14], sizes = [8, 8, 1], strides = [1, 1, 1]} : vector<8x8x25xf32> to vector<8x8x1xf32>
    %403 = vector.broadcast %402 : vector<8x8x1xf32> to vector<8x8x4xf32>
    %404 = arith.mulf %403, %401 : vector<8x8x4xf32>
    %405 = arith.addf %388, %404 : vector<8x8x4xf32>
    %406 = vector.extract_strided_slice %127 {offsets = [0, 0, 14], sizes = [8, 8, 1], strides = [1, 1, 1]} : vector<8x8x25xf32> to vector<8x8x1xf32>
    %407 = vector.broadcast %406 : vector<8x8x1xf32> to vector<8x8x4xf32>
    %408 = arith.mulf %407, %401 : vector<8x8x4xf32>
    %409 = arith.addf %392, %408 : vector<8x8x4xf32>
    %410 = vector.extract_strided_slice %139 {offsets = [0, 0, 14], sizes = [8, 8, 1], strides = [1, 1, 1]} : vector<8x8x25xf32> to vector<8x8x1xf32>
    %411 = vector.broadcast %410 : vector<8x8x1xf32> to vector<8x8x4xf32>
    %412 = arith.mulf %411, %401 : vector<8x8x4xf32>
    %413 = arith.addf %396, %412 : vector<8x8x4xf32>
    %414 = vector.extract_strided_slice %151 {offsets = [0, 0, 14], sizes = [8, 8, 1], strides = [1, 1, 1]} : vector<8x8x25xf32> to vector<8x8x1xf32>
    %415 = vector.broadcast %414 : vector<8x8x1xf32> to vector<8x8x4xf32>
    %416 = arith.mulf %415, %401 : vector<8x8x4xf32>
    %417 = arith.addf %400, %416 : vector<8x8x4xf32>
    %c3_172 = arith.constant 3 : index
    %c0_173 = arith.constant 0 : index
    %c0_174 = arith.constant 0 : index
    %418 = vector.load %arg16[%c3_172, %c0_173, %c0_174] : memref<12x12x4xf32, #tpu.memory_space<vmem>>, vector<8x8x4xf32>
    %419 = vector.extract_strided_slice %115 {offsets = [0, 0, 15], sizes = [8, 8, 1], strides = [1, 1, 1]} : vector<8x8x25xf32> to vector<8x8x1xf32>
    %420 = vector.broadcast %419 : vector<8x8x1xf32> to vector<8x8x4xf32>
    %421 = arith.mulf %420, %418 : vector<8x8x4xf32>
    %422 = arith.addf %405, %421 : vector<8x8x4xf32>
    %423 = vector.extract_strided_slice %127 {offsets = [0, 0, 15], sizes = [8, 8, 1], strides = [1, 1, 1]} : vector<8x8x25xf32> to vector<8x8x1xf32>
    %424 = vector.broadcast %423 : vector<8x8x1xf32> to vector<8x8x4xf32>
    %425 = arith.mulf %424, %418 : vector<8x8x4xf32>
    %426 = arith.addf %409, %425 : vector<8x8x4xf32>
    %427 = vector.extract_strided_slice %139 {offsets = [0, 0, 15], sizes = [8, 8, 1], strides = [1, 1, 1]} : vector<8x8x25xf32> to vector<8x8x1xf32>
    %428 = vector.broadcast %427 : vector<8x8x1xf32> to vector<8x8x4xf32>
    %429 = arith.mulf %428, %418 : vector<8x8x4xf32>
    %430 = arith.addf %413, %429 : vector<8x8x4xf32>
    %431 = vector.extract_strided_slice %151 {offsets = [0, 0, 15], sizes = [8, 8, 1], strides = [1, 1, 1]} : vector<8x8x25xf32> to vector<8x8x1xf32>
    %432 = vector.broadcast %431 : vector<8x8x1xf32> to vector<8x8x4xf32>
    %433 = arith.mulf %432, %418 : vector<8x8x4xf32>
    %434 = arith.addf %417, %433 : vector<8x8x4xf32>
    %c3_175 = arith.constant 3 : index
    %c1_176 = arith.constant 1 : index
    %c0_177 = arith.constant 0 : index
    %435 = vector.load %arg16[%c3_175, %c1_176, %c0_177] : memref<12x12x4xf32, #tpu.memory_space<vmem>>, vector<8x8x4xf32>
    %436 = vector.extract_strided_slice %115 {offsets = [0, 0, 16], sizes = [8, 8, 1], strides = [1, 1, 1]} : vector<8x8x25xf32> to vector<8x8x1xf32>
    %437 = vector.broadcast %436 : vector<8x8x1xf32> to vector<8x8x4xf32>
    %438 = arith.mulf %437, %435 : vector<8x8x4xf32>
    %439 = arith.addf %422, %438 : vector<8x8x4xf32>
    %440 = vector.extract_strided_slice %127 {offsets = [0, 0, 16], sizes = [8, 8, 1], strides = [1, 1, 1]} : vector<8x8x25xf32> to vector<8x8x1xf32>
    %441 = vector.broadcast %440 : vector<8x8x1xf32> to vector<8x8x4xf32>
    %442 = arith.mulf %441, %435 : vector<8x8x4xf32>
    %443 = arith.addf %426, %442 : vector<8x8x4xf32>
    %444 = vector.extract_strided_slice %139 {offsets = [0, 0, 16], sizes = [8, 8, 1], strides = [1, 1, 1]} : vector<8x8x25xf32> to vector<8x8x1xf32>
    %445 = vector.broadcast %444 : vector<8x8x1xf32> to vector<8x8x4xf32>
    %446 = arith.mulf %445, %435 : vector<8x8x4xf32>
    %447 = arith.addf %430, %446 : vector<8x8x4xf32>
    %448 = vector.extract_strided_slice %151 {offsets = [0, 0, 16], sizes = [8, 8, 1], strides = [1, 1, 1]} : vector<8x8x25xf32> to vector<8x8x1xf32>
    %449 = vector.broadcast %448 : vector<8x8x1xf32> to vector<8x8x4xf32>
    %450 = arith.mulf %449, %435 : vector<8x8x4xf32>
    %451 = arith.addf %434, %450 : vector<8x8x4xf32>
    %c3_178 = arith.constant 3 : index
    %c2_179 = arith.constant 2 : index
    %c0_180 = arith.constant 0 : index
    %452 = vector.load %arg16[%c3_178, %c2_179, %c0_180] : memref<12x12x4xf32, #tpu.memory_space<vmem>>, vector<8x8x4xf32>
    %453 = vector.extract_strided_slice %115 {offsets = [0, 0, 17], sizes = [8, 8, 1], strides = [1, 1, 1]} : vector<8x8x25xf32> to vector<8x8x1xf32>
    %454 = vector.broadcast %453 : vector<8x8x1xf32> to vector<8x8x4xf32>
    %455 = arith.mulf %454, %452 : vector<8x8x4xf32>
    %456 = arith.addf %439, %455 : vector<8x8x4xf32>
    %457 = vector.extract_strided_slice %127 {offsets = [0, 0, 17], sizes = [8, 8, 1], strides = [1, 1, 1]} : vector<8x8x25xf32> to vector<8x8x1xf32>
    %458 = vector.broadcast %457 : vector<8x8x1xf32> to vector<8x8x4xf32>
    %459 = arith.mulf %458, %452 : vector<8x8x4xf32>
    %460 = arith.addf %443, %459 : vector<8x8x4xf32>
    %461 = vector.extract_strided_slice %139 {offsets = [0, 0, 17], sizes = [8, 8, 1], strides = [1, 1, 1]} : vector<8x8x25xf32> to vector<8x8x1xf32>
    %462 = vector.broadcast %461 : vector<8x8x1xf32> to vector<8x8x4xf32>
    %463 = arith.mulf %462, %452 : vector<8x8x4xf32>
    %464 = arith.addf %447, %463 : vector<8x8x4xf32>
    %465 = vector.extract_strided_slice %151 {offsets = [0, 0, 17], sizes = [8, 8, 1], strides = [1, 1, 1]} : vector<8x8x25xf32> to vector<8x8x1xf32>
    %466 = vector.broadcast %465 : vector<8x8x1xf32> to vector<8x8x4xf32>
    %467 = arith.mulf %466, %452 : vector<8x8x4xf32>
    %468 = arith.addf %451, %467 : vector<8x8x4xf32>
    %c3_181 = arith.constant 3 : index
    %c3_182 = arith.constant 3 : index
    %c0_183 = arith.constant 0 : index
    %469 = vector.load %arg16[%c3_181, %c3_182, %c0_183] : memref<12x12x4xf32, #tpu.memory_space<vmem>>, vector<8x8x4xf32>
    %470 = vector.extract_strided_slice %115 {offsets = [0, 0, 18], sizes = [8, 8, 1], strides = [1, 1, 1]} : vector<8x8x25xf32> to vector<8x8x1xf32>
    %471 = vector.broadcast %470 : vector<8x8x1xf32> to vector<8x8x4xf32>
    %472 = arith.mulf %471, %469 : vector<8x8x4xf32>
    %473 = arith.addf %456, %472 : vector<8x8x4xf32>
    %474 = vector.extract_strided_slice %127 {offsets = [0, 0, 18], sizes = [8, 8, 1], strides = [1, 1, 1]} : vector<8x8x25xf32> to vector<8x8x1xf32>
    %475 = vector.broadcast %474 : vector<8x8x1xf32> to vector<8x8x4xf32>
    %476 = arith.mulf %475, %469 : vector<8x8x4xf32>
    %477 = arith.addf %460, %476 : vector<8x8x4xf32>
    %478 = vector.extract_strided_slice %139 {offsets = [0, 0, 18], sizes = [8, 8, 1], strides = [1, 1, 1]} : vector<8x8x25xf32> to vector<8x8x1xf32>
    %479 = vector.broadcast %478 : vector<8x8x1xf32> to vector<8x8x4xf32>
    %480 = arith.mulf %479, %469 : vector<8x8x4xf32>
    %481 = arith.addf %464, %480 : vector<8x8x4xf32>
    %482 = vector.extract_strided_slice %151 {offsets = [0, 0, 18], sizes = [8, 8, 1], strides = [1, 1, 1]} : vector<8x8x25xf32> to vector<8x8x1xf32>
    %483 = vector.broadcast %482 : vector<8x8x1xf32> to vector<8x8x4xf32>
    %484 = arith.mulf %483, %469 : vector<8x8x4xf32>
    %485 = arith.addf %468, %484 : vector<8x8x4xf32>
    %c3_184 = arith.constant 3 : index
    %c4_185 = arith.constant 4 : index
    %c0_186 = arith.constant 0 : index
    %486 = vector.load %arg16[%c3_184, %c4_185, %c0_186] : memref<12x12x4xf32, #tpu.memory_space<vmem>>, vector<8x8x4xf32>
    %487 = vector.extract_strided_slice %115 {offsets = [0, 0, 19], sizes = [8, 8, 1], strides = [1, 1, 1]} : vector<8x8x25xf32> to vector<8x8x1xf32>
    %488 = vector.broadcast %487 : vector<8x8x1xf32> to vector<8x8x4xf32>
    %489 = arith.mulf %488, %486 : vector<8x8x4xf32>
    %490 = arith.addf %473, %489 : vector<8x8x4xf32>
    %491 = vector.extract_strided_slice %127 {offsets = [0, 0, 19], sizes = [8, 8, 1], strides = [1, 1, 1]} : vector<8x8x25xf32> to vector<8x8x1xf32>
    %492 = vector.broadcast %491 : vector<8x8x1xf32> to vector<8x8x4xf32>
    %493 = arith.mulf %492, %486 : vector<8x8x4xf32>
    %494 = arith.addf %477, %493 : vector<8x8x4xf32>
    %495 = vector.extract_strided_slice %139 {offsets = [0, 0, 19], sizes = [8, 8, 1], strides = [1, 1, 1]} : vector<8x8x25xf32> to vector<8x8x1xf32>
    %496 = vector.broadcast %495 : vector<8x8x1xf32> to vector<8x8x4xf32>
    %497 = arith.mulf %496, %486 : vector<8x8x4xf32>
    %498 = arith.addf %481, %497 : vector<8x8x4xf32>
    %499 = vector.extract_strided_slice %151 {offsets = [0, 0, 19], sizes = [8, 8, 1], strides = [1, 1, 1]} : vector<8x8x25xf32> to vector<8x8x1xf32>
    %500 = vector.broadcast %499 : vector<8x8x1xf32> to vector<8x8x4xf32>
    %501 = arith.mulf %500, %486 : vector<8x8x4xf32>
    %502 = arith.addf %485, %501 : vector<8x8x4xf32>
    %c4_187 = arith.constant 4 : index
    %c0_188 = arith.constant 0 : index
    %c0_189 = arith.constant 0 : index
    %503 = vector.load %arg16[%c4_187, %c0_188, %c0_189] : memref<12x12x4xf32, #tpu.memory_space<vmem>>, vector<8x8x4xf32>
    %504 = vector.extract_strided_slice %115 {offsets = [0, 0, 20], sizes = [8, 8, 1], strides = [1, 1, 1]} : vector<8x8x25xf32> to vector<8x8x1xf32>
    %505 = vector.broadcast %504 : vector<8x8x1xf32> to vector<8x8x4xf32>
    %506 = arith.mulf %505, %503 : vector<8x8x4xf32>
    %507 = arith.addf %490, %506 : vector<8x8x4xf32>
    %508 = vector.extract_strided_slice %127 {offsets = [0, 0, 20], sizes = [8, 8, 1], strides = [1, 1, 1]} : vector<8x8x25xf32> to vector<8x8x1xf32>
    %509 = vector.broadcast %508 : vector<8x8x1xf32> to vector<8x8x4xf32>
    %510 = arith.mulf %509, %503 : vector<8x8x4xf32>
    %511 = arith.addf %494, %510 : vector<8x8x4xf32>
    %512 = vector.extract_strided_slice %139 {offsets = [0, 0, 20], sizes = [8, 8, 1], strides = [1, 1, 1]} : vector<8x8x25xf32> to vector<8x8x1xf32>
    %513 = vector.broadcast %512 : vector<8x8x1xf32> to vector<8x8x4xf32>
    %514 = arith.mulf %513, %503 : vector<8x8x4xf32>
    %515 = arith.addf %498, %514 : vector<8x8x4xf32>
    %516 = vector.extract_strided_slice %151 {offsets = [0, 0, 20], sizes = [8, 8, 1], strides = [1, 1, 1]} : vector<8x8x25xf32> to vector<8x8x1xf32>
    %517 = vector.broadcast %516 : vector<8x8x1xf32> to vector<8x8x4xf32>
    %518 = arith.mulf %517, %503 : vector<8x8x4xf32>
    %519 = arith.addf %502, %518 : vector<8x8x4xf32>
    %c4_190 = arith.constant 4 : index
    %c1_191 = arith.constant 1 : index
    %c0_192 = arith.constant 0 : index
    %520 = vector.load %arg16[%c4_190, %c1_191, %c0_192] : memref<12x12x4xf32, #tpu.memory_space<vmem>>, vector<8x8x4xf32>
    %521 = vector.extract_strided_slice %115 {offsets = [0, 0, 21], sizes = [8, 8, 1], strides = [1, 1, 1]} : vector<8x8x25xf32> to vector<8x8x1xf32>
    %522 = vector.broadcast %521 : vector<8x8x1xf32> to vector<8x8x4xf32>
    %523 = arith.mulf %522, %520 : vector<8x8x4xf32>
    %524 = arith.addf %507, %523 : vector<8x8x4xf32>
    %525 = vector.extract_strided_slice %127 {offsets = [0, 0, 21], sizes = [8, 8, 1], strides = [1, 1, 1]} : vector<8x8x25xf32> to vector<8x8x1xf32>
    %526 = vector.broadcast %525 : vector<8x8x1xf32> to vector<8x8x4xf32>
    %527 = arith.mulf %526, %520 : vector<8x8x4xf32>
    %528 = arith.addf %511, %527 : vector<8x8x4xf32>
    %529 = vector.extract_strided_slice %139 {offsets = [0, 0, 21], sizes = [8, 8, 1], strides = [1, 1, 1]} : vector<8x8x25xf32> to vector<8x8x1xf32>
    %530 = vector.broadcast %529 : vector<8x8x1xf32> to vector<8x8x4xf32>
    %531 = arith.mulf %530, %520 : vector<8x8x4xf32>
    %532 = arith.addf %515, %531 : vector<8x8x4xf32>
    %533 = vector.extract_strided_slice %151 {offsets = [0, 0, 21], sizes = [8, 8, 1], strides = [1, 1, 1]} : vector<8x8x25xf32> to vector<8x8x1xf32>
    %534 = vector.broadcast %533 : vector<8x8x1xf32> to vector<8x8x4xf32>
    %535 = arith.mulf %534, %520 : vector<8x8x4xf32>
    %536 = arith.addf %519, %535 : vector<8x8x4xf32>
    %c4_193 = arith.constant 4 : index
    %c2_194 = arith.constant 2 : index
    %c0_195 = arith.constant 0 : index
    %537 = vector.load %arg16[%c4_193, %c2_194, %c0_195] : memref<12x12x4xf32, #tpu.memory_space<vmem>>, vector<8x8x4xf32>
    %538 = vector.extract_strided_slice %115 {offsets = [0, 0, 22], sizes = [8, 8, 1], strides = [1, 1, 1]} : vector<8x8x25xf32> to vector<8x8x1xf32>
    %539 = vector.broadcast %538 : vector<8x8x1xf32> to vector<8x8x4xf32>
    %540 = arith.mulf %539, %537 : vector<8x8x4xf32>
    %541 = arith.addf %524, %540 : vector<8x8x4xf32>
    %542 = vector.extract_strided_slice %127 {offsets = [0, 0, 22], sizes = [8, 8, 1], strides = [1, 1, 1]} : vector<8x8x25xf32> to vector<8x8x1xf32>
    %543 = vector.broadcast %542 : vector<8x8x1xf32> to vector<8x8x4xf32>
    %544 = arith.mulf %543, %537 : vector<8x8x4xf32>
    %545 = arith.addf %528, %544 : vector<8x8x4xf32>
    %546 = vector.extract_strided_slice %139 {offsets = [0, 0, 22], sizes = [8, 8, 1], strides = [1, 1, 1]} : vector<8x8x25xf32> to vector<8x8x1xf32>
    %547 = vector.broadcast %546 : vector<8x8x1xf32> to vector<8x8x4xf32>
    %548 = arith.mulf %547, %537 : vector<8x8x4xf32>
    %549 = arith.addf %532, %548 : vector<8x8x4xf32>
    %550 = vector.extract_strided_slice %151 {offsets = [0, 0, 22], sizes = [8, 8, 1], strides = [1, 1, 1]} : vector<8x8x25xf32> to vector<8x8x1xf32>
    %551 = vector.broadcast %550 : vector<8x8x1xf32> to vector<8x8x4xf32>
    %552 = arith.mulf %551, %537 : vector<8x8x4xf32>
    %553 = arith.addf %536, %552 : vector<8x8x4xf32>
    %c4_196 = arith.constant 4 : index
    %c3_197 = arith.constant 3 : index
    %c0_198 = arith.constant 0 : index
    %554 = vector.load %arg16[%c4_196, %c3_197, %c0_198] : memref<12x12x4xf32, #tpu.memory_space<vmem>>, vector<8x8x4xf32>
    %555 = vector.extract_strided_slice %115 {offsets = [0, 0, 23], sizes = [8, 8, 1], strides = [1, 1, 1]} : vector<8x8x25xf32> to vector<8x8x1xf32>
    %556 = vector.broadcast %555 : vector<8x8x1xf32> to vector<8x8x4xf32>
    %557 = arith.mulf %556, %554 : vector<8x8x4xf32>
    %558 = arith.addf %541, %557 : vector<8x8x4xf32>
    %559 = vector.extract_strided_slice %127 {offsets = [0, 0, 23], sizes = [8, 8, 1], strides = [1, 1, 1]} : vector<8x8x25xf32> to vector<8x8x1xf32>
    %560 = vector.broadcast %559 : vector<8x8x1xf32> to vector<8x8x4xf32>
    %561 = arith.mulf %560, %554 : vector<8x8x4xf32>
    %562 = arith.addf %545, %561 : vector<8x8x4xf32>
    %563 = vector.extract_strided_slice %139 {offsets = [0, 0, 23], sizes = [8, 8, 1], strides = [1, 1, 1]} : vector<8x8x25xf32> to vector<8x8x1xf32>
    %564 = vector.broadcast %563 : vector<8x8x1xf32> to vector<8x8x4xf32>
    %565 = arith.mulf %564, %554 : vector<8x8x4xf32>
    %566 = arith.addf %549, %565 : vector<8x8x4xf32>
    %567 = vector.extract_strided_slice %151 {offsets = [0, 0, 23], sizes = [8, 8, 1], strides = [1, 1, 1]} : vector<8x8x25xf32> to vector<8x8x1xf32>
    %568 = vector.broadcast %567 : vector<8x8x1xf32> to vector<8x8x4xf32>
    %569 = arith.mulf %568, %554 : vector<8x8x4xf32>
    %570 = arith.addf %553, %569 : vector<8x8x4xf32>
    %c4_199 = arith.constant 4 : index
    %c4_200 = arith.constant 4 : index
    %c0_201 = arith.constant 0 : index
    %571 = vector.load %arg16[%c4_199, %c4_200, %c0_201] : memref<12x12x4xf32, #tpu.memory_space<vmem>>, vector<8x8x4xf32>
    %572 = vector.extract_strided_slice %115 {offsets = [0, 0, 24], sizes = [8, 8, 1], strides = [1, 1, 1]} : vector<8x8x25xf32> to vector<8x8x1xf32>
    %573 = vector.broadcast %572 : vector<8x8x1xf32> to vector<8x8x4xf32>
    %574 = arith.mulf %573, %571 : vector<8x8x4xf32>
    %575 = arith.addf %558, %574 : vector<8x8x4xf32>
    %576 = vector.extract_strided_slice %127 {offsets = [0, 0, 24], sizes = [8, 8, 1], strides = [1, 1, 1]} : vector<8x8x25xf32> to vector<8x8x1xf32>
    %577 = vector.broadcast %576 : vector<8x8x1xf32> to vector<8x8x4xf32>
    %578 = arith.mulf %577, %571 : vector<8x8x4xf32>
    %579 = arith.addf %562, %578 : vector<8x8x4xf32>
    %580 = vector.extract_strided_slice %139 {offsets = [0, 0, 24], sizes = [8, 8, 1], strides = [1, 1, 1]} : vector<8x8x25xf32> to vector<8x8x1xf32>
    %581 = vector.broadcast %580 : vector<8x8x1xf32> to vector<8x8x4xf32>
    %582 = arith.mulf %581, %571 : vector<8x8x4xf32>
    %583 = arith.addf %566, %582 : vector<8x8x4xf32>
    %584 = vector.extract_strided_slice %151 {offsets = [0, 0, 24], sizes = [8, 8, 1], strides = [1, 1, 1]} : vector<8x8x25xf32> to vector<8x8x1xf32>
    %585 = vector.broadcast %584 : vector<8x8x1xf32> to vector<8x8x4xf32>
    %586 = arith.mulf %585, %571 : vector<8x8x4xf32>
    %587 = arith.addf %570, %586 : vector<8x8x4xf32>
    %588 = vector.shape_cast %575 : vector<8x8x4xf32> to vector<64x4xf32>
    %589 = arith.truncf %588 : vector<64x4xf32> to vector<64x4xbf16>
    %c0_202 = arith.constant 0 : index
    %c0_203 = arith.constant 0 : index
    %c0_204 = arith.constant 0 : index
    %590 = vector.load %arg11[%c0_202, %c0_203, %c0_204] : memref<4x4x4xbf16, #tpu.memory_space<vmem>>, vector<1x4x4xbf16>
    %591 = vector.shape_cast %590 : vector<1x4x4xbf16> to vector<4x4xbf16>
    %cst_205 = arith.constant dense<0.000000e+00> : vector<64x4xf32>
    %592 = tpu.matmul %589, %591, %cst_205 {dimension_numbers = #tpu.dot_dimension_numbers<[1], [0], [0], [1], [0, 0, 1, 1], [], []>} : vector<64x4xbf16>, vector<4x4xbf16>, vector<64x4xf32> -> vector<64x4xf32>
    %593 = vector.shape_cast %579 : vector<8x8x4xf32> to vector<64x4xf32>
    %594 = arith.truncf %593 : vector<64x4xf32> to vector<64x4xbf16>
    %c1_206 = arith.constant 1 : index
    %c0_207 = arith.constant 0 : index
    %c0_208 = arith.constant 0 : index
    %595 = vector.load %arg11[%c1_206, %c0_207, %c0_208] : memref<4x4x4xbf16, #tpu.memory_space<vmem>>, vector<1x4x4xbf16>
    %596 = vector.shape_cast %595 : vector<1x4x4xbf16> to vector<4x4xbf16>
    %cst_209 = arith.constant dense<0.000000e+00> : vector<64x4xf32>
    %597 = tpu.matmul %594, %596, %cst_209 {dimension_numbers = #tpu.dot_dimension_numbers<[1], [0], [0], [1], [0, 0, 1, 1], [], []>} : vector<64x4xbf16>, vector<4x4xbf16>, vector<64x4xf32> -> vector<64x4xf32>
    %598 = arith.addf %592, %597 : vector<64x4xf32>
    %599 = vector.shape_cast %583 : vector<8x8x4xf32> to vector<64x4xf32>
    %600 = arith.truncf %599 : vector<64x4xf32> to vector<64x4xbf16>
    %c2_210 = arith.constant 2 : index
    %c0_211 = arith.constant 0 : index
    %c0_212 = arith.constant 0 : index
    %601 = vector.load %arg11[%c2_210, %c0_211, %c0_212] : memref<4x4x4xbf16, #tpu.memory_space<vmem>>, vector<1x4x4xbf16>
    %602 = vector.shape_cast %601 : vector<1x4x4xbf16> to vector<4x4xbf16>
    %cst_213 = arith.constant dense<0.000000e+00> : vector<64x4xf32>
    %603 = tpu.matmul %600, %602, %cst_213 {dimension_numbers = #tpu.dot_dimension_numbers<[1], [0], [0], [1], [0, 0, 1, 1], [], []>} : vector<64x4xbf16>, vector<4x4xbf16>, vector<64x4xf32> -> vector<64x4xf32>
    %604 = arith.addf %598, %603 : vector<64x4xf32>
    %605 = vector.shape_cast %587 : vector<8x8x4xf32> to vector<64x4xf32>
    %606 = arith.truncf %605 : vector<64x4xf32> to vector<64x4xbf16>
    %c3_214 = arith.constant 3 : index
    %c0_215 = arith.constant 0 : index
    %c0_216 = arith.constant 0 : index
    %607 = vector.load %arg11[%c3_214, %c0_215, %c0_216] : memref<4x4x4xbf16, #tpu.memory_space<vmem>>, vector<1x4x4xbf16>
    %608 = vector.shape_cast %607 : vector<1x4x4xbf16> to vector<4x4xbf16>
    %cst_217 = arith.constant dense<0.000000e+00> : vector<64x4xf32>
    %609 = tpu.matmul %606, %608, %cst_217 {dimension_numbers = #tpu.dot_dimension_numbers<[1], [0], [0], [1], [0, 0, 1, 1], [], []>} : vector<64x4xbf16>, vector<4x4xbf16>, vector<64x4xf32> -> vector<64x4xf32>
    %610 = arith.addf %604, %609 : vector<64x4xf32>
    %c0_218 = arith.constant 0 : index
    %c0_219 = arith.constant 0 : index
    %611 = vector.load %arg12[%c0_218, %c0_219] : memref<1x4xf32, #tpu.memory_space<vmem>>, vector<1x4xf32>
    %612 = vector.broadcast %611 : vector<1x4xf32> to vector<64x4xf32>
    %613 = arith.addf %610, %612 : vector<64x4xf32>
    %614 = arith.negf %613 : vector<64x4xf32>
    %615 = math.exp %614 : vector<64x4xf32>
    %cst_220 = arith.constant 1.000000e+00 : f32
    %616 = vector.broadcast %cst_220 : f32 to vector<64x4xf32>
    %617 = arith.addf %616, %615 : vector<64x4xf32>
    %618 = arith.divf %616, %617 : vector<64x4xf32>
    %619 = arith.mulf %613, %618 : vector<64x4xf32>
    %620 = vector.shape_cast %619 : vector<64x4xf32> to vector<8x8x4xf32>
    %c0_221 = arith.constant 0 : index
    %c0_222 = arith.constant 0 : index
    %c0_223 = arith.constant 0 : index
    %c0_224 = arith.constant 0 : index
    %621 = vector.load %arg13[%c0_221, %c0_222, %c0_223, %c0_224] : memref<1x8x8x4xf32, #tpu.memory_space<vmem>>, vector<1x8x8x4xf32>
    %622 = vector.shape_cast %621 : vector<1x8x8x4xf32> to vector<8x8x4xf32>
    %623 = vector.shape_cast %620 : vector<8x8x4xf32> to vector<1x8x8x4xf32>
    tpu.vector_store %arg13[%c0_221, %c0_222, %c0_223, %c0_224], %623 {strides = array<i32>} : memref<1x8x8x4xf32, #tpu.memory_space<vmem>>, vector<1x8x8x4xf32>,
    return
  }
  func.func @transform_0(%arg0: i32) -> (i32, i32, i32, i32) {
    %c0_i32 = arith.constant 0 : i32
    %c0_i32_0 = arith.constant 0 : i32
    %c0_i32_1 = arith.constant 0 : i32
    %c0_i32_2 = arith.constant 0 : i32
    return %arg0, %c0_i32, %c0_i32_0, %c0_i32_1 : i32, i32, i32, i32
  }
  func.func @transform_1(%arg0: i32) -> (i32, i32, i32, i32) {
    %c0_i32 = arith.constant 0 : i32
    %c0_i32_0 = arith.constant 0 : i32
    %c0_i32_1 = arith.constant 0 : i32
    %c0_i32_2 = arith.constant 0 : i32
    return %arg0, %c0_i32, %c0_i32_0, %c0_i32_1 : i32, i32, i32, i32
  }
  func.func @transform_2(%arg0: i32) -> (i32, i32) {
    %c0_i32 = arith.constant 0 : i32
    %c0_i32_0 = arith.constant 0 : i32
    %c0_i32_1 = arith.constant 0 : i32
    return %c0_i32, %c0_i32_0 : i32, i32
  }
  func.func @transform_3(%arg0: i32) -> (i32, i32) {
    %c0_i32 = arith.constant 0 : i32
    %c0_i32_0 = arith.constant 0 : i32
    %c0_i32_1 = arith.constant 0 : i32
    return %c0_i32, %c0_i32_0 : i32, i32
  }
  func.func @transform_4(%arg0: i32) -> (i32, i32) {
    %c0_i32 = arith.constant 0 : i32
    %c0_i32_0 = arith.constant 0 : i32
    %c0_i32_1 = arith.constant 0 : i32
    return %c0_i32, %c0_i32_0 : i32, i32
  }
  func.func @transform_5(%arg0: i32) -> (i32, i32) {
    %c0_i32 = arith.constant 0 : i32
    %c0_i32_0 = arith.constant 0 : i32
    %c0_i32_1 = arith.constant 0 : i32
    return %c0_i32, %c0_i32_0 : i32, i32
  }
  func.func @transform_6(%arg0: i32) -> (i32, i32) {
    %c0_i32 = arith.constant 0 : i32
    %c0_i32_0 = arith.constant 0 : i32
    %c0_i32_1 = arith.constant 0 : i32
    return %c0_i32, %c0_i32_0 : i32, i32
  }
  func.func @transform_7(%arg0: i32) -> (i32, i32) {
    %c0_i32 = arith.constant 0 : i32
    %c0_i32_0 = arith.constant 0 : i32
    %c0_i32_1 = arith.constant 0 : i32
    return %c0_i32, %c0_i32_0 : i32, i32
  }
  func.func @transform_8(%arg0: i32) -> (i32, i32, i32) {
    %c0_i32 = arith.constant 0 : i32
    %c0_i32_0 = arith.constant 0 : i32
    %c0_i32_1 = arith.constant 0 : i32
    %c0_i32_2 = arith.constant 0 : i32
    return %c0_i32, %c0_i32_0, %c0_i32_1 : i32, i32, i32
  }
  func.func @transform_9(%arg0: i32) -> (i32, i32) {
    %c0_i32 = arith.constant 0 : i32
    %c0_i32_0 = arith.constant 0 : i32
    %c0_i32_1 = arith.constant 0 : i32
    return %c0_i32, %c0_i32_0 : i32, i32
  }
  func.func @transform_10(%arg0: i32) -> (i32, i32, i32) {
    %c0_i32 = arith.constant 0 : i32
    %c0_i32_0 = arith.constant 0 : i32
    %c0_i32_1 = arith.constant 0 : i32
    %c0_i32_2 = arith.constant 0 : i32
    return %c0_i32, %c0_i32_0, %c0_i32_1 : i32, i32, i32
  }
  func.func @transform_11(%arg0: i32) -> (i32, i32) {
    %c0_i32 = arith.constant 0 : i32
    %c0_i32_0 = arith.constant 0 : i32
    %c0_i32_1 = arith.constant 0 : i32
    return %c0_i32, %c0_i32_0 : i32, i32
  }
  func.func @transform_12(%arg0: i32) -> (i32, i32, i32, i32) {
    %c0_i32 = arith.constant 0 : i32
    %c0_i32_0 = arith.constant 0 : i32
    %c0_i32_1 = arith.constant 0 : i32
    %c0_i32_2 = arith.constant 0 : i32
    return %arg0, %c0_i32, %c0_i32_0, %c0_i32_1 : i32, i32, i32, i32
  }
  func.func @transform_13(%arg0: i32) -> (i32, i32, i32, i32) {
    %c0_i32 = arith.constant 0 : i32
    %c0_i32_0 = arith.constant 0 : i32
    %c0_i32_1 = arith.constant 0 : i32
    %c0_i32_2 = arith.constant 0 : i32
    return %arg0, %c0_i32, %c0_i32_0, %c0_i32_1 : i32, i32, i32, i32
  }
}

</mosaic_0001>

<llo_original>
// kernel: octconv_carafe_hwd_forward.1
$region0: #{octconv_carafe_hwd_forward.1}
  #allocation0 [shape = 'u32[]', space=smem, size = 0x4, offset = 0x4, fixed_abs, tag = 'smem constant byte address 0x4 - core index']
  #allocation1 [shape = 'u32[144,128]{1,0:T(1,128)}', space=vmem, size = 0x12000, scoped, tag = 'internal scratch']
  #allocation2 [shape = 'bf16[10,10,64]{2,1,0:T(8,128)(2,1)}', space=vmem, size = 0xa000, scoped, tag = 'scratch operand']
  #allocation3 [shape = 'f32[12,12,4]{2,1,0:T(8,128)}', space=vmem, size = 0x18000, scoped, tag = 'scratch operand']
  %s0 = inlined_call_operand.vmem [shape: bf16[2,8,8,16], index: 0, kind: input, shape index: {}]
  %s1 = inlined_call_operand.vmem [shape: bf16[2,8,8,16], index: 1, kind: input, shape index: {}]
  %s2 = inlined_call_operand.vmem [shape: bf16[16,132], index: 2, kind: input, shape index: {}]
  %s3 = inlined_call_operand.vmem [shape: f32[1,132], index: 3, kind: input, shape index: {}]
  %s4 = inlined_call_operand.vmem [shape: bf16[16,132], index: 4, kind: input, shape index: {}]
  %s5 = inlined_call_operand.vmem [shape: f32[1,132], index: 5, kind: input, shape index: {}]
  %s6 = inlined_call_operand.vmem [shape: bf16[4,64], index: 6, kind: input, shape index: {}]
  %s7 = inlined_call_operand.vmem [shape: f32[1,64], index: 7, kind: input, shape index: {}]
  %s8 = inlined_call_operand.vmem [shape: bf16[9,64,128], index: 8, kind: input, shape index: {}]
  %s9 = inlined_call_operand.vmem [shape: f32[1,128], index: 9, kind: input, shape index: {}]
  %s10 = inlined_call_operand.vmem [shape: bf16[4,4,4], index: 10, kind: input, shape index: {}]
  %s11 = inlined_call_operand.vmem [shape: f32[1,4], index: 11, kind: input, shape index: {}]
  %s12 = inlined_call_operand.vmem [shape: f32[2,8,8,4], index: 12, kind: output, shape index: {0}]
  %s13 = inlined_call_operand.vmem [shape: f32[2,8,8,4], index: 13, kind: output, shape index: {1}]
  %14 = xla_tuple %s12, %s13
  %s15 = sld [smem:[#allocation0]]
  $region89: #{octconv_carafe_hwd_forward.1} parent=0
    _
  %s17 = ssub.s32 1, %s15
  %s18 = scalar_select 0, %s17, %s15
  loop: start=0, step=1, limit=4
  $region2: #{octconv_carafe_hwd_forward.1} parent=0 // loop_pre_header
    _
  $region3: #{octconv_carafe_hwd_forward.1} parent=0 // loop_header
    %s20 = sphi 0, %s24
    %p21 = scmp.ge.s32.totalorder %s20, 4
    %s30 = sphi 0, %s32
    %s33 = sphi 0, %s30
    %s34 = sphi 0, %s33
    %s50 = sphi 0, %s34
    %s56 = sphi 0, %s58
    %s59 = sphi 0, %s56
    %s60 = sphi 0, %s59
    %s76 = sphi 0, %s60
    %s80 = sphi 0, %s80
    %s82 = sphi 0, %s80
    %s83 = sphi 0, %s82
    %s97 = sphi 0, %s83
    %s101 = sphi 0, %s101
    %s103 = sphi 0, %s101
    %s104 = sphi 0, %s103
    %s118 = sphi 0, %s104
    %s122 = sphi 0, %s122
    %s124 = sphi 0, %s122
    %s125 = sphi 0, %s124
    %s139 = sphi 0, %s125
    %s143 = sphi 0, %s143
    %s145 = sphi 0, %s143
    %s146 = sphi 0, %s145
    %s160 = sphi 0, %s146
    %s164 = sphi 0, %s164
    %s166 = sphi 0, %s164
    %s167 = sphi 0, %s166
    %s181 = sphi 0, %s167
    %s185 = sphi 0, %s185
    %s187 = sphi 0, %s185
    %s188 = sphi 0, %s187
    %s202 = sphi 0, %s188
    %s206 = sphi 0, %s206
    %s208 = sphi 0, %s206
    %s209 = sphi 0, %s208
    %s223 = sphi 0, %s209
    %s227 = sphi 0, %s227
    %s229 = sphi 0, %s227
    %s230 = sphi 0, %s229
    %s244 = sphi 0, %s230
    %s248 = sphi 0, %s248
    %s250 = sphi 0, %s248
    %s251 = sphi 0, %s250
    %s265 = sphi 0, %s251
    %s269 = sphi 0, %s269
    %s271 = sphi 0, %s269
    %s272 = sphi 0, %s271
    %s286 = sphi 0, %s272
    %s292 = sphi 0, %s294
    %s295 = sphi 0, %s292
    %s296 = sphi 0, %s295
    %s312 = sphi 0, %s296
    %s318 = sphi 0, %s320
    %s321 = sphi 0, %s318
    %s322 = sphi 0, %s321
    %s338 = sphi 0, %s322
  $region4: #{octconv_carafe_hwd_forward.1} parent=0 // loop_header_branch
    %23 = sbr.rel (%p21) target = $region8
  $region5: #{octconv_carafe_hwd_forward.1} parent=0 // loop_body
    %s25 = ssub.s32 %s20, 1
    %s26 = ssub.s32 %s20, 2
    %s27 = sadd.s32 %s20, 1
    %s28 = ssub.s32 %s20, %s27
    %p29 = scmp.eq.s32.totalorder %s28, 0
    %s31 = sadd.s32 %s30, 1
    %s32 = scalar_select %p29, %s30, %s31
    %p35 = pneg %p29
    %p36 = scmp.eq.s32.totalorder %s20, 1
    %p37 = por %p35, %p36
    %p38 = scmp.ne.s32.totalorder %s30, %s33
    %p39 = scmp.eq.s32.totalorder %s20, 0
    %p40 = por %p38, %p39
    %p41 = scmp.ne.s32.totalorder %s30, %s33
    %p42 = scmp.eq.s32.totalorder %s25, 1
    %p43 = por %p41, %p42
    %p44 = scmp.ne.s32.totalorder %s33, %s34
    %p45 = scmp.eq.s32.totalorder %s25, 0
    %p46 = por %p44, %p45
    %p47 = scmp.ne.s32.totalorder %s33, %s34
    %p48 = scmp.eq.s32.totalorder %s26, 1
    %p49 = por %p47, %p48
    %p51 = scmp.ne.s32.totalorder %s34, %s50
    %p52 = scmp.eq.s32.totalorder %s26, 0
    %p53 = por %p51, %p52
    %s54 = ssub.s32 %s20, %s27
    %p55 = scmp.eq.s32.totalorder %s54, 0
    %s57 = sadd.s32 %s56, 1
    %s58 = scalar_select %p55, %s56, %s57
    %p61 = pneg %p55
    %p62 = scmp.eq.s32.totalorder %s20, 1
    %p63 = por %p61, %p62
    %p64 = scmp.ne.s32.totalorder %s56, %s59
    %p65 = scmp.eq.s32.totalorder %s20, 0
    %p66 = por %p64, %p65
    %p67 = scmp.ne.s32.totalorder %s56, %s59
    %p68 = scmp.eq.s32.totalorder %s25, 1
    %p69 = por %p67, %p68
    %p70 = scmp.ne.s32.totalorder %s59, %s60
    %p71 = scmp.eq.s32.totalorder %s25, 0
    %p72 = por %p70, %p71
    %p73 = scmp.ne.s32.totalorder %s59, %s60
    %p74 = scmp.eq.s32.totalorder %s26, 1
    %p75 = por %p73, %p74
    %p77 = scmp.ne.s32.totalorder %s60, %s76
    %p78 = scmp.eq.s32.totalorder %s26, 0
    %p79 = por %p77, %p78
    %s81 = sadd.s32 %s80, 1
    %p84 = scmp.eq.s32.totalorder %s20, 1
    %p85 = scmp.ne.s32.totalorder %s80, %s82
    %p86 = scmp.eq.s32.totalorder %s20, 0
    %p87 = por %p85, %p86
    %p88 = scmp.ne.s32.totalorder %s80, %s82
    %p89 = scmp.eq.s32.totalorder %s25, 1
    %p90 = por %p88, %p89
    %p91 = scmp.ne.s32.totalorder %s82, %s83
    %p92 = scmp.eq.s32.totalorder %s25, 0
    %p93 = por %p91, %p92
    %p94 = scmp.ne.s32.totalorder %s82, %s83
    %p95 = scmp.eq.s32.totalorder %s26, 1
    %p96 = por %p94, %p95
    %p98 = scmp.ne.s32.totalorder %s83, %s97
    %p99 = scmp.eq.s32.totalorder %s26, 0
    %p100 = por %p98, %p99
    %s102 = sadd.s32 %s101, 1
    %p105 = scmp.eq.s32.totalorder %s20, 1
    %p106 = scmp.ne.s32.totalorder %s101, %s103
    %p107 = scmp.eq.s32.totalorder %s20, 0
    %p108 = por %p106, %p107
    %p109 = scmp.ne.s32.totalorder %s101, %s103
    %p110 = scmp.eq.s32.totalorder %s25, 1
    %p111 = por %p109, %p110
    %p112 = scmp.ne.s32.totalorder %s103, %s104
    %p113 = scmp.eq.s32.totalorder %s25, 0
    %p114 = por %p112, %p113
    %p115 = scmp.ne.s32.totalorder %s103, %s104
    %p116 = scmp.eq.s32.totalorder %s26, 1
    %p117 = por %p115, %p116
    %p119 = scmp.ne.s32.totalorder %s104, %s118
    %p120 = scmp.eq.s32.totalorder %s26, 0
    %p121 = por %p119, %p120
    %s123 = sadd.s32 %s122, 1
    %p126 = scmp.eq.s32.totalorder %s20, 1
    %p127 = scmp.ne.s32.totalorder %s122, %s124
    %p128 = scmp.eq.s32.totalorder %s20, 0
    %p129 = por %p127, %p128
    %p130 = scmp.ne.s32.totalorder %s122, %s124
    %p131 = scmp.eq.s32.totalorder %s25, 1
    %p132 = por %p130, %p131
    %p133 = scmp.ne.s32.totalorder %s124, %s125
    %p134 = scmp.eq.s32.totalorder %s25, 0
    %p135 = por %p133, %p134
    %p136 = scmp.ne.s32.totalorder %s124, %s125
    %p137 = scmp.eq.s32.totalorder %s26, 1
    %p138 = por %p136, %p137
    %p140 = scmp.ne.s32.totalorder %s125, %s139
    %p141 = scmp.eq.s32.totalorder %s26, 0
    %p142 = por %p140, %p141
    %s144 = sadd.s32 %s143, 1
    %p147 = scmp.eq.s32.totalorder %s20, 1
    %p148 = scmp.ne.s32.totalorder %s143, %s145
    %p149 = scmp.eq.s32.totalorder %s20, 0
    %p150 = por %p148, %p149
    %p151 = scmp.ne.s32.totalorder %s143, %s145
    %p152 = scmp.eq.s32.totalorder %s25, 1
    %p153 = por %p151, %p152
    %p154 = scmp.ne.s32.totalorder %s145, %s146
    %p155 = scmp.eq.s32.totalorder %s25, 0
    %p156 = por %p154, %p155
    %p157 = scmp.ne.s32.totalorder %s145, %s146
    %p158 = scmp.eq.s32.totalorder %s26, 1
    %p159 = por %p157, %p158
    %p161 = scmp.ne.s32.totalorder %s146, %s160
    %p162 = scmp.eq.s32.totalorder %s26, 0
    %p163 = por %p161, %p162
    %s165 = sadd.s32 %s164, 1
    %p168 = scmp.eq.s32.totalorder %s20, 1
    %p169 = scmp.ne.s32.totalorder %s164, %s166
    %p170 = scmp.eq.s32.totalorder %s20, 0
    %p171 = por %p169, %p170
    %p172 = scmp.ne.s32.totalorder %s164, %s166
    %p173 = scmp.eq.s32.totalorder %s25, 1
    %p174 = por %p172, %p173
    %p175 = scmp.ne.s32.totalorder %s166, %s167
    %p176 = scmp.eq.s32.totalorder %s25, 0
    %p177 = por %p175, %p176
    %p178 = scmp.ne.s32.totalorder %s166, %s167
    %p179 = scmp.eq.s32.totalorder %s26, 1
    %p180 = por %p178, %p179
    %p182 = scmp.ne.s32.totalorder %s167, %s181
    %p183 = scmp.eq.s32.totalorder %s26, 0
    %p184 = por %p182, %p183
    %s186 = sadd.s32 %s185, 1
    %p189 = scmp.eq.s32.totalorder %s20, 1
    %p190 = scmp.ne.s32.totalorder %s185, %s187
    %p191 = scmp.eq.s32.totalorder %s20, 0
    %p192 = por %p190, %p191
    %p193 = scmp.ne.s32.totalorder %s185, %s187
    %p194 = scmp.eq.s32.totalorder %s25, 1
    %p195 = por %p193, %p194
    %p196 = scmp.ne.s32.totalorder %s187, %s188
    %p197 = scmp.eq.s32.totalorder %s25, 0
    %p198 = por %p196, %p197
    %p199 = scmp.ne.s32.totalorder %s187, %s188
    %p200 = scmp.eq.s32.totalorder %s26, 1
    %p201 = por %p199, %p200
    %p203 = scmp.ne.s32.totalorder %s188, %s202
    %p204 = scmp.eq.s32.totalorder %s26, 0
    %p205 = por %p203, %p204
    %s207 = sadd.s32 %s206, 1
    %p210 = scmp.eq.s32.totalorder %s20, 1
    %p211 = scmp.ne.s32.totalorder %s206, %s208
    %p212 = scmp.eq.s32.totalorder %s20, 0
    %p213 = por %p211, %p212
    %p214 = scmp.ne.s32.totalorder %s206, %s208
    %p215 = scmp.eq.s32.totalorder %s25, 1
    %p216 = por %p214, %p215
    %p217 = scmp.ne.s32.totalorder %s208, %s209
    %p218 = scmp.eq.s32.totalorder %s25, 0
    %p219 = por %p217, %p218
    %p220 = scmp.ne.s32.totalorder %s208, %s209
    %p221 = scmp.eq.s32.totalorder %s26, 1
    %p222 = por %p220, %p221
    %p224 = scmp.ne.s32.totalorder %s209, %s223
    %p225 = scmp.eq.s32.totalorder %s26, 0
    %p226 = por %p224, %p225
    %s228 = sadd.s32 %s227, 1
    %p231 = scmp.eq.s32.totalorder %s20, 1
    %p232 = scmp.ne.s32.totalorder %s227, %s229
    %p233 = scmp.eq.s32.totalorder %s20, 0
    %p234 = por %p232, %p233
    %p235 = scmp.ne.s32.totalorder %s227, %s229
    %p236 = scmp.eq.s32.totalorder %s25, 1
    %p237 = por %p235, %p236
    %p238 = scmp.ne.s32.totalorder %s229, %s230
    %p239 = scmp.eq.s32.totalorder %s25, 0
    %p240 = por %p238, %p239
    %p241 = scmp.ne.s32.totalorder %s229, %s230
    %p242 = scmp.eq.s32.totalorder %s26, 1
    %p243 = por %p241, %p242
    %p245 = scmp.ne.s32.totalorder %s230, %s244
    %p246 = scmp.eq.s32.totalorder %s26, 0
    %p247 = por %p245, %p246
    %s249 = sadd.s32 %s248, 1
    %p252 = scmp.eq.s32.totalorder %s20, 1
    %p253 = scmp.ne.s32.totalorder %s248, %s250
    %p254 = scmp.eq.s32.totalorder %s20, 0
    %p255 = por %p253, %p254
    %p256 = scmp.ne.s32.totalorder %s248, %s250
    %p257 = scmp.eq.s32.totalorder %s25, 1
    %p258 = por %p256, %p257
    %p259 = scmp.ne.s32.totalorder %s250, %s251
    %p260 = scmp.eq.s32.totalorder %s25, 0
    %p261 = por %p259, %p260
    %p262 = scmp.ne.s32.totalorder %s250, %s251
    %p263 = scmp.eq.s32.totalorder %s26, 1
    %p264 = por %p262, %p263
    %p266 = scmp.ne.s32.totalorder %s251, %s265
    %p267 = scmp.eq.s32.totalorder %s26, 0
    %p268 = por %p266, %p267
    %s270 = sadd.s32 %s269, 1
    %p273 = scmp.eq.s32.totalorder %s20, 1
    %p274 = scmp.ne.s32.totalorder %s269, %s271
    %p275 = scmp.eq.s32.totalorder %s20, 0
    %p276 = por %p274, %p275
    %p277 = scmp.ne.s32.totalorder %s269, %s271
    %p278 = scmp.eq.s32.totalorder %s25, 1
    %p279 = por %p277, %p278
    %p280 = scmp.ne.s32.totalorder %s271, %s272
    %p281 = scmp.eq.s32.totalorder %s25, 0
    %p282 = por %p280, %p281
    %p283 = scmp.ne.s32.totalorder %s271, %s272
    %p284 = scmp.eq.s32.totalorder %s26, 1
    %p285 = por %p283, %p284
    %p287 = scmp.ne.s32.totalorder %s272, %s286
    %p288 = scmp.eq.s32.totalorder %s26, 0
    %p289 = por %p287, %p288
    %s290 = ssub.s32 %s20, %s27
    %p291 = scmp.eq.s32.totalorder %s290, 0
    %s293 = sadd.s32 %s292, 1
    %s294 = scalar_select %p291, %s292, %s293
    %p297 = pneg %p291
    %p298 = scmp.eq.s32.totalorder %s20, 1
    %p299 = por %p297, %p298
    %p300 = scmp.ne.s32.totalorder %s292, %s295
    %p301 = scmp.eq.s32.totalorder %s20, 0
    %p302 = por %p300, %p301
    %p303 = scmp.ne.s32.totalorder %s292, %s295
    %p304 = scmp.eq.s32.totalorder %s25, 1
    %p305 = por %p303, %p304
    %p306 = scmp.ne.s32.totalorder %s295, %s296
    %p307 = scmp.eq.s32.totalorder %s25, 0
    %p308 = por %p306, %p307
    %p309 = scmp.ne.s32.totalorder %s295, %s296
    %p310 = scmp.eq.s32.totalorder %s26, 1
    %p311 = por %p309, %p310
    %p313 = scmp.ne.s32.totalorder %s296, %s312
    %p314 = scmp.eq.s32.totalorder %s26, 0
    %p315 = por %p313, %p314
    %s316 = ssub.s32 %s20, %s27
    %p317 = scmp.eq.s32.totalorder %s316, 0
    %s319 = sadd.s32 %s318, 1
    %s320 = scalar_select %p317, %s318, %s319
    %p323 = pneg %p317
    %p324 = scmp.eq.s32.totalorder %s20, 1
    %p325 = por %p323, %p324
    %p326 = scmp.ne.s32.totalorder %s318, %s321
    %p327 = scmp.eq.s32.totalorder %s20, 0
    %p328 = por %p326, %p327
    %p329 = scmp.ne.s32.totalorder %s318, %s321
    %p330 = scmp.eq.s32.totalorder %s25, 1
    %p331 = por %p329, %p330
    %p332 = scmp.ne.s32.totalorder %s321, %s322
    %p333 = scmp.eq.s32.totalorder %s25, 0
    %p334 = por %p332, %p333
    %p335 = scmp.ne.s32.totalorder %s321, %s322
    %p336 = scmp.eq.s32.totalorder %s26, 1
    %p337 = por %p335, %p336
    %p339 = scmp.ne.s32.totalorder %s322, %s338
    %p340 = scmp.eq.s32.totalorder %s26, 0
    %p341 = por %p339, %p340
    %p342 = scmp.le.s32.totalorder 1, %s20
    %p343 = scmp.lt.s32.totalorder %s20, 3
    %p344 = pnand %p342, %p343
    %p345 = pneg %p344
    // Predicated region
    $region9: #{octconv_carafe_hwd_forward.1} parent=5 // pred_check
      _
    $region10: #{octconv_carafe_hwd_forward.1} parent=5 // pred_check_branch
      %347 = sbr.rel (%p344) target = $region12
    $region11: #{octconv_carafe_hwd_forward.1} parent=5 // pred_region
      %s348 = ssub.s32 %s20, 1
      // Predicated region
      $region13: #{octconv_carafe_hwd_forward.1} parent=11 // pred_check
        %p349 = pneg %p93
      $region14: #{octconv_carafe_hwd_forward.1} parent=11 // pred_check_branch
        %351 = sbr.rel (%p349) target = $region16
      $region15: #{octconv_carafe_hwd_forward.1} parent=11 // pred_region
        _
      $region16: #{octconv_carafe_hwd_forward.1} parent=11 // pred_fallthru
        _
      // Predicated region
      $region17: #{octconv_carafe_hwd_forward.1} parent=11 // pred_check
        %p352 = pneg %p114
      $region18: #{octconv_carafe_hwd_forward.1} parent=11 // pred_check_branch
        %354 = sbr.rel (%p352) target = $region20
      $region19: #{octconv_carafe_hwd_forward.1} parent=11 // pred_region
        _
      $region20: #{octconv_carafe_hwd_forward.1} parent=11 // pred_fallthru
        _
      // Predicated region
      $region21: #{octconv_carafe_hwd_forward.1} parent=11 // pred_check
        %p355 = pneg %p135
      $region22: #{octconv_carafe_hwd_forward.1} parent=11 // pred_check_branch
        %357 = sbr.rel (%p355) target = $region24
      $region23: #{octconv_carafe_hwd_forward.1} parent=11 // pred_region
        _
      $region24: #{octconv_carafe_hwd_forward.1} parent=11 // pred_fallthru
        _
      // Predicated region
      $region25: #{octconv_carafe_hwd_forward.1} parent=11 // pred_check
        %p358 = pneg %p156
      $region26: #{octconv_carafe_hwd_forward.1} parent=11 // pred_check_branch
        %360 = sbr.rel (%p358) target = $region28
      $region27: #{octconv_carafe_hwd_forward.1} parent=11 // pred_region
        _
      $region28: #{octconv_carafe_hwd_forward.1} parent=11 // pred_fallthru
        _
      // Predicated region
      $region29: #{octconv_carafe_hwd_forward.1} parent=11 // pred_check
        %p361 = pneg %p177
      $region30: #{octconv_carafe_hwd_forward.1} parent=11 // pred_check_branch
        %363 = sbr.rel (%p361) target = $region32
      $region31: #{octconv_carafe_hwd_forward.1} parent=11 // pred_region
        _
      $region32: #{octconv_carafe_hwd_forward.1} parent=11 // pred_fallthru
        _
      // Predicated region
      $region33: #{octconv_carafe_hwd_forward.1} parent=11 // pred_check
        %p364 = pneg %p198
      $region34: #{octconv_carafe_hwd_forward.1} parent=11 // pred_check_branch
        %366 = sbr.rel (%p364) target = $region36
      $region35: #{octconv_carafe_hwd_forward.1} parent=11 // pred_region
        _
      $region36: #{octconv_carafe_hwd_forward.1} parent=11 // pred_fallthru
        _
      // Predicated region
      $region37: #{octconv_carafe_hwd_forward.1} parent=11 // pred_check
        %p367 = pneg %p219
      $region38: #{octconv_carafe_hwd_forward.1} parent=11 // pred_check_branch
        %369 = sbr.rel (%p367) target = $region40
      $region39: #{octconv_carafe_hwd_forward.1} parent=11 // pred_region
        _
      $region40: #{octconv_carafe_hwd_forward.1} parent=11 // pred_fallthru
        _
      // Predicated region
      $region41: #{octconv_carafe_hwd_forward.1} parent=11 // pred_check
        %p370 = pneg %p240
      $region42: #{octconv_carafe_hwd_forward.1} parent=11 // pred_check_branch
        %372 = sbr.rel (%p370) target = $region44
      $region43: #{octconv_carafe_hwd_forward.1} parent=11 // pred_region
        _
      $region44: #{octconv_carafe_hwd_forward.1} parent=11 // pred_fallthru
        _
      // Predicated region
      $region45: #{octconv_carafe_hwd_forward.1} parent=11 // pred_check
        %p373 = pneg %p261
      $region46: #{octconv_carafe_hwd_forward.1} parent=11 // pred_check_branch
        %375 = sbr.rel (%p373) target = $region48
      $region47: #{octconv_carafe_hwd_forward.1} parent=11 // pred_region
        _
      $region48: #{octconv_carafe_hwd_forward.1} parent=11 // pred_fallthru
        _
      // Predicated region
      $region49: #{octconv_carafe_hwd_forward.1} parent=11 // pred_check
        %p376 = pneg %p282
      $region50: #{octconv_carafe_hwd_forward.1} parent=11 // pred_check_branch
        %378 = sbr.rel (%p376) target = $region52
      $region51: #{octconv_carafe_hwd_forward.1} parent=11 // pred_region
        _
      $region52: #{octconv_carafe_hwd_forward.1} parent=11 // pred_fallthru
        _
    $region12: #{octconv_carafe_hwd_forward.1} parent=5 // pred_fallthru
      _
    %p379 = scmp.lt.s32.totalorder %s20, 2
    // Predicated region
    $region53: #{octconv_carafe_hwd_forward.1} parent=5 // pred_check
      %p380 = pneg %p379
    $region54: #{octconv_carafe_hwd_forward.1} parent=5 // pred_check_branch
      %382 = sbr.rel (%p380) target = $region56
    $region55: #{octconv_carafe_hwd_forward.1} parent=5 // pred_region
      // Predicated region
      $region57: #{octconv_carafe_hwd_forward.1} parent=55 // pred_check
        %p383 = pneg %p40
      $region58: #{octconv_carafe_hwd_forward.1} parent=55 // pred_check_branch
        %385 = sbr.rel (%p383) target = $region60
      $region59: #{octconv_carafe_hwd_forward.1} parent=55 // pred_region
        %p386 = scmp.lt.s32.totalorder %s20, 1
        %s387 = scalar_select %p386, %s20, 1
        %s388 = smul.addr %s387, 8
        %s389 = smul.addr %s388, 4
        %s390 = scalar_lea.vmem %s0, %s389
      $region60: #{octconv_carafe_hwd_forward.1} parent=55 // pred_fallthru
        _
      // Predicated region
      $region61: #{octconv_carafe_hwd_forward.1} parent=55 // pred_check
        %p391 = pneg %p66
      $region62: #{octconv_carafe_hwd_forward.1} parent=55 // pred_check_branch
        %393 = sbr.rel (%p391) target = $region64
      $region63: #{octconv_carafe_hwd_forward.1} parent=55 // pred_region
        %p394 = scmp.lt.s32.totalorder %s20, 1
        %s395 = scalar_select %p394, %s20, 1
        %s396 = smul.addr %s395, 8
        %s397 = smul.addr %s396, 4
        %s398 = scalar_lea.vmem %s1, %s397
      $region64: #{octconv_carafe_hwd_forward.1} parent=55 // pred_fallthru
        _
    $region56: #{octconv_carafe_hwd_forward.1} parent=5 // pred_fallthru
      _
    %p399 = scmp.le.s32.totalorder 1, %s20
    %p400 = scmp.lt.s32.totalorder %s20, 3
    %p401 = pnand %p399, %p400
    %p402 = pneg %p401
    // Predicated region
    $region65: #{octconv_carafe_hwd_forward.1} parent=5 // pred_check
      _
    $region66: #{octconv_carafe_hwd_forward.1} parent=5 // pred_check_branch
      %404 = sbr.rel (%p401) target = $region68
    $region67: #{octconv_carafe_hwd_forward.1} parent=5 // pred_region
      %s405 = ssub.s32 %s20, 1
      %p406 = scmp.lt.s32.totalorder %s25, 1
      %s407 = scalar_select %p406, %s25, 1
      %s408 = smul.addr %s407, 8
      %s409 = smul.addr %s408, 4
      %s410 = scalar_lea.vmem %s0, %s409
      %p411 = pneg %p46
      %p412 = pneg %p43
      %p413 = scmp.lt.s32.totalorder %s25, 1
      %s414 = scalar_select %p413, %s25, 1
      %s415 = smul.addr %s414, 8
      %s416 = smul.addr %s415, 4
      %s417 = scalar_lea.vmem %s1, %s416
      %p418 = pneg %p72
      %p419 = pneg %p69
      %p420 = pneg %p93
      %p421 = pneg %p90
      %p422 = pneg %p114
      %p423 = pneg %p111
      %p424 = pneg %p135
      %p425 = pneg %p132
      %p426 = pneg %p156
      %p427 = pneg %p153
      %p428 = pneg %p177
      %p429 = pneg %p174
      %p430 = pneg %p198
      %p431 = pneg %p195
      %p432 = pneg %p219
      %p433 = pneg %p216
      %p434 = pneg %p240
      %p435 = pneg %p237
      %p436 = pneg %p261
      %p437 = pneg %p258
      %p438 = pneg %p282
      %p439 = pneg %p279
      %p440 = pneg %p308
      %p441 = pneg %p305
      %p442 = scmp.lt.s32.totalorder %s25, 1
      %s443 = scalar_select %p442, %s25, 1
      %s444 = smul.addr %s443, 8
      %s445 = smul.addr %s444, 8
      %s446 = scalar_lea.vmem %s12, %s445
      %p447 = pneg %p334
      %p448 = pneg %p331
      %p449 = scmp.lt.s32.totalorder %s25, 1
      %s450 = scalar_select %p449, %s25, 1
      %s451 = smul.addr %s450, 8
      %s452 = smul.addr %s451, 8
      %s453 = scalar_lea.vmem %s13, %s452
      %p454 = scmp.lt.s32.totalorder %s25, 1
      %s455 = scalar_select %p454, %s25, 1
      %s456 = smul.addr %s455, 8
      %s457 = smul.addr %s456, 4
      %s458 = scalar_lea.vmem %s0, %s457
      %p459 = scmp.lt.s32.totalorder %s25, 1
      %s460 = scalar_select %p459, %s25, 1
      %s461 = smul.addr %s460, 8
      %s462 = smul.addr %s461, 4
      %s463 = scalar_lea.vmem %s1, %s462
      %p464 = scmp.lt.s32.totalorder %s25, 1
      %s465 = scalar_select %p464, %s25, 1
      %s466 = smul.addr %s465, 8
      %s467 = smul.addr %s466, 8
      %s468 = scalar_lea.vmem %s12, %s467
      %p469 = scmp.lt.s32.totalorder %s25, 1
      %s470 = scalar_select %p469, %s25, 1
      %s471 = smul.addr %s470, 8
      %s472 = smul.addr %s471, 8
      %s473 = scalar_lea.vmem %s13, %s472
      %v475 = vld [vmem:[%s458] sm:$0xf]
      %v476 = vld [vmem:[%s458 + $0x4] sm:$0xf]
      %v477 = vld [vmem:[%s458 + $0x8] sm:$0xf]
      %v478 = vld [vmem:[%s458 + $0xc] sm:$0xf]
      %v479 = vld [vmem:[%s458 + $0x10] sm:$0xf]
      %v480 = vld [vmem:[%s458 + $0x14] sm:$0xf]
      %v481 = vld [vmem:[%s458 + $0x18] sm:$0xf]
      %v482 = vld [vmem:[%s458 + $0x1c] sm:$0xf]
      %v483 = vld [vmem:[%s463] sm:$0xf]
      %v484 = vld [vmem:[%s463 + $0x4] sm:$0xf]
      %v485 = vld [vmem:[%s463 + $0x8] sm:$0xf]
      %v486 = vld [vmem:[%s463 + $0xc] sm:$0xf]
      %v487 = vld [vmem:[%s463 + $0x10] sm:$0xf]
      %v488 = vld [vmem:[%s463 + $0x14] sm:$0xf]
      %v489 = vld [vmem:[%s463 + $0x18] sm:$0xf]
      %v490 = vld [vmem:[%s463 + $0x1c] sm:$0xf]
      %v491 = vld [vmem:[%s2] sm:$0xff]
      %v492 = vld [vmem:[%s2 + $0x8] sm:$0xff]
      %v493 = vld [vmem:[%s3] sm:$0x3]
      %v495 = vlaneseq
      %v496 = vshrl.u32 %v495, 7
      %v497 = vsub.s32 0, %v496
      %v498 = vrot.slane %v493, %v497
      %v499 = vlaneseq
      %v500 = vshrl.u32 %v499, 7
      %v501 = vsub.s32 1, %v500
      %v502 = vrot.slane %v493, %v501
      %v513 = vunpack.c.l.b16 %v475
      %v514 = vunpack.c.l.b16 %v476
      %v515 = vunpack.c.l.b16 %v477
      %v516 = vunpack.c.l.b16 %v478
      %v517 = vunpack.c.l.b16 %v479
      %v518 = vunpack.c.l.b16 %v480
      %v519 = vunpack.c.l.b16 %v481
      %v520 = vunpack.c.l.b16 %v482
      %v521 = vpack.c.b16 %v514, %v513
      %v522 = vpack.c.b16 %v516, %v515
      %v523 = vpack.c.b16 %v518, %v517
      %v524 = vpack.c.b16 %v520, %v519
      %v527 = vunpack.c.l.b16 %v491
      %v528 = vunpack.c.h.b16 %v491
      %v529 = vunpack.c.l.b16 %v492
      %v530 = vunpack.c.h.b16 %v492
      %v531 = vpack.c.b16 %v529, %v527
      %v532 = vpack.c.b16 %v530, %v528
      %vm535 = vcmask 130048
      %v537 = vsel %vm535, %v521, 0
      %v540 = vsel %vm535, %v522, 0
      %v543 = vsel %vm535, %v523, 0
      %v546 = vsel %vm535, %v524, 0
      %548 = vmatprep.subr.bf16.mxu0 0
      %549 = vmatpush1.bf16.msra.mxu0 0
      %550 = vmatprep.subr.bf16.mxu0 0
      %551 = vmatpush1.bf16.msra.mxu0 0
      %552 = vmatprep.subr.bf16.mxu0 0
      %553 = vmatpush1.bf16.msra.mxu0 0
      %554 = vmatprep.subr.bf16.mxu0 0
      %555 = vmatpush1.bf16.msra.mxu0 0
      %556 = vmatprep.subr.bf16.mxu0 0
      %557 = vmatpush1.bf16.msra.mxu0 0
      %558 = vmatprep.subr.bf16.mxu0 0
      %559 = vmatpush1.bf16.msra.mxu0 0
      %560 = vmatprep.subr.bf16.mxu0 0
      %561 = vmatpush1.bf16.msra.mxu0 0
      %562 = vmatprep.subr.bf16.mxu0 %v532
      %563 = vmatpush1.bf16.msra.mxu0 %v531
      %564 = vmatprep.subr.bf16.mxu0 0
      %565 = vmatpush2.bf16.msra.mxu0 0
      %566 = vmatprep.subr.bf16.mxu0 0
      %567 = vmatpush2.bf16.msra.mxu0 0
      %568 = vmatprep.subr.bf16.mxu0 0
      %569 = vmatpush2.bf16.msra.mxu0 0
      %570 = vmatprep.subr.bf16.mxu0 0
      %571 = vmatpush2.bf16.msra.mxu0 0
      %572 = vmatprep.subr.bf16.mxu0 0
      %573 = vmatpush2.bf16.msra.mxu0 0
      %574 = vmatprep.subr.bf16.mxu0 0
      %575 = vmatpush2.bf16.msra.mxu0 0
      %576 = vmatprep.subr.bf16.mxu0 0
      %577 = vmatpush2.bf16.msra.mxu0 0
      %578 = vmatprep.subr.bf16.mxu0 0
      %579 = vmatpush2.bf16.msra.mxu0 0
      %580 = vmatprep.mubr.bf16.mxu0 0
      %581 = vmatmul.mubr.bf16.gmra.mxu0 %v537
      %v582 = vpop.f32.mrf.mxu0
      %v583 = vadd.f32 %v498, %v582
      %v584 = vpop.f32.mrf.mxu0
      %v585 = vadd.f32 %v502, %v584
      %v586 = vpop.f32.mrf.mxu0
      %v587 = vadd.f32 %v498, %v586
      %v588 = vpop.f32.mrf.mxu0
      %v589 = vadd.f32 %v502, %v588
      %590 = vmatprep.mubr.bf16.mxu0 0
      %591 = vmatmul.mubr.bf16.gmra.mxu0 %v540
      %v592 = vpop.f32.mrf.mxu0
      %v593 = vadd.f32 %v498, %v592
      %v594 = vpop.f32.mrf.mxu0
      %v595 = vadd.f32 %v502, %v594
      %v596 = vpop.f32.mrf.mxu0
      %v597 = vadd.f32 %v498, %v596
      %v598 = vpop.f32.mrf.mxu0
      %v599 = vadd.f32 %v502, %v598
      %600 = vmatprep.mubr.bf16.mxu0 0
      %601 = vmatmul.mubr.bf16.gmra.mxu0 %v543
      %v602 = vpop.f32.mrf.mxu0
      %v603 = vadd.f32 %v498, %v602
      %v604 = vpop.f32.mrf.mxu0
      %v605 = vadd.f32 %v502, %v604
      %v606 = vpop.f32.mrf.mxu0
      %v607 = vadd.f32 %v498, %v606
      %v608 = vpop.f32.mrf.mxu0
      %v609 = vadd.f32 %v502, %v608
      %610 = vmatprep.mubr.bf16.mxu0 0
      %611 = vmatmul.mubr.bf16.gmra.mxu0 %v546
      %v612 = vpop.f32.mrf.mxu0
      %v613 = vadd.f32 %v498, %v612
      %v614 = vpop.f32.mrf.mxu0
      %v615 = vadd.f32 %v502, %v614
      %v616 = vpop.f32.mrf.mxu0
      %v617 = vadd.f32 %v498, %v616
      %v618 = vpop.f32.mrf.mxu0
      %v619 = vadd.f32 %v502, %v618
      %620 = vdwg.mxu0
      %v621 = vld [vmem:[%s4] sm:$0xff]
      %v622 = vld [vmem:[%s4 + $0x8] sm:$0xff]
      %v623 = vld [vmem:[%s5] sm:$0x3]
      %v625 = vlaneseq
      %v626 = vshrl.u32 %v625, 7
      %v627 = vsub.s32 0, %v626
      %v628 = vrot.slane %v623, %v627
      %v629 = vlaneseq
      %v630 = vshrl.u32 %v629, 7
      %v631 = vsub.s32 1, %v630
      %v632 = vrot.slane %v623, %v631
      %v643 = vunpack.c.l.b16 %v483
      %v644 = vunpack.c.l.b16 %v484
      %v645 = vunpack.c.l.b16 %v485
      %v646 = vunpack.c.l.b16 %v486
      %v647 = vunpack.c.l.b16 %v487
      %v648 = vunpack.c.l.b16 %v488
      %v649 = vunpack.c.l.b16 %v489
      %v650 = vunpack.c.l.b16 %v490
      %v651 = vpack.c.b16 %v644, %v643
      %v652 = vpack.c.b16 %v646, %v645
      %v653 = vpack.c.b16 %v648, %v647
      %v654 = vpack.c.b16 %v650, %v649
      %v657 = vunpack.c.l.b16 %v621
      %v658 = vunpack.c.h.b16 %v621
      %v659 = vunpack.c.l.b16 %v622
      %v660 = vunpack.c.h.b16 %v622
      %v661 = vpack.c.b16 %v659, %v657
      %v662 = vpack.c.b16 %v660, %v658
      %v666 = vsel %vm535, %v651, 0
      %v669 = vsel %vm535, %v652, 0
      %v672 = vsel %vm535, %v653, 0
      %v675 = vsel %vm535, %v654, 0
      %677 = vmatprep.subr.bf16.mxu0 0
      %678 = vmatpush1.bf16.msra.mxu0 0
      %679 = vmatprep.subr.bf16.mxu0 0
      %680 = vmatpush1.bf16.msra.mxu0 0
      %681 = vmatprep.subr.bf16.mxu0 0
      %682 = vmatpush1.bf16.msra.mxu0 0
      %683 = vmatprep.subr.bf16.mxu0 0
      %684 = vmatpush1.bf16.msra.mxu0 0
      %685 = vmatprep.subr.bf16.mxu0 0
      %686 = vmatpush1.bf16.msra.mxu0 0
      %687 = vmatprep.subr.bf16.mxu0 0
      %688 = vmatpush1.bf16.msra.mxu0 0
      %689 = vmatprep.subr.bf16.mxu0 0
      %690 = vmatpush1.bf16.msra.mxu0 0
      %691 = vmatprep.subr.bf16.mxu0 %v662
      %692 = vmatpush1.bf16.msra.mxu0 %v661
      %693 = vmatprep.subr.bf16.mxu0 0
      %694 = vmatpush2.bf16.msra.mxu0 0
      %695 = vmatprep.subr.bf16.mxu0 0
      %696 = vmatpush2.bf16.msra.mxu0 0
      %697 = vmatprep.subr.bf16.mxu0 0
      %698 = vmatpush2.bf16.msra.mxu0 0
      %699 = vmatprep.subr.bf16.mxu0 0
      %700 = vmatpush2.bf16.msra.mxu0 0
      %701 = vmatprep.subr.bf16.mxu0 0
      %702 = vmatpush2.bf16.msra.mxu0 0
      %703 = vmatprep.subr.bf16.mxu0 0
      %704 = vmatpush2.bf16.msra.mxu0 0
      %705 = vmatprep.subr.bf16.mxu0 0
      %706 = vmatpush2.bf16.msra.mxu0 0
      %707 = vmatprep.subr.bf16.mxu0 0
      %708 = vmatpush2.bf16.msra.mxu0 0
      %709 = vmatprep.mubr.bf16.mxu0 0
      %710 = vmatmul.mubr.bf16.gmra.mxu0 %v666
      %v711 = vpop.f32.mrf.mxu0
      %v712 = vadd.f32 %v628, %v711
      %v713 = vpop.f32.mrf.mxu0
      %v714 = vadd.f32 %v632, %v713
      %v715 = vpop.f32.mrf.mxu0
      %v716 = vadd.f32 %v628, %v715
      %v717 = vpop.f32.mrf.mxu0
      %v718 = vadd.f32 %v632, %v717
      %719 = vmatprep.mubr.bf16.mxu0 0
      %720 = vmatmul.mubr.bf16.gmra.mxu0 %v669
      %v721 = vpop.f32.mrf.mxu0
      %v722 = vadd.f32 %v628, %v721
      %v723 = vpop.f32.mrf.mxu0
      %v724 = vadd.f32 %v632, %v723
      %v725 = vpop.f32.mrf.mxu0
      %v726 = vadd.f32 %v628, %v725
      %v727 = vpop.f32.mrf.mxu0
      %v728 = vadd.f32 %v632, %v727
      %729 = vmatprep.mubr.bf16.mxu0 0
      %730 = vmatmul.mubr.bf16.gmra.mxu0 %v672
      %v731 = vpop.f32.mrf.mxu0
      %v732 = vadd.f32 %v628, %v731
      %v733 = vpop.f32.mrf.mxu0
      %v734 = vadd.f32 %v632, %v733
      %v735 = vpop.f32.mrf.mxu0
      %v736 = vadd.f32 %v628, %v735
      %v737 = vpop.f32.mrf.mxu0
      %v738 = vadd.f32 %v632, %v737
      %739 = vmatprep.mubr.bf16.mxu0 0
      %740 = vmatmul.mubr.bf16.gmra.mxu0 %v675
      %v741 = vpop.f32.mrf.mxu0
      %v742 = vadd.f32 %v628, %v741
      %v743 = vpop.f32.mrf.mxu0
      %v744 = vadd.f32 %v632, %v743
      %v745 = vpop.f32.mrf.mxu0
      %v746 = vadd.f32 %v628, %v745
      %v747 = vpop.f32.mrf.mxu0
      %v748 = vadd.f32 %v632, %v747
      %749 = vdwg.mxu0
      %v750 = vadd.f32 %v712, %v585
      %v751 = vadd.f32 %v716, %v589
      %v752 = vadd.f32 %v722, %v595
      %v753 = vadd.f32 %v726, %v599
      %v754 = vadd.f32 %v732, %v605
      %v755 = vadd.f32 %v736, %v609
      %v756 = vadd.f32 %v742, %v615
      %v757 = vadd.f32 %v746, %v619
      %vm758 = vcmask 31744
      %759 = vst.msk [vmem:[%s473] sm:$0xff] %vm758, %v750
      %760 = vst.msk [vmem:[%s473 + $0x8] sm:$0xff] %vm758, %v751
      %761 = vst.msk [vmem:[%s473 + $0x10] sm:$0xff] %vm758, %v752
      %762 = vst.msk [vmem:[%s473 + $0x18] sm:$0xff] %vm758, %v753
      %763 = vst.msk [vmem:[%s473 + $0x20] sm:$0xff] %vm758, %v754
      %764 = vst.msk [vmem:[%s473 + $0x28] sm:$0xff] %vm758, %v755
      %765 = vst.msk [vmem:[%s473 + $0x30] sm:$0xff] %vm758, %v756
      %766 = vst.msk [vmem:[%s473 + $0x38] sm:$0xff] %vm758, %v757
      %v767 = vpack.c.bf16 %v587, %v583
      %v768 = vpack.c.bf16 %v597, %v593
      %v769 = vpack.c.bf16 %v607, %v603
      %v770 = vpack.c.bf16 %v617, %v613
      %v771 = vld [vmem:[%s6] sm:$0x3]
      %v772 = vld [vmem:[%s7] sm:$0x1]
      %v774 = vlaneseq
      %v775 = vshrl.u32 %v774, 7
      %v776 = vsub.s32 0, %v775
      %v777 = vrot.slane %v772, %v776
      %v780 = vsel %vm758, %v767, 0
      %v783 = vsel %vm758, %v768, 0
      %v786 = vsel %vm758, %v769, 0
      %v789 = vsel %vm758, %v770, 0
      %vm791 = vcmask 1041408
      %v793 = vsel %vm791, %v771, 0
      %795 = vmatprep.subr.bf16.mxu0 0
      %796 = vmatpush1.bf16.msra.mxu0 0
      %797 = vmatprep.subr.bf16.mxu0 0
      %798 = vmatpush1.bf16.msra.mxu0 0
      %799 = vmatprep.subr.bf16.mxu0 0
      %800 = vmatpush1.bf16.msra.mxu0 0
      %801 = vmatprep.subr.bf16.mxu0 0
      %802 = vmatpush1.bf16.msra.mxu0 0
      %803 = vmatprep.subr.bf16.mxu0 0
      %804 = vmatpush1.bf16.msra.mxu0 0
      %805 = vmatprep.subr.bf16.mxu0 0
      %806 = vmatpush1.bf16.msra.mxu0 0
      %807 = vmatprep.subr.bf16.mxu0 0
      %808 = vmatpush1.bf16.msra.mxu0 0
      %809 = vmatprep.subr.bf16.mxu0 0
      %810 = vmatpush1.bf16.msra.mxu0 %v793
      %811 = vmatprep.subr.bf16.mxu0 0
      %812 = vmatpush2.bf16.msra.mxu0 0
      %813 = vmatprep.subr.bf16.mxu0 0
      %814 = vmatpush2.bf16.msra.mxu0 0
      %815 = vmatprep.subr.bf16.mxu0 0
      %816 = vmatpush2.bf16.msra.mxu0 0
      %817 = vmatprep.subr.bf16.mxu0 0
      %818 = vmatpush2.bf16.msra.mxu0 0
      %819 = vmatprep.subr.bf16.mxu0 0
      %820 = vmatpush2.bf16.msra.mxu0 0
      %821 = vmatprep.subr.bf16.mxu0 0
      %822 = vmatpush2.bf16.msra.mxu0 0
      %823 = vmatprep.subr.bf16.mxu0 0
      %824 = vmatpush2.bf16.msra.mxu0 0
      %825 = vmatprep.subr.bf16.mxu0 0
      %826 = vmatpush2.bf16.msra.mxu0 0
      %827 = vmatprep.mubr.bf16.mxu0 0
      %828 = vmatmul.mubr.bf16.gmra.mxu0 %v780
      %v829 = vpop.f32.mrf.mxu0
      %v830 = vadd.f32 %v777, %v829
      %v831 = vpop.f32.mrf.mxu0
      %v832 = vpop.f32.mrf.mxu0
      %v833 = vadd.f32 %v777, %v832
      %v834 = vpop.f32.mrf.mxu0
      %835 = vmatprep.mubr.bf16.mxu0 0
      %836 = vmatmul.mubr.bf16.gmra.mxu0 %v783
      %v837 = vpop.f32.mrf.mxu0
      %v838 = vadd.f32 %v777, %v837
      %v839 = vpop.f32.mrf.mxu0
      %v840 = vpop.f32.mrf.mxu0
      %v841 = vadd.f32 %v777, %v840
      %v842 = vpop.f32.mrf.mxu0
      %843 = vmatprep.mubr.bf16.mxu0 0
      %844 = vmatmul.mubr.bf16.gmra.mxu0 %v786
      %v845 = vpop.f32.mrf.mxu0
      %v846 = vadd.f32 %v777, %v845
      %v847 = vpop.f32.mrf.mxu0
      %v848 = vpop.f32.mrf.mxu0
      %v849 = vadd.f32 %v777, %v848
      %v850 = vpop.f32.mrf.mxu0
      %851 = vmatprep.mubr.bf16.mxu0 0
      %852 = vmatmul.mubr.bf16.gmra.mxu0 %v789
      %v853 = vpop.f32.mrf.mxu0
      %v854 = vadd.f32 %v777, %v853
      %v855 = vpop.f32.mrf.mxu0
      %v856 = vpop.f32.mrf.mxu0
      %v857 = vadd.f32 %v777, %v856
      %v858 = vpop.f32.mrf.mxu0
      %859 = vdwg.mxu0
      %v860 = vxor.u32 %v830, 2147483648
      %v861 = vxor.u32 %v833, 2147483648
      %v862 = vxor.u32 %v838, 2147483648
      %v863 = vxor.u32 %v841, 2147483648
      %v864 = vxor.u32 %v846, 2147483648
      %v865 = vxor.u32 %v849, 2147483648
      %v866 = vxor.u32 %v854, 2147483648
      %v867 = vxor.u32 %v857, 2147483648
      %v868 = vmul.f32 %v860, 1.442695
      %v869 = vpow.pop %v868
      %v870 = vmul.f32 %v861, 1.442695
      %v871 = vpow.pop %v870
      %v872 = vmul.f32 %v862, 1.442695
      %v873 = vpow.pop %v872
      %v874 = vmul.f32 %v863, 1.442695
      %v875 = vpow.pop %v874
      %v876 = vmul.f32 %v864, 1.442695
      %v877 = vpow.pop %v876
      %v878 = vmul.f32 %v865, 1.442695
      %v879 = vpow.pop %v878
      %v880 = vmul.f32 %v866, 1.442695
      %v881 = vpow.pop %v880
      %v882 = vmul.f32 %v867, 1.442695
      %v883 = vpow.pop %v882
      %v884 = vadd.f32 %v869, 1.0
      %v885 = vadd.f32 %v871, 1.0
      %v886 = vadd.f32 %v873, 1.0
      %v887 = vadd.f32 %v875, 1.0
      %v888 = vadd.f32 %v877, 1.0
      %v889 = vadd.f32 %v879, 1.0
      %v890 = vadd.f32 %v881, 1.0
      %v891 = vadd.f32 %v883, 1.0
      %v892 = vrcp.pop %v884
      %v893 = vmul.f32 1.0, %v892
      %v894 = vrcp.pop %v885
      %v895 = vmul.f32 1.0, %v894
      %v896 = vrcp.pop %v886
      %v897 = vmul.f32 1.0, %v896
      %v898 = vrcp.pop %v887
      %v899 = vmul.f32 1.0, %v898
      %v900 = vrcp.pop %v888
      %v901 = vmul.f32 1.0, %v900
      %v902 = vrcp.pop %v889
      %v903 = vmul.f32 1.0, %v902
      %v904 = vrcp.pop %v890
      %v905 = vmul.f32 1.0, %v904
      %v906 = vrcp.pop %v891
      %v907 = vmul.f32 1.0, %v906
      %v908 = vmul.f32 %v830, %v893
      %v909 = vmul.f32 %v833, %v895
      %v910 = vmul.f32 %v838, %v897
      %v911 = vmul.f32 %v841, %v899
      %v912 = vmul.f32 %v846, %v901
      %v913 = vmul.f32 %v849, %v903
      %v914 = vmul.f32 %v854, %v905
      %v915 = vmul.f32 %v857, %v907
      %vm916 = vcmask 519168
      %917 = vst.msk [vmem:[#allocation2] sm:$0xf] %vm916, 0
      %vm918 = vcmask 516096
      %919 = vst.msk [vmem:[#allocation2 + $0x4] sm:$0x1] %vm918, 0
      %s920 = scalar_lea.vmem [#allocation2], 72
      %921 = vst.msk [vmem:[%s920] sm:$0xf] %vm916, 0
      %922 = vst.msk [vmem:[%s920 + $0x4] sm:$0x1] %vm918, 0
      %vm923 = vcmask 516096
      %vm924 = vsmask.f32 256
      %vm925 = vmand %vm923, %vm924
      %v926 = vld [vmem:[#allocation2] sm:$0x1]
      %v927 = vsel %vm925, 0, %v926
      %928 = vst [vmem:[#allocation2] sm:$0x1] %v927
      %v929 = vld [vmem:[#allocation2 + $0x8] sm:$0x1]
      %v930 = vsel %vm925, 0, %v929
      %931 = vst [vmem:[#allocation2 + $0x8] sm:$0x1] %v930
      %v932 = vld [vmem:[#allocation2 + $0x10] sm:$0x1]
      %v933 = vsel %vm925, 0, %v932
      %934 = vst [vmem:[#allocation2 + $0x10] sm:$0x1] %v933
      %v935 = vld [vmem:[#allocation2 + $0x18] sm:$0x1]
      %v936 = vsel %vm925, 0, %v935
      %937 = vst [vmem:[#allocation2 + $0x18] sm:$0x1] %v936
      %v938 = vld [vmem:[#allocation2 + $0x20] sm:$0x1]
      %v939 = vsel %vm925, 0, %v938
      %940 = vst [vmem:[#allocation2 + $0x20] sm:$0x1] %v939
      %v941 = vld [vmem:[#allocation2 + $0x28] sm:$0x1]
      %v942 = vsel %vm925, 0, %v941
      %943 = vst [vmem:[#allocation2 + $0x28] sm:$0x1] %v942
      %v944 = vld [vmem:[#allocation2 + $0x30] sm:$0x1]
      %v945 = vsel %vm925, 0, %v944
      %946 = vst [vmem:[#allocation2 + $0x30] sm:$0x1] %v945
      %v947 = vld [vmem:[#allocation2 + $0x38] sm:$0x1]
      %v948 = vsel %vm925, 0, %v947
      %949 = vst [vmem:[#allocation2 + $0x38] sm:$0x1] %v948
      %v950 = vld [vmem:[#allocation2 + $0x40] sm:$0x1]
      %v951 = vsel %vm925, 0, %v950
      %952 = vst [vmem:[#allocation2 + $0x40] sm:$0x1] %v951
      %v953 = vld [vmem:[#allocation2 + $0x48] sm:$0x1]
      %v954 = vsel %vm925, 0, %v953
      %955 = vst [vmem:[#allocation2 + $0x48] sm:$0x1] %v954
      %vm956 = vsmask.f32 7938
      %vm957 = vmand %vm923, %vm956
      %v958 = vld [vmem:[#allocation2 + $0x4] sm:$0x1]
      %v959 = vsel %vm957, 0, %v958
      %960 = vst [vmem:[#allocation2 + $0x4] sm:$0x1] %v959
      %v961 = vld [vmem:[#allocation2 + $0xc] sm:$0x1]
      %v962 = vsel %vm957, 0, %v961
      %963 = vst [vmem:[#allocation2 + $0xc] sm:$0x1] %v962
      %v964 = vld [vmem:[#allocation2 + $0x14] sm:$0x1]
      %v965 = vsel %vm957, 0, %v964
      %966 = vst [vmem:[#allocation2 + $0x14] sm:$0x1] %v965
      %v967 = vld [vmem:[#allocation2 + $0x1c] sm:$0x1]
      %v968 = vsel %vm957, 0, %v967
      %969 = vst [vmem:[#allocation2 + $0x1c] sm:$0x1] %v968
      %v970 = vld [vmem:[#allocation2 + $0x24] sm:$0x1]
      %v971 = vsel %vm957, 0, %v970
      %972 = vst [vmem:[#allocation2 + $0x24] sm:$0x1] %v971
      %v973 = vld [vmem:[#allocation2 + $0x2c] sm:$0x1]
      %v974 = vsel %vm957, 0, %v973
      %975 = vst [vmem:[#allocation2 + $0x2c] sm:$0x1] %v974
      %v976 = vld [vmem:[#allocation2 + $0x34] sm:$0x1]
      %v977 = vsel %vm957, 0, %v976
      %978 = vst [vmem:[#allocation2 + $0x34] sm:$0x1] %v977
      %v979 = vld [vmem:[#allocation2 + $0x3c] sm:$0x1]
      %v980 = vsel %vm957, 0, %v979
      %981 = vst [vmem:[#allocation2 + $0x3c] sm:$0x1] %v980
      %v982 = vld [vmem:[#allocation2 + $0x44] sm:$0x1]
      %v983 = vsel %vm957, 0, %v982
      %984 = vst [vmem:[#allocation2 + $0x44] sm:$0x1] %v983
      %v985 = vld [vmem:[#allocation2 + $0x4c] sm:$0x1]
      %v986 = vsel %vm957, 0, %v985
      %987 = vst [vmem:[#allocation2 + $0x4c] sm:$0x1] %v986
      %v988 = vpack.c.bf16 %v909, %v908
      %v989 = vpack.c.bf16 %v911, %v910
      %v990 = vpack.c.bf16 %v913, %v912
      %v991 = vpack.c.bf16 %v915, %v914
      %v996 = vunpack.c.l.b16 %v988
      %v997 = vunpack.c.h.b16 %v988
      %v998 = vunpack.c.l.b16 %v989
      %v999 = vunpack.c.h.b16 %v989
      %v1000 = vunpack.c.l.b16 %v990
      %v1001 = vunpack.c.h.b16 %v990
      %v1002 = vunpack.c.l.b16 %v991
      %v1003 = vunpack.c.h.b16 %v991
      %v1004 = vpack.c.b16 %v996, %v996
      %v1005 = vpack.c.b16 %v997, %v997
      %v1006 = vpack.c.b16 %v998, %v998
      %v1007 = vpack.c.b16 %v999, %v999
      %v1008 = vpack.c.b16 %v1000, %v1000
      %v1009 = vpack.c.b16 %v1001, %v1001
      %v1010 = vpack.c.b16 %v1002, %v1002
      %v1011 = vpack.c.b16 %v1003, %v1003
      %v1013 = vshrl.u32 %v1004, 16
      %v1015 = vrot.slane %v1013, 7
      %v1016 = vshll.u32 %v1004, 16
      %v1018 = vor.u32 %v1015, %v1016
      %v1019 = vrot.slane %v1015, 4
      %v1021 = vshrl.u32 %v1005, 16
      %v1023 = vrot.slane %v1021, 7
      %v1024 = vshll.u32 %v1005, 16
      %v1026 = vor.u32 %v1023, %v1024
      %v1027 = vrot.slane %v1023, 4
      %v1029 = vshrl.u32 %v1006, 16
      %v1031 = vrot.slane %v1029, 7
      %v1032 = vshll.u32 %v1006, 16
      %v1034 = vor.u32 %v1031, %v1032
      %v1035 = vrot.slane %v1031, 4
      %v1037 = vshrl.u32 %v1007, 16
      %v1039 = vrot.slane %v1037, 7
      %v1040 = vshll.u32 %v1007, 16
      %v1042 = vor.u32 %v1039, %v1040
      %v1043 = vrot.slane %v1039, 4
      %v1045 = vshrl.u32 %v1008, 16
      %v1047 = vrot.slane %v1045, 7
      %v1048 = vshll.u32 %v1008, 16
      %v1050 = vor.u32 %v1047, %v1048
      %v1051 = vrot.slane %v1047, 4
      %v1053 = vshrl.u32 %v1009, 16
      %v1055 = vrot.slane %v1053, 7
      %v1056 = vshll.u32 %v1009, 16
      %v1058 = vor.u32 %v1055, %v1056
      %v1059 = vrot.slane %v1055, 4
      %v1061 = vshrl.u32 %v1010, 16
      %v1063 = vrot.slane %v1061, 7
      %v1064 = vshll.u32 %v1010, 16
      %v1066 = vor.u32 %v1063, %v1064
      %v1067 = vrot.slane %v1063, 4
      %v1069 = vshrl.u32 %v1011, 16
      %v1071 = vrot.slane %v1069, 7
      %v1072 = vshll.u32 %v1011, 16
      %v1074 = vor.u32 %v1071, %v1072
      %v1075 = vrot.slane %v1071, 4
      %s1092 = scalar_lea.vmem [#allocation2], 8
      %vm1093 = vcmask 519168
      %vm1094 = vmand %vm1093, %vm956
      %v1095 = vld [vmem:[%s1092] sm:$0xf]
      %v1096 = vsel %vm1094, %v1018, %v1095
      %1097 = vst [vmem:[%s1092] sm:$0xf] %v1096
      %v1098 = vld [vmem:[%s1092 + $0x4] sm:$0x1]
      %v1099 = vsel %vm925, %v1019, %v1098
      %1100 = vst [vmem:[%s1092 + $0x4] sm:$0x1] %v1099
      %v1101 = vld [vmem:[%s1092 + $0x8] sm:$0xf]
      %v1102 = vsel %vm1094, %v1026, %v1101
      %1103 = vst [vmem:[%s1092 + $0x8] sm:$0xf] %v1102
      %v1104 = vld [vmem:[%s1092 + $0xc] sm:$0x1]
      %v1105 = vsel %vm925, %v1027, %v1104
      %1106 = vst [vmem:[%s1092 + $0xc] sm:$0x1] %v1105
      %v1107 = vld [vmem:[%s1092 + $0x10] sm:$0xf]
      %v1108 = vsel %vm1094, %v1034, %v1107
      %1109 = vst [vmem:[%s1092 + $0x10] sm:$0xf] %v1108
      %v1110 = vld [vmem:[%s1092 + $0x14] sm:$0x1]
      %v1111 = vsel %vm925, %v1035, %v1110
      %1112 = vst [vmem:[%s1092 + $0x14] sm:$0x1] %v1111
      %v1113 = vld [vmem:[%s1092 + $0x18] sm:$0xf]
      %v1114 = vsel %vm1094, %v1042, %v1113
      %1115 = vst [vmem:[%s1092 + $0x18] sm:$0xf] %v1114
      %v1116 = vld [vmem:[%s1092 + $0x1c] sm:$0x1]
      %v1117 = vsel %vm925, %v1043, %v1116
      %1118 = vst [vmem:[%s1092 + $0x1c] sm:$0x1] %v1117
      %v1119 = vld [vmem:[%s1092 + $0x20] sm:$0xf]
      %v1120 = vsel %vm1094, %v1050, %v1119
      %1121 = vst [vmem:[%s1092 + $0x20] sm:$0xf] %v1120
      %v1122 = vld [vmem:[%s1092 + $0x24] sm:$0x1]
      %v1123 = vsel %vm925, %v1051, %v1122
      %1124 = vst [vmem:[%s1092 + $0x24] sm:$0x1] %v1123
      %v1125 = vld [vmem:[%s1092 + $0x28] sm:$0xf]
      %v1126 = vsel %vm1094, %v1058, %v1125
      %1127 = vst [vmem:[%s1092 + $0x28] sm:$0xf] %v1126
      %v1128 = vld [vmem:[%s1092 + $0x2c] sm:$0x1]
      %v1129 = vsel %vm925, %v1059, %v1128
      %1130 = vst [vmem:[%s1092 + $0x2c] sm:$0x1] %v1129
      %v1131 = vld [vmem:[%s1092 + $0x30] sm:$0xf]
      %v1132 = vsel %vm1094, %v1066, %v1131
      %1133 = vst [vmem:[%s1092 + $0x30] sm:$0xf] %v1132
      %v1134 = vld [vmem:[%s1092 + $0x34] sm:$0x1]
      %v1135 = vsel %vm925, %v1067, %v1134
      %1136 = vst [vmem:[%s1092 + $0x34] sm:$0x1] %v1135
      %v1137 = vld [vmem:[%s1092 + $0x38] sm:$0xf]
      %v1138 = vsel %vm1094, %v1074, %v1137
      %1139 = vst [vmem:[%s1092 + $0x38] sm:$0xf] %v1138
      %v1140 = vld [vmem:[%s1092 + $0x3c] sm:$0x1]
      %v1141 = vsel %vm925, %v1075, %v1140
      %1142 = vst [vmem:[%s1092 + $0x3c] sm:$0x1] %v1141
      %v1143 = vld [vmem:[#allocation2] sm:$0xf]
      %v1144 = vld [vmem:[#allocation2 + $0x8] sm:$0xf]
      %v1145 = vld [vmem:[#allocation2 + $0x10] sm:$0xf]
      %v1146 = vld [vmem:[#allocation2 + $0x18] sm:$0xf]
      %v1147 = vld [vmem:[#allocation2 + $0x20] sm:$0xf]
      %v1148 = vld [vmem:[#allocation2 + $0x28] sm:$0xf]
      %v1149 = vld [vmem:[#allocation2 + $0x30] sm:$0xf]
      %v1150 = vld [vmem:[#allocation2 + $0x38] sm:$0xf]
      %v1151 = vld [vmem:[%s8] sm:$0xf]
      %v1152 = vld [vmem:[%s8 + $0x4] sm:$0xf]
      %v1153 = vld [vmem:[%s8 + $0x8] sm:$0xf]
      %v1154 = vld [vmem:[%s8 + $0xc] sm:$0xf]
      %v1155 = vld [vmem:[%s8 + $0x10] sm:$0xf]
      %v1156 = vld [vmem:[%s8 + $0x14] sm:$0xf]
      %v1157 = vld [vmem:[%s8 + $0x18] sm:$0xf]
      %v1158 = vld [vmem:[%s8 + $0x1c] sm:$0xf]
      %v1159 = vld [vmem:[#allocation2 + $0x4] sm:$0x1]
      %v1160 = vld [vmem:[#allocation2 + $0xc] sm:$0x1]
      %v1161 = vld [vmem:[#allocation2 + $0x14] sm:$0x1]
      %v1162 = vld [vmem:[#allocation2 + $0x1c] sm:$0x1]
      %v1163 = vld [vmem:[#allocation2 + $0x24] sm:$0x1]
      %v1164 = vld [vmem:[#allocation2 + $0x2c] sm:$0x1]
      %v1165 = vld [vmem:[#allocation2 + $0x34] sm:$0x1]
      %v1166 = vld [vmem:[#allocation2 + $0x3c] sm:$0x1]
      %vm1167 = vsmask.f32 3328
      %vm1168 = vsmask.f32 7440
      %vm1169 = vmor %vm1167, %vm1168
      %v1171 = vshrl.u32 %v1143, 16
      %v1173 = vrot.slane %v1171, 4
      %v1174 = vshll.u32 %v1143, 16
      %v1176 = vrot.slane %v1174, 5
      %v1177 = vor.u32 %v1173, %v1176
      %v1178 = vrot.slane %v1177, 4
      %v1180 = vshll.u32 %v1159, 16
      %v1182 = vrot.slane %v1180, 5
      %v1183 = vsel %vm1169, %v1178, %v1182
      %v1185 = vshrl.u32 %v1144, 16
      %v1187 = vrot.slane %v1185, 4
      %v1188 = vshll.u32 %v1144, 16
      %v1190 = vrot.slane %v1188, 5
      %v1191 = vor.u32 %v1187, %v1190
      %v1192 = vrot.slane %v1191, 4
      %v1194 = vshll.u32 %v1160, 16
      %v1196 = vrot.slane %v1194, 5
      %v1197 = vsel %vm1169, %v1192, %v1196
      %v1199 = vshrl.u32 %v1145, 16
      %v1201 = vrot.slane %v1199, 4
      %v1202 = vshll.u32 %v1145, 16
      %v1204 = vrot.slane %v1202, 5
      %v1205 = vor.u32 %v1201, %v1204
      %v1206 = vrot.slane %v1205, 4
      %v1208 = vshll.u32 %v1161, 16
      %v1210 = vrot.slane %v1208, 5
      %v1211 = vsel %vm1169, %v1206, %v1210
      %v1213 = vshrl.u32 %v1146, 16
      %v1215 = vrot.slane %v1213, 4
      %v1216 = vshll.u32 %v1146, 16
      %v1218 = vrot.slane %v1216, 5
      %v1219 = vor.u32 %v1215, %v1218
      %v1220 = vrot.slane %v1219, 4
      %v1222 = vshll.u32 %v1162, 16
      %v1224 = vrot.slane %v1222, 5
      %v1225 = vsel %vm1169, %v1220, %v1224
      %v1227 = vshrl.u32 %v1147, 16
      %v1229 = vrot.slane %v1227, 4
      %v1230 = vshll.u32 %v1147, 16
      %v1232 = vrot.slane %v1230, 5
      %v1233 = vor.u32 %v1229, %v1232
      %v1234 = vrot.slane %v1233, 4
      %v1236 = vshll.u32 %v1163, 16
      %v1238 = vrot.slane %v1236, 5
      %v1239 = vsel %vm1169, %v1234, %v1238
      %v1241 = vshrl.u32 %v1148, 16
      %v1243 = vrot.slane %v1241, 4
      %v1244 = vshll.u32 %v1148, 16
      %v1246 = vrot.slane %v1244, 5
      %v1247 = vor.u32 %v1243, %v1246
      %v1248 = vrot.slane %v1247, 4
      %v1250 = vshll.u32 %v1164, 16
      %v1252 = vrot.slane %v1250, 5
      %v1253 = vsel %vm1169, %v1248, %v1252
      %v1255 = vshrl.u32 %v1149, 16
      %v1257 = vrot.slane %v1255, 4
      %v1258 = vshll.u32 %v1149, 16
      %v1260 = vrot.slane %v1258, 5
      %v1261 = vor.u32 %v1257, %v1260
      %v1262 = vrot.slane %v1261, 4
      %v1264 = vshll.u32 %v1165, 16
      %v1266 = vrot.slane %v1264, 5
      %v1267 = vsel %vm1169, %v1262, %v1266
      %v1269 = vshrl.u32 %v1150, 16
      %v1271 = vrot.slane %v1269, 4
      %v1272 = vshll.u32 %v1150, 16
      %v1274 = vrot.slane %v1272, 5
      %v1275 = vor.u32 %v1271, %v1274
      %v1276 = vrot.slane %v1275, 4
      %v1278 = vshll.u32 %v1166, 16
      %v1280 = vrot.slane %v1278, 5
      %v1281 = vsel %vm1169, %v1276, %v1280
      %s1282 = scalar_lea.vmem %s8, 32
      %v1283 = vld [vmem:[%s1282] sm:$0xf]
      %v1284 = vld [vmem:[%s1282 + $0x4] sm:$0xf]
      %v1285 = vld [vmem:[%s1282 + $0x8] sm:$0xf]
      %v1286 = vld [vmem:[%s1282 + $0xc] sm:$0xf]
      %v1287 = vld [vmem:[%s1282 + $0x10] sm:$0xf]
      %v1288 = vld [vmem:[%s1282 + $0x14] sm:$0xf]
      %v1289 = vld [vmem:[%s1282 + $0x18] sm:$0xf]
      %v1290 = vld [vmem:[%s1282 + $0x1c] sm:$0xf]
      %v1291 = vunpack.c.l.b16 %v1183
      %v1292 = vunpack.c.l.b16 %v1197
      %v1293 = vunpack.c.l.b16 %v1211
      %v1294 = vunpack.c.l.b16 %v1225
      %v1295 = vunpack.c.l.b16 %v1239
      %v1296 = vunpack.c.l.b16 %v1253
      %v1297 = vunpack.c.l.b16 %v1267
      %v1298 = vunpack.c.l.b16 %v1281
      %v1299 = vpack.c.b16 %v1292, %v1291
      %v1300 = vpack.c.b16 %v1294, %v1293
      %v1301 = vpack.c.b16 %v1296, %v1295
      %v1302 = vpack.c.b16 %v1298, %v1297
      %v1311 = vunpack.c.l.b16 %v1283
      %v1312 = vunpack.c.l.b16 %v1284
      %v1313 = vunpack.c.l.b16 %v1285
      %v1314 = vunpack.c.l.b16 %v1286
      %v1315 = vunpack.c.l.b16 %v1287
      %v1316 = vunpack.c.l.b16 %v1288
      %v1317 = vunpack.c.l.b16 %v1289
      %v1318 = vunpack.c.l.b16 %v1290
      %v1319 = vpack.c.b16 %v1312, %v1311
      %v1320 = vpack.c.b16 %v1314, %v1313
      %v1321 = vpack.c.b16 %v1316, %v1315
      %v1322 = vpack.c.b16 %v1318, %v1317
      %vm1327 = vcmask 523264
      %v1329 = vsel %vm1327, %v1299, 0
      %v1332 = vsel %vm1327, %v1300, 0
      %v1335 = vsel %vm1327, %v1301, 0
      %v1338 = vsel %vm1327, %v1302, 0
      %1340 = vmatprep.subr.bf16.mxu0 0
      %1341 = vmatpush1.bf16.msra.mxu0 0
      %1342 = vmatprep.subr.bf16.mxu0 0
      %1343 = vmatpush1.bf16.msra.mxu0 0
      %1344 = vmatprep.subr.bf16.mxu0 0
      %1345 = vmatpush1.bf16.msra.mxu0 0
      %1346 = vmatprep.subr.bf16.mxu0 0
      %1347 = vmatpush1.bf16.msra.mxu0 0
      %1348 = vmatprep.subr.bf16.mxu0 0
      %1349 = vmatpush1.bf16.msra.mxu0 %v1322
      %1350 = vmatprep.subr.bf16.mxu0 0
      %1351 = vmatpush1.bf16.msra.mxu0 %v1321
      %1352 = vmatprep.subr.bf16.mxu0 0
      %1353 = vmatpush1.bf16.msra.mxu0 %v1320
      %1354 = vmatprep.subr.bf16.mxu0 0
      %1355 = vmatpush1.bf16.msra.mxu0 %v1319
      %1356 = vmatprep.subr.bf16.mxu0 0
      %1357 = vmatpush2.bf16.msra.mxu0 0
      %1358 = vmatprep.subr.bf16.mxu0 0
      %1359 = vmatpush2.bf16.msra.mxu0 0
      %1360 = vmatprep.subr.bf16.mxu0 0
      %1361 = vmatpush2.bf16.msra.mxu0 0
      %1362 = vmatprep.subr.bf16.mxu0 0
      %1363 = vmatpush2.bf16.msra.mxu0 0
      %1364 = vmatprep.subr.bf16.mxu0 0
      %1365 = vmatpush2.bf16.msra.mxu0 0
      %1366 = vmatprep.subr.bf16.mxu0 0
      %1367 = vmatpush2.bf16.msra.mxu0 0
      %1368 = vmatprep.subr.bf16.mxu0 0
      %1369 = vmatpush2.bf16.msra.mxu0 0
      %1370 = vmatprep.subr.bf16.mxu0 0
      %1371 = vmatpush2.bf16.msra.mxu0 0
      %1372 = vmatprep.mubr.bf16.mxu0 0
      %1373 = vmatmul.mubr.bf16.gmra.mxu0 %v1329
      %v1374 = vpop.f32.mrf.mxu0
      %v1375 = vadd.f32 0.0, %v1374
      %v1376 = vpop.f32.mrf.mxu0
      %v1377 = vpop.f32.mrf.mxu0
      %v1378 = vadd.f32 0.0, %v1377
      %v1379 = vpop.f32.mrf.mxu0
      %1380 = vmatprep.mubr.bf16.mxu0 0
      %1381 = vmatmul.mubr.bf16.gmra.mxu0 %v1332
      %v1382 = vpop.f32.mrf.mxu0
      %v1383 = vadd.f32 0.0, %v1382
      %v1384 = vpop.f32.mrf.mxu0
      %v1385 = vpop.f32.mrf.mxu0
      %v1386 = vadd.f32 0.0, %v1385
      %v1387 = vpop.f32.mrf.mxu0
      %1388 = vmatprep.mubr.bf16.mxu0 0
      %1389 = vmatmul.mubr.bf16.gmra.mxu0 %v1335
      %v1390 = vpop.f32.mrf.mxu0
      %v1391 = vadd.f32 0.0, %v1390
      %v1392 = vpop.f32.mrf.mxu0
      %v1393 = vpop.f32.mrf.mxu0
      %v1394 = vadd.f32 0.0, %v1393
      %v1395 = vpop.f32.mrf.mxu0
      %1396 = vmatprep.mubr.bf16.mxu0 0
      %1397 = vmatmul.mubr.bf16.gmra.mxu0 %v1338
      %v1398 = vpop.f32.mrf.mxu0
      %v1399 = vadd.f32 0.0, %v1398
      %v1400 = vpop.f32.mrf.mxu0
      %v1401 = vpop.f32.mrf.mxu0
      %v1402 = vadd.f32 0.0, %v1401
      %v1403 = vpop.f32.mrf.mxu0
      %1404 = vdwg.mxu0
      %v1413 = vunpack.c.l.b16 %v1143
      %v1414 = vunpack.c.l.b16 %v1144
      %v1415 = vunpack.c.l.b16 %v1145
      %v1416 = vunpack.c.l.b16 %v1146
      %v1417 = vunpack.c.l.b16 %v1147
      %v1418 = vunpack.c.l.b16 %v1148
      %v1419 = vunpack.c.l.b16 %v1149
      %v1420 = vunpack.c.l.b16 %v1150
      %v1421 = vpack.c.b16 %v1414, %v1413
      %v1422 = vpack.c.b16 %v1416, %v1415
      %v1423 = vpack.c.b16 %v1418, %v1417
      %v1424 = vpack.c.b16 %v1420, %v1419
      %v1433 = vunpack.c.l.b16 %v1151
      %v1434 = vunpack.c.l.b16 %v1152
      %v1435 = vunpack.c.l.b16 %v1153
      %v1436 = vunpack.c.l.b16 %v1154
      %v1437 = vunpack.c.l.b16 %v1155
      %v1438 = vunpack.c.l.b16 %v1156
      %v1439 = vunpack.c.l.b16 %v1157
      %v1440 = vunpack.c.l.b16 %v1158
      %v1441 = vpack.c.b16 %v1434, %v1433
      %v1442 = vpack.c.b16 %v1436, %v1435
      %v1443 = vpack.c.b16 %v1438, %v1437
      %v1444 = vpack.c.b16 %v1440, %v1439
      %v1450 = vsel %vm1327, %v1421, 0
      %v1453 = vsel %vm1327, %v1422, 0
      %v1456 = vsel %vm1327, %v1423, 0
      %v1459 = vsel %vm1327, %v1424, 0
      %1461 = vmatprep.subr.bf16.mxu0 0
      %1462 = vmatpush1.bf16.msra.mxu0 0
      %1463 = vmatprep.subr.bf16.mxu0 0
      %1464 = vmatpush1.bf16.msra.mxu0 0
      %1465 = vmatprep.subr.bf16.mxu0 0
      %1466 = vmatpush1.bf16.msra.mxu0 0
      %1467 = vmatprep.subr.bf16.mxu0 0
      %1468 = vmatpush1.bf16.msra.mxu0 0
      %1469 = vmatprep.subr.bf16.mxu0 0
      %1470 = vmatpush1.bf16.msra.mxu0 %v1444
      %1471 = vmatprep.subr.bf16.mxu0 0
      %1472 = vmatpush1.bf16.msra.mxu0 %v1443
      %1473 = vmatprep.subr.bf16.mxu0 0
      %1474 = vmatpush1.bf16.msra.mxu0 %v1442
      %1475 = vmatprep.subr.bf16.mxu0 0
      %1476 = vmatpush1.bf16.msra.mxu0 %v1441
      %1477 = vmatprep.subr.bf16.mxu0 0
      %1478 = vmatpush2.bf16.msra.mxu0 0
      %1479 = vmatprep.subr.bf16.mxu0 0
      %1480 = vmatpush2.bf16.msra.mxu0 0
      %1481 = vmatprep.subr.bf16.mxu0 0
      %1482 = vmatpush2.bf16.msra.mxu0 0
      %1483 = vmatprep.subr.bf16.mxu0 0
      %1484 = vmatpush2.bf16.msra.mxu0 0
      %1485 = vmatprep.subr.bf16.mxu0 0
      %1486 = vmatpush2.bf16.msra.mxu0 0
      %1487 = vmatprep.subr.bf16.mxu0 0
      %1488 = vmatpush2.bf16.msra.mxu0 0
      %1489 = vmatprep.subr.bf16.mxu0 0
      %1490 = vmatpush2.bf16.msra.mxu0 0
      %1491 = vmatprep.subr.bf16.mxu0 0
      %1492 = vmatpush2.bf16.msra.mxu0 0
      %1493 = vmatprep.mubr.bf16.mxu0 0
      %1494 = vmatmul.mubr.bf16.gmra.mxu0 %v1450
      %v1495 = vpop.f32.mrf.mxu0
      %v1496 = vadd.f32 %v1375, %v1495
      %v1497 = vpop.f32.mrf.mxu0
      %v1498 = vpop.f32.mrf.mxu0
      %v1499 = vadd.f32 %v1378, %v1498
      %v1500 = vpop.f32.mrf.mxu0
      %1501 = vmatprep.mubr.bf16.mxu0 0
      %1502 = vmatmul.mubr.bf16.gmra.mxu0 %v1453
      %v1503 = vpop.f32.mrf.mxu0
      %v1504 = vadd.f32 %v1383, %v1503
      %v1505 = vpop.f32.mrf.mxu0
      %v1506 = vpop.f32.mrf.mxu0
      %v1507 = vadd.f32 %v1386, %v1506
      %v1508 = vpop.f32.mrf.mxu0
      %1509 = vmatprep.mubr.bf16.mxu0 0
      %1510 = vmatmul.mubr.bf16.gmra.mxu0 %v1456
      %v1511 = vpop.f32.mrf.mxu0
      %v1512 = vadd.f32 %v1391, %v1511
      %v1513 = vpop.f32.mrf.mxu0
      %v1514 = vpop.f32.mrf.mxu0
      %v1515 = vadd.f32 %v1394, %v1514
      %v1516 = vpop.f32.mrf.mxu0
      %1517 = vmatprep.mubr.bf16.mxu0 0
      %1518 = vmatmul.mubr.bf16.gmra.mxu0 %v1459
      %v1519 = vpop.f32.mrf.mxu0
      %v1520 = vadd.f32 %v1399, %v1519
      %v1521 = vpop.f32.mrf.mxu0
      %v1522 = vpop.f32.mrf.mxu0
      %v1523 = vadd.f32 %v1402, %v1522
      %v1524 = vpop.f32.mrf.mxu0
      %1525 = vdwg.mxu0
      %v1526 = vld [vmem:[#allocation2] sm:$0xe]
      %v1527 = vld [vmem:[#allocation2 + $0x8] sm:$0xe]
      %v1528 = vld [vmem:[#allocation2 + $0x10] sm:$0xe]
      %v1529 = vld [vmem:[#allocation2 + $0x18] sm:$0xe]
      %v1530 = vld [vmem:[#allocation2 + $0x20] sm:$0xe]
      %v1531 = vld [vmem:[#allocation2 + $0x28] sm:$0xe]
      %v1532 = vld [vmem:[#allocation2 + $0x30] sm:$0xe]
      %v1533 = vld [vmem:[#allocation2 + $0x38] sm:$0xe]
      %vm1550 = vcmask 1042432
      %vm1551 = vcmask 1046532
      %vm1552 = vmor %vm1550, %vm1551
      %v1553 = vrot.slane %v1526, 5
      %v1554 = vrot.slane %v1553, 4
      %v1555 = vrot.slane %v1159, 5
      %v1556 = vsel %vm1552, %v1554, %v1555
      %v1557 = vrot.slane %v1527, 5
      %v1558 = vrot.slane %v1557, 4
      %v1559 = vrot.slane %v1160, 5
      %v1560 = vsel %vm1552, %v1558, %v1559
      %v1561 = vrot.slane %v1528, 5
      %v1562 = vrot.slane %v1561, 4
      %v1563 = vrot.slane %v1161, 5
      %v1564 = vsel %vm1552, %v1562, %v1563
      %v1565 = vrot.slane %v1529, 5
      %v1566 = vrot.slane %v1565, 4
      %v1567 = vrot.slane %v1162, 5
      %v1568 = vsel %vm1552, %v1566, %v1567
      %v1569 = vrot.slane %v1530, 5
      %v1570 = vrot.slane %v1569, 4
      %v1571 = vrot.slane %v1163, 5
      %v1572 = vsel %vm1552, %v1570, %v1571
      %v1573 = vrot.slane %v1531, 5
      %v1574 = vrot.slane %v1573, 4
      %v1575 = vrot.slane %v1164, 5
      %v1576 = vsel %vm1552, %v1574, %v1575
      %v1577 = vrot.slane %v1532, 5
      %v1578 = vrot.slane %v1577, 4
      %v1579 = vrot.slane %v1165, 5
      %v1580 = vsel %vm1552, %v1578, %v1579
      %v1581 = vrot.slane %v1533, 5
      %v1582 = vrot.slane %v1581, 4
      %v1583 = vrot.slane %v1166, 5
      %v1584 = vsel %vm1552, %v1582, %v1583
      %s1585 = scalar_lea.vmem %s8, 64
      %v1586 = vld [vmem:[%s1585] sm:$0xf]
      %v1587 = vld [vmem:[%s1585 + $0x4] sm:$0xf]
      %v1588 = vld [vmem:[%s1585 + $0x8] sm:$0xf]
      %v1589 = vld [vmem:[%s1585 + $0xc] sm:$0xf]
      %v1590 = vld [vmem:[%s1585 + $0x10] sm:$0xf]
      %v1591 = vld [vmem:[%s1585 + $0x14] sm:$0xf]
      %v1592 = vld [vmem:[%s1585 + $0x18] sm:$0xf]
      %v1593 = vld [vmem:[%s1585 + $0x1c] sm:$0xf]
      %v1594 = vunpack.c.l.b16 %v1556
      %v1595 = vunpack.c.l.b16 %v1560
      %v1596 = vunpack.c.l.b16 %v1564
      %v1597 = vunpack.c.l.b16 %v1568
      %v1598 = vunpack.c.l.b16 %v1572
      %v1599 = vunpack.c.l.b16 %v1576
      %v1600 = vunpack.c.l.b16 %v1580
      %v1601 = vunpack.c.l.b16 %v1584
      %v1602 = vpack.c.b16 %v1595, %v1594
      %v1603 = vpack.c.b16 %v1597, %v1596
      %v1604 = vpack.c.b16 %v1599, %v1598
      %v1605 = vpack.c.b16 %v1601, %v1600
      %v1614 = vunpack.c.l.b16 %v1586
      %v1615 = vunpack.c.l.b16 %v1587
      %v1616 = vunpack.c.l.b16 %v1588
      %v1617 = vunpack.c.l.b16 %v1589
      %v1618 = vunpack.c.l.b16 %v1590
      %v1619 = vunpack.c.l.b16 %v1591
      %v1620 = vunpack.c.l.b16 %v1592
      %v1621 = vunpack.c.l.b16 %v1593
      %v1622 = vpack.c.b16 %v1615, %v1614
      %v1623 = vpack.c.b16 %v1617, %v1616
      %v1624 = vpack.c.b16 %v1619, %v1618
      %v1625 = vpack.c.b16 %v1621, %v1620
      %v1631 = vsel %vm1327, %v1602, 0
      %v1634 = vsel %vm1327, %v1603, 0
      %v1637 = vsel %vm1327, %v1604, 0
      %v1640 = vsel %vm1327, %v1605, 0
      %1642 = vmatprep.subr.bf16.mxu0 0
      %1643 = vmatpush1.bf16.msra.mxu0 0
      %1644 = vmatprep.subr.bf16.mxu0 0
      %1645 = vmatpush1.bf16.msra.mxu0 0
      %1646 = vmatprep.subr.bf16.mxu0 0
      %1647 = vmatpush1.bf16.msra.mxu0 0
      %1648 = vmatprep.subr.bf16.mxu0 0
      %1649 = vmatpush1.bf16.msra.mxu0 0
      %1650 = vmatprep.subr.bf16.mxu0 0
      %1651 = vmatpush1.bf16.msra.mxu0 %v1625
      %1652 = vmatprep.subr.bf16.mxu0 0
      %1653 = vmatpush1.bf16.msra.mxu0 %v1624
      %1654 = vmatprep.subr.bf16.mxu0 0
      %1655 = vmatpush1.bf16.msra.mxu0 %v1623
      %1656 = vmatprep.subr.bf16.mxu0 0
      %1657 = vmatpush1.bf16.msra.mxu0 %v1622
      %1658 = vmatprep.subr.bf16.mxu0 0
      %1659 = vmatpush2.bf16.msra.mxu0 0
      %1660 = vmatprep.subr.bf16.mxu0 0
      %1661 = vmatpush2.bf16.msra.mxu0 0
      %1662 = vmatprep.subr.bf16.mxu0 0
      %1663 = vmatpush2.bf16.msra.mxu0 0
      %1664 = vmatprep.subr.bf16.mxu0 0
      %1665 = vmatpush2.bf16.msra.mxu0 0
      %1666 = vmatprep.subr.bf16.mxu0 0
      %1667 = vmatpush2.bf16.msra.mxu0 0
      %1668 = vmatprep.subr.bf16.mxu0 0
      %1669 = vmatpush2.bf16.msra.mxu0 0
      %1670 = vmatprep.subr.bf16.mxu0 0
      %1671 = vmatpush2.bf16.msra.mxu0 0
      %1672 = vmatprep.subr.bf16.mxu0 0
      %1673 = vmatpush2.bf16.msra.mxu0 0
      %1674 = vmatprep.mubr.bf16.mxu0 0
      %1675 = vmatmul.mubr.bf16.gmra.mxu0 %v1631
      %v1676 = vpop.f32.mrf.mxu0
      %v1677 = vadd.f32 0.0, %v1676
      %v1678 = vpop.f32.mrf.mxu0
      %v1679 = vpop.f32.mrf.mxu0
      %v1680 = vadd.f32 0.0, %v1679
      %v1681 = vpop.f32.mrf.mxu0
      %1682 = vmatprep.mubr.bf16.mxu0 0
      %1683 = vmatmul.mubr.bf16.gmra.mxu0 %v1634
      %v1684 = vpop.f32.mrf.mxu0
      %v1685 = vadd.f32 0.0, %v1684
      %v1686 = vpop.f32.mrf.mxu0
      %v1687 = vpop.f32.mrf.mxu0
      %v1688 = vadd.f32 0.0, %v1687
      %v1689 = vpop.f32.mrf.mxu0
      %1690 = vmatprep.mubr.bf16.mxu0 0
      %1691 = vmatmul.mubr.bf16.gmra.mxu0 %v1637
      %v1692 = vpop.f32.mrf.mxu0
      %v1693 = vadd.f32 0.0, %v1692
      %v1694 = vpop.f32.mrf.mxu0
      %v1695 = vpop.f32.mrf.mxu0
      %v1696 = vadd.f32 0.0, %v1695
      %v1697 = vpop.f32.mrf.mxu0
      %1698 = vmatprep.mubr.bf16.mxu0 0
      %1699 = vmatmul.mubr.bf16.gmra.mxu0 %v1640
      %v1700 = vpop.f32.mrf.mxu0
      %v1701 = vadd.f32 0.0, %v1700
      %v1702 = vpop.f32.mrf.mxu0
      %v1703 = vpop.f32.mrf.mxu0
      %v1704 = vadd.f32 0.0, %v1703
      %v1705 = vpop.f32.mrf.mxu0
      %1706 = vdwg.mxu0
      %v1707 = vadd.f32 %v1496, %v1677
      %v1708 = vadd.f32 %v1499, %v1680
      %v1709 = vadd.f32 %v1504, %v1685
      %v1710 = vadd.f32 %v1507, %v1688
      %v1711 = vadd.f32 %v1512, %v1693
      %v1712 = vadd.f32 %v1515, %v1696
      %v1713 = vadd.f32 %v1520, %v1701
      %v1714 = vadd.f32 %v1523, %v1704
      %v1715 = vld [vmem:[%s1092] sm:$0xf]
      %v1716 = vld [vmem:[%s1092 + $0x8] sm:$0xf]
      %v1717 = vld [vmem:[%s1092 + $0x10] sm:$0xf]
      %v1718 = vld [vmem:[%s1092 + $0x18] sm:$0xf]
      %v1719 = vld [vmem:[%s1092 + $0x20] sm:$0xf]
      %v1720 = vld [vmem:[%s1092 + $0x28] sm:$0xf]
      %v1721 = vld [vmem:[%s1092 + $0x30] sm:$0xf]
      %v1722 = vld [vmem:[%s1092 + $0x38] sm:$0xf]
      %s1723 = scalar_lea.vmem %s8, 96
      %v1724 = vld [vmem:[%s1723] sm:$0xf]
      %v1725 = vld [vmem:[%s1723 + $0x4] sm:$0xf]
      %v1726 = vld [vmem:[%s1723 + $0x8] sm:$0xf]
      %v1727 = vld [vmem:[%s1723 + $0xc] sm:$0xf]
      %v1728 = vld [vmem:[%s1723 + $0x10] sm:$0xf]
      %v1729 = vld [vmem:[%s1723 + $0x14] sm:$0xf]
      %v1730 = vld [vmem:[%s1723 + $0x18] sm:$0xf]
      %v1731 = vld [vmem:[%s1723 + $0x1c] sm:$0xf]
      %v1740 = vunpack.c.l.b16 %v1715
      %v1741 = vunpack.c.l.b16 %v1716
      %v1742 = vunpack.c.l.b16 %v1717
      %v1743 = vunpack.c.l.b16 %v1718
      %v1744 = vunpack.c.l.b16 %v1719
      %v1745 = vunpack.c.l.b16 %v1720
      %v1746 = vunpack.c.l.b16 %v1721
      %v1747 = vunpack.c.l.b16 %v1722
      %v1748 = vpack.c.b16 %v1741, %v1740
      %v1749 = vpack.c.b16 %v1743, %v1742
      %v1750 = vpack.c.b16 %v1745, %v1744
      %v1751 = vpack.c.b16 %v1747, %v1746
      %v1760 = vunpack.c.l.b16 %v1724
      %v1761 = vunpack.c.l.b16 %v1725
      %v1762 = vunpack.c.l.b16 %v1726
      %v1763 = vunpack.c.l.b16 %v1727
      %v1764 = vunpack.c.l.b16 %v1728
      %v1765 = vunpack.c.l.b16 %v1729
      %v1766 = vunpack.c.l.b16 %v1730
      %v1767 = vunpack.c.l.b16 %v1731
      %v1768 = vpack.c.b16 %v1761, %v1760
      %v1769 = vpack.c.b16 %v1763, %v1762
      %v1770 = vpack.c.b16 %v1765, %v1764
      %v1771 = vpack.c.b16 %v1767, %v1766
      %v1777 = vsel %vm1327, %v1748, 0
      %v1780 = vsel %vm1327, %v1749, 0
      %v1783 = vsel %vm1327, %v1750, 0
      %v1786 = vsel %vm1327, %v1751, 0
      %1788 = vmatprep.subr.bf16.mxu0 0
      %1789 = vmatpush1.bf16.msra.mxu0 0
      %1790 = vmatprep.subr.bf16.mxu0 0
      %1791 = vmatpush1.bf16.msra.mxu0 0
      %1792 = vmatprep.subr.bf16.mxu0 0
      %1793 = vmatpush1.bf16.msra.mxu0 0
      %1794 = vmatprep.subr.bf16.mxu0 0
      %1795 = vmatpush1.bf16.msra.mxu0 0
      %1796 = vmatprep.subr.bf16.mxu0 0
      %1797 = vmatpush1.bf16.msra.mxu0 %v1771
      %1798 = vmatprep.subr.bf16.mxu0 0
      %1799 = vmatpush1.bf16.msra.mxu0 %v1770
      %1800 = vmatprep.subr.bf16.mxu0 0
      %1801 = vmatpush1.bf16.msra.mxu0 %v1769
      %1802 = vmatprep.subr.bf16.mxu0 0
      %1803 = vmatpush1.bf16.msra.mxu0 %v1768
      %1804 = vmatprep.subr.bf16.mxu0 0
      %1805 = vmatpush2.bf16.msra.mxu0 0
      %1806 = vmatprep.subr.bf16.mxu0 0
      %1807 = vmatpush2.bf16.msra.mxu0 0
      %1808 = vmatprep.subr.bf16.mxu0 0
      %1809 = vmatpush2.bf16.msra.mxu0 0
      %1810 = vmatprep.subr.bf16.mxu0 0
      %1811 = vmatpush2.bf16.msra.mxu0 0
      %1812 = vmatprep.subr.bf16.mxu0 0
      %1813 = vmatpush2.bf16.msra.mxu0 0
      %1814 = vmatprep.subr.bf16.mxu0 0
      %1815 = vmatpush2.bf16.msra.mxu0 0
      %1816 = vmatprep.subr.bf16.mxu0 0
      %1817 = vmatpush2.bf16.msra.mxu0 0
      %1818 = vmatprep.subr.bf16.mxu0 0
      %1819 = vmatpush2.bf16.msra.mxu0 0
      %1820 = vmatprep.mubr.bf16.mxu0 0
      %1821 = vmatmul.mubr.bf16.gmra.mxu0 %v1777
      %v1822 = vpop.f32.mrf.mxu0
      %v1823 = vadd.f32 0.0, %v1822
      %v1824 = vpop.f32.mrf.mxu0
      %v1825 = vpop.f32.mrf.mxu0
      %v1826 = vadd.f32 0.0, %v1825
      %v1827 = vpop.f32.mrf.mxu0
      %1828 = vmatprep.mubr.bf16.mxu0 0
      %1829 = vmatmul.mubr.bf16.gmra.mxu0 %v1780
      %v1830 = vpop.f32.mrf.mxu0
      %v1831 = vadd.f32 0.0, %v1830
      %v1832 = vpop.f32.mrf.mxu0
      %v1833 = vpop.f32.mrf.mxu0
      %v1834 = vadd.f32 0.0, %v1833
      %v1835 = vpop.f32.mrf.mxu0
      %1836 = vmatprep.mubr.bf16.mxu0 0
      %1837 = vmatmul.mubr.bf16.gmra.mxu0 %v1783
      %v1838 = vpop.f32.mrf.mxu0
      %v1839 = vadd.f32 0.0, %v1838
      %v1840 = vpop.f32.mrf.mxu0
      %v1841 = vpop.f32.mrf.mxu0
      %v1842 = vadd.f32 0.0, %v1841
      %v1843 = vpop.f32.mrf.mxu0
      %1844 = vmatprep.mubr.bf16.mxu0 0
      %1845 = vmatmul.mubr.bf16.gmra.mxu0 %v1786
      %v1846 = vpop.f32.mrf.mxu0
      %v1847 = vadd.f32 0.0, %v1846
      %v1848 = vpop.f32.mrf.mxu0
      %v1849 = vpop.f32.mrf.mxu0
      %v1850 = vadd.f32 0.0, %v1849
      %v1851 = vpop.f32.mrf.mxu0
      %1852 = vdwg.mxu0
      %v1853 = vadd.f32 %v1707, %v1823
      %v1854 = vadd.f32 %v1708, %v1826
      %v1855 = vadd.f32 %v1709, %v1831
      %v1856 = vadd.f32 %v1710, %v1834
      %v1857 = vadd.f32 %v1711, %v1839
      %v1858 = vadd.f32 %v1712, %v1842
      %v1859 = vadd.f32 %v1713, %v1847
      %v1860 = vadd.f32 %v1714, %v1850
      %v1861 = vld [vmem:[%s1092] sm:$0xf]
      %v1862 = vld [vmem:[%s1092 + $0x4] sm:$0x1]
      %v1863 = vld [vmem:[%s1092 + $0x8] sm:$0xf]
      %v1864 = vld [vmem:[%s1092 + $0xc] sm:$0x1]
      %v1865 = vld [vmem:[%s1092 + $0x10] sm:$0xf]
      %v1866 = vld [vmem:[%s1092 + $0x14] sm:$0x1]
      %v1867 = vld [vmem:[%s1092 + $0x18] sm:$0xf]
      %v1868 = vld [vmem:[%s1092 + $0x1c] sm:$0x1]
      %v1869 = vld [vmem:[%s1092 + $0x20] sm:$0xf]
      %v1870 = vld [vmem:[%s1092 + $0x24] sm:$0x1]
      %v1871 = vld [vmem:[%s1092 + $0x28] sm:$0xf]
      %v1872 = vld [vmem:[%s1092 + $0x2c] sm:$0x1]
      %v1873 = vld [vmem:[%s1092 + $0x30] sm:$0xf]
      %v1874 = vld [vmem:[%s1092 + $0x34] sm:$0x1]
      %v1875 = vld [vmem:[%s1092 + $0x38] sm:$0xf]
      %v1876 = vld [vmem:[%s1092 + $0x3c] sm:$0x1]
      %v1878 = vshrl.u32 %v1861, 16
      %v1880 = vrot.slane %v1878, 4
      %v1881 = vshll.u32 %v1861, 16
      %v1883 = vrot.slane %v1881, 5
      %v1884 = vor.u32 %v1880, %v1883
      %v1885 = vrot.slane %v1884, 4
      %v1887 = vshll.u32 %v1862, 16
      %v1889 = vrot.slane %v1887, 5
      %v1890 = vsel %vm1169, %v1885, %v1889
      %v1892 = vshrl.u32 %v1863, 16
      %v1894 = vrot.slane %v1892, 4
      %v1895 = vshll.u32 %v1863, 16
      %v1897 = vrot.slane %v1895, 5
      %v1898 = vor.u32 %v1894, %v1897
      %v1899 = vrot.slane %v1898, 4
      %v1901 = vshll.u32 %v1864, 16
      %v1903 = vrot.slane %v1901, 5
      %v1904 = vsel %vm1169, %v1899, %v1903
      %v1906 = vshrl.u32 %v1865, 16
      %v1908 = vrot.slane %v1906, 4
      %v1909 = vshll.u32 %v1865, 16
      %v1911 = vrot.slane %v1909, 5
      %v1912 = vor.u32 %v1908, %v1911
      %v1913 = vrot.slane %v1912, 4
      %v1915 = vshll.u32 %v1866, 16
      %v1917 = vrot.slane %v1915, 5
      %v1918 = vsel %vm1169, %v1913, %v1917
      %v1920 = vshrl.u32 %v1867, 16
      %v1922 = vrot.slane %v1920, 4
      %v1923 = vshll.u32 %v1867, 16
      %v1925 = vrot.slane %v1923, 5
      %v1926 = vor.u32 %v1922, %v1925
      %v1927 = vrot.slane %v1926, 4
      %v1929 = vshll.u32 %v1868, 16
      %v1931 = vrot.slane %v1929, 5
      %v1932 = vsel %vm1169, %v1927, %v1931
      %v1934 = vshrl.u32 %v1869, 16
      %v1936 = vrot.slane %v1934, 4
      %v1937 = vshll.u32 %v1869, 16
      %v1939 = vrot.slane %v1937, 5
      %v1940 = vor.u32 %v1936, %v1939
      %v1941 = vrot.slane %v1940, 4
      %v1943 = vshll.u32 %v1870, 16
      %v1945 = vrot.slane %v1943, 5
      %v1946 = vsel %vm1169, %v1941, %v1945
      %v1948 = vshrl.u32 %v1871, 16
      %v1950 = vrot.slane %v1948, 4
      %v1951 = vshll.u32 %v1871, 16
      %v1953 = vrot.slane %v1951, 5
      %v1954 = vor.u32 %v1950, %v1953
      %v1955 = vrot.slane %v1954, 4
      %v1957 = vshll.u32 %v1872, 16
      %v1959 = vrot.slane %v1957, 5
      %v1960 = vsel %vm1169, %v1955, %v1959
      %v1962 = vshrl.u32 %v1873, 16
      %v1964 = vrot.slane %v1962, 4
      %v1965 = vshll.u32 %v1873, 16
      %v1967 = vrot.slane %v1965, 5
      %v1968 = vor.u32 %v1964, %v1967
      %v1969 = vrot.slane %v1968, 4
      %v1971 = vshll.u32 %v1874, 16
      %v1973 = vrot.slane %v1971, 5
      %v1974 = vsel %vm1169, %v1969, %v1973
      %v1976 = vshrl.u32 %v1875, 16
      %v1978 = vrot.slane %v1976, 4
      %v1979 = vshll.u32 %v1875, 16
      %v1981 = vrot.slane %v1979, 5
      %v1982 = vor.u32 %v1978, %v1981
      %v1983 = vrot.slane %v1982, 4
      %v1985 = vshll.u32 %v1876, 16
      %v1987 = vrot.slane %v1985, 5
      %v1988 = vsel %vm1169, %v1983, %v1987
      %s1989 = scalar_lea.vmem %s8, 128
      %v1990 = vld [vmem:[%s1989] sm:$0xf]
      %v1991 = vld [vmem:[%s1989 + $0x4] sm:$0xf]
      %v1992 = vld [vmem:[%s1989 + $0x8] sm:$0xf]
      %v1993 = vld [vmem:[%s1989 + $0xc] sm:$0xf]
      %v1994 = vld [vmem:[%s1989 + $0x10] sm:$0xf]
      %v1995 = vld [vmem:[%s1989 + $0x14] sm:$0xf]
      %v1996 = vld [vmem:[%s1989 + $0x18] sm:$0xf]
      %v1997 = vld [vmem:[%s1989 + $0x1c] sm:$0xf]
      %v1998 = vunpack.c.l.b16 %v1890
      %v1999 = vunpack.c.l.b16 %v1904
      %v2000 = vunpack.c.l.b16 %v1918
      %v2001 = vunpack.c.l.b16 %v1932
      %v2002 = vunpack.c.l.b16 %v1946
      %v2003 = vunpack.c.l.b16 %v1960
      %v2004 = vunpack.c.l.b16 %v1974
      %v2005 = vunpack.c.l.b16 %v1988
      %v2006 = vpack.c.b16 %v1999, %v1998
      %v2007 = vpack.c.b16 %v2001, %v2000
      %v2008 = vpack.c.b16 %v2003, %v2002
      %v2009 = vpack.c.b16 %v2005, %v2004
      %v2018 = vunpack.c.l.b16 %v1990
      %v2019 = vunpack.c.l.b16 %v1991
      %v2020 = vunpack.c.l.b16 %v1992
      %v2021 = vunpack.c.l.b16 %v1993
      %v2022 = vunpack.c.l.b16 %v1994
      %v2023 = vunpack.c.l.b16 %v1995
      %v2024 = vunpack.c.l.b16 %v1996
      %v2025 = vunpack.c.l.b16 %v1997
      %v2026 = vpack.c.b16 %v2019, %v2018
      %v2027 = vpack.c.b16 %v2021, %v2020
      %v2028 = vpack.c.b16 %v2023, %v2022
      %v2029 = vpack.c.b16 %v2025, %v2024
      %v2035 = vsel %vm1327, %v2006, 0
      %v2038 = vsel %vm1327, %v2007, 0
      %v2041 = vsel %vm1327, %v2008, 0
      %v2044 = vsel %vm1327, %v2009, 0
      %2046 = vmatprep.subr.bf16.mxu0 0
      %2047 = vmatpush1.bf16.msra.mxu0 0
      %2048 = vmatprep.subr.bf16.mxu0 0
      %2049 = vmatpush1.bf16.msra.mxu0 0
      %2050 = vmatprep.subr.bf16.mxu0 0
      %2051 = vmatpush1.bf16.msra.mxu0 0
      %2052 = vmatprep.subr.bf16.mxu0 0
      %2053 = vmatpush1.bf16.msra.mxu0 0
      %2054 = vmatprep.subr.bf16.mxu0 0
      %2055 = vmatpush1.bf16.msra.mxu0 %v2029
      %2056 = vmatprep.subr.bf16.mxu0 0
      %2057 = vmatpush1.bf16.msra.mxu0 %v2028
      %2058 = vmatprep.subr.bf16.mxu0 0
      %2059 = vmatpush1.bf16.msra.mxu0 %v2027
      %2060 = vmatprep.subr.bf16.mxu0 0
      %2061 = vmatpush1.bf16.msra.mxu0 %v2026
      %2062 = vmatprep.subr.bf16.mxu0 0
      %2063 = vmatpush2.bf16.msra.mxu0 0
      %2064 = vmatprep.subr.bf16.mxu0 0
      %2065 = vmatpush2.bf16.msra.mxu0 0
      %2066 = vmatprep.subr.bf16.mxu0 0
      %2067 = vmatpush2.bf16.msra.mxu0 0
      %2068 = vmatprep.subr.bf16.mxu0 0
      %2069 = vmatpush2.bf16.msra.mxu0 0
      %2070 = vmatprep.subr.bf16.mxu0 0
      %2071 = vmatpush2.bf16.msra.mxu0 0
      %2072 = vmatprep.subr.bf16.mxu0 0
      %2073 = vmatpush2.bf16.msra.mxu0 0
      %2074 = vmatprep.subr.bf16.mxu0 0
      %2075 = vmatpush2.bf16.msra.mxu0 0
      %2076 = vmatprep.subr.bf16.mxu0 0
      %2077 = vmatpush2.bf16.msra.mxu0 0
      %2078 = vmatprep.mubr.bf16.mxu0 0
      %2079 = vmatmul.mubr.bf16.gmra.mxu0 %v2035
      %v2080 = vpop.f32.mrf.mxu0
      %v2081 = vadd.f32 0.0, %v2080
      %v2082 = vpop.f32.mrf.mxu0
      %v2083 = vpop.f32.mrf.mxu0
      %v2084 = vadd.f32 0.0, %v2083
      %v2085 = vpop.f32.mrf.mxu0
      %2086 = vmatprep.mubr.bf16.mxu0 0
      %2087 = vmatmul.mubr.bf16.gmra.mxu0 %v2038
      %v2088 = vpop.f32.mrf.mxu0
      %v2089 = vadd.f32 0.0, %v2088
      %v2090 = vpop.f32.mrf.mxu0
      %v2091 = vpop.f32.mrf.mxu0
      %v2092 = vadd.f32 0.0, %v2091
      %v2093 = vpop.f32.mrf.mxu0
      %2094 = vmatprep.mubr.bf16.mxu0 0
      %2095 = vmatmul.mubr.bf16.gmra.mxu0 %v2041
      %v2096 = vpop.f32.mrf.mxu0
      %v2097 = vadd.f32 0.0, %v2096
      %v2098 = vpop.f32.mrf.mxu0
      %v2099 = vpop.f32.mrf.mxu0
      %v2100 = vadd.f32 0.0, %v2099
      %v2101 = vpop.f32.mrf.mxu0
      %2102 = vmatprep.mubr.bf16.mxu0 0
      %2103 = vmatmul.mubr.bf16.gmra.mxu0 %v2044
      %v2104 = vpop.f32.mrf.mxu0
      %v2105 = vadd.f32 0.0, %v2104
      %v2106 = vpop.f32.mrf.mxu0
      %v2107 = vpop.f32.mrf.mxu0
      %v2108 = vadd.f32 0.0, %v2107
      %v2109 = vpop.f32.mrf.mxu0
      %2110 = vdwg.mxu0
      %v2111 = vadd.f32 %v1853, %v2081
      %v2112 = vadd.f32 %v1854, %v2084
      %v2113 = vadd.f32 %v1855, %v2089
      %v2114 = vadd.f32 %v1856, %v2092
      %v2115 = vadd.f32 %v1857, %v2097
      %v2116 = vadd.f32 %v1858, %v2100
      %v2117 = vadd.f32 %v1859, %v2105
      %v2118 = vadd.f32 %v1860, %v2108
      %v2119 = vld [vmem:[%s1092] sm:$0xe]
      %v2120 = vld [vmem:[%s1092 + $0x8] sm:$0xe]
      %v2121 = vld [vmem:[%s1092 + $0x10] sm:$0xe]
      %v2122 = vld [vmem:[%s1092 + $0x18] sm:$0xe]
      %v2123 = vld [vmem:[%s1092 + $0x20] sm:$0xe]
      %v2124 = vld [vmem:[%s1092 + $0x28] sm:$0xe]
      %v2125 = vld [vmem:[%s1092 + $0x30] sm:$0xe]
      %v2126 = vld [vmem:[%s1092 + $0x38] sm:$0xe]
      %v2143 = vrot.slane %v2119, 5
      %v2144 = vrot.slane %v2143, 4
      %v2145 = vrot.slane %v1862, 5
      %v2146 = vsel %vm1552, %v2144, %v2145
      %v2147 = vrot.slane %v2120, 5
      %v2148 = vrot.slane %v2147, 4
      %v2149 = vrot.slane %v1864, 5
      %v2150 = vsel %vm1552, %v2148, %v2149
      %v2151 = vrot.slane %v2121, 5
      %v2152 = vrot.slane %v2151, 4
      %v2153 = vrot.slane %v1866, 5
      %v2154 = vsel %vm1552, %v2152, %v2153
      %v2155 = vrot.slane %v2122, 5
      %v2156 = vrot.slane %v2155, 4
      %v2157 = vrot.slane %v1868, 5
      %v2158 = vsel %vm1552, %v2156, %v2157
      %v2159 = vrot.slane %v2123, 5
      %v2160 = vrot.slane %v2159, 4
      %v2161 = vrot.slane %v1870, 5
      %v2162 = vsel %vm1552, %v2160, %v2161
      %v2163 = vrot.slane %v2124, 5
      %v2164 = vrot.slane %v2163, 4
      %v2165 = vrot.slane %v1872, 5
      %v2166 = vsel %vm1552, %v2164, %v2165
      %v2167 = vrot.slane %v2125, 5
      %v2168 = vrot.slane %v2167, 4
      %v2169 = vrot.slane %v1874, 5
      %v2170 = vsel %vm1552, %v2168, %v2169
      %v2171 = vrot.slane %v2126, 5
      %v2172 = vrot.slane %v2171, 4
      %v2173 = vrot.slane %v1876, 5
      %v2174 = vsel %vm1552, %v2172, %v2173
      %s2175 = scalar_lea.vmem %s8, 160
      %v2176 = vld [vmem:[%s2175] sm:$0xf]
      %v2177 = vld [vmem:[%s2175 + $0x4] sm:$0xf]
      %v2178 = vld [vmem:[%s2175 + $0x8] sm:$0xf]
      %v2179 = vld [vmem:[%s2175 + $0xc] sm:$0xf]
      %v2180 = vld [vmem:[%s2175 + $0x10] sm:$0xf]
      %v2181 = vld [vmem:[%s2175 + $0x14] sm:$0xf]
      %v2182 = vld [vmem:[%s2175 + $0x18] sm:$0xf]
      %v2183 = vld [vmem:[%s2175 + $0x1c] sm:$0xf]
      %v2184 = vunpack.c.l.b16 %v2146
      %v2185 = vunpack.c.l.b16 %v2150
      %v2186 = vunpack.c.l.b16 %v2154
      %v2187 = vunpack.c.l.b16 %v2158
      %v2188 = vunpack.c.l.b16 %v2162
      %v2189 = vunpack.c.l.b16 %v2166
      %v2190 = vunpack.c.l.b16 %v2170
      %v2191 = vunpack.c.l.b16 %v2174
      %v2192 = vpack.c.b16 %v2185, %v2184
      %v2193 = vpack.c.b16 %v2187, %v2186
      %v2194 = vpack.c.b16 %v2189, %v2188
      %v2195 = vpack.c.b16 %v2191, %v2190
      %v2204 = vunpack.c.l.b16 %v2176
      %v2205 = vunpack.c.l.b16 %v2177
      %v2206 = vunpack.c.l.b16 %v2178
      %v2207 = vunpack.c.l.b16 %v2179
      %v2208 = vunpack.c.l.b16 %v2180
      %v2209 = vunpack.c.l.b16 %v2181
      %v2210 = vunpack.c.l.b16 %v2182
      %v2211 = vunpack.c.l.b16 %v2183
      %v2212 = vpack.c.b16 %v2205, %v2204
      %v2213 = vpack.c.b16 %v2207, %v2206
      %v2214 = vpack.c.b16 %v2209, %v2208
      %v2215 = vpack.c.b16 %v2211, %v2210
      %v2221 = vsel %vm1327, %v2192, 0
      %v2224 = vsel %vm1327, %v2193, 0
      %v2227 = vsel %vm1327, %v2194, 0
      %v2230 = vsel %vm1327, %v2195, 0
      %2232 = vmatprep.subr.bf16.mxu0 0
      %2233 = vmatpush1.bf16.msra.mxu0 0
      %2234 = vmatprep.subr.bf16.mxu0 0
      %2235 = vmatpush1.bf16.msra.mxu0 0
      %2236 = vmatprep.subr.bf16.mxu0 0
      %2237 = vmatpush1.bf16.msra.mxu0 0
      %2238 = vmatprep.subr.bf16.mxu0 0
      %2239 = vmatpush1.bf16.msra.mxu0 0
      %2240 = vmatprep.subr.bf16.mxu0 0
      %2241 = vmatpush1.bf16.msra.mxu0 %v2215
      %2242 = vmatprep.subr.bf16.mxu0 0
      %2243 = vmatpush1.bf16.msra.mxu0 %v2214
      %2244 = vmatprep.subr.bf16.mxu0 0
      %2245 = vmatpush1.bf16.msra.mxu0 %v2213
      %2246 = vmatprep.subr.bf16.mxu0 0
      %2247 = vmatpush1.bf16.msra.mxu0 %v2212
      %2248 = vmatprep.subr.bf16.mxu0 0
      %2249 = vmatpush2.bf16.msra.mxu0 0
      %2250 = vmatprep.subr.bf16.mxu0 0
      %2251 = vmatpush2.bf16.msra.mxu0 0
      %2252 = vmatprep.subr.bf16.mxu0 0
      %2253 = vmatpush2.bf16.msra.mxu0 0
      %2254 = vmatprep.subr.bf16.mxu0 0
      %2255 = vmatpush2.bf16.msra.mxu0 0
      %2256 = vmatprep.subr.bf16.mxu0 0
      %2257 = vmatpush2.bf16.msra.mxu0 0
      %2258 = vmatprep.subr.bf16.mxu0 0
      %2259 = vmatpush2.bf16.msra.mxu0 0
      %2260 = vmatprep.subr.bf16.mxu0 0
      %2261 = vmatpush2.bf16.msra.mxu0 0
      %2262 = vmatprep.subr.bf16.mxu0 0
      %2263 = vmatpush2.bf16.msra.mxu0 0
      %2264 = vmatprep.mubr.bf16.mxu0 0
      %2265 = vmatmul.mubr.bf16.gmra.mxu0 %v2221
      %v2266 = vpop.f32.mrf.mxu0
      %v2267 = vadd.f32 0.0, %v2266
      %v2268 = vpop.f32.mrf.mxu0
      %v2269 = vpop.f32.mrf.mxu0
      %v2270 = vadd.f32 0.0, %v2269
      %v2271 = vpop.f32.mrf.mxu0
      %2272 = vmatprep.mubr.bf16.mxu0 0
      %2273 = vmatmul.mubr.bf16.gmra.mxu0 %v2224
      %v2274 = vpop.f32.mrf.mxu0
      %v2275 = vadd.f32 0.0, %v2274
      %v2276 = vpop.f32.mrf.mxu0
      %v2277 = vpop.f32.mrf.mxu0
      %v2278 = vadd.f32 0.0, %v2277
      %v2279 = vpop.f32.mrf.mxu0
      %2280 = vmatprep.mubr.bf16.mxu0 0
      %2281 = vmatmul.mubr.bf16.gmra.mxu0 %v2227
      %v2282 = vpop.f32.mrf.mxu0
      %v2283 = vadd.f32 0.0, %v2282
      %v2284 = vpop.f32.mrf.mxu0
      %v2285 = vpop.f32.mrf.mxu0
      %v2286 = vadd.f32 0.0, %v2285
      %v2287 = vpop.f32.mrf.mxu0
      %2288 = vmatprep.mubr.bf16.mxu0 0
      %2289 = vmatmul.mubr.bf16.gmra.mxu0 %v2230
      %v2290 = vpop.f32.mrf.mxu0
      %v2291 = vadd.f32 0.0, %v2290
      %v2292 = vpop.f32.mrf.mxu0
      %v2293 = vpop.f32.mrf.mxu0
      %v2294 = vadd.f32 0.0, %v2293
      %v2295 = vpop.f32.mrf.mxu0
      %2296 = vdwg.mxu0
      %v2297 = vadd.f32 %v2111, %v2267
      %v2298 = vadd.f32 %v2112, %v2270
      %v2299 = vadd.f32 %v2113, %v2275
      %v2300 = vadd.f32 %v2114, %v2278
      %v2301 = vadd.f32 %v2115, %v2283
      %v2302 = vadd.f32 %v2116, %v2286
      %v2303 = vadd.f32 %v2117, %v2291
      %v2304 = vadd.f32 %v2118, %v2294
      %s2305 = scalar_lea.vmem [#allocation2], 16
      %v2306 = vld [vmem:[%s2305] sm:$0xf]
      %v2307 = vld [vmem:[%s2305 + $0x8] sm:$0xf]
      %v2308 = vld [vmem:[%s2305 + $0x10] sm:$0xf]
      %v2309 = vld [vmem:[%s2305 + $0x18] sm:$0xf]
      %v2310 = vld [vmem:[%s2305 + $0x20] sm:$0xf]
      %v2311 = vld [vmem:[%s2305 + $0x28] sm:$0xf]
      %v2312 = vld [vmem:[%s2305 + $0x30] sm:$0xf]
      %v2313 = vld [vmem:[%s2305 + $0x38] sm:$0xf]
      %s2314 = scalar_lea.vmem %s8, 192
      %v2315 = vld [vmem:[%s2314] sm:$0xf]
      %v2316 = vld [vmem:[%s2314 + $0x4] sm:$0xf]
      %v2317 = vld [vmem:[%s2314 + $0x8] sm:$0xf]
      %v2318 = vld [vmem:[%s2314 + $0xc] sm:$0xf]
      %v2319 = vld [vmem:[%s2314 + $0x10] sm:$0xf]
      %v2320 = vld [vmem:[%s2314 + $0x14] sm:$0xf]
      %v2321 = vld [vmem:[%s2314 + $0x18] sm:$0xf]
      %v2322 = vld [vmem:[%s2314 + $0x1c] sm:$0xf]
      %v2331 = vunpack.c.l.b16 %v2306
      %v2332 = vunpack.c.l.b16 %v2307
      %v2333 = vunpack.c.l.b16 %v2308
      %v2334 = vunpack.c.l.b16 %v2309
      %v2335 = vunpack.c.l.b16 %v2310
      %v2336 = vunpack.c.l.b16 %v2311
      %v2337 = vunpack.c.l.b16 %v2312
      %v2338 = vunpack.c.l.b16 %v2313
      %v2339 = vpack.c.b16 %v2332, %v2331
      %v2340 = vpack.c.b16 %v2334, %v2333
      %v2341 = vpack.c.b16 %v2336, %v2335
      %v2342 = vpack.c.b16 %v2338, %v2337
      %v2351 = vunpack.c.l.b16 %v2315
      %v2352 = vunpack.c.l.b16 %v2316
      %v2353 = vunpack.c.l.b16 %v2317
      %v2354 = vunpack.c.l.b16 %v2318
      %v2355 = vunpack.c.l.b16 %v2319
      %v2356 = vunpack.c.l.b16 %v2320
      %v2357 = vunpack.c.l.b16 %v2321
      %v2358 = vunpack.c.l.b16 %v2322
      %v2359 = vpack.c.b16 %v2352, %v2351
      %v2360 = vpack.c.b16 %v2354, %v2353
      %v2361 = vpack.c.b16 %v2356, %v2355
      %v2362 = vpack.c.b16 %v2358, %v2357
      %v2368 = vsel %vm1327, %v2339, 0
      %v2371 = vsel %vm1327, %v2340, 0
      %v2374 = vsel %vm1327, %v2341, 0
      %v2377 = vsel %vm1327, %v2342, 0
      %2379 = vmatprep.subr.bf16.mxu0 0
      %2380 = vmatpush1.bf16.msra.mxu0 0
      %2381 = vmatprep.subr.bf16.mxu0 0
      %2382 = vmatpush1.bf16.msra.mxu0 0
      %2383 = vmatprep.subr.bf16.mxu0 0
      %2384 = vmatpush1.bf16.msra.mxu0 0
      %2385 = vmatprep.subr.bf16.mxu0 0
      %2386 = vmatpush1.bf16.msra.mxu0 0
      %2387 = vmatprep.subr.bf16.mxu0 0
      %2388 = vmatpush1.bf16.msra.mxu0 %v2362
      %2389 = vmatprep.subr.bf16.mxu0 0
      %2390 = vmatpush1.bf16.msra.mxu0 %v2361
      %2391 = vmatprep.subr.bf16.mxu0 0
      %2392 = vmatpush1.bf16.msra.mxu0 %v2360
      %2393 = vmatprep.subr.bf16.mxu0 0
      %2394 = vmatpush1.bf16.msra.mxu0 %v2359
      %2395 = vmatprep.subr.bf16.mxu0 0
      %2396 = vmatpush2.bf16.msra.mxu0 0
      %2397 = vmatprep.subr.bf16.mxu0 0
      %2398 = vmatpush2.bf16.msra.mxu0 0
      %2399 = vmatprep.subr.bf16.mxu0 0
      %2400 = vmatpush2.bf16.msra.mxu0 0
      %2401 = vmatprep.subr.bf16.mxu0 0
      %2402 = vmatpush2.bf16.msra.mxu0 0
      %2403 = vmatprep.subr.bf16.mxu0 0
      %2404 = vmatpush2.bf16.msra.mxu0 0
      %2405 = vmatprep.subr.bf16.mxu0 0
      %2406 = vmatpush2.bf16.msra.mxu0 0
      %2407 = vmatprep.subr.bf16.mxu0 0
      %2408 = vmatpush2.bf16.msra.mxu0 0
      %2409 = vmatprep.subr.bf16.mxu0 0
      %2410 = vmatpush2.bf16.msra.mxu0 0
      %2411 = vmatprep.mubr.bf16.mxu0 0
      %2412 = vmatmul.mubr.bf16.gmra.mxu0 %v2368
      %v2413 = vpop.f32.mrf.mxu0
      %v2414 = vadd.f32 0.0, %v2413
      %v2415 = vpop.f32.mrf.mxu0
      %v2416 = vpop.f32.mrf.mxu0
      %v2417 = vadd.f32 0.0, %v2416
      %v2418 = vpop.f32.mrf.mxu0
      %2419 = vmatprep.mubr.bf16.mxu0 0
      %2420 = vmatmul.mubr.bf16.gmra.mxu0 %v2371
      %v2421 = vpop.f32.mrf.mxu0
      %v2422 = vadd.f32 0.0, %v2421
      %v2423 = vpop.f32.mrf.mxu0
      %v2424 = vpop.f32.mrf.mxu0
      %v2425 = vadd.f32 0.0, %v2424
      %v2426 = vpop.f32.mrf.mxu0
      %2427 = vmatprep.mubr.bf16.mxu0 0
      %2428 = vmatmul.mubr.bf16.gmra.mxu0 %v2374
      %v2429 = vpop.f32.mrf.mxu0
      %v2430 = vadd.f32 0.0, %v2429
      %v2431 = vpop.f32.mrf.mxu0
      %v2432 = vpop.f32.mrf.mxu0
      %v2433 = vadd.f32 0.0, %v2432
      %v2434 = vpop.f32.mrf.mxu0
      %2435 = vmatprep.mubr.bf16.mxu0 0
      %2436 = vmatmul.mubr.bf16.gmra.mxu0 %v2377
      %v2437 = vpop.f32.mrf.mxu0
      %v2438 = vadd.f32 0.0, %v2437
      %v2439 = vpop.f32.mrf.mxu0
      %v2440 = vpop.f32.mrf.mxu0
      %v2441 = vadd.f32 0.0, %v2440
      %v2442 = vpop.f32.mrf.mxu0
      %2443 = vdwg.mxu0
      %v2444 = vadd.f32 %v2297, %v2414
      %v2445 = vadd.f32 %v2298, %v2417
      %v2446 = vadd.f32 %v2299, %v2422
      %v2447 = vadd.f32 %v2300, %v2425
      %v2448 = vadd.f32 %v2301, %v2430
      %v2449 = vadd.f32 %v2302, %v2433
      %v2450 = vadd.f32 %v2303, %v2438
      %v2451 = vadd.f32 %v2304, %v2441
      %v2452 = vld [vmem:[%s2305] sm:$0xf]
      %v2453 = vld [vmem:[%s2305 + $0x4] sm:$0x1]
      %v2454 = vld [vmem:[%s2305 + $0x8] sm:$0xf]
      %v2455 = vld [vmem:[%s2305 + $0xc] sm:$0x1]
      %v2456 = vld [vmem:[%s2305 + $0x10] sm:$0xf]
      %v2457 = vld [vmem:[%s2305 + $0x14] sm:$0x1]
      %v2458 = vld [vmem:[%s2305 + $0x18] sm:$0xf]
      %v2459 = vld [vmem:[%s2305 + $0x1c] sm:$0x1]
      %v2460 = vld [vmem:[%s2305 + $0x20] sm:$0xf]
      %v2461 = vld [vmem:[%s2305 + $0x24] sm:$0x1]
      %v2462 = vld [vmem:[%s2305 + $0x28] sm:$0xf]
      %v2463 = vld [vmem:[%s2305 + $0x2c] sm:$0x1]
      %v2464 = vld [vmem:[%s2305 + $0x30] sm:$0xf]
      %v2465 = vld [vmem:[%s2305 + $0x34] sm:$0x1]
      %v2466 = vld [vmem:[%s2305 + $0x38] sm:$0xf]
      %v2467 = vld [vmem:[%s2305 + $0x3c] sm:$0x1]
      %v2469 = vshrl.u32 %v2452, 16
      %v2471 = vrot.slane %v2469, 4
      %v2472 = vshll.u32 %v2452, 16
      %v2474 = vrot.slane %v2472, 5
      %v2475 = vor.u32 %v2471, %v2474
      %v2476 = vrot.slane %v2475, 4
      %v2478 = vshll.u32 %v2453, 16
      %v2480 = vrot.slane %v2478, 5
      %v2481 = vsel %vm1169, %v2476, %v2480
      %v2483 = vshrl.u32 %v2454, 16
      %v2485 = vrot.slane %v2483, 4
      %v2486 = vshll.u32 %v2454, 16
      %v2488 = vrot.slane %v2486, 5
      %v2489 = vor.u32 %v2485, %v2488
      %v2490 = vrot.slane %v2489, 4
      %v2492 = vshll.u32 %v2455, 16
      %v2494 = vrot.slane %v2492, 5
      %v2495 = vsel %vm1169, %v2490, %v2494
      %v2497 = vshrl.u32 %v2456, 16
      %v2499 = vrot.slane %v2497, 4
      %v2500 = vshll.u32 %v2456, 16
      %v2502 = vrot.slane %v2500, 5
      %v2503 = vor.u32 %v2499, %v2502
      %v2504 = vrot.slane %v2503, 4
      %v2506 = vshll.u32 %v2457, 16
      %v2508 = vrot.slane %v2506, 5
      %v2509 = vsel %vm1169, %v2504, %v2508
      %v2511 = vshrl.u32 %v2458, 16
      %v2513 = vrot.slane %v2511, 4
      %v2514 = vshll.u32 %v2458, 16
      %v2516 = vrot.slane %v2514, 5
      %v2517 = vor.u32 %v2513, %v2516
      %v2518 = vrot.slane %v2517, 4
      %v2520 = vshll.u32 %v2459, 16
      %v2522 = vrot.slane %v2520, 5
      %v2523 = vsel %vm1169, %v2518, %v2522
      %v2525 = vshrl.u32 %v2460, 16
      %v2527 = vrot.slane %v2525, 4
      %v2528 = vshll.u32 %v2460, 16
      %v2530 = vrot.slane %v2528, 5
      %v2531 = vor.u32 %v2527, %v2530
      %v2532 = vrot.slane %v2531, 4
      %v2534 = vshll.u32 %v2461, 16
      %v2536 = vrot.slane %v2534, 5
      %v2537 = vsel %vm1169, %v2532, %v2536
      %v2539 = vshrl.u32 %v2462, 16
      %v2541 = vrot.slane %v2539, 4
      %v2542 = vshll.u32 %v2462, 16
      %v2544 = vrot.slane %v2542, 5
      %v2545 = vor.u32 %v2541, %v2544
      %v2546 = vrot.slane %v2545, 4
      %v2548 = vshll.u32 %v2463, 16
      %v2550 = vrot.slane %v2548, 5
      %v2551 = vsel %vm1169, %v2546, %v2550
      %v2553 = vshrl.u32 %v2464, 16
      %v2555 = vrot.slane %v2553, 4
      %v2556 = vshll.u32 %v2464, 16
      %v2558 = vrot.slane %v2556, 5
      %v2559 = vor.u32 %v2555, %v2558
      %v2560 = vrot.slane %v2559, 4
      %v2562 = vshll.u32 %v2465, 16
      %v2564 = vrot.slane %v2562, 5
      %v2565 = vsel %vm1169, %v2560, %v2564
      %v2567 = vshrl.u32 %v2466, 16
      %v2569 = vrot.slane %v2567, 4
      %v2570 = vshll.u32 %v2466, 16
      %v2572 = vrot.slane %v2570, 5
      %v2573 = vor.u32 %v2569, %v2572
      %v2574 = vrot.slane %v2573, 4
      %v2576 = vshll.u32 %v2467, 16
      %v2578 = vrot.slane %v2576, 5
      %v2579 = vsel %vm1169, %v2574, %v2578
      %s2580 = scalar_lea.vmem %s8, 224
      %v2581 = vld [vmem:[%s2580] sm:$0xf]
      %v2582 = vld [vmem:[%s2580 + $0x4] sm:$0xf]
      %v2583 = vld [vmem:[%s2580 + $0x8] sm:$0xf]
      %v2584 = vld [vmem:[%s2580 + $0xc] sm:$0xf]
      %v2585 = vld [vmem:[%s2580 + $0x10] sm:$0xf]
      %v2586 = vld [vmem:[%s2580 + $0x14] sm:$0xf]
      %v2587 = vld [vmem:[%s2580 + $0x18] sm:$0xf]
      %v2588 = vld [vmem:[%s2580 + $0x1c] sm:$0xf]
      %v2589 = vunpack.c.l.b16 %v2481
      %v2590 = vunpack.c.l.b16 %v2495
      %v2591 = vunpack.c.l.b16 %v2509
      %v2592 = vunpack.c.l.b16 %v2523
      %v2593 = vunpack.c.l.b16 %v2537
      %v2594 = vunpack.c.l.b16 %v2551
      %v2595 = vunpack.c.l.b16 %v2565
      %v2596 = vunpack.c.l.b16 %v2579
      %v2597 = vpack.c.b16 %v2590, %v2589
      %v2598 = vpack.c.b16 %v2592, %v2591
      %v2599 = vpack.c.b16 %v2594, %v2593
      %v2600 = vpack.c.b16 %v2596, %v2595
      %v2609 = vunpack.c.l.b16 %v2581
      %v2610 = vunpack.c.l.b16 %v2582
      %v2611 = vunpack.c.l.b16 %v2583
      %v2612 = vunpack.c.l.b16 %v2584
      %v2613 = vunpack.c.l.b16 %v2585
      %v2614 = vunpack.c.l.b16 %v2586
      %v2615 = vunpack.c.l.b16 %v2587
      %v2616 = vunpack.c.l.b16 %v2588
      %v2617 = vpack.c.b16 %v2610, %v2609
      %v2618 = vpack.c.b16 %v2612, %v2611
      %v2619 = vpack.c.b16 %v2614, %v2613
      %v2620 = vpack.c.b16 %v2616, %v2615
      %v2626 = vsel %vm1327, %v2597, 0
      %v2629 = vsel %vm1327, %v2598, 0
      %v2632 = vsel %vm1327, %v2599, 0
      %v2635 = vsel %vm1327, %v2600, 0
      %2637 = vmatprep.subr.bf16.mxu0 0
      %2638 = vmatpush1.bf16.msra.mxu0 0
      %2639 = vmatprep.subr.bf16.mxu0 0
      %2640 = vmatpush1.bf16.msra.mxu0 0
      %2641 = vmatprep.subr.bf16.mxu0 0
      %2642 = vmatpush1.bf16.msra.mxu0 0
      %2643 = vmatprep.subr.bf16.mxu0 0
      %2644 = vmatpush1.bf16.msra.mxu0 0
      %2645 = vmatprep.subr.bf16.mxu0 0
      %2646 = vmatpush1.bf16.msra.mxu0 %v2620
      %2647 = vmatprep.subr.bf16.mxu0 0
      %2648 = vmatpush1.bf16.msra.mxu0 %v2619
      %2649 = vmatprep.subr.bf16.mxu0 0
      %2650 = vmatpush1.bf16.msra.mxu0 %v2618
      %2651 = vmatprep.subr.bf16.mxu0 0
      %2652 = vmatpush1.bf16.msra.mxu0 %v2617
      %2653 = vmatprep.subr.bf16.mxu0 0
      %2654 = vmatpush2.bf16.msra.mxu0 0
      %2655 = vmatprep.subr.bf16.mxu0 0
      %2656 = vmatpush2.bf16.msra.mxu0 0
      %2657 = vmatprep.subr.bf16.mxu0 0
      %2658 = vmatpush2.bf16.msra.mxu0 0
      %2659 = vmatprep.subr.bf16.mxu0 0
      %2660 = vmatpush2.bf16.msra.mxu0 0
      %2661 = vmatprep.subr.bf16.mxu0 0
      %2662 = vmatpush2.bf16.msra.mxu0 0
      %2663 = vmatprep.subr.bf16.mxu0 0
      %2664 = vmatpush2.bf16.msra.mxu0 0
      %2665 = vmatprep.subr.bf16.mxu0 0
      %2666 = vmatpush2.bf16.msra.mxu0 0
      %2667 = vmatprep.subr.bf16.mxu0 0
      %2668 = vmatpush2.bf16.msra.mxu0 0
      %2669 = vmatprep.mubr.bf16.mxu0 0
      %2670 = vmatmul.mubr.bf16.gmra.mxu0 %v2626
      %v2671 = vpop.f32.mrf.mxu0
      %v2672 = vadd.f32 0.0, %v2671
      %v2673 = vpop.f32.mrf.mxu0
      %v2674 = vpop.f32.mrf.mxu0
      %v2675 = vadd.f32 0.0, %v2674
      %v2676 = vpop.f32.mrf.mxu0
      %2677 = vmatprep.mubr.bf16.mxu0 0
      %2678 = vmatmul.mubr.bf16.gmra.mxu0 %v2629
      %v2679 = vpop.f32.mrf.mxu0
      %v2680 = vadd.f32 0.0, %v2679
      %v2681 = vpop.f32.mrf.mxu0
      %v2682 = vpop.f32.mrf.mxu0
      %v2683 = vadd.f32 0.0, %v2682
      %v2684 = vpop.f32.mrf.mxu0
      %2685 = vmatprep.mubr.bf16.mxu0 0
      %2686 = vmatmul.mubr.bf16.gmra.mxu0 %v2632
      %v2687 = vpop.f32.mrf.mxu0
      %v2688 = vadd.f32 0.0, %v2687
      %v2689 = vpop.f32.mrf.mxu0
      %v2690 = vpop.f32.mrf.mxu0
      %v2691 = vadd.f32 0.0, %v2690
      %v2692 = vpop.f32.mrf.mxu0
      %2693 = vmatprep.mubr.bf16.mxu0 0
      %2694 = vmatmul.mubr.bf16.gmra.mxu0 %v2635
      %v2695 = vpop.f32.mrf.mxu0
      %v2696 = vadd.f32 0.0, %v2695
      %v2697 = vpop.f32.mrf.mxu0
      %v2698 = vpop.f32.mrf.mxu0
      %v2699 = vadd.f32 0.0, %v2698
      %v2700 = vpop.f32.mrf.mxu0
      %2701 = vdwg.mxu0
      %v2702 = vadd.f32 %v2444, %v2672
      %v2703 = vadd.f32 %v2445, %v2675
      %v2704 = vadd.f32 %v2446, %v2680
      %v2705 = vadd.f32 %v2447, %v2683
      %v2706 = vadd.f32 %v2448, %v2688
      %v2707 = vadd.f32 %v2449, %v2691
      %v2708 = vadd.f32 %v2450, %v2696
      %v2709 = vadd.f32 %v2451, %v2699
      %v2710 = vld [vmem:[%s2305] sm:$0xe]
      %v2711 = vld [vmem:[%s2305 + $0x8] sm:$0xe]
      %v2712 = vld [vmem:[%s2305 + $0x10] sm:$0xe]
      %v2713 = vld [vmem:[%s2305 + $0x18] sm:$0xe]
      %v2714 = vld [vmem:[%s2305 + $0x20] sm:$0xe]
      %v2715 = vld [vmem:[%s2305 + $0x28] sm:$0xe]
      %v2716 = vld [vmem:[%s2305 + $0x30] sm:$0xe]
      %v2717 = vld [vmem:[%s2305 + $0x38] sm:$0xe]
      %v2734 = vrot.slane %v2710, 5
      %v2735 = vrot.slane %v2734, 4
      %v2736 = vrot.slane %v2453, 5
      %v2737 = vsel %vm1552, %v2735, %v2736
      %v2738 = vrot.slane %v2711, 5
      %v2739 = vrot.slane %v2738, 4
      %v2740 = vrot.slane %v2455, 5
      %v2741 = vsel %vm1552, %v2739, %v2740
      %v2742 = vrot.slane %v2712, 5
      %v2743 = vrot.slane %v2742, 4
      %v2744 = vrot.slane %v2457, 5
      %v2745 = vsel %vm1552, %v2743, %v2744
      %v2746 = vrot.slane %v2713, 5
      %v2747 = vrot.slane %v2746, 4
      %v2748 = vrot.slane %v2459, 5
      %v2749 = vsel %vm1552, %v2747, %v2748
      %v2750 = vrot.slane %v2714, 5
      %v2751 = vrot.slane %v2750, 4
      %v2752 = vrot.slane %v2461, 5
      %v2753 = vsel %vm1552, %v2751, %v2752
      %v2754 = vrot.slane %v2715, 5
      %v2755 = vrot.slane %v2754, 4
      %v2756 = vrot.slane %v2463, 5
      %v2757 = vsel %vm1552, %v2755, %v2756
      %v2758 = vrot.slane %v2716, 5
      %v2759 = vrot.slane %v2758, 4
      %v2760 = vrot.slane %v2465, 5
      %v2761 = vsel %vm1552, %v2759, %v2760
      %v2762 = vrot.slane %v2717, 5
      %v2763 = vrot.slane %v2762, 4
      %v2764 = vrot.slane %v2467, 5
      %v2765 = vsel %vm1552, %v2763, %v2764
      %s2766 = scalar_lea.vmem %s8, 256
      %v2767 = vld [vmem:[%s2766] sm:$0xf]
      %v2768 = vld [vmem:[%s2766 + $0x4] sm:$0xf]
      %v2769 = vld [vmem:[%s2766 + $0x8] sm:$0xf]
      %v2770 = vld [vmem:[%s2766 + $0xc] sm:$0xf]
      %v2771 = vld [vmem:[%s2766 + $0x10] sm:$0xf]
      %v2772 = vld [vmem:[%s2766 + $0x14] sm:$0xf]
      %v2773 = vld [vmem:[%s2766 + $0x18] sm:$0xf]
      %v2774 = vld [vmem:[%s2766 + $0x1c] sm:$0xf]
      %v2775 = vunpack.c.l.b16 %v2737
      %v2776 = vunpack.c.l.b16 %v2741
      %v2777 = vunpack.c.l.b16 %v2745
      %v2778 = vunpack.c.l.b16 %v2749
      %v2779 = vunpack.c.l.b16 %v2753
      %v2780 = vunpack.c.l.b16 %v2757
      %v2781 = vunpack.c.l.b16 %v2761
      %v2782 = vunpack.c.l.b16 %v2765
      %v2783 = vpack.c.b16 %v2776, %v2775
      %v2784 = vpack.c.b16 %v2778, %v2777
      %v2785 = vpack.c.b16 %v2780, %v2779
      %v2786 = vpack.c.b16 %v2782, %v2781
      %v2795 = vunpack.c.l.b16 %v2767
      %v2796 = vunpack.c.l.b16 %v2768
      %v2797 = vunpack.c.l.b16 %v2769
      %v2798 = vunpack.c.l.b16 %v2770
      %v2799 = vunpack.c.l.b16 %v2771
      %v2800 = vunpack.c.l.b16 %v2772
      %v2801 = vunpack.c.l.b16 %v2773
      %v2802 = vunpack.c.l.b16 %v2774
      %v2803 = vpack.c.b16 %v2796, %v2795
      %v2804 = vpack.c.b16 %v2798, %v2797
      %v2805 = vpack.c.b16 %v2800, %v2799
      %v2806 = vpack.c.b16 %v2802, %v2801
      %v2812 = vsel %vm1327, %v2783, 0
      %v2815 = vsel %vm1327, %v2784, 0
      %v2818 = vsel %vm1327, %v2785, 0
      %v2821 = vsel %vm1327, %v2786, 0
      %2823 = vmatprep.subr.bf16.mxu0 0
      %2824 = vmatpush1.bf16.msra.mxu0 0
      %2825 = vmatprep.subr.bf16.mxu0 0
      %2826 = vmatpush1.bf16.msra.mxu0 0
      %2827 = vmatprep.subr.bf16.mxu0 0
      %2828 = vmatpush1.bf16.msra.mxu0 0
      %2829 = vmatprep.subr.bf16.mxu0 0
      %2830 = vmatpush1.bf16.msra.mxu0 0
      %2831 = vmatprep.subr.bf16.mxu0 0
      %2832 = vmatpush1.bf16.msra.mxu0 %v2806
      %2833 = vmatprep.subr.bf16.mxu0 0
      %2834 = vmatpush1.bf16.msra.mxu0 %v2805
      %2835 = vmatprep.subr.bf16.mxu0 0
      %2836 = vmatpush1.bf16.msra.mxu0 %v2804
      %2837 = vmatprep.subr.bf16.mxu0 0
      %2838 = vmatpush1.bf16.msra.mxu0 %v2803
      %2839 = vmatprep.subr.bf16.mxu0 0
      %2840 = vmatpush2.bf16.msra.mxu0 0
      %2841 = vmatprep.subr.bf16.mxu0 0
      %2842 = vmatpush2.bf16.msra.mxu0 0
      %2843 = vmatprep.subr.bf16.mxu0 0
      %2844 = vmatpush2.bf16.msra.mxu0 0
      %2845 = vmatprep.subr.bf16.mxu0 0
      %2846 = vmatpush2.bf16.msra.mxu0 0
      %2847 = vmatprep.subr.bf16.mxu0 0
      %2848 = vmatpush2.bf16.msra.mxu0 0
      %2849 = vmatprep.subr.bf16.mxu0 0
      %2850 = vmatpush2.bf16.msra.mxu0 0
      %2851 = vmatprep.subr.bf16.mxu0 0
      %2852 = vmatpush2.bf16.msra.mxu0 0
      %2853 = vmatprep.subr.bf16.mxu0 0
      %2854 = vmatpush2.bf16.msra.mxu0 0
      %2855 = vmatprep.mubr.bf16.mxu0 0
      %2856 = vmatmul.mubr.bf16.gmra.mxu0 %v2812
      %v2857 = vpop.f32.mrf.mxu0
      %v2858 = vadd.f32 0.0, %v2857
      %v2859 = vpop.f32.mrf.mxu0
      %v2860 = vpop.f32.mrf.mxu0
      %v2861 = vadd.f32 0.0, %v2860
      %v2862 = vpop.f32.mrf.mxu0
      %2863 = vmatprep.mubr.bf16.mxu0 0
      %2864 = vmatmul.mubr.bf16.gmra.mxu0 %v2815
      %v2865 = vpop.f32.mrf.mxu0
      %v2866 = vadd.f32 0.0, %v2865
      %v2867 = vpop.f32.mrf.mxu0
      %v2868 = vpop.f32.mrf.mxu0
      %v2869 = vadd.f32 0.0, %v2868
      %v2870 = vpop.f32.mrf.mxu0
      %2871 = vmatprep.mubr.bf16.mxu0 0
      %2872 = vmatmul.mubr.bf16.gmra.mxu0 %v2818
      %v2873 = vpop.f32.mrf.mxu0
      %v2874 = vadd.f32 0.0, %v2873
      %v2875 = vpop.f32.mrf.mxu0
      %v2876 = vpop.f32.mrf.mxu0
      %v2877 = vadd.f32 0.0, %v2876
      %v2878 = vpop.f32.mrf.mxu0
      %2879 = vmatprep.mubr.bf16.mxu0 0
      %2880 = vmatmul.mubr.bf16.gmra.mxu0 %v2821
      %v2881 = vpop.f32.mrf.mxu0
      %v2882 = vadd.f32 0.0, %v2881
      %v2883 = vpop.f32.mrf.mxu0
      %v2884 = vpop.f32.mrf.mxu0
      %v2885 = vadd.f32 0.0, %v2884
      %v2886 = vpop.f32.mrf.mxu0
      %2887 = vdwg.mxu0
      %v2888 = vadd.f32 %v2702, %v2858
      %v2889 = vadd.f32 %v2703, %v2861
      %v2890 = vadd.f32 %v2704, %v2866
      %v2891 = vadd.f32 %v2705, %v2869
      %v2892 = vadd.f32 %v2706, %v2874
      %v2893 = vadd.f32 %v2707, %v2877
      %v2894 = vadd.f32 %v2708, %v2882
      %v2895 = vadd.f32 %v2709, %v2885
      %v2896 = vld [vmem:[%s9] sm:$0x1]
      %v2898 = vlaneseq
      %v2899 = vshrl.u32 %v2898, 7
      %v2900 = vsub.s32 0, %v2899
      %v2901 = vrot.slane %v2896, %v2900
      %v2903 = vadd.f32 %v2888, %v2901
      %v2904 = vadd.f32 %v2889, %v2901
      %v2905 = vadd.f32 %v2890, %v2901
      %v2906 = vadd.f32 %v2891, %v2901
      %v2907 = vadd.f32 %v2892, %v2901
      %v2908 = vadd.f32 %v2893, %v2901
      %v2909 = vadd.f32 %v2894, %v2901
      %v2910 = vadd.f32 %v2895, %v2901
      %vm2911 = vcmask 203776
      %v2912 = vsel %vm2911, %v2903, -inf
      %2913 = vmax.xlane.f32.xlu0 %v2912
      %v2914 = vpop.xlane.xlu0 %2913
      %v2915 = vsel %vm2911, %v2904, -inf
      %2916 = vmax.xlane.f32.xlu0 %v2915
      %v2917 = vpop.xlane.xlu0 %2916
      %v2918 = vsel %vm2911, %v2905, -inf
      %2919 = vmax.xlane.f32.xlu0 %v2918
      %v2920 = vpop.xlane.xlu0 %2919
      %v2921 = vsel %vm2911, %v2906, -inf
      %2922 = vmax.xlane.f32.xlu0 %v2921
      %v2923 = vpop.xlane.xlu0 %2922
      %v2924 = vsel %vm2911, %v2907, -inf
      %2925 = vmax.xlane.f32.xlu0 %v2924
      %v2926 = vpop.xlane.xlu0 %2925
      %v2927 = vsel %vm2911, %v2908, -inf
      %2928 = vmax.xlane.f32.xlu0 %v2927
      %v2929 = vpop.xlane.xlu0 %2928
      %v2930 = vsel %vm2911, %v2909, -inf
      %2931 = vmax.xlane.f32.xlu0 %v2930
      %v2932 = vpop.xlane.xlu0 %2931
      %v2933 = vsel %vm2911, %v2910, -inf
      %2934 = vmax.xlane.f32.xlu0 %v2933
      %v2935 = vpop.xlane.xlu0 %2934
      %v2936 = vsub.f32 %v2903, %v2914
      %v2937 = vsub.f32 %v2904, %v2917
      %v2938 = vsub.f32 %v2905, %v2920
      %v2939 = vsub.f32 %v2906, %v2923
      %v2940 = vsub.f32 %v2907, %v2926
      %v2941 = vsub.f32 %v2908, %v2929
      %v2942 = vsub.f32 %v2909, %v2932
      %v2943 = vsub.f32 %v2910, %v2935
      %v2944 = vmul.f32 %v2936, 1.442695
      %v2945 = vpow.pop %v2944
      %v2946 = vmul.f32 %v2937, 1.442695
      %v2947 = vpow.pop %v2946
      %v2948 = vmul.f32 %v2938, 1.442695
      %v2949 = vpow.pop %v2948
      %v2950 = vmul.f32 %v2939, 1.442695
      %v2951 = vpow.pop %v2950
      %v2952 = vmul.f32 %v2940, 1.442695
      %v2953 = vpow.pop %v2952
      %v2954 = vmul.f32 %v2941, 1.442695
      %v2955 = vpow.pop %v2954
      %v2956 = vmul.f32 %v2942, 1.442695
      %v2957 = vpow.pop %v2956
      %v2958 = vmul.f32 %v2943, 1.442695
      %v2959 = vpow.pop %v2958
      %v2960 = vsel %vm2911, %v2945, 0.0
      %2961 = vadd.xlane.f32.xlu0 %v2960
      %v2962 = vpop.xlane.xlu0 %2961
      %v2963 = vsel %vm2911, %v2947, 0.0
      %2964 = vadd.xlane.f32.xlu0 %v2963
      %v2965 = vpop.xlane.xlu0 %2964
      %v2966 = vsel %vm2911, %v2949, 0.0
      %2967 = vadd.xlane.f32.xlu0 %v2966
      %v2968 = vpop.xlane.xlu0 %2967
      %v2969 = vsel %vm2911, %v2951, 0.0
      %2970 = vadd.xlane.f32.xlu0 %v2969
      %v2971 = vpop.xlane.xlu0 %2970
      %v2972 = vsel %vm2911, %v2953, 0.0
      %2973 = vadd.xlane.f32.xlu0 %v2972
      %v2974 = vpop.xlane.xlu0 %2973
      %v2975 = vsel %vm2911, %v2955, 0.0
      %2976 = vadd.xlane.f32.xlu0 %v2975
      %v2977 = vpop.xlane.xlu0 %2976
      %v2978 = vsel %vm2911, %v2957, 0.0
      %2979 = vadd.xlane.f32.xlu0 %v2978
      %v2980 = vpop.xlane.xlu0 %2979
      %v2981 = vsel %vm2911, %v2959, 0.0
      %2982 = vadd.xlane.f32.xlu0 %v2981
      %v2983 = vpop.xlane.xlu0 %2982
      %v2984 = vrcp.pop %v2962
      %v2985 = vrcp.pop %v2965
      %v2986 = vrcp.pop %v2968
      %v2987 = vrcp.pop %v2971
      %v2988 = vrcp.pop %v2974
      %v2989 = vrcp.pop %v2977
      %v2990 = vrcp.pop %v2980
      %v2991 = vrcp.pop %v2983
      %v2992 = vmul.f32 %v2945, %v2984
      %v2993 = vmul.f32 %v2947, %v2985
      %v2994 = vmul.f32 %v2949, %v2986
      %v2995 = vmul.f32 %v2951, %v2987
      %v2996 = vmul.f32 %v2953, %v2988
      %v2997 = vmul.f32 %v2955, %v2989
      %v2998 = vmul.f32 %v2957, %v2990
      %v2999 = vmul.f32 %v2959, %v2991
      %vm3000 = vcmask 466176
      %v3001 = vsel %vm3000, %v2903, -inf
      %3002 = vmax.xlane.f32.xlu0 %v3001
      %v3003 = vpop.xlane.xlu0 %3002
      %v3004 = vsel %vm3000, %v2904, -inf
      %3005 = vmax.xlane.f32.xlu0 %v3004
      %v3006 = vpop.xlane.xlu0 %3005
      %v3007 = vsel %vm3000, %v2905, -inf
      %3008 = vmax.xlane.f32.xlu0 %v3007
      %v3009 = vpop.xlane.xlu0 %3008
      %v3010 = vsel %vm3000, %v2906, -inf
      %3011 = vmax.xlane.f32.xlu0 %v3010
      %v3012 = vpop.xlane.xlu0 %3011
      %v3013 = vsel %vm3000, %v2907, -inf
      %3014 = vmax.xlane.f32.xlu0 %v3013
      %v3015 = vpop.xlane.xlu0 %3014
      %v3016 = vsel %vm3000, %v2908, -inf
      %3017 = vmax.xlane.f32.xlu0 %v3016
      %v3018 = vpop.xlane.xlu0 %3017
      %v3019 = vsel %vm3000, %v2909, -inf
      %3020 = vmax.xlane.f32.xlu0 %v3019
      %v3021 = vpop.xlane.xlu0 %3020
      %v3022 = vsel %vm3000, %v2910, -inf
      %3023 = vmax.xlane.f32.xlu0 %v3022
      %v3024 = vpop.xlane.xlu0 %3023
      %v3025 = vsub.f32 %v2903, %v3003
      %v3026 = vsub.f32 %v2904, %v3006
      %v3027 = vsub.f32 %v2905, %v3009
      %v3028 = vsub.f32 %v2906, %v3012
      %v3029 = vsub.f32 %v2907, %v3015
      %v3030 = vsub.f32 %v2908, %v3018
      %v3031 = vsub.f32 %v2909, %v3021
      %v3032 = vsub.f32 %v2910, %v3024
      %v3033 = vmul.f32 %v3025, 1.442695
      %v3034 = vpow.pop %v3033
      %v3035 = vmul.f32 %v3026, 1.442695
      %v3036 = vpow.pop %v3035
      %v3037 = vmul.f32 %v3027, 1.442695
      %v3038 = vpow.pop %v3037
      %v3039 = vmul.f32 %v3028, 1.442695
      %v3040 = vpow.pop %v3039
      %v3041 = vmul.f32 %v3029, 1.442695
      %v3042 = vpow.pop %v3041
      %v3043 = vmul.f32 %v3030, 1.442695
      %v3044 = vpow.pop %v3043
      %v3045 = vmul.f32 %v3031, 1.442695
      %v3046 = vpow.pop %v3045
      %v3047 = vmul.f32 %v3032, 1.442695
      %v3048 = vpow.pop %v3047
      %3057 = vrot.lane.b32.xlu0 %v3034, 96
      %v3058 = vpop.permute.xlu0 %3057
      %3059 = vrot.lane.b32.xlu0 %v3036, 96
      %v3060 = vpop.permute.xlu0 %3059
      %3061 = vrot.lane.b32.xlu0 %v3038, 96
      %v3062 = vpop.permute.xlu0 %3061
      %3063 = vrot.lane.b32.xlu0 %v3040, 96
      %v3064 = vpop.permute.xlu0 %3063
      %3065 = vrot.lane.b32.xlu0 %v3042, 96
      %v3066 = vpop.permute.xlu0 %3065
      %3067 = vrot.lane.b32.xlu0 %v3044, 96
      %v3068 = vpop.permute.xlu0 %3067
      %3069 = vrot.lane.b32.xlu0 %v3046, 96
      %v3070 = vpop.permute.xlu0 %3069
      %3071 = vrot.lane.b32.xlu0 %v3048, 96
      %v3072 = vpop.permute.xlu0 %3071
      %v3081 = vsel %vm2911, %v3058, 0.0
      %3082 = vadd.xlane.f32.xlu0 %v3081
      %v3083 = vpop.xlane.xlu0 %3082
      %v3084 = vsel %vm2911, %v3060, 0.0
      %3085 = vadd.xlane.f32.xlu0 %v3084
      %v3086 = vpop.xlane.xlu0 %3085
      %v3087 = vsel %vm2911, %v3062, 0.0
      %3088 = vadd.xlane.f32.xlu0 %v3087
      %v3089 = vpop.xlane.xlu0 %3088
      %v3090 = vsel %vm2911, %v3064, 0.0
      %3091 = vadd.xlane.f32.xlu0 %v3090
      %v3092 = vpop.xlane.xlu0 %3091
      %v3093 = vsel %vm2911, %v3066, 0.0
      %3094 = vadd.xlane.f32.xlu0 %v3093
      %v3095 = vpop.xlane.xlu0 %3094
      %v3096 = vsel %vm2911, %v3068, 0.0
      %3097 = vadd.xlane.f32.xlu0 %v3096
      %v3098 = vpop.xlane.xlu0 %3097
      %v3099 = vsel %vm2911, %v3070, 0.0
      %3100 = vadd.xlane.f32.xlu0 %v3099
      %v3101 = vpop.xlane.xlu0 %3100
      %v3102 = vsel %vm2911, %v3072, 0.0
      %3103 = vadd.xlane.f32.xlu0 %v3102
      %v3104 = vpop.xlane.xlu0 %3103
      %v3105 = vrcp.pop %v3083
      %v3106 = vrcp.pop %v3086
      %v3107 = vrcp.pop %v3089
      %v3108 = vrcp.pop %v3092
      %v3109 = vrcp.pop %v3095
      %v3110 = vrcp.pop %v3098
      %v3111 = vrcp.pop %v3101
      %v3112 = vrcp.pop %v3104
      %v3113 = vmul.f32 %v3034, %v3105
      %v3114 = vmul.f32 %v3036, %v3106
      %v3115 = vmul.f32 %v3038, %v3107
      %v3116 = vmul.f32 %v3040, %v3108
      %v3117 = vmul.f32 %v3042, %v3109
      %v3118 = vmul.f32 %v3044, %v3110
      %v3119 = vmul.f32 %v3046, %v3111
      %v3120 = vmul.f32 %v3048, %v3112
      %vm3121 = vcmask 728576
      %v3122 = vsel %vm3121, %v2903, -inf
      %3123 = vmax.xlane.f32.xlu0 %v3122
      %v3124 = vpop.xlane.xlu0 %3123
      %v3125 = vsel %vm3121, %v2904, -inf
      %3126 = vmax.xlane.f32.xlu0 %v3125
      %v3127 = vpop.xlane.xlu0 %3126
      %v3128 = vsel %vm3121, %v2905, -inf
      %3129 = vmax.xlane.f32.xlu0 %v3128
      %v3130 = vpop.xlane.xlu0 %3129
      %v3131 = vsel %vm3121, %v2906, -inf
      %3132 = vmax.xlane.f32.xlu0 %v3131
      %v3133 = vpop.xlane.xlu0 %3132
      %v3134 = vsel %vm3121, %v2907, -inf
      %3135 = vmax.xlane.f32.xlu0 %v3134
      %v3136 = vpop.xlane.xlu0 %3135
      %v3137 = vsel %vm3121, %v2908, -inf
      %3138 = vmax.xlane.f32.xlu0 %v3137
      %v3139 = vpop.xlane.xlu0 %3138
      %v3140 = vsel %vm3121, %v2909, -inf
      %3141 = vmax.xlane.f32.xlu0 %v3140
      %v3142 = vpop.xlane.xlu0 %3141
      %v3143 = vsel %vm3121, %v2910, -inf
      %3144 = vmax.xlane.f32.xlu0 %v3143
      %v3145 = vpop.xlane.xlu0 %3144
      %v3146 = vsub.f32 %v2903, %v3124
      %v3147 = vsub.f32 %v2904, %v3127
      %v3148 = vsub.f32 %v2905, %v3130
      %v3149 = vsub.f32 %v2906, %v3133
      %v3150 = vsub.f32 %v2907, %v3136
      %v3151 = vsub.f32 %v2908, %v3139
      %v3152 = vsub.f32 %v2909, %v3142
      %v3153 = vsub.f32 %v2910, %v3145
      %v3154 = vmul.f32 %v3146, 1.442695
      %v3155 = vpow.pop %v3154
      %v3156 = vmul.f32 %v3147, 1.442695
      %v3157 = vpow.pop %v3156
      %v3158 = vmul.f32 %v3148, 1.442695
      %v3159 = vpow.pop %v3158
      %v3160 = vmul.f32 %v3149, 1.442695
      %v3161 = vpow.pop %v3160
      %v3162 = vmul.f32 %v3150, 1.442695
      %v3163 = vpow.pop %v3162
      %v3164 = vmul.f32 %v3151, 1.442695
      %v3165 = vpow.pop %v3164
      %v3166 = vmul.f32 %v3152, 1.442695
      %v3167 = vpow.pop %v3166
      %v3168 = vmul.f32 %v3153, 1.442695
      %v3169 = vpow.pop %v3168
      %3178 = vrot.lane.b32.xlu0 %v3155, 64
      %v3179 = vpop.permute.xlu0 %3178
      %3180 = vrot.lane.b32.xlu0 %v3157, 64
      %v3181 = vpop.permute.xlu0 %3180
      %3182 = vrot.lane.b32.xlu0 %v3159, 64
      %v3183 = vpop.permute.xlu0 %3182
      %3184 = vrot.lane.b32.xlu0 %v3161, 64
      %v3185 = vpop.permute.xlu0 %3184
      %3186 = vrot.lane.b32.xlu0 %v3163, 64
      %v3187 = vpop.permute.xlu0 %3186
      %3188 = vrot.lane.b32.xlu0 %v3165, 64
      %v3189 = vpop.permute.xlu0 %3188
      %3190 = vrot.lane.b32.xlu0 %v3167, 64
      %v3191 = vpop.permute.xlu0 %3190
      %3192 = vrot.lane.b32.xlu0 %v3169, 64
      %v3193 = vpop.permute.xlu0 %3192
      %v3202 = vsel %vm2911, %v3179, 0.0
      %3203 = vadd.xlane.f32.xlu0 %v3202
      %v3204 = vpop.xlane.xlu0 %3203
      %v3205 = vsel %vm2911, %v3181, 0.0
      %3206 = vadd.xlane.f32.xlu0 %v3205
      %v3207 = vpop.xlane.xlu0 %3206
      %v3208 = vsel %vm2911, %v3183, 0.0
      %3209 = vadd.xlane.f32.xlu0 %v3208
      %v3210 = vpop.xlane.xlu0 %3209
      %v3211 = vsel %vm2911, %v3185, 0.0
      %3212 = vadd.xlane.f32.xlu0 %v3211
      %v3213 = vpop.xlane.xlu0 %3212
      %v3214 = vsel %vm2911, %v3187, 0.0
      %3215 = vadd.xlane.f32.xlu0 %v3214
      %v3216 = vpop.xlane.xlu0 %3215
      %v3217 = vsel %vm2911, %v3189, 0.0
      %3218 = vadd.xlane.f32.xlu0 %v3217
      %v3219 = vpop.xlane.xlu0 %3218
      %v3220 = vsel %vm2911, %v3191, 0.0
      %3221 = vadd.xlane.f32.xlu0 %v3220
      %v3222 = vpop.xlane.xlu0 %3221
      %v3223 = vsel %vm2911, %v3193, 0.0
      %3224 = vadd.xlane.f32.xlu0 %v3223
      %v3225 = vpop.xlane.xlu0 %3224
      %v3226 = vrcp.pop %v3204
      %v3227 = vrcp.pop %v3207
      %v3228 = vrcp.pop %v3210
      %v3229 = vrcp.pop %v3213
      %v3230 = vrcp.pop %v3216
      %v3231 = vrcp.pop %v3219
      %v3232 = vrcp.pop %v3222
      %v3233 = vrcp.pop %v3225
      %v3234 = vmul.f32 %v3155, %v3226
      %v3235 = vmul.f32 %v3157, %v3227
      %v3236 = vmul.f32 %v3159, %v3228
      %v3237 = vmul.f32 %v3161, %v3229
      %v3238 = vmul.f32 %v3163, %v3230
      %v3239 = vmul.f32 %v3165, %v3231
      %v3240 = vmul.f32 %v3167, %v3232
      %v3241 = vmul.f32 %v3169, %v3233
      %vm3242 = vcmask 990976
      %v3243 = vsel %vm3242, %v2903, -inf
      %3244 = vmax.xlane.f32.xlu0 %v3243
      %v3245 = vpop.xlane.xlu0 %3244
      %v3246 = vsel %vm3242, %v2904, -inf
      %3247 = vmax.xlane.f32.xlu0 %v3246
      %v3248 = vpop.xlane.xlu0 %3247
      %v3249 = vsel %vm3242, %v2905, -inf
      %3250 = vmax.xlane.f32.xlu0 %v3249
      %v3251 = vpop.xlane.xlu0 %3250
      %v3252 = vsel %vm3242, %v2906, -inf
      %3253 = vmax.xlane.f32.xlu0 %v3252
      %v3254 = vpop.xlane.xlu0 %3253
      %v3255 = vsel %vm3242, %v2907, -inf
      %3256 = vmax.xlane.f32.xlu0 %v3255
      %v3257 = vpop.xlane.xlu0 %3256
      %v3258 = vsel %vm3242, %v2908, -inf
      %3259 = vmax.xlane.f32.xlu0 %v3258
      %v3260 = vpop.xlane.xlu0 %3259
      %v3261 = vsel %vm3242, %v2909, -inf
      %3262 = vmax.xlane.f32.xlu0 %v3261
      %v3263 = vpop.xlane.xlu0 %3262
      %v3264 = vsel %vm3242, %v2910, -inf
      %3265 = vmax.xlane.f32.xlu0 %v3264
      %v3266 = vpop.xlane.xlu0 %3265
      %v3267 = vsub.f32 %v2903, %v3245
      %v3268 = vsub.f32 %v2904, %v3248
      %v3269 = vsub.f32 %v2905, %v3251
      %v3270 = vsub.f32 %v2906, %v3254
      %v3271 = vsub.f32 %v2907, %v3257
      %v3272 = vsub.f32 %v2908, %v3260
      %v3273 = vsub.f32 %v2909, %v3263
      %v3274 = vsub.f32 %v2910, %v3266
      %v3275 = vmul.f32 %v3267, 1.442695
      %v3276 = vpow.pop %v3275
      %v3277 = vmul.f32 %v3268, 1.442695
      %v3278 = vpow.pop %v3277
      %v3279 = vmul.f32 %v3269, 1.442695
      %v3280 = vpow.pop %v3279
      %v3281 = vmul.f32 %v3270, 1.442695
      %v3282 = vpow.pop %v3281
      %v3283 = vmul.f32 %v3271, 1.442695
      %v3284 = vpow.pop %v3283
      %v3285 = vmul.f32 %v3272, 1.442695
      %v3286 = vpow.pop %v3285
      %v3287 = vmul.f32 %v3273, 1.442695
      %v3288 = vpow.pop %v3287
      %v3289 = vmul.f32 %v3274, 1.442695
      %v3290 = vpow.pop %v3289
      %3299 = vrot.lane.b32.xlu0 %v3276, 32
      %v3300 = vpop.permute.xlu0 %3299
      %3301 = vrot.lane.b32.xlu0 %v3278, 32
      %v3302 = vpop.permute.xlu0 %3301
      %3303 = vrot.lane.b32.xlu0 %v3280, 32
      %v3304 = vpop.permute.xlu0 %3303
      %3305 = vrot.lane.b32.xlu0 %v3282, 32
      %v3306 = vpop.permute.xlu0 %3305
      %3307 = vrot.lane.b32.xlu0 %v3284, 32
      %v3308 = vpop.permute.xlu0 %3307
      %3309 = vrot.lane.b32.xlu0 %v3286, 32
      %v3310 = vpop.permute.xlu0 %3309
      %3311 = vrot.lane.b32.xlu0 %v3288, 32
      %v3312 = vpop.permute.xlu0 %3311
      %3313 = vrot.lane.b32.xlu0 %v3290, 32
      %v3314 = vpop.permute.xlu0 %3313
      %v3323 = vsel %vm2911, %v3300, 0.0
      %3324 = vadd.xlane.f32.xlu0 %v3323
      %v3325 = vpop.xlane.xlu0 %3324
      %v3326 = vsel %vm2911, %v3302, 0.0
      %3327 = vadd.xlane.f32.xlu0 %v3326
      %v3328 = vpop.xlane.xlu0 %3327
      %v3329 = vsel %vm2911, %v3304, 0.0
      %3330 = vadd.xlane.f32.xlu0 %v3329
      %v3331 = vpop.xlane.xlu0 %3330
      %v3332 = vsel %vm2911, %v3306, 0.0
      %3333 = vadd.xlane.f32.xlu0 %v3332
      %v3334 = vpop.xlane.xlu0 %3333
      %v3335 = vsel %vm2911, %v3308, 0.0
      %3336 = vadd.xlane.f32.xlu0 %v3335
      %v3337 = vpop.xlane.xlu0 %3336
      %v3338 = vsel %vm2911, %v3310, 0.0
      %3339 = vadd.xlane.f32.xlu0 %v3338
      %v3340 = vpop.xlane.xlu0 %3339
      %v3341 = vsel %vm2911, %v3312, 0.0
      %3342 = vadd.xlane.f32.xlu0 %v3341
      %v3343 = vpop.xlane.xlu0 %3342
      %v3344 = vsel %vm2911, %v3314, 0.0
      %3345 = vadd.xlane.f32.xlu0 %v3344
      %v3346 = vpop.xlane.xlu0 %3345
      %v3347 = vrcp.pop %v3325
      %v3348 = vrcp.pop %v3328
      %v3349 = vrcp.pop %v3331
      %v3350 = vrcp.pop %v3334
      %v3351 = vrcp.pop %v3337
      %v3352 = vrcp.pop %v3340
      %v3353 = vrcp.pop %v3343
      %v3354 = vrcp.pop %v3346
      %v3355 = vmul.f32 %v3276, %v3347
      %v3356 = vmul.f32 %v3278, %v3348
      %v3357 = vmul.f32 %v3280, %v3349
      %v3358 = vmul.f32 %v3282, %v3350
      %v3359 = vmul.f32 %v3284, %v3351
      %v3360 = vmul.f32 %v3286, %v3352
      %v3361 = vmul.f32 %v3288, %v3353
      %v3362 = vmul.f32 %v3290, %v3354
      %3363 = vst.msk [vmem:[#allocation3] sm:$0xff] %vm758, 0.0
      %vm3364 = vcmask 27648
      %3365 = vst.msk [vmem:[#allocation3 + $0x8] sm:$0xf] %vm3364, 0.0
      %3366 = vst.msk [vmem:[#allocation3 + $0x10] sm:$0xff] %vm758, 0.0
      %3367 = vst.msk [vmem:[#allocation3 + $0x18] sm:$0xf] %vm3364, 0.0
      %s3368 = scalar_lea.vmem [#allocation3], 160
      %3369 = vst.msk [vmem:[%s3368] sm:$0xff] %vm758, 0.0
      %3370 = vst.msk [vmem:[%s3368 + $0x8] sm:$0xf] %vm3364, 0.0
      %3371 = vst.msk [vmem:[%s3368 + $0x10] sm:$0xff] %vm758, 0.0
      %3372 = vst.msk [vmem:[%s3368 + $0x18] sm:$0xf] %vm3364, 0.0
      %vm3373 = vcmask 25600
      %3374 = vst.msk [vmem:[#allocation3] sm:$0x3] %vm3373, 0.0
      %3375 = vst.msk [vmem:[#allocation3 + $0x10] sm:$0x3] %vm3373, 0.0
      %3376 = vst.msk [vmem:[#allocation3 + $0x20] sm:$0x3] %vm3373, 0.0
      %3377 = vst.msk [vmem:[#allocation3 + $0x30] sm:$0x3] %vm3373, 0.0
      %3378 = vst.msk [vmem:[#allocation3 + $0x40] sm:$0x3] %vm3373, 0.0
      %3379 = vst.msk [vmem:[#allocation3 + $0x50] sm:$0x3] %vm3373, 0.0
      %3380 = vst.msk [vmem:[#allocation3 + $0x60] sm:$0x3] %vm3373, 0.0
      %3381 = vst.msk [vmem:[#allocation3 + $0x70] sm:$0x3] %vm3373, 0.0
      %3382 = vst.msk [vmem:[#allocation3 + $0x80] sm:$0x3] %vm3373, 0.0
      %3383 = vst.msk [vmem:[#allocation3 + $0x90] sm:$0x3] %vm3373, 0.0
      %3384 = vst.msk [vmem:[#allocation3 + $0xa0] sm:$0x3] %vm3373, 0.0
      %3385 = vst.msk [vmem:[#allocation3 + $0xb0] sm:$0x3] %vm3373, 0.0
      %3386 = vst.msk [vmem:[#allocation3 + $0xa] sm:$0x3] %vm3373, 0.0
      %3387 = vst.msk [vmem:[#allocation3 + $0x1a] sm:$0x3] %vm3373, 0.0
      %3388 = vst.msk [vmem:[#allocation3 + $0x2a] sm:$0x3] %vm3373, 0.0
      %3389 = vst.msk [vmem:[#allocation3 + $0x3a] sm:$0x3] %vm3373, 0.0
      %3390 = vst.msk [vmem:[#allocation3 + $0x4a] sm:$0x3] %vm3373, 0.0
      %3391 = vst.msk [vmem:[#allocation3 + $0x5a] sm:$0x3] %vm3373, 0.0
      %3392 = vst.msk [vmem:[#allocation3 + $0x6a] sm:$0x3] %vm3373, 0.0
      %3393 = vst.msk [vmem:[#allocation3 + $0x7a] sm:$0x3] %vm3373, 0.0
      %3394 = vst.msk [vmem:[#allocation3 + $0x8a] sm:$0x3] %vm3373, 0.0
      %3395 = vst.msk [vmem:[#allocation3 + $0x9a] sm:$0x3] %vm3373, 0.0
      %3396 = vst.msk [vmem:[#allocation3 + $0xaa] sm:$0x3] %vm3373, 0.0
      %3397 = vst.msk [vmem:[#allocation3 + $0xba] sm:$0x3] %vm3373, 0.0
      %s3398 = scalar_lea.vmem [#allocation3], 32
      %3399 = vst.msk [vmem:[%s3398 + $0x2] sm:$0xff] %vm758, %v583
      %3400 = vst.msk [vmem:[%s3398 + $0x12] sm:$0xff] %vm758, %v587
      %3401 = vst.msk [vmem:[%s3398 + $0x22] sm:$0xff] %vm758, %v593
      %3402 = vst.msk [vmem:[%s3398 + $0x32] sm:$0xff] %vm758, %v597
      %3403 = vst.msk [vmem:[%s3398 + $0x42] sm:$0xff] %vm758, %v603
      %3404 = vst.msk [vmem:[%s3398 + $0x52] sm:$0xff] %vm758, %v607
      %3405 = vst.msk [vmem:[%s3398 + $0x62] sm:$0xff] %vm758, %v613
      %3406 = vst.msk [vmem:[%s3398 + $0x72] sm:$0xff] %vm758, %v617
      %v3407 = vld [vmem:[#allocation3] sm:$0xff]
      %v3408 = vld [vmem:[#allocation3 + $0x10] sm:$0xff]
      %v3409 = vld [vmem:[#allocation3 + $0x20] sm:$0xff]
      %v3410 = vld [vmem:[#allocation3 + $0x30] sm:$0xff]
      %v3411 = vld [vmem:[#allocation3 + $0x40] sm:$0xff]
      %v3412 = vld [vmem:[#allocation3 + $0x50] sm:$0xff]
      %v3413 = vld [vmem:[#allocation3 + $0x60] sm:$0xff]
      %v3414 = vld [vmem:[#allocation3 + $0x70] sm:$0xff]
      %3416 = vset.pattern.permute.xlu0 0
      %3417 = vperm.xlu0 %3416, %v2992
      %v3418 = vpop.permute.xlu0 %3417
      %3421 = vset.pattern.permute.xlu0 0
      %3422 = vperm.xlu0 %3421, %v2993
      %v3423 = vpop.permute.xlu0 %3422
      %3426 = vset.pattern.permute.xlu0 0
      %3427 = vperm.xlu0 %3426, %v2994
      %v3428 = vpop.permute.xlu0 %3427
      %3431 = vset.pattern.permute.xlu0 0
      %3432 = vperm.xlu0 %3431, %v2995
      %v3433 = vpop.permute.xlu0 %3432
      %3436 = vset.pattern.permute.xlu0 0
      %3437 = vperm.xlu0 %3436, %v2996
      %v3438 = vpop.permute.xlu0 %3437
      %3441 = vset.pattern.permute.xlu0 0
      %3442 = vperm.xlu0 %3441, %v2997
      %v3443 = vpop.permute.xlu0 %3442
      %3446 = vset.pattern.permute.xlu0 0
      %3447 = vperm.xlu0 %3446, %v2998
      %v3448 = vpop.permute.xlu0 %3447
      %3451 = vset.pattern.permute.xlu0 0
      %3452 = vperm.xlu0 %3451, %v2999
      %v3453 = vpop.permute.xlu0 %3452
      %v3455 = vmul.f32 %v3418, %v3407
      %v3456 = vmul.f32 %v3423, %v3408
      %v3457 = vmul.f32 %v3428, %v3409
      %v3458 = vmul.f32 %v3433, %v3410
      %v3459 = vmul.f32 %v3438, %v3411
      %v3460 = vmul.f32 %v3443, %v3412
      %v3461 = vmul.f32 %v3448, %v3413
      %v3462 = vmul.f32 %v3453, %v3414
      %v3463 = vadd.f32 %v714, %v3455
      %v3464 = vadd.f32 %v718, %v3456
      %v3465 = vadd.f32 %v724, %v3457
      %v3466 = vadd.f32 %v728, %v3458
      %v3467 = vadd.f32 %v734, %v3459
      %v3468 = vadd.f32 %v738, %v3460
      %v3469 = vadd.f32 %v744, %v3461
      %v3470 = vadd.f32 %v748, %v3462
      %3472 = vset.pattern.permute.xlu0 32
      %3473 = vperm.xlu0 %3472, %v3113
      %v3474 = vpop.permute.xlu0 %3473
      %3477 = vset.pattern.permute.xlu0 32
      %3478 = vperm.xlu0 %3477, %v3114
      %v3479 = vpop.permute.xlu0 %3478
      %3482 = vset.pattern.permute.xlu0 32
      %3483 = vperm.xlu0 %3482, %v3115
      %v3484 = vpop.permute.xlu0 %3483
      %3487 = vset.pattern.permute.xlu0 32
      %3488 = vperm.xlu0 %3487, %v3116
      %v3489 = vpop.permute.xlu0 %3488
      %3492 = vset.pattern.permute.xlu0 32
      %3493 = vperm.xlu0 %3492, %v3117
      %v3494 = vpop.permute.xlu0 %3493
      %3497 = vset.pattern.permute.xlu0 32
      %3498 = vperm.xlu0 %3497, %v3118
      %v3499 = vpop.permute.xlu0 %3498
      %3502 = vset.pattern.permute.xlu0 32
      %3503 = vperm.xlu0 %3502, %v3119
      %v3504 = vpop.permute.xlu0 %3503
      %3507 = vset.pattern.permute.xlu0 32
      %3508 = vperm.xlu0 %3507, %v3120
      %v3509 = vpop.permute.xlu0 %3508
      %v3511 = vmul.f32 %v3474, %v3407
      %v3512 = vmul.f32 %v3479, %v3408
      %v3513 = vmul.f32 %v3484, %v3409
      %v3514 = vmul.f32 %v3489, %v3410
      %v3515 = vmul.f32 %v3494, %v3411
      %v3516 = vmul.f32 %v3499, %v3412
      %v3517 = vmul.f32 %v3504, %v3413
      %v3518 = vmul.f32 %v3509, %v3414
      %v3519 = vadd.f32 %v714, %v3511
      %v3520 = vadd.f32 %v718, %v3512
      %v3521 = vadd.f32 %v724, %v3513
      %v3522 = vadd.f32 %v728, %v3514
      %v3523 = vadd.f32 %v734, %v3515
      %v3524 = vadd.f32 %v738, %v3516
      %v3525 = vadd.f32 %v744, %v3517
      %v3526 = vadd.f32 %v748, %v3518
      %3528 = vset.pattern.permute.xlu0 64
      %3529 = vperm.xlu0 %3528, %v3234
      %v3530 = vpop.permute.xlu0 %3529
      %3533 = vset.pattern.permute.xlu0 64
      %3534 = vperm.xlu0 %3533, %v3235
      %v3535 = vpop.permute.xlu0 %3534
      %3538 = vset.pattern.permute.xlu0 64
      %3539 = vperm.xlu0 %3538, %v3236
      %v3540 = vpop.permute.xlu0 %3539
      %3543 = vset.pattern.permute.xlu0 64
      %3544 = vperm.xlu0 %3543, %v3237
      %v3545 = vpop.permute.xlu0 %3544
      %3548 = vset.pattern.permute.xlu0 64
      %3549 = vperm.xlu0 %3548, %v3238
      %v3550 = vpop.permute.xlu0 %3549
      %3553 = vset.pattern.permute.xlu0 64
      %3554 = vperm.xlu0 %3553, %v3239
      %v3555 = vpop.permute.xlu0 %3554
      %3558 = vset.pattern.permute.xlu0 64
      %3559 = vperm.xlu0 %3558, %v3240
      %v3560 = vpop.permute.xlu0 %3559
      %3563 = vset.pattern.permute.xlu0 64
      %3564 = vperm.xlu0 %3563, %v3241
      %v3565 = vpop.permute.xlu0 %3564
      %v3567 = vmul.f32 %v3530, %v3407
      %v3568 = vmul.f32 %v3535, %v3408
      %v3569 = vmul.f32 %v3540, %v3409
      %v3570 = vmul.f32 %v3545, %v3410
      %v3571 = vmul.f32 %v3550, %v3411
      %v3572 = vmul.f32 %v3555, %v3412
      %v3573 = vmul.f32 %v3560, %v3413
      %v3574 = vmul.f32 %v3565, %v3414
      %v3575 = vadd.f32 %v714, %v3567
      %v3576 = vadd.f32 %v718, %v3568
      %v3577 = vadd.f32 %v724, %v3569
      %v3578 = vadd.f32 %v728, %v3570
      %v3579 = vadd.f32 %v734, %v3571
      %v3580 = vadd.f32 %v738, %v3572
      %v3581 = vadd.f32 %v744, %v3573
      %v3582 = vadd.f32 %v748, %v3574
      %3584 = vset.pattern.permute.xlu0 96
      %3585 = vperm.xlu0 %3584, %v3355
      %v3586 = vpop.permute.xlu0 %3585
      %3589 = vset.pattern.permute.xlu0 96
      %3590 = vperm.xlu0 %3589, %v3356
      %v3591 = vpop.permute.xlu0 %3590
      %3594 = vset.pattern.permute.xlu0 96
      %3595 = vperm.xlu0 %3594, %v3357
      %v3596 = vpop.permute.xlu0 %3595
      %3599 = vset.pattern.permute.xlu0 96
      %3600 = vperm.xlu0 %3599, %v3358
      %v3601 = vpop.permute.xlu0 %3600
      %3604 = vset.pattern.permute.xlu0 96
      %3605 = vperm.xlu0 %3604, %v3359
      %v3606 = vpop.permute.xlu0 %3605
      %3609 = vset.pattern.permute.xlu0 96
      %3610 = vperm.xlu0 %3609, %v3360
      %v3611 = vpop.permute.xlu0 %3610
      %3614 = vset.pattern.permute.xlu0 96
      %3615 = vperm.xlu0 %3614, %v3361
      %v3616 = vpop.permute.xlu0 %3615
      %3619 = vset.pattern.permute.xlu0 96
      %3620 = vperm.xlu0 %3619, %v3362
      %v3621 = vpop.permute.xlu0 %3620
      %v3623 = vmul.f32 %v3586, %v3407
      %v3624 = vmul.f32 %v3591, %v3408
      %v3625 = vmul.f32 %v3596, %v3409
      %v3626 = vmul.f32 %v3601, %v3410
      %v3627 = vmul.f32 %v3606, %v3411
      %v3628 = vmul.f32 %v3611, %v3412
      %v3629 = vmul.f32 %v3616, %v3413
      %v3630 = vmul.f32 %v3621, %v3414
      %v3631 = vadd.f32 %v714, %v3623
      %v3632 = vadd.f32 %v718, %v3624
      %v3633 = vadd.f32 %v724, %v3625
      %v3634 = vadd.f32 %v728, %v3626
      %v3635 = vadd.f32 %v734, %v3627
      %v3636 = vadd.f32 %v738, %v3628
      %v3637 = vadd.f32 %v744, %v3629
      %v3638 = vadd.f32 %v748, %v3630
      %v3639 = vld [vmem:[#allocation3 + $0x1] sm:$0xff]
      %v3640 = vld [vmem:[#allocation3 + $0x11] sm:$0xff]
      %v3641 = vld [vmem:[#allocation3 + $0x21] sm:$0xff]
      %v3642 = vld [vmem:[#allocation3 + $0x31] sm:$0xff]
      %v3643 = vld [vmem:[#allocation3 + $0x41] sm:$0xff]
      %v3644 = vld [vmem:[#allocation3 + $0x51] sm:$0xff]
      %v3645 = vld [vmem:[#allocation3 + $0x61] sm:$0xff]
      %v3646 = vld [vmem:[#allocation3 + $0x71] sm:$0xff]
      %3647 = vset.pattern.permute.xlu0 1
      %3648 = vperm.xlu0 %3647, %v2992
      %v3649 = vpop.permute.xlu0 %3648
      %3651 = vset.pattern.permute.xlu0 1
      %3652 = vperm.xlu0 %3651, %v2993
      %v3653 = vpop.permute.xlu0 %3652
      %3655 = vset.pattern.permute.xlu0 1
      %3656 = vperm.xlu0 %3655, %v2994
      %v3657 = vpop.permute.xlu0 %3656
      %3659 = vset.pattern.permute.xlu0 1
      %3660 = vperm.xlu0 %3659, %v2995
      %v3661 = vpop.permute.xlu0 %3660
      %3663 = vset.pattern.permute.xlu0 1
      %3664 = vperm.xlu0 %3663, %v2996
      %v3665 = vpop.permute.xlu0 %3664
      %3667 = vset.pattern.permute.xlu0 1
      %3668 = vperm.xlu0 %3667, %v2997
      %v3669 = vpop.permute.xlu0 %3668
      %3671 = vset.pattern.permute.xlu0 1
      %3672 = vperm.xlu0 %3671, %v2998
      %v3673 = vpop.permute.xlu0 %3672
      %3675 = vset.pattern.permute.xlu0 1
      %3676 = vperm.xlu0 %3675, %v2999
      %v3677 = vpop.permute.xlu0 %3676
      %v3679 = vmul.f32 %v3649, %v3639
      %v3680 = vmul.f32 %v3653, %v3640
      %v3681 = vmul.f32 %v3657, %v3641
      %v3682 = vmul.f32 %v3661, %v3642
      %v3683 = vmul.f32 %v3665, %v3643
      %v3684 = vmul.f32 %v3669, %v3644
      %v3685 = vmul.f32 %v3673, %v3645
      %v3686 = vmul.f32 %v3677, %v3646
      %v3687 = vadd.f32 %v3463, %v3679
      %v3688 = vadd.f32 %v3464, %v3680
      %v3689 = vadd.f32 %v3465, %v3681
      %v3690 = vadd.f32 %v3466, %v3682
      %v3691 = vadd.f32 %v3467, %v3683
      %v3692 = vadd.f32 %v3468, %v3684
      %v3693 = vadd.f32 %v3469, %v3685
      %v3694 = vadd.f32 %v3470, %v3686
      %3695 = vset.pattern.permute.xlu0 33
      %3696 = vperm.xlu0 %3695, %v3113
      %v3697 = vpop.permute.xlu0 %3696
      %3699 = vset.pattern.permute.xlu0 33
      %3700 = vperm.xlu0 %3699, %v3114
      %v3701 = vpop.permute.xlu0 %3700
      %3703 = vset.pattern.permute.xlu0 33
      %3704 = vperm.xlu0 %3703, %v3115
      %v3705 = vpop.permute.xlu0 %3704
      %3707 = vset.pattern.permute.xlu0 33
      %3708 = vperm.xlu0 %3707, %v3116
      %v3709 = vpop.permute.xlu0 %3708
      %3711 = vset.pattern.permute.xlu0 33
      %3712 = vperm.xlu0 %3711, %v3117
      %v3713 = vpop.permute.xlu0 %3712
      %3715 = vset.pattern.permute.xlu0 33
      %3716 = vperm.xlu0 %3715, %v3118
      %v3717 = vpop.permute.xlu0 %3716
      %3719 = vset.pattern.permute.xlu0 33
      %3720 = vperm.xlu0 %3719, %v3119
      %v3721 = vpop.permute.xlu0 %3720
      %3723 = vset.pattern.permute.xlu0 33
      %3724 = vperm.xlu0 %3723, %v3120
      %v3725 = vpop.permute.xlu0 %3724
      %v3727 = vmul.f32 %v3697, %v3639
      %v3728 = vmul.f32 %v3701, %v3640
      %v3729 = vmul.f32 %v3705, %v3641
      %v3730 = vmul.f32 %v3709, %v3642
      %v3731 = vmul.f32 %v3713, %v3643
      %v3732 = vmul.f32 %v3717, %v3644
      %v3733 = vmul.f32 %v3721, %v3645
      %v3734 = vmul.f32 %v3725, %v3646
      %v3735 = vadd.f32 %v3519, %v3727
      %v3736 = vadd.f32 %v3520, %v3728
      %v3737 = vadd.f32 %v3521, %v3729
      %v3738 = vadd.f32 %v3522, %v3730
      %v3739 = vadd.f32 %v3523, %v3731
      %v3740 = vadd.f32 %v3524, %v3732
      %v3741 = vadd.f32 %v3525, %v3733
      %v3742 = vadd.f32 %v3526, %v3734
      %3743 = vset.pattern.permute.xlu0 65
      %3744 = vperm.xlu0 %3743, %v3234
      %v3745 = vpop.permute.xlu0 %3744
      %3747 = vset.pattern.permute.xlu0 65
      %3748 = vperm.xlu0 %3747, %v3235
      %v3749 = vpop.permute.xlu0 %3748
      %3751 = vset.pattern.permute.xlu0 65
      %3752 = vperm.xlu0 %3751, %v3236
      %v3753 = vpop.permute.xlu0 %3752
      %3755 = vset.pattern.permute.xlu0 65
      %3756 = vperm.xlu0 %3755, %v3237
      %v3757 = vpop.permute.xlu0 %3756
      %3759 = vset.pattern.permute.xlu0 65
      %3760 = vperm.xlu0 %3759, %v3238
      %v3761 = vpop.permute.xlu0 %3760
      %3763 = vset.pattern.permute.xlu0 65
      %3764 = vperm.xlu0 %3763, %v3239
      %v3765 = vpop.permute.xlu0 %3764
      %3767 = vset.pattern.permute.xlu0 65
      %3768 = vperm.xlu0 %3767, %v3240
      %v3769 = vpop.permute.xlu0 %3768
      %3771 = vset.pattern.permute.xlu0 65
      %3772 = vperm.xlu0 %3771, %v3241
      %v3773 = vpop.permute.xlu0 %3772
      %v3775 = vmul.f32 %v3745, %v3639
      %v3776 = vmul.f32 %v3749, %v3640
      %v3777 = vmul.f32 %v3753, %v3641
      %v3778 = vmul.f32 %v3757, %v3642
      %v3779 = vmul.f32 %v3761, %v3643
      %v3780 = vmul.f32 %v3765, %v3644
      %v3781 = vmul.f32 %v3769, %v3645
      %v3782 = vmul.f32 %v3773, %v3646
      %v3783 = vadd.f32 %v3575, %v3775
      %v3784 = vadd.f32 %v3576, %v3776
      %v3785 = vadd.f32 %v3577, %v3777
      %v3786 = vadd.f32 %v3578, %v3778
      %v3787 = vadd.f32 %v3579, %v3779
      %v3788 = vadd.f32 %v3580, %v3780
      %v3789 = vadd.f32 %v3581, %v3781
      %v3790 = vadd.f32 %v3582, %v3782
      %3791 = vset.pattern.permute.xlu0 97
      %3792 = vperm.xlu0 %3791, %v3355
      %v3793 = vpop.permute.xlu0 %3792
      %3795 = vset.pattern.permute.xlu0 97
      %3796 = vperm.xlu0 %3795, %v3356
      %v3797 = vpop.permute.xlu0 %3796
      %3799 = vset.pattern.permute.xlu0 97
      %3800 = vperm.xlu0 %3799, %v3357
      %v3801 = vpop.permute.xlu0 %3800
      %3803 = vset.pattern.permute.xlu0 97
      %3804 = vperm.xlu0 %3803, %v3358
      %v3805 = vpop.permute.xlu0 %3804
      %3807 = vset.pattern.permute.xlu0 97
      %3808 = vperm.xlu0 %3807, %v3359
      %v3809 = vpop.permute.xlu0 %3808
      %3811 = vset.pattern.permute.xlu0 97
      %3812 = vperm.xlu0 %3811, %v3360
      %v3813 = vpop.permute.xlu0 %3812
      %3815 = vset.pattern.permute.xlu0 97
      %3816 = vperm.xlu0 %3815, %v3361
      %v3817 = vpop.permute.xlu0 %3816
      %3819 = vset.pattern.permute.xlu0 97
      %3820 = vperm.xlu0 %3819, %v3362
      %v3821 = vpop.permute.xlu0 %3820
      %v3823 = vmul.f32 %v3793, %v3639
      %v3824 = vmul.f32 %v3797, %v3640
      %v3825 = vmul.f32 %v3801, %v3641
      %v3826 = vmul.f32 %v3805, %v3642
      %v3827 = vmul.f32 %v3809, %v3643
      %v3828 = vmul.f32 %v3813, %v3644
      %v3829 = vmul.f32 %v3817, %v3645
      %v3830 = vmul.f32 %v3821, %v3646
      %v3831 = vadd.f32 %v3631, %v3823
      %v3832 = vadd.f32 %v3632, %v3824
      %v3833 = vadd.f32 %v3633, %v3825
      %v3834 = vadd.f32 %v3634, %v3826
      %v3835 = vadd.f32 %v3635, %v3827
      %v3836 = vadd.f32 %v3636, %v3828
      %v3837 = vadd.f32 %v3637, %v3829
      %v3838 = vadd.f32 %v3638, %v3830
      %v3839 = vld [vmem:[#allocation3 + $0x2] sm:$0xff]
      %v3840 = vld [vmem:[#allocation3 + $0x12] sm:$0xff]
      %v3841 = vld [vmem:[#allocation3 + $0x22] sm:$0xff]
      %v3842 = vld [vmem:[#allocation3 + $0x32] sm:$0xff]
      %v3843 = vld [vmem:[#allocation3 + $0x42] sm:$0xff]
      %v3844 = vld [vmem:[#allocation3 + $0x52] sm:$0xff]
      %v3845 = vld [vmem:[#allocation3 + $0x62] sm:$0xff]
      %v3846 = vld [vmem:[#allocation3 + $0x72] sm:$0xff]
      %3847 = vset.pattern.permute.xlu0 2
      %3848 = vperm.xlu0 %3847, %v2992
      %v3849 = vpop.permute.xlu0 %3848
      %3851 = vset.pattern.permute.xlu0 2
      %3852 = vperm.xlu0 %3851, %v2993
      %v3853 = vpop.permute.xlu0 %3852
      %3855 = vset.pattern.permute.xlu0 2
      %3856 = vperm.xlu0 %3855, %v2994
      %v3857 = vpop.permute.xlu0 %3856
      %3859 = vset.pattern.permute.xlu0 2
      %3860 = vperm.xlu0 %3859, %v2995
      %v3861 = vpop.permute.xlu0 %3860
      %3863 = vset.pattern.permute.xlu0 2
      %3864 = vperm.xlu0 %3863, %v2996
      %v3865 = vpop.permute.xlu0 %3864
      %3867 = vset.pattern.permute.xlu0 2
      %3868 = vperm.xlu0 %3867, %v2997
      %v3869 = vpop.permute.xlu0 %3868
      %3871 = vset.pattern.permute.xlu0 2
      %3872 = vperm.xlu0 %3871, %v2998
      %v3873 = vpop.permute.xlu0 %3872
      %3875 = vset.pattern.permute.xlu0 2
      %3876 = vperm.xlu0 %3875, %v2999
      %v3877 = vpop.permute.xlu0 %3876
      %v3879 = vmul.f32 %v3849, %v3839
      %v3880 = vmul.f32 %v3853, %v3840
      %v3881 = vmul.f32 %v3857, %v3841
      %v3882 = vmul.f32 %v3861, %v3842
      %v3883 = vmul.f32 %v3865, %v3843
      %v3884 = vmul.f32 %v3869, %v3844
      %v3885 = vmul.f32 %v3873, %v3845
      %v3886 = vmul.f32 %v3877, %v3846
      %v3887 = vadd.f32 %v3687, %v3879
      %v3888 = vadd.f32 %v3688, %v3880
      %v3889 = vadd.f32 %v3689, %v3881
      %v3890 = vadd.f32 %v3690, %v3882
      %v3891 = vadd.f32 %v3691, %v3883
      %v3892 = vadd.f32 %v3692, %v3884
      %v3893 = vadd.f32 %v3693, %v3885
      %v3894 = vadd.f32 %v3694, %v3886
      %3895 = vset.pattern.permute.xlu0 34
      %3896 = vperm.xlu0 %3895, %v3113
      %v3897 = vpop.permute.xlu0 %3896
      %3899 = vset.pattern.permute.xlu0 34
      %3900 = vperm.xlu0 %3899, %v3114
      %v3901 = vpop.permute.xlu0 %3900
      %3903 = vset.pattern.permute.xlu0 34
      %3904 = vperm.xlu0 %3903, %v3115
      %v3905 = vpop.permute.xlu0 %3904
      %3907 = vset.pattern.permute.xlu0 34
      %3908 = vperm.xlu0 %3907, %v3116
      %v3909 = vpop.permute.xlu0 %3908
      %3911 = vset.pattern.permute.xlu0 34
      %3912 = vperm.xlu0 %3911, %v3117
      %v3913 = vpop.permute.xlu0 %3912
      %3915 = vset.pattern.permute.xlu0 34
      %3916 = vperm.xlu0 %3915, %v3118
      %v3917 = vpop.permute.xlu0 %3916
      %3919 = vset.pattern.permute.xlu0 34
      %3920 = vperm.xlu0 %3919, %v3119
      %v3921 = vpop.permute.xlu0 %3920
      %3923 = vset.pattern.permute.xlu0 34
      %3924 = vperm.xlu0 %3923, %v3120
      %v3925 = vpop.permute.xlu0 %3924
      %v3927 = vmul.f32 %v3897, %v3839
      %v3928 = vmul.f32 %v3901, %v3840
      %v3929 = vmul.f32 %v3905, %v3841
      %v3930 = vmul.f32 %v3909, %v3842
      %v3931 = vmul.f32 %v3913, %v3843
      %v3932 = vmul.f32 %v3917, %v3844
      %v3933 = vmul.f32 %v3921, %v3845
      %v3934 = vmul.f32 %v3925, %v3846
      %v3935 = vadd.f32 %v3735, %v3927
      %v3936 = vadd.f32 %v3736, %v3928
      %v3937 = vadd.f32 %v3737, %v3929
      %v3938 = vadd.f32 %v3738, %v3930
      %v3939 = vadd.f32 %v3739, %v3931
      %v3940 = vadd.f32 %v3740, %v3932
      %v3941 = vadd.f32 %v3741, %v3933
      %v3942 = vadd.f32 %v3742, %v3934
      %3943 = vset.pattern.permute.xlu0 66
      %3944 = vperm.xlu0 %3943, %v3234
      %v3945 = vpop.permute.xlu0 %3944
      %3947 = vset.pattern.permute.xlu0 66
      %3948 = vperm.xlu0 %3947, %v3235
      %v3949 = vpop.permute.xlu0 %3948
      %3951 = vset.pattern.permute.xlu0 66
      %3952 = vperm.xlu0 %3951, %v3236
      %v3953 = vpop.permute.xlu0 %3952
      %3955 = vset.pattern.permute.xlu0 66
      %3956 = vperm.xlu0 %3955, %v3237
      %v3957 = vpop.permute.xlu0 %3956
      %3959 = vset.pattern.permute.xlu0 66
      %3960 = vperm.xlu0 %3959, %v3238
      %v3961 = vpop.permute.xlu0 %3960
      %3963 = vset.pattern.permute.xlu0 66
      %3964 = vperm.xlu0 %3963, %v3239
      %v3965 = vpop.permute.xlu0 %3964
      %3967 = vset.pattern.permute.xlu0 66
      %3968 = vperm.xlu0 %3967, %v3240
      %v3969 = vpop.permute.xlu0 %3968
      %3971 = vset.pattern.permute.xlu0 66
      %3972 = vperm.xlu0 %3971, %v3241
      %v3973 = vpop.permute.xlu0 %3972
      %v3975 = vmul.f32 %v3945, %v3839
      %v3976 = vmul.f32 %v3949, %v3840
      %v3977 = vmul.f32 %v3953, %v3841
      %v3978 = vmul.f32 %v3957, %v3842
      %v3979 = vmul.f32 %v3961, %v3843
      %v3980 = vmul.f32 %v3965, %v3844
      %v3981 = vmul.f32 %v3969, %v3845
      %v3982 = vmul.f32 %v3973, %v3846
      %v3983 = vadd.f32 %v3783, %v3975
      %v3984 = vadd.f32 %v3784, %v3976
      %v3985 = vadd.f32 %v3785, %v3977
      %v3986 = vadd.f32 %v3786, %v3978
      %v3987 = vadd.f32 %v3787, %v3979
      %v3988 = vadd.f32 %v3788, %v3980
      %v3989 = vadd.f32 %v3789, %v3981
      %v3990 = vadd.f32 %v3790, %v3982
      %3991 = vset.pattern.permute.xlu0 98
      %3992 = vperm.xlu0 %3991, %v3355
      %v3993 = vpop.permute.xlu0 %3992
      %3995 = vset.pattern.permute.xlu0 98
      %3996 = vperm.xlu0 %3995, %v3356
      %v3997 = vpop.permute.xlu0 %3996
      %3999 = vset.pattern.permute.xlu0 98
      %4000 = vperm.xlu0 %3999, %v3357
      %v4001 = vpop.permute.xlu0 %4000
      %4003 = vset.pattern.permute.xlu0 98
      %4004 = vperm.xlu0 %4003, %v3358
      %v4005 = vpop.permute.xlu0 %4004
      %4007 = vset.pattern.permute.xlu0 98
      %4008 = vperm.xlu0 %4007, %v3359
      %v4009 = vpop.permute.xlu0 %4008
      %4011 = vset.pattern.permute.xlu0 98
      %4012 = vperm.xlu0 %4011, %v3360
      %v4013 = vpop.permute.xlu0 %4012
      %4015 = vset.pattern.permute.xlu0 98
      %4016 = vperm.xlu0 %4015, %v3361
      %v4017 = vpop.permute.xlu0 %4016
      %4019 = vset.pattern.permute.xlu0 98
      %4020 = vperm.xlu0 %4019, %v3362
      %v4021 = vpop.permute.xlu0 %4020
      %v4023 = vmul.f32 %v3993, %v3839
      %v4024 = vmul.f32 %v3997, %v3840
      %v4025 = vmul.f32 %v4001, %v3841
      %v4026 = vmul.f32 %v4005, %v3842
      %v4027 = vmul.f32 %v4009, %v3843
      %v4028 = vmul.f32 %v4013, %v3844
      %v4029 = vmul.f32 %v4017, %v3845
      %v4030 = vmul.f32 %v4021, %v3846
      %v4031 = vadd.f32 %v3831, %v4023
      %v4032 = vadd.f32 %v3832, %v4024
      %v4033 = vadd.f32 %v3833, %v4025
      %v4034 = vadd.f32 %v3834, %v4026
      %v4035 = vadd.f32 %v3835, %v4027
      %v4036 = vadd.f32 %v3836, %v4028
      %v4037 = vadd.f32 %v3837, %v4029
      %v4038 = vadd.f32 %v3838, %v4030
      %v4039 = vld [vmem:[#allocation3 + $0x3] sm:$0xff]
      %v4040 = vld [vmem:[#allocation3 + $0x13] sm:$0xff]
      %v4041 = vld [vmem:[#allocation3 + $0x23] sm:$0xff]
      %v4042 = vld [vmem:[#allocation3 + $0x33] sm:$0xff]
      %v4043 = vld [vmem:[#allocation3 + $0x43] sm:$0xff]
      %v4044 = vld [vmem:[#allocation3 + $0x53] sm:$0xff]
      %v4045 = vld [vmem:[#allocation3 + $0x63] sm:$0xff]
      %v4046 = vld [vmem:[#allocation3 + $0x73] sm:$0xff]
      %4047 = vset.pattern.permute.xlu0 3
      %4048 = vperm.xlu0 %4047, %v2992
      %v4049 = vpop.permute.xlu0 %4048
      %4051 = vset.pattern.permute.xlu0 3
      %4052 = vperm.xlu0 %4051, %v2993
      %v4053 = vpop.permute.xlu0 %4052
      %4055 = vset.pattern.permute.xlu0 3
      %4056 = vperm.xlu0 %4055, %v2994
      %v4057 = vpop.permute.xlu0 %4056
      %4059 = vset.pattern.permute.xlu0 3
      %4060 = vperm.xlu0 %4059, %v2995
      %v4061 = vpop.permute.xlu0 %4060
      %4063 = vset.pattern.permute.xlu0 3
      %4064 = vperm.xlu0 %4063, %v2996
      %v4065 = vpop.permute.xlu0 %4064
      %4067 = vset.pattern.permute.xlu0 3
      %4068 = vperm.xlu0 %4067, %v2997
      %v4069 = vpop.permute.xlu0 %4068
      %4071 = vset.pattern.permute.xlu0 3
      %4072 = vperm.xlu0 %4071, %v2998
      %v4073 = vpop.permute.xlu0 %4072
      %4075 = vset.pattern.permute.xlu0 3
      %4076 = vperm.xlu0 %4075, %v2999
      %v4077 = vpop.permute.xlu0 %4076
      %v4079 = vmul.f32 %v4049, %v4039
      %v4080 = vmul.f32 %v4053, %v4040
      %v4081 = vmul.f32 %v4057, %v4041
      %v4082 = vmul.f32 %v4061, %v4042
      %v4083 = vmul.f32 %v4065, %v4043
      %v4084 = vmul.f32 %v4069, %v4044
      %v4085 = vmul.f32 %v4073, %v4045
      %v4086 = vmul.f32 %v4077, %v4046
      %v4087 = vadd.f32 %v3887, %v4079
      %v4088 = vadd.f32 %v3888, %v4080
      %v4089 = vadd.f32 %v3889, %v4081
      %v4090 = vadd.f32 %v3890, %v4082
      %v4091 = vadd.f32 %v3891, %v4083
      %v4092 = vadd.f32 %v3892, %v4084
      %v4093 = vadd.f32 %v3893, %v4085
      %v4094 = vadd.f32 %v3894, %v4086
      %4095 = vset.pattern.permute.xlu0 35
      %4096 = vperm.xlu0 %4095, %v3113
      %v4097 = vpop.permute.xlu0 %4096
      %4099 = vset.pattern.permute.xlu0 35
      %4100 = vperm.xlu0 %4099, %v3114
      %v4101 = vpop.permute.xlu0 %4100
      %4103 = vset.pattern.permute.xlu0 35
      %4104 = vperm.xlu0 %4103, %v3115
      %v4105 = vpop.permute.xlu0 %4104
      %4107 = vset.pattern.permute.xlu0 35
      %4108 = vperm.xlu0 %4107, %v3116
      %v4109 = vpop.permute.xlu0 %4108
      %4111 = vset.pattern.permute.xlu0 35
      %4112 = vperm.xlu0 %4111, %v3117
      %v4113 = vpop.permute.xlu0 %4112
      %4115 = vset.pattern.permute.xlu0 35
      %4116 = vperm.xlu0 %4115, %v3118
      %v4117 = vpop.permute.xlu0 %4116
      %4119 = vset.pattern.permute.xlu0 35
      %4120 = vperm.xlu0 %4119, %v3119
      %v4121 = vpop.permute.xlu0 %4120
      %4123 = vset.pattern.permute.xlu0 35
      %4124 = vperm.xlu0 %4123, %v3120
      %v4125 = vpop.permute.xlu0 %4124
      %v4127 = vmul.f32 %v4097, %v4039
      %v4128 = vmul.f32 %v4101, %v4040
      %v4129 = vmul.f32 %v4105, %v4041
      %v4130 = vmul.f32 %v4109, %v4042
      %v4131 = vmul.f32 %v4113, %v4043
      %v4132 = vmul.f32 %v4117, %v4044
      %v4133 = vmul.f32 %v4121, %v4045
      %v4134 = vmul.f32 %v4125, %v4046
      %v4135 = vadd.f32 %v3935, %v4127
      %v4136 = vadd.f32 %v3936, %v4128
      %v4137 = vadd.f32 %v3937, %v4129
      %v4138 = vadd.f32 %v3938, %v4130
      %v4139 = vadd.f32 %v3939, %v4131
      %v4140 = vadd.f32 %v3940, %v4132
      %v4141 = vadd.f32 %v3941, %v4133
      %v4142 = vadd.f32 %v3942, %v4134
      %4143 = vset.pattern.permute.xlu0 67
      %4144 = vperm.xlu0 %4143, %v3234
      %v4145 = vpop.permute.xlu0 %4144
      %4147 = vset.pattern.permute.xlu0 67
      %4148 = vperm.xlu0 %4147, %v3235
      %v4149 = vpop.permute.xlu0 %4148
      %4151 = vset.pattern.permute.xlu0 67
      %4152 = vperm.xlu0 %4151, %v3236
      %v4153 = vpop.permute.xlu0 %4152
      %4155 = vset.pattern.permute.xlu0 67
      %4156 = vperm.xlu0 %4155, %v3237
      %v4157 = vpop.permute.xlu0 %4156
      %4159 = vset.pattern.permute.xlu0 67
      %4160 = vperm.xlu0 %4159, %v3238
      %v4161 = vpop.permute.xlu0 %4160
      %4163 = vset.pattern.permute.xlu0 67
      %4164 = vperm.xlu0 %4163, %v3239
      %v4165 = vpop.permute.xlu0 %4164
      %4167 = vset.pattern.permute.xlu0 67
      %4168 = vperm.xlu0 %4167, %v3240
      %v4169 = vpop.permute.xlu0 %4168
      %4171 = vset.pattern.permute.xlu0 67
      %4172 = vperm.xlu0 %4171, %v3241
      %v4173 = vpop.permute.xlu0 %4172
      %v4175 = vmul.f32 %v4145, %v4039
      %v4176 = vmul.f32 %v4149, %v4040
      %v4177 = vmul.f32 %v4153, %v4041
      %v4178 = vmul.f32 %v4157, %v4042
      %v4179 = vmul.f32 %v4161, %v4043
      %v4180 = vmul.f32 %v4165, %v4044
      %v4181 = vmul.f32 %v4169, %v4045
      %v4182 = vmul.f32 %v4173, %v4046
      %v4183 = vadd.f32 %v3983, %v4175
      %v4184 = vadd.f32 %v3984, %v4176
      %v4185 = vadd.f32 %v3985, %v4177
      %v4186 = vadd.f32 %v3986, %v4178
      %v4187 = vadd.f32 %v3987, %v4179
      %v4188 = vadd.f32 %v3988, %v4180
      %v4189 = vadd.f32 %v3989, %v4181
      %v4190 = vadd.f32 %v3990, %v4182
      %4191 = vset.pattern.permute.xlu0 99
      %4192 = vperm.xlu0 %4191, %v3355
      %v4193 = vpop.permute.xlu0 %4192
      %4195 = vset.pattern.permute.xlu0 99
      %4196 = vperm.xlu0 %4195, %v3356
      %v4197 = vpop.permute.xlu0 %4196
      %4199 = vset.pattern.permute.xlu0 99
      %4200 = vperm.xlu0 %4199, %v3357
      %v4201 = vpop.permute.xlu0 %4200
      %4203 = vset.pattern.permute.xlu0 99
      %4204 = vperm.xlu0 %4203, %v3358
      %v4205 = vpop.permute.xlu0 %4204
      %4207 = vset.pattern.permute.xlu0 99
      %4208 = vperm.xlu0 %4207, %v3359
      %v4209 = vpop.permute.xlu0 %4208
      %4211 = vset.pattern.permute.xlu0 99
      %4212 = vperm.xlu0 %4211, %v3360
      %v4213 = vpop.permute.xlu0 %4212
      %4215 = vset.pattern.permute.xlu0 99
      %4216 = vperm.xlu0 %4215, %v3361
      %v4217 = vpop.permute.xlu0 %4216
      %4219 = vset.pattern.permute.xlu0 99
      %4220 = vperm.xlu0 %4219, %v3362
      %v4221 = vpop.permute.xlu0 %4220
      %v4223 = vmul.f32 %v4193, %v4039
      %v4224 = vmul.f32 %v4197, %v4040
      %v4225 = vmul.f32 %v4201, %v4041
      %v4226 = vmul.f32 %v4205, %v4042
      %v4227 = vmul.f32 %v4209, %v4043
      %v4228 = vmul.f32 %v4213, %v4044
      %v4229 = vmul.f32 %v4217, %v4045
      %v4230 = vmul.f32 %v4221, %v4046
      %v4231 = vadd.f32 %v4031, %v4223
      %v4232 = vadd.f32 %v4032, %v4224
      %v4233 = vadd.f32 %v4033, %v4225
      %v4234 = vadd.f32 %v4034, %v4226
      %v4235 = vadd.f32 %v4035, %v4227
      %v4236 = vadd.f32 %v4036, %v4228
      %v4237 = vadd.f32 %v4037, %v4229
      %v4238 = vadd.f32 %v4038, %v4230
      %v4239 = vld [vmem:[#allocation3 + $0x4] sm:$0xff]
      %v4240 = vld [vmem:[#allocation3 + $0x14] sm:$0xff]
      %v4241 = vld [vmem:[#allocation3 + $0x24] sm:$0xff]
      %v4242 = vld [vmem:[#allocation3 + $0x34] sm:$0xff]
      %v4243 = vld [vmem:[#allocation3 + $0x44] sm:$0xff]
      %v4244 = vld [vmem:[#allocation3 + $0x54] sm:$0xff]
      %v4245 = vld [vmem:[#allocation3 + $0x64] sm:$0xff]
      %v4246 = vld [vmem:[#allocation3 + $0x74] sm:$0xff]
      %4247 = vset.pattern.permute.xlu0 4
      %4248 = vperm.xlu0 %4247, %v2992
      %v4249 = vpop.permute.xlu0 %4248
      %4251 = vset.pattern.permute.xlu0 4
      %4252 = vperm.xlu0 %4251, %v2993
      %v4253 = vpop.permute.xlu0 %4252
      %4255 = vset.pattern.permute.xlu0 4
      %4256 = vperm.xlu0 %4255, %v2994
      %v4257 = vpop.permute.xlu0 %4256
      %4259 = vset.pattern.permute.xlu0 4
      %4260 = vperm.xlu0 %4259, %v2995
      %v4261 = vpop.permute.xlu0 %4260
      %4263 = vset.pattern.permute.xlu0 4
      %4264 = vperm.xlu0 %4263, %v2996
      %v4265 = vpop.permute.xlu0 %4264
      %4267 = vset.pattern.permute.xlu0 4
      %4268 = vperm.xlu0 %4267, %v2997
      %v4269 = vpop.permute.xlu0 %4268
      %4271 = vset.pattern.permute.xlu0 4
      %4272 = vperm.xlu0 %4271, %v2998
      %v4273 = vpop.permute.xlu0 %4272
      %4275 = vset.pattern.permute.xlu0 4
      %4276 = vperm.xlu0 %4275, %v2999
      %v4277 = vpop.permute.xlu0 %4276
      %v4279 = vmul.f32 %v4249, %v4239
      %v4280 = vmul.f32 %v4253, %v4240
      %v4281 = vmul.f32 %v4257, %v4241
      %v4282 = vmul.f32 %v4261, %v4242
      %v4283 = vmul.f32 %v4265, %v4243
      %v4284 = vmul.f32 %v4269, %v4244
      %v4285 = vmul.f32 %v4273, %v4245
      %v4286 = vmul.f32 %v4277, %v4246
      %v4287 = vadd.f32 %v4087, %v4279
      %v4288 = vadd.f32 %v4088, %v4280
      %v4289 = vadd.f32 %v4089, %v4281
      %v4290 = vadd.f32 %v4090, %v4282
      %v4291 = vadd.f32 %v4091, %v4283
      %v4292 = vadd.f32 %v4092, %v4284
      %v4293 = vadd.f32 %v4093, %v4285
      %v4294 = vadd.f32 %v4094, %v4286
      %4295 = vset.pattern.permute.xlu0 36
      %4296 = vperm.xlu0 %4295, %v3113
      %v4297 = vpop.permute.xlu0 %4296
      %4299 = vset.pattern.permute.xlu0 36
      %4300 = vperm.xlu0 %4299, %v3114
      %v4301 = vpop.permute.xlu0 %4300
      %4303 = vset.pattern.permute.xlu0 36
      %4304 = vperm.xlu0 %4303, %v3115
      %v4305 = vpop.permute.xlu0 %4304
      %4307 = vset.pattern.permute.xlu0 36
      %4308 = vperm.xlu0 %4307, %v3116
      %v4309 = vpop.permute.xlu0 %4308
      %4311 = vset.pattern.permute.xlu0 36
      %4312 = vperm.xlu0 %4311, %v3117
      %v4313 = vpop.permute.xlu0 %4312
      %4315 = vset.pattern.permute.xlu0 36
      %4316 = vperm.xlu0 %4315, %v3118
      %v4317 = vpop.permute.xlu0 %4316
      %4319 = vset.pattern.permute.xlu0 36
      %4320 = vperm.xlu0 %4319, %v3119
      %v4321 = vpop.permute.xlu0 %4320
      %4323 = vset.pattern.permute.xlu0 36
      %4324 = vperm.xlu0 %4323, %v3120
      %v4325 = vpop.permute.xlu0 %4324
      %v4327 = vmul.f32 %v4297, %v4239
      %v4328 = vmul.f32 %v4301, %v4240
      %v4329 = vmul.f32 %v4305, %v4241
      %v4330 = vmul.f32 %v4309, %v4242
      %v4331 = vmul.f32 %v4313, %v4243
      %v4332 = vmul.f32 %v4317, %v4244
      %v4333 = vmul.f32 %v4321, %v4245
      %v4334 = vmul.f32 %v4325, %v4246
      %v4335 = vadd.f32 %v4135, %v4327
      %v4336 = vadd.f32 %v4136, %v4328
      %v4337 = vadd.f32 %v4137, %v4329
      %v4338 = vadd.f32 %v4138, %v4330
      %v4339 = vadd.f32 %v4139, %v4331
      %v4340 = vadd.f32 %v4140, %v4332
      %v4341 = vadd.f32 %v4141, %v4333
      %v4342 = vadd.f32 %v4142, %v4334
      %4343 = vset.pattern.permute.xlu0 68
      %4344 = vperm.xlu0 %4343, %v3234
      %v4345 = vpop.permute.xlu0 %4344
      %4347 = vset.pattern.permute.xlu0 68
      %4348 = vperm.xlu0 %4347, %v3235
      %v4349 = vpop.permute.xlu0 %4348
      %4351 = vset.pattern.permute.xlu0 68
      %4352 = vperm.xlu0 %4351, %v3236
      %v4353 = vpop.permute.xlu0 %4352
      %4355 = vset.pattern.permute.xlu0 68
      %4356 = vperm.xlu0 %4355, %v3237
      %v4357 = vpop.permute.xlu0 %4356
      %4359 = vset.pattern.permute.xlu0 68
      %4360 = vperm.xlu0 %4359, %v3238
      %v4361 = vpop.permute.xlu0 %4360
      %4363 = vset.pattern.permute.xlu0 68
      %4364 = vperm.xlu0 %4363, %v3239
      %v4365 = vpop.permute.xlu0 %4364
      %4367 = vset.pattern.permute.xlu0 68
      %4368 = vperm.xlu0 %4367, %v3240
      %v4369 = vpop.permute.xlu0 %4368
      %4371 = vset.pattern.permute.xlu0 68
      %4372 = vperm.xlu0 %4371, %v3241
      %v4373 = vpop.permute.xlu0 %4372
      %v4375 = vmul.f32 %v4345, %v4239
      %v4376 = vmul.f32 %v4349, %v4240
      %v4377 = vmul.f32 %v4353, %v4241
      %v4378 = vmul.f32 %v4357, %v4242
      %v4379 = vmul.f32 %v4361, %v4243
      %v4380 = vmul.f32 %v4365, %v4244
      %v4381 = vmul.f32 %v4369, %v4245
      %v4382 = vmul.f32 %v4373, %v4246
      %v4383 = vadd.f32 %v4183, %v4375
      %v4384 = vadd.f32 %v4184, %v4376
      %v4385 = vadd.f32 %v4185, %v4377
      %v4386 = vadd.f32 %v4186, %v4378
      %v4387 = vadd.f32 %v4187, %v4379
      %v4388 = vadd.f32 %v4188, %v4380
      %v4389 = vadd.f32 %v4189, %v4381
      %v4390 = vadd.f32 %v4190, %v4382
      %4391 = vset.pattern.permute.xlu0 100
      %4392 = vperm.xlu0 %4391, %v3355
      %v4393 = vpop.permute.xlu0 %4392
      %4395 = vset.pattern.permute.xlu0 100
      %4396 = vperm.xlu0 %4395, %v3356
      %v4397 = vpop.permute.xlu0 %4396
      %4399 = vset.pattern.permute.xlu0 100
      %4400 = vperm.xlu0 %4399, %v3357
      %v4401 = vpop.permute.xlu0 %4400
      %4403 = vset.pattern.permute.xlu0 100
      %4404 = vperm.xlu0 %4403, %v3358
      %v4405 = vpop.permute.xlu0 %4404
      %4407 = vset.pattern.permute.xlu0 100
      %4408 = vperm.xlu0 %4407, %v3359
      %v4409 = vpop.permute.xlu0 %4408
      %4411 = vset.pattern.permute.xlu0 100
      %4412 = vperm.xlu0 %4411, %v3360
      %v4413 = vpop.permute.xlu0 %4412
      %4415 = vset.pattern.permute.xlu0 100
      %4416 = vperm.xlu0 %4415, %v3361
      %v4417 = vpop.permute.xlu0 %4416
      %4419 = vset.pattern.permute.xlu0 100
      %4420 = vperm.xlu0 %4419, %v3362
      %v4421 = vpop.permute.xlu0 %4420
      %v4423 = vmul.f32 %v4393, %v4239
      %v4424 = vmul.f32 %v4397, %v4240
      %v4425 = vmul.f32 %v4401, %v4241
      %v4426 = vmul.f32 %v4405, %v4242
      %v4427 = vmul.f32 %v4409, %v4243
      %v4428 = vmul.f32 %v4413, %v4244
      %v4429 = vmul.f32 %v4417, %v4245
      %v4430 = vmul.f32 %v4421, %v4246
      %v4431 = vadd.f32 %v4231, %v4423
      %v4432 = vadd.f32 %v4232, %v4424
      %v4433 = vadd.f32 %v4233, %v4425
      %v4434 = vadd.f32 %v4234, %v4426
      %v4435 = vadd.f32 %v4235, %v4427
      %v4436 = vadd.f32 %v4236, %v4428
      %v4437 = vadd.f32 %v4237, %v4429
      %v4438 = vadd.f32 %v4238, %v4430
      %s4439 = scalar_lea.vmem [#allocation3], 16
      %v4440 = vld [vmem:[%s4439] sm:$0xff]
      %v4441 = vld [vmem:[%s4439 + $0x10] sm:$0xff]
      %v4442 = vld [vmem:[%s4439 + $0x20] sm:$0xff]
      %v4443 = vld [vmem:[%s4439 + $0x30] sm:$0xff]
      %v4444 = vld [vmem:[%s4439 + $0x40] sm:$0xff]
      %v4445 = vld [vmem:[%s4439 + $0x50] sm:$0xff]
      %v4446 = vld [vmem:[%s4439 + $0x60] sm:$0xff]
      %v4447 = vld [vmem:[%s4439 + $0x70] sm:$0xff]
      %4448 = vset.pattern.permute.xlu0 5
      %4449 = vperm.xlu0 %4448, %v2992
      %v4450 = vpop.permute.xlu0 %4449
      %4452 = vset.pattern.permute.xlu0 5
      %4453 = vperm.xlu0 %4452, %v2993
      %v4454 = vpop.permute.xlu0 %4453
      %4456 = vset.pattern.permute.xlu0 5
      %4457 = vperm.xlu0 %4456, %v2994
      %v4458 = vpop.permute.xlu0 %4457
      %4460 = vset.pattern.permute.xlu0 5
      %4461 = vperm.xlu0 %4460, %v2995
      %v4462 = vpop.permute.xlu0 %4461
      %4464 = vset.pattern.permute.xlu0 5
      %4465 = vperm.xlu0 %4464, %v2996
      %v4466 = vpop.permute.xlu0 %4465
      %4468 = vset.pattern.permute.xlu0 5
      %4469 = vperm.xlu0 %4468, %v2997
      %v4470 = vpop.permute.xlu0 %4469
      %4472 = vset.pattern.permute.xlu0 5
      %4473 = vperm.xlu0 %4472, %v2998
      %v4474 = vpop.permute.xlu0 %4473
      %4476 = vset.pattern.permute.xlu0 5
      %4477 = vperm.xlu0 %4476, %v2999
      %v4478 = vpop.permute.xlu0 %4477
      %v4480 = vmul.f32 %v4450, %v4440
      %v4481 = vmul.f32 %v4454, %v4441
      %v4482 = vmul.f32 %v4458, %v4442
      %v4483 = vmul.f32 %v4462, %v4443
      %v4484 = vmul.f32 %v4466, %v4444
      %v4485 = vmul.f32 %v4470, %v4445
      %v4486 = vmul.f32 %v4474, %v4446
      %v4487 = vmul.f32 %v4478, %v4447
      %v4488 = vadd.f32 %v4287, %v4480
      %v4489 = vadd.f32 %v4288, %v4481
      %v4490 = vadd.f32 %v4289, %v4482
      %v4491 = vadd.f32 %v4290, %v4483
      %v4492 = vadd.f32 %v4291, %v4484
      %v4493 = vadd.f32 %v4292, %v4485
      %v4494 = vadd.f32 %v4293, %v4486
      %v4495 = vadd.f32 %v4294, %v4487
      %4496 = vset.pattern.permute.xlu0 37
      %4497 = vperm.xlu0 %4496, %v3113
      %v4498 = vpop.permute.xlu0 %4497
      %4500 = vset.pattern.permute.xlu0 37
      %4501 = vperm.xlu0 %4500, %v3114
      %v4502 = vpop.permute.xlu0 %4501
      %4504 = vset.pattern.permute.xlu0 37
      %4505 = vperm.xlu0 %4504, %v3115
      %v4506 = vpop.permute.xlu0 %4505
      %4508 = vset.pattern.permute.xlu0 37
      %4509 = vperm.xlu0 %4508, %v3116
      %v4510 = vpop.permute.xlu0 %4509
      %4512 = vset.pattern.permute.xlu0 37
      %4513 = vperm.xlu0 %4512, %v3117
      %v4514 = vpop.permute.xlu0 %4513
      %4516 = vset.pattern.permute.xlu0 37
      %4517 = vperm.xlu0 %4516, %v3118
      %v4518 = vpop.permute.xlu0 %4517
      %4520 = vset.pattern.permute.xlu0 37
      %4521 = vperm.xlu0 %4520, %v3119
      %v4522 = vpop.permute.xlu0 %4521
      %4524 = vset.pattern.permute.xlu0 37
      %4525 = vperm.xlu0 %4524, %v3120
      %v4526 = vpop.permute.xlu0 %4525
      %v4528 = vmul.f32 %v4498, %v4440
      %v4529 = vmul.f32 %v4502, %v4441
      %v4530 = vmul.f32 %v4506, %v4442
      %v4531 = vmul.f32 %v4510, %v4443
      %v4532 = vmul.f32 %v4514, %v4444
      %v4533 = vmul.f32 %v4518, %v4445
      %v4534 = vmul.f32 %v4522, %v4446
      %v4535 = vmul.f32 %v4526, %v4447
      %v4536 = vadd.f32 %v4335, %v4528
      %v4537 = vadd.f32 %v4336, %v4529
      %v4538 = vadd.f32 %v4337, %v4530
      %v4539 = vadd.f32 %v4338, %v4531
      %v4540 = vadd.f32 %v4339, %v4532
      %v4541 = vadd.f32 %v4340, %v4533
      %v4542 = vadd.f32 %v4341, %v4534
      %v4543 = vadd.f32 %v4342, %v4535
      %4544 = vset.pattern.permute.xlu0 69
      %4545 = vperm.xlu0 %4544, %v3234
      %v4546 = vpop.permute.xlu0 %4545
      %4548 = vset.pattern.permute.xlu0 69
      %4549 = vperm.xlu0 %4548, %v3235
      %v4550 = vpop.permute.xlu0 %4549
      %4552 = vset.pattern.permute.xlu0 69
      %4553 = vperm.xlu0 %4552, %v3236
      %v4554 = vpop.permute.xlu0 %4553
      %4556 = vset.pattern.permute.xlu0 69
      %4557 = vperm.xlu0 %4556, %v3237
      %v4558 = vpop.permute.xlu0 %4557
      %4560 = vset.pattern.permute.xlu0 69
      %4561 = vperm.xlu0 %4560, %v3238
      %v4562 = vpop.permute.xlu0 %4561
      %4564 = vset.pattern.permute.xlu0 69
      %4565 = vperm.xlu0 %4564, %v3239
      %v4566 = vpop.permute.xlu0 %4565
      %4568 = vset.pattern.permute.xlu0 69
      %4569 = vperm.xlu0 %4568, %v3240
      %v4570 = vpop.permute.xlu0 %4569
      %4572 = vset.pattern.permute.xlu0 69
      %4573 = vperm.xlu0 %4572, %v3241
      %v4574 = vpop.permute.xlu0 %4573
      %v4576 = vmul.f32 %v4546, %v4440
      %v4577 = vmul.f32 %v4550, %v4441
      %v4578 = vmul.f32 %v4554, %v4442
      %v4579 = vmul.f32 %v4558, %v4443
      %v4580 = vmul.f32 %v4562, %v4444
      %v4581 = vmul.f32 %v4566, %v4445
      %v4582 = vmul.f32 %v4570, %v4446
      %v4583 = vmul.f32 %v4574, %v4447
      %v4584 = vadd.f32 %v4383, %v4576
      %v4585 = vadd.f32 %v4384, %v4577
      %v4586 = vadd.f32 %v4385, %v4578
      %v4587 = vadd.f32 %v4386, %v4579
      %v4588 = vadd.f32 %v4387, %v4580
      %v4589 = vadd.f32 %v4388, %v4581
      %v4590 = vadd.f32 %v4389, %v4582
      %v4591 = vadd.f32 %v4390, %v4583
      %4592 = vset.pattern.permute.xlu0 101
      %4593 = vperm.xlu0 %4592, %v3355
      %v4594 = vpop.permute.xlu0 %4593
      %4596 = vset.pattern.permute.xlu0 101
      %4597 = vperm.xlu0 %4596, %v3356
      %v4598 = vpop.permute.xlu0 %4597
      %4600 = vset.pattern.permute.xlu0 101
      %4601 = vperm.xlu0 %4600, %v3357
      %v4602 = vpop.permute.xlu0 %4601
      %4604 = vset.pattern.permute.xlu0 101
      %4605 = vperm.xlu0 %4604, %v3358
      %v4606 = vpop.permute.xlu0 %4605
      %4608 = vset.pattern.permute.xlu0 101
      %4609 = vperm.xlu0 %4608, %v3359
      %v4610 = vpop.permute.xlu0 %4609
      %4612 = vset.pattern.permute.xlu0 101
      %4613 = vperm.xlu0 %4612, %v3360
      %v4614 = vpop.permute.xlu0 %4613
      %4616 = vset.pattern.permute.xlu0 101
      %4617 = vperm.xlu0 %4616, %v3361
      %v4618 = vpop.permute.xlu0 %4617
      %4620 = vset.pattern.permute.xlu0 101
      %4621 = vperm.xlu0 %4620, %v3362
      %v4622 = vpop.permute.xlu0 %4621
      %v4624 = vmul.f32 %v4594, %v4440
      %v4625 = vmul.f32 %v4598, %v4441
      %v4626 = vmul.f32 %v4602, %v4442
      %v4627 = vmul.f32 %v4606, %v4443
      %v4628 = vmul.f32 %v4610, %v4444
      %v4629 = vmul.f32 %v4614, %v4445
      %v4630 = vmul.f32 %v4618, %v4446
      %v4631 = vmul.f32 %v4622, %v4447
      %v4632 = vadd.f32 %v4431, %v4624
      %v4633 = vadd.f32 %v4432, %v4625
      %v4634 = vadd.f32 %v4433, %v4626
      %v4635 = vadd.f32 %v4434, %v4627
      %v4636 = vadd.f32 %v4435, %v4628
      %v4637 = vadd.f32 %v4436, %v4629
      %v4638 = vadd.f32 %v4437, %v4630
      %v4639 = vadd.f32 %v4438, %v4631
      %v4640 = vld [vmem:[%s4439 + $0x1] sm:$0xff]
      %v4641 = vld [vmem:[%s4439 + $0x11] sm:$0xff]
      %v4642 = vld [vmem:[%s4439 + $0x21] sm:$0xff]
      %v4643 = vld [vmem:[%s4439 + $0x31] sm:$0xff]
      %v4644 = vld [vmem:[%s4439 + $0x41] sm:$0xff]
      %v4645 = vld [vmem:[%s4439 + $0x51] sm:$0xff]
      %v4646 = vld [vmem:[%s4439 + $0x61] sm:$0xff]
      %v4647 = vld [vmem:[%s4439 + $0x71] sm:$0xff]
      %4648 = vset.pattern.permute.xlu0 6
      %4649 = vperm.xlu0 %4648, %v2992
      %v4650 = vpop.permute.xlu0 %4649
      %4652 = vset.pattern.permute.xlu0 6
      %4653 = vperm.xlu0 %4652, %v2993
      %v4654 = vpop.permute.xlu0 %4653
      %4656 = vset.pattern.permute.xlu0 6
      %4657 = vperm.xlu0 %4656, %v2994
      %v4658 = vpop.permute.xlu0 %4657
      %4660 = vset.pattern.permute.xlu0 6
      %4661 = vperm.xlu0 %4660, %v2995
      %v4662 = vpop.permute.xlu0 %4661
      %4664 = vset.pattern.permute.xlu0 6
      %4665 = vperm.xlu0 %4664, %v2996
      %v4666 = vpop.permute.xlu0 %4665
      %4668 = vset.pattern.permute.xlu0 6
      %4669 = vperm.xlu0 %4668, %v2997
      %v4670 = vpop.permute.xlu0 %4669
      %4672 = vset.pattern.permute.xlu0 6
      %4673 = vperm.xlu0 %4672, %v2998
      %v4674 = vpop.permute.xlu0 %4673
      %4676 = vset.pattern.permute.xlu0 6
      %4677 = vperm.xlu0 %4676, %v2999
      %v4678 = vpop.permute.xlu0 %4677
      %v4680 = vmul.f32 %v4650, %v4640
      %v4681 = vmul.f32 %v4654, %v4641
      %v4682 = vmul.f32 %v4658, %v4642
      %v4683 = vmul.f32 %v4662, %v4643
      %v4684 = vmul.f32 %v4666, %v4644
      %v4685 = vmul.f32 %v4670, %v4645
      %v4686 = vmul.f32 %v4674, %v4646
      %v4687 = vmul.f32 %v4678, %v4647
      %v4688 = vadd.f32 %v4488, %v4680
      %v4689 = vadd.f32 %v4489, %v4681
      %v4690 = vadd.f32 %v4490, %v4682
      %v4691 = vadd.f32 %v4491, %v4683
      %v4692 = vadd.f32 %v4492, %v4684
      %v4693 = vadd.f32 %v4493, %v4685
      %v4694 = vadd.f32 %v4494, %v4686
      %v4695 = vadd.f32 %v4495, %v4687
      %4696 = vset.pattern.permute.xlu0 38
      %4697 = vperm.xlu0 %4696, %v3113
      %v4698 = vpop.permute.xlu0 %4697
      %4700 = vset.pattern.permute.xlu0 38
      %4701 = vperm.xlu0 %4700, %v3114
      %v4702 = vpop.permute.xlu0 %4701
      %4704 = vset.pattern.permute.xlu0 38
      %4705 = vperm.xlu0 %4704, %v3115
      %v4706 = vpop.permute.xlu0 %4705
      %4708 = vset.pattern.permute.xlu0 38
      %4709 = vperm.xlu0 %4708, %v3116
      %v4710 = vpop.permute.xlu0 %4709
      %4712 = vset.pattern.permute.xlu0 38
      %4713 = vperm.xlu0 %4712, %v3117
      %v4714 = vpop.permute.xlu0 %4713
      %4716 = vset.pattern.permute.xlu0 38
      %4717 = vperm.xlu0 %4716, %v3118
      %v4718 = vpop.permute.xlu0 %4717
      %4720 = vset.pattern.permute.xlu0 38
      %4721 = vperm.xlu0 %4720, %v3119
      %v4722 = vpop.permute.xlu0 %4721
      %4724 = vset.pattern.permute.xlu0 38
      %4725 = vperm.xlu0 %4724, %v3120
      %v4726 = vpop.permute.xlu0 %4725
      %v4728 = vmul.f32 %v4698, %v4640
      %v4729 = vmul.f32 %v4702, %v4641
      %v4730 = vmul.f32 %v4706, %v4642
      %v4731 = vmul.f32 %v4710, %v4643
      %v4732 = vmul.f32 %v4714, %v4644
      %v4733 = vmul.f32 %v4718, %v4645
      %v4734 = vmul.f32 %v4722, %v4646
      %v4735 = vmul.f32 %v4726, %v4647
      %v4736 = vadd.f32 %v4536, %v4728
      %v4737 = vadd.f32 %v4537, %v4729
      %v4738 = vadd.f32 %v4538, %v4730
      %v4739 = vadd.f32 %v4539, %v4731
      %v4740 = vadd.f32 %v4540, %v4732
      %v4741 = vadd.f32 %v4541, %v4733
      %v4742 = vadd.f32 %v4542, %v4734
      %v4743 = vadd.f32 %v4543, %v4735
      %4744 = vset.pattern.permute.xlu0 70
      %4745 = vperm.xlu0 %4744, %v3234
      %v4746 = vpop.permute.xlu0 %4745
      %4748 = vset.pattern.permute.xlu0 70
      %4749 = vperm.xlu0 %4748, %v3235
      %v4750 = vpop.permute.xlu0 %4749
      %4752 = vset.pattern.permute.xlu0 70
      %4753 = vperm.xlu0 %4752, %v3236
      %v4754 = vpop.permute.xlu0 %4753
      %4756 = vset.pattern.permute.xlu0 70
      %4757 = vperm.xlu0 %4756, %v3237
      %v4758 = vpop.permute.xlu0 %4757
      %4760 = vset.pattern.permute.xlu0 70
      %4761 = vperm.xlu0 %4760, %v3238
      %v4762 = vpop.permute.xlu0 %4761
      %4764 = vset.pattern.permute.xlu0 70
      %4765 = vperm.xlu0 %4764, %v3239
      %v4766 = vpop.permute.xlu0 %4765
      %4768 = vset.pattern.permute.xlu0 70
      %4769 = vperm.xlu0 %4768, %v3240
      %v4770 = vpop.permute.xlu0 %4769
      %4772 = vset.pattern.permute.xlu0 70
      %4773 = vperm.xlu0 %4772, %v3241
      %v4774 = vpop.permute.xlu0 %4773
      %v4776 = vmul.f32 %v4746, %v4640
      %v4777 = vmul.f32 %v4750, %v4641
      %v4778 = vmul.f32 %v4754, %v4642
      %v4779 = vmul.f32 %v4758, %v4643
      %v4780 = vmul.f32 %v4762, %v4644
      %v4781 = vmul.f32 %v4766, %v4645
      %v4782 = vmul.f32 %v4770, %v4646
      %v4783 = vmul.f32 %v4774, %v4647
      %v4784 = vadd.f32 %v4584, %v4776
      %v4785 = vadd.f32 %v4585, %v4777
      %v4786 = vadd.f32 %v4586, %v4778
      %v4787 = vadd.f32 %v4587, %v4779
      %v4788 = vadd.f32 %v4588, %v4780
      %v4789 = vadd.f32 %v4589, %v4781
      %v4790 = vadd.f32 %v4590, %v4782
      %v4791 = vadd.f32 %v4591, %v4783
      %4792 = vset.pattern.permute.xlu0 102
      %4793 = vperm.xlu0 %4792, %v3355
      %v4794 = vpop.permute.xlu0 %4793
      %4796 = vset.pattern.permute.xlu0 102
      %4797 = vperm.xlu0 %4796, %v3356
      %v4798 = vpop.permute.xlu0 %4797
      %4800 = vset.pattern.permute.xlu0 102
      %4801 = vperm.xlu0 %4800, %v3357
      %v4802 = vpop.permute.xlu0 %4801
      %4804 = vset.pattern.permute.xlu0 102
      %4805 = vperm.xlu0 %4804, %v3358
      %v4806 = vpop.permute.xlu0 %4805
      %4808 = vset.pattern.permute.xlu0 102
      %4809 = vperm.xlu0 %4808, %v3359
      %v4810 = vpop.permute.xlu0 %4809
      %4812 = vset.pattern.permute.xlu0 102
      %4813 = vperm.xlu0 %4812, %v3360
      %v4814 = vpop.permute.xlu0 %4813
      %4816 = vset.pattern.permute.xlu0 102
      %4817 = vperm.xlu0 %4816, %v3361
      %v4818 = vpop.permute.xlu0 %4817
      %4820 = vset.pattern.permute.xlu0 102
      %4821 = vperm.xlu0 %4820, %v3362
      %v4822 = vpop.permute.xlu0 %4821
      %v4824 = vmul.f32 %v4794, %v4640
      %v4825 = vmul.f32 %v4798, %v4641
      %v4826 = vmul.f32 %v4802, %v4642
      %v4827 = vmul.f32 %v4806, %v4643
      %v4828 = vmul.f32 %v4810, %v4644
      %v4829 = vmul.f32 %v4814, %v4645
      %v4830 = vmul.f32 %v4818, %v4646
      %v4831 = vmul.f32 %v4822, %v4647
      %v4832 = vadd.f32 %v4632, %v4824
      %v4833 = vadd.f32 %v4633, %v4825
      %v4834 = vadd.f32 %v4634, %v4826
      %v4835 = vadd.f32 %v4635, %v4827
      %v4836 = vadd.f32 %v4636, %v4828
      %v4837 = vadd.f32 %v4637, %v4829
      %v4838 = vadd.f32 %v4638, %v4830
      %v4839 = vadd.f32 %v4639, %v4831
      %v4840 = vld [vmem:[%s4439 + $0x2] sm:$0xff]
      %v4841 = vld [vmem:[%s4439 + $0x12] sm:$0xff]
      %v4842 = vld [vmem:[%s4439 + $0x22] sm:$0xff]
      %v4843 = vld [vmem:[%s4439 + $0x32] sm:$0xff]
      %v4844 = vld [vmem:[%s4439 + $0x42] sm:$0xff]
      %v4845 = vld [vmem:[%s4439 + $0x52] sm:$0xff]
      %v4846 = vld [vmem:[%s4439 + $0x62] sm:$0xff]
      %v4847 = vld [vmem:[%s4439 + $0x72] sm:$0xff]
      %4848 = vset.pattern.permute.xlu0 7
      %4849 = vperm.xlu0 %4848, %v2992
      %v4850 = vpop.permute.xlu0 %4849
      %4852 = vset.pattern.permute.xlu0 7
      %4853 = vperm.xlu0 %4852, %v2993
      %v4854 = vpop.permute.xlu0 %4853
      %4856 = vset.pattern.permute.xlu0 7
      %4857 = vperm.xlu0 %4856, %v2994
      %v4858 = vpop.permute.xlu0 %4857
      %4860 = vset.pattern.permute.xlu0 7
      %4861 = vperm.xlu0 %4860, %v2995
      %v4862 = vpop.permute.xlu0 %4861
      %4864 = vset.pattern.permute.xlu0 7
      %4865 = vperm.xlu0 %4864, %v2996
      %v4866 = vpop.permute.xlu0 %4865
      %4868 = vset.pattern.permute.xlu0 7
      %4869 = vperm.xlu0 %4868, %v2997
      %v4870 = vpop.permute.xlu0 %4869
      %4872 = vset.pattern.permute.xlu0 7
      %4873 = vperm.xlu0 %4872, %v2998
      %v4874 = vpop.permute.xlu0 %4873
      %4876 = vset.pattern.permute.xlu0 7
      %4877 = vperm.xlu0 %4876, %v2999
      %v4878 = vpop.permute.xlu0 %4877
      %v4880 = vmul.f32 %v4850, %v4840
      %v4881 = vmul.f32 %v4854, %v4841
      %v4882 = vmul.f32 %v4858, %v4842
      %v4883 = vmul.f32 %v4862, %v4843
      %v4884 = vmul.f32 %v4866, %v4844
      %v4885 = vmul.f32 %v4870, %v4845
      %v4886 = vmul.f32 %v4874, %v4846
      %v4887 = vmul.f32 %v4878, %v4847
      %v4888 = vadd.f32 %v4688, %v4880
      %v4889 = vadd.f32 %v4689, %v4881
      %v4890 = vadd.f32 %v4690, %v4882
      %v4891 = vadd.f32 %v4691, %v4883
      %v4892 = vadd.f32 %v4692, %v4884
      %v4893 = vadd.f32 %v4693, %v4885
      %v4894 = vadd.f32 %v4694, %v4886
      %v4895 = vadd.f32 %v4695, %v4887
      %4896 = vset.pattern.permute.xlu0 39
      %4897 = vperm.xlu0 %4896, %v3113
      %v4898 = vpop.permute.xlu0 %4897
      %4900 = vset.pattern.permute.xlu0 39
      %4901 = vperm.xlu0 %4900, %v3114
      %v4902 = vpop.permute.xlu0 %4901
      %4904 = vset.pattern.permute.xlu0 39
      %4905 = vperm.xlu0 %4904, %v3115
      %v4906 = vpop.permute.xlu0 %4905
      %4908 = vset.pattern.permute.xlu0 39
      %4909 = vperm.xlu0 %4908, %v3116
      %v4910 = vpop.permute.xlu0 %4909
      %4912 = vset.pattern.permute.xlu0 39
      %4913 = vperm.xlu0 %4912, %v3117
      %v4914 = vpop.permute.xlu0 %4913
      %4916 = vset.pattern.permute.xlu0 39
      %4917 = vperm.xlu0 %4916, %v3118
      %v4918 = vpop.permute.xlu0 %4917
      %4920 = vset.pattern.permute.xlu0 39
      %4921 = vperm.xlu0 %4920, %v3119
      %v4922 = vpop.permute.xlu0 %4921
      %4924 = vset.pattern.permute.xlu0 39
      %4925 = vperm.xlu0 %4924, %v3120
      %v4926 = vpop.permute.xlu0 %4925
      %v4928 = vmul.f32 %v4898, %v4840
      %v4929 = vmul.f32 %v4902, %v4841
      %v4930 = vmul.f32 %v4906, %v4842
      %v4931 = vmul.f32 %v4910, %v4843
      %v4932 = vmul.f32 %v4914, %v4844
      %v4933 = vmul.f32 %v4918, %v4845
      %v4934 = vmul.f32 %v4922, %v4846
      %v4935 = vmul.f32 %v4926, %v4847
      %v4936 = vadd.f32 %v4736, %v4928
      %v4937 = vadd.f32 %v4737, %v4929
      %v4938 = vadd.f32 %v4738, %v4930
      %v4939 = vadd.f32 %v4739, %v4931
      %v4940 = vadd.f32 %v4740, %v4932
      %v4941 = vadd.f32 %v4741, %v4933
      %v4942 = vadd.f32 %v4742, %v4934
      %v4943 = vadd.f32 %v4743, %v4935
      %4944 = vset.pattern.permute.xlu0 71
      %4945 = vperm.xlu0 %4944, %v3234
      %v4946 = vpop.permute.xlu0 %4945
      %4948 = vset.pattern.permute.xlu0 71
      %4949 = vperm.xlu0 %4948, %v3235
      %v4950 = vpop.permute.xlu0 %4949
      %4952 = vset.pattern.permute.xlu0 71
      %4953 = vperm.xlu0 %4952, %v3236
      %v4954 = vpop.permute.xlu0 %4953
      %4956 = vset.pattern.permute.xlu0 71
      %4957 = vperm.xlu0 %4956, %v3237
      %v4958 = vpop.permute.xlu0 %4957
      %4960 = vset.pattern.permute.xlu0 71
      %4961 = vperm.xlu0 %4960, %v3238
      %v4962 = vpop.permute.xlu0 %4961
      %4964 = vset.pattern.permute.xlu0 71
      %4965 = vperm.xlu0 %4964, %v3239
      %v4966 = vpop.permute.xlu0 %4965
      %4968 = vset.pattern.permute.xlu0 71
      %4969 = vperm.xlu0 %4968, %v3240
      %v4970 = vpop.permute.xlu0 %4969
      %4972 = vset.pattern.permute.xlu0 71
      %4973 = vperm.xlu0 %4972, %v3241
      %v4974 = vpop.permute.xlu0 %4973
      %v4976 = vmul.f32 %v4946, %v4840
      %v4977 = vmul.f32 %v4950, %v4841
      %v4978 = vmul.f32 %v4954, %v4842
      %v4979 = vmul.f32 %v4958, %v4843
      %v4980 = vmul.f32 %v4962, %v4844
      %v4981 = vmul.f32 %v4966, %v4845
      %v4982 = vmul.f32 %v4970, %v4846
      %v4983 = vmul.f32 %v4974, %v4847
      %v4984 = vadd.f32 %v4784, %v4976
      %v4985 = vadd.f32 %v4785, %v4977
      %v4986 = vadd.f32 %v4786, %v4978
      %v4987 = vadd.f32 %v4787, %v4979
      %v4988 = vadd.f32 %v4788, %v4980
      %v4989 = vadd.f32 %v4789, %v4981
      %v4990 = vadd.f32 %v4790, %v4982
      %v4991 = vadd.f32 %v4791, %v4983
      %4992 = vset.pattern.permute.xlu0 103
      %4993 = vperm.xlu0 %4992, %v3355
      %v4994 = vpop.permute.xlu0 %4993
      %4996 = vset.pattern.permute.xlu0 103
      %4997 = vperm.xlu0 %4996, %v3356
      %v4998 = vpop.permute.xlu0 %4997
      %5000 = vset.pattern.permute.xlu0 103
      %5001 = vperm.xlu0 %5000, %v3357
      %v5002 = vpop.permute.xlu0 %5001
      %5004 = vset.pattern.permute.xlu0 103
      %5005 = vperm.xlu0 %5004, %v3358
      %v5006 = vpop.permute.xlu0 %5005
      %5008 = vset.pattern.permute.xlu0 103
      %5009 = vperm.xlu0 %5008, %v3359
      %v5010 = vpop.permute.xlu0 %5009
      %5012 = vset.pattern.permute.xlu0 103
      %5013 = vperm.xlu0 %5012, %v3360
      %v5014 = vpop.permute.xlu0 %5013
      %5016 = vset.pattern.permute.xlu0 103
      %5017 = vperm.xlu0 %5016, %v3361
      %v5018 = vpop.permute.xlu0 %5017
      %5020 = vset.pattern.permute.xlu0 103
      %5021 = vperm.xlu0 %5020, %v3362
      %v5022 = vpop.permute.xlu0 %5021
      %v5024 = vmul.f32 %v4994, %v4840
      %v5025 = vmul.f32 %v4998, %v4841
      %v5026 = vmul.f32 %v5002, %v4842
      %v5027 = vmul.f32 %v5006, %v4843
      %v5028 = vmul.f32 %v5010, %v4844
      %v5029 = vmul.f32 %v5014, %v4845
      %v5030 = vmul.f32 %v5018, %v4846
      %v5031 = vmul.f32 %v5022, %v4847
      %v5032 = vadd.f32 %v4832, %v5024
      %v5033 = vadd.f32 %v4833, %v5025
      %v5034 = vadd.f32 %v4834, %v5026
      %v5035 = vadd.f32 %v4835, %v5027
      %v5036 = vadd.f32 %v4836, %v5028
      %v5037 = vadd.f32 %v4837, %v5029
      %v5038 = vadd.f32 %v4838, %v5030
      %v5039 = vadd.f32 %v4839, %v5031
      %v5040 = vld [vmem:[%s4439 + $0x3] sm:$0xff]
      %v5041 = vld [vmem:[%s4439 + $0x13] sm:$0xff]
      %v5042 = vld [vmem:[%s4439 + $0x23] sm:$0xff]
      %v5043 = vld [vmem:[%s4439 + $0x33] sm:$0xff]
      %v5044 = vld [vmem:[%s4439 + $0x43] sm:$0xff]
      %v5045 = vld [vmem:[%s4439 + $0x53] sm:$0xff]
      %v5046 = vld [vmem:[%s4439 + $0x63] sm:$0xff]
      %v5047 = vld [vmem:[%s4439 + $0x73] sm:$0xff]
      %5048 = vset.pattern.permute.xlu0 8
      %5049 = vperm.xlu0 %5048, %v2992
      %v5050 = vpop.permute.xlu0 %5049
      %5052 = vset.pattern.permute.xlu0 8
      %5053 = vperm.xlu0 %5052, %v2993
      %v5054 = vpop.permute.xlu0 %5053
      %5056 = vset.pattern.permute.xlu0 8
      %5057 = vperm.xlu0 %5056, %v2994
      %v5058 = vpop.permute.xlu0 %5057
      %5060 = vset.pattern.permute.xlu0 8
      %5061 = vperm.xlu0 %5060, %v2995
      %v5062 = vpop.permute.xlu0 %5061
      %5064 = vset.pattern.permute.xlu0 8
      %5065 = vperm.xlu0 %5064, %v2996
      %v5066 = vpop.permute.xlu0 %5065
      %5068 = vset.pattern.permute.xlu0 8
      %5069 = vperm.xlu0 %5068, %v2997
      %v5070 = vpop.permute.xlu0 %5069
      %5072 = vset.pattern.permute.xlu0 8
      %5073 = vperm.xlu0 %5072, %v2998
      %v5074 = vpop.permute.xlu0 %5073
      %5076 = vset.pattern.permute.xlu0 8
      %5077 = vperm.xlu0 %5076, %v2999
      %v5078 = vpop.permute.xlu0 %5077
      %v5080 = vmul.f32 %v5050, %v5040
      %v5081 = vmul.f32 %v5054, %v5041
      %v5082 = vmul.f32 %v5058, %v5042
      %v5083 = vmul.f32 %v5062, %v5043
      %v5084 = vmul.f32 %v5066, %v5044
      %v5085 = vmul.f32 %v5070, %v5045
      %v5086 = vmul.f32 %v5074, %v5046
      %v5087 = vmul.f32 %v5078, %v5047
      %v5088 = vadd.f32 %v4888, %v5080
      %v5089 = vadd.f32 %v4889, %v5081
      %v5090 = vadd.f32 %v4890, %v5082
      %v5091 = vadd.f32 %v4891, %v5083
      %v5092 = vadd.f32 %v4892, %v5084
      %v5093 = vadd.f32 %v4893, %v5085
      %v5094 = vadd.f32 %v4894, %v5086
      %v5095 = vadd.f32 %v4895, %v5087
      %5096 = vset.pattern.permute.xlu0 40
      %5097 = vperm.xlu0 %5096, %v3113
      %v5098 = vpop.permute.xlu0 %5097
      %5100 = vset.pattern.permute.xlu0 40
      %5101 = vperm.xlu0 %5100, %v3114
      %v5102 = vpop.permute.xlu0 %5101
      %5104 = vset.pattern.permute.xlu0 40
      %5105 = vperm.xlu0 %5104, %v3115
      %v5106 = vpop.permute.xlu0 %5105
      %5108 = vset.pattern.permute.xlu0 40
      %5109 = vperm.xlu0 %5108, %v3116
      %v5110 = vpop.permute.xlu0 %5109
      %5112 = vset.pattern.permute.xlu0 40
      %5113 = vperm.xlu0 %5112, %v3117
      %v5114 = vpop.permute.xlu0 %5113
      %5116 = vset.pattern.permute.xlu0 40
      %5117 = vperm.xlu0 %5116, %v3118
      %v5118 = vpop.permute.xlu0 %5117
      %5120 = vset.pattern.permute.xlu0 40
      %5121 = vperm.xlu0 %5120, %v3119
      %v5122 = vpop.permute.xlu0 %5121
      %5124 = vset.pattern.permute.xlu0 40
      %5125 = vperm.xlu0 %5124, %v3120
      %v5126 = vpop.permute.xlu0 %5125
      %v5128 = vmul.f32 %v5098, %v5040
      %v5129 = vmul.f32 %v5102, %v5041
      %v5130 = vmul.f32 %v5106, %v5042
      %v5131 = vmul.f32 %v5110, %v5043
      %v5132 = vmul.f32 %v5114, %v5044
      %v5133 = vmul.f32 %v5118, %v5045
      %v5134 = vmul.f32 %v5122, %v5046
      %v5135 = vmul.f32 %v5126, %v5047
      %v5136 = vadd.f32 %v4936, %v5128
      %v5137 = vadd.f32 %v4937, %v5129
      %v5138 = vadd.f32 %v4938, %v5130
      %v5139 = vadd.f32 %v4939, %v5131
      %v5140 = vadd.f32 %v4940, %v5132
      %v5141 = vadd.f32 %v4941, %v5133
      %v5142 = vadd.f32 %v4942, %v5134
      %v5143 = vadd.f32 %v4943, %v5135
      %5144 = vset.pattern.permute.xlu0 72
      %5145 = vperm.xlu0 %5144, %v3234
      %v5146 = vpop.permute.xlu0 %5145
      %5148 = vset.pattern.permute.xlu0 72
      %5149 = vperm.xlu0 %5148, %v3235
      %v5150 = vpop.permute.xlu0 %5149
      %5152 = vset.pattern.permute.xlu0 72
      %5153 = vperm.xlu0 %5152, %v3236
      %v5154 = vpop.permute.xlu0 %5153
      %5156 = vset.pattern.permute.xlu0 72
      %5157 = vperm.xlu0 %5156, %v3237
      %v5158 = vpop.permute.xlu0 %5157
      %5160 = vset.pattern.permute.xlu0 72
      %5161 = vperm.xlu0 %5160, %v3238
      %v5162 = vpop.permute.xlu0 %5161
      %5164 = vset.pattern.permute.xlu0 72
      %5165 = vperm.xlu0 %5164, %v3239
      %v5166 = vpop.permute.xlu0 %5165
      %5168 = vset.pattern.permute.xlu0 72
      %5169 = vperm.xlu0 %5168, %v3240
      %v5170 = vpop.permute.xlu0 %5169
      %5172 = vset.pattern.permute.xlu0 72
      %5173 = vperm.xlu0 %5172, %v3241
      %v5174 = vpop.permute.xlu0 %5173
      %v5176 = vmul.f32 %v5146, %v5040
      %v5177 = vmul.f32 %v5150, %v5041
      %v5178 = vmul.f32 %v5154, %v5042
      %v5179 = vmul.f32 %v5158, %v5043
      %v5180 = vmul.f32 %v5162, %v5044
      %v5181 = vmul.f32 %v5166, %v5045
      %v5182 = vmul.f32 %v5170, %v5046
      %v5183 = vmul.f32 %v5174, %v5047
      %v5184 = vadd.f32 %v4984, %v5176
      %v5185 = vadd.f32 %v4985, %v5177
      %v5186 = vadd.f32 %v4986, %v5178
      %v5187 = vadd.f32 %v4987, %v5179
      %v5188 = vadd.f32 %v4988, %v5180
      %v5189 = vadd.f32 %v4989, %v5181
      %v5190 = vadd.f32 %v4990, %v5182
      %v5191 = vadd.f32 %v4991, %v5183
      %5192 = vset.pattern.permute.xlu0 104
      %5193 = vperm.xlu0 %5192, %v3355
      %v5194 = vpop.permute.xlu0 %5193
      %5196 = vset.pattern.permute.xlu0 104
      %5197 = vperm.xlu0 %5196, %v3356
      %v5198 = vpop.permute.xlu0 %5197
      %5200 = vset.pattern.permute.xlu0 104
      %5201 = vperm.xlu0 %5200, %v3357
      %v5202 = vpop.permute.xlu0 %5201
      %5204 = vset.pattern.permute.xlu0 104
      %5205 = vperm.xlu0 %5204, %v3358
      %v5206 = vpop.permute.xlu0 %5205
      %5208 = vset.pattern.permute.xlu0 104
      %5209 = vperm.xlu0 %5208, %v3359
      %v5210 = vpop.permute.xlu0 %5209
      %5212 = vset.pattern.permute.xlu0 104
      %5213 = vperm.xlu0 %5212, %v3360
      %v5214 = vpop.permute.xlu0 %5213
      %5216 = vset.pattern.permute.xlu0 104
      %5217 = vperm.xlu0 %5216, %v3361
      %v5218 = vpop.permute.xlu0 %5217
      %5220 = vset.pattern.permute.xlu0 104
      %5221 = vperm.xlu0 %5220, %v3362
      %v5222 = vpop.permute.xlu0 %5221
      %v5224 = vmul.f32 %v5194, %v5040
      %v5225 = vmul.f32 %v5198, %v5041
      %v5226 = vmul.f32 %v5202, %v5042
      %v5227 = vmul.f32 %v5206, %v5043
      %v5228 = vmul.f32 %v5210, %v5044
      %v5229 = vmul.f32 %v5214, %v5045
      %v5230 = vmul.f32 %v5218, %v5046
      %v5231 = vmul.f32 %v5222, %v5047
      %v5232 = vadd.f32 %v5032, %v5224
      %v5233 = vadd.f32 %v5033, %v5225
      %v5234 = vadd.f32 %v5034, %v5226
      %v5235 = vadd.f32 %v5035, %v5227
      %v5236 = vadd.f32 %v5036, %v5228
      %v5237 = vadd.f32 %v5037, %v5229
      %v5238 = vadd.f32 %v5038, %v5230
      %v5239 = vadd.f32 %v5039, %v5231
      %v5240 = vld [vmem:[%s4439 + $0x4] sm:$0xff]
      %v5241 = vld [vmem:[%s4439 + $0x14] sm:$0xff]
      %v5242 = vld [vmem:[%s4439 + $0x24] sm:$0xff]
      %v5243 = vld [vmem:[%s4439 + $0x34] sm:$0xff]
      %v5244 = vld [vmem:[%s4439 + $0x44] sm:$0xff]
      %v5245 = vld [vmem:[%s4439 + $0x54] sm:$0xff]
      %v5246 = vld [vmem:[%s4439 + $0x64] sm:$0xff]
      %v5247 = vld [vmem:[%s4439 + $0x74] sm:$0xff]
      %5248 = vset.pattern.permute.xlu0 9
      %5249 = vperm.xlu0 %5248, %v2992
      %v5250 = vpop.permute.xlu0 %5249
      %5252 = vset.pattern.permute.xlu0 9
      %5253 = vperm.xlu0 %5252, %v2993
      %v5254 = vpop.permute.xlu0 %5253
      %5256 = vset.pattern.permute.xlu0 9
      %5257 = vperm.xlu0 %5256, %v2994
      %v5258 = vpop.permute.xlu0 %5257
      %5260 = vset.pattern.permute.xlu0 9
      %5261 = vperm.xlu0 %5260, %v2995
      %v5262 = vpop.permute.xlu0 %5261
      %5264 = vset.pattern.permute.xlu0 9
      %5265 = vperm.xlu0 %5264, %v2996
      %v5266 = vpop.permute.xlu0 %5265
      %5268 = vset.pattern.permute.xlu0 9
      %5269 = vperm.xlu0 %5268, %v2997
      %v5270 = vpop.permute.xlu0 %5269
      %5272 = vset.pattern.permute.xlu0 9
      %5273 = vperm.xlu0 %5272, %v2998
      %v5274 = vpop.permute.xlu0 %5273
      %5276 = vset.pattern.permute.xlu0 9
      %5277 = vperm.xlu0 %5276, %v2999
      %v5278 = vpop.permute.xlu0 %5277
      %v5280 = vmul.f32 %v5250, %v5240
      %v5281 = vmul.f32 %v5254, %v5241
      %v5282 = vmul.f32 %v5258, %v5242
      %v5283 = vmul.f32 %v5262, %v5243
      %v5284 = vmul.f32 %v5266, %v5244
      %v5285 = vmul.f32 %v5270, %v5245
      %v5286 = vmul.f32 %v5274, %v5246
      %v5287 = vmul.f32 %v5278, %v5247
      %v5288 = vadd.f32 %v5088, %v5280
      %v5289 = vadd.f32 %v5089, %v5281
      %v5290 = vadd.f32 %v5090, %v5282
      %v5291 = vadd.f32 %v5091, %v5283
      %v5292 = vadd.f32 %v5092, %v5284
      %v5293 = vadd.f32 %v5093, %v5285
      %v5294 = vadd.f32 %v5094, %v5286
      %v5295 = vadd.f32 %v5095, %v5287
      %5296 = vset.pattern.permute.xlu0 41
      %5297 = vperm.xlu0 %5296, %v3113
      %v5298 = vpop.permute.xlu0 %5297
      %5300 = vset.pattern.permute.xlu0 41
      %5301 = vperm.xlu0 %5300, %v3114
      %v5302 = vpop.permute.xlu0 %5301
      %5304 = vset.pattern.permute.xlu0 41
      %5305 = vperm.xlu0 %5304, %v3115
      %v5306 = vpop.permute.xlu0 %5305
      %5308 = vset.pattern.permute.xlu0 41
      %5309 = vperm.xlu0 %5308, %v3116
      %v5310 = vpop.permute.xlu0 %5309
      %5312 = vset.pattern.permute.xlu0 41
      %5313 = vperm.xlu0 %5312, %v3117
      %v5314 = vpop.permute.xlu0 %5313
      %5316 = vset.pattern.permute.xlu0 41
      %5317 = vperm.xlu0 %5316, %v3118
      %v5318 = vpop.permute.xlu0 %5317
      %5320 = vset.pattern.permute.xlu0 41
      %5321 = vperm.xlu0 %5320, %v3119
      %v5322 = vpop.permute.xlu0 %5321
      %5324 = vset.pattern.permute.xlu0 41
      %5325 = vperm.xlu0 %5324, %v3120
      %v5326 = vpop.permute.xlu0 %5325
      %v5328 = vmul.f32 %v5298, %v5240
      %v5329 = vmul.f32 %v5302, %v5241
      %v5330 = vmul.f32 %v5306, %v5242
      %v5331 = vmul.f32 %v5310, %v5243
      %v5332 = vmul.f32 %v5314, %v5244
      %v5333 = vmul.f32 %v5318, %v5245
      %v5334 = vmul.f32 %v5322, %v5246
      %v5335 = vmul.f32 %v5326, %v5247
      %v5336 = vadd.f32 %v5136, %v5328
      %v5337 = vadd.f32 %v5137, %v5329
      %v5338 = vadd.f32 %v5138, %v5330
      %v5339 = vadd.f32 %v5139, %v5331
      %v5340 = vadd.f32 %v5140, %v5332
      %v5341 = vadd.f32 %v5141, %v5333
      %v5342 = vadd.f32 %v5142, %v5334
      %v5343 = vadd.f32 %v5143, %v5335
      %5344 = vset.pattern.permute.xlu0 73
      %5345 = vperm.xlu0 %5344, %v3234
      %v5346 = vpop.permute.xlu0 %5345
      %5348 = vset.pattern.permute.xlu0 73
      %5349 = vperm.xlu0 %5348, %v3235
      %v5350 = vpop.permute.xlu0 %5349
      %5352 = vset.pattern.permute.xlu0 73
      %5353 = vperm.xlu0 %5352, %v3236
      %v5354 = vpop.permute.xlu0 %5353
      %5356 = vset.pattern.permute.xlu0 73
      %5357 = vperm.xlu0 %5356, %v3237
      %v5358 = vpop.permute.xlu0 %5357
      %5360 = vset.pattern.permute.xlu0 73
      %5361 = vperm.xlu0 %5360, %v3238
      %v5362 = vpop.permute.xlu0 %5361
      %5364 = vset.pattern.permute.xlu0 73
      %5365 = vperm.xlu0 %5364, %v3239
      %v5366 = vpop.permute.xlu0 %5365
      %5368 = vset.pattern.permute.xlu0 73
      %5369 = vperm.xlu0 %5368, %v3240
      %v5370 = vpop.permute.xlu0 %5369
      %5372 = vset.pattern.permute.xlu0 73
      %5373 = vperm.xlu0 %5372, %v3241
      %v5374 = vpop.permute.xlu0 %5373
      %v5376 = vmul.f32 %v5346, %v5240
      %v5377 = vmul.f32 %v5350, %v5241
      %v5378 = vmul.f32 %v5354, %v5242
      %v5379 = vmul.f32 %v5358, %v5243
      %v5380 = vmul.f32 %v5362, %v5244
      %v5381 = vmul.f32 %v5366, %v5245
      %v5382 = vmul.f32 %v5370, %v5246
      %v5383 = vmul.f32 %v5374, %v5247
      %v5384 = vadd.f32 %v5184, %v5376
      %v5385 = vadd.f32 %v5185, %v5377
      %v5386 = vadd.f32 %v5186, %v5378
      %v5387 = vadd.f32 %v5187, %v5379
      %v5388 = vadd.f32 %v5188, %v5380
      %v5389 = vadd.f32 %v5189, %v5381
      %v5390 = vadd.f32 %v5190, %v5382
      %v5391 = vadd.f32 %v5191, %v5383
      %5392 = vset.pattern.permute.xlu0 105
      %5393 = vperm.xlu0 %5392, %v3355
      %v5394 = vpop.permute.xlu0 %5393
      %5396 = vset.pattern.permute.xlu0 105
      %5397 = vperm.xlu0 %5396, %v3356
      %v5398 = vpop.permute.xlu0 %5397
      %5400 = vset.pattern.permute.xlu0 105
      %5401 = vperm.xlu0 %5400, %v3357
      %v5402 = vpop.permute.xlu0 %5401
      %5404 = vset.pattern.permute.xlu0 105
      %5405 = vperm.xlu0 %5404, %v3358
      %v5406 = vpop.permute.xlu0 %5405
      %5408 = vset.pattern.permute.xlu0 105
      %5409 = vperm.xlu0 %5408, %v3359
      %v5410 = vpop.permute.xlu0 %5409
      %5412 = vset.pattern.permute.xlu0 105
      %5413 = vperm.xlu0 %5412, %v3360
      %v5414 = vpop.permute.xlu0 %5413
      %5416 = vset.pattern.permute.xlu0 105
      %5417 = vperm.xlu0 %5416, %v3361
      %v5418 = vpop.permute.xlu0 %5417
      %5420 = vset.pattern.permute.xlu0 105
      %5421 = vperm.xlu0 %5420, %v3362
      %v5422 = vpop.permute.xlu0 %5421
      %v5424 = vmul.f32 %v5394, %v5240
      %v5425 = vmul.f32 %v5398, %v5241
      %v5426 = vmul.f32 %v5402, %v5242
      %v5427 = vmul.f32 %v5406, %v5243
      %v5428 = vmul.f32 %v5410, %v5244
      %v5429 = vmul.f32 %v5414, %v5245
      %v5430 = vmul.f32 %v5418, %v5246
      %v5431 = vmul.f32 %v5422, %v5247
      %v5432 = vadd.f32 %v5232, %v5424
      %v5433 = vadd.f32 %v5233, %v5425
      %v5434 = vadd.f32 %v5234, %v5426
      %v5435 = vadd.f32 %v5235, %v5427
      %v5436 = vadd.f32 %v5236, %v5428
      %v5437 = vadd.f32 %v5237, %v5429
      %v5438 = vadd.f32 %v5238, %v5430
      %v5439 = vadd.f32 %v5239, %v5431
      %v5440 = vld [vmem:[%s3398] sm:$0xff]
      %v5441 = vld [vmem:[%s3398 + $0x10] sm:$0xff]
      %v5442 = vld [vmem:[%s3398 + $0x20] sm:$0xff]
      %v5443 = vld [vmem:[%s3398 + $0x30] sm:$0xff]
      %v5444 = vld [vmem:[%s3398 + $0x40] sm:$0xff]
      %v5445 = vld [vmem:[%s3398 + $0x50] sm:$0xff]
      %v5446 = vld [vmem:[%s3398 + $0x60] sm:$0xff]
      %v5447 = vld [vmem:[%s3398 + $0x70] sm:$0xff]
      %5448 = vset.pattern.permute.xlu0 10
      %5449 = vperm.xlu0 %5448, %v2992
      %v5450 = vpop.permute.xlu0 %5449
      %5452 = vset.pattern.permute.xlu0 10
      %5453 = vperm.xlu0 %5452, %v2993
      %v5454 = vpop.permute.xlu0 %5453
      %5456 = vset.pattern.permute.xlu0 10
      %5457 = vperm.xlu0 %5456, %v2994
      %v5458 = vpop.permute.xlu0 %5457
      %5460 = vset.pattern.permute.xlu0 10
      %5461 = vperm.xlu0 %5460, %v2995
      %v5462 = vpop.permute.xlu0 %5461
      %5464 = vset.pattern.permute.xlu0 10
      %5465 = vperm.xlu0 %5464, %v2996
      %v5466 = vpop.permute.xlu0 %5465
      %5468 = vset.pattern.permute.xlu0 10
      %5469 = vperm.xlu0 %5468, %v2997
      %v5470 = vpop.permute.xlu0 %5469
      %5472 = vset.pattern.permute.xlu0 10
      %5473 = vperm.xlu0 %5472, %v2998
      %v5474 = vpop.permute.xlu0 %5473
      %5476 = vset.pattern.permute.xlu0 10
      %5477 = vperm.xlu0 %5476, %v2999
      %v5478 = vpop.permute.xlu0 %5477
      %v5480 = vmul.f32 %v5450, %v5440
      %v5481 = vmul.f32 %v5454, %v5441
      %v5482 = vmul.f32 %v5458, %v5442
      %v5483 = vmul.f32 %v5462, %v5443
      %v5484 = vmul.f32 %v5466, %v5444
      %v5485 = vmul.f32 %v5470, %v5445
      %v5486 = vmul.f32 %v5474, %v5446
      %v5487 = vmul.f32 %v5478, %v5447
      %v5488 = vadd.f32 %v5288, %v5480
      %v5489 = vadd.f32 %v5289, %v5481
      %v5490 = vadd.f32 %v5290, %v5482
      %v5491 = vadd.f32 %v5291, %v5483
      %v5492 = vadd.f32 %v5292, %v5484
      %v5493 = vadd.f32 %v5293, %v5485
      %v5494 = vadd.f32 %v5294, %v5486
      %v5495 = vadd.f32 %v5295, %v5487
      %5496 = vset.pattern.permute.xlu0 42
      %5497 = vperm.xlu0 %5496, %v3113
      %v5498 = vpop.permute.xlu0 %5497
      %5500 = vset.pattern.permute.xlu0 42
      %5501 = vperm.xlu0 %5500, %v3114
      %v5502 = vpop.permute.xlu0 %5501
      %5504 = vset.pattern.permute.xlu0 42
      %5505 = vperm.xlu0 %5504, %v3115
      %v5506 = vpop.permute.xlu0 %5505
      %5508 = vset.pattern.permute.xlu0 42
      %5509 = vperm.xlu0 %5508, %v3116
      %v5510 = vpop.permute.xlu0 %5509
      %5512 = vset.pattern.permute.xlu0 42
      %5513 = vperm.xlu0 %5512, %v3117
      %v5514 = vpop.permute.xlu0 %5513
      %5516 = vset.pattern.permute.xlu0 42
      %5517 = vperm.xlu0 %5516, %v3118
      %v5518 = vpop.permute.xlu0 %5517
      %5520 = vset.pattern.permute.xlu0 42
      %5521 = vperm.xlu0 %5520, %v3119
      %v5522 = vpop.permute.xlu0 %5521
      %5524 = vset.pattern.permute.xlu0 42
      %5525 = vperm.xlu0 %5524, %v3120
      %v5526 = vpop.permute.xlu0 %5525
      %v5528 = vmul.f32 %v5498, %v5440
      %v5529 = vmul.f32 %v5502, %v5441
      %v5530 = vmul.f32 %v5506, %v5442
      %v5531 = vmul.f32 %v5510, %v5443
      %v5532 = vmul.f32 %v5514, %v5444
      %v5533 = vmul.f32 %v5518, %v5445
      %v5534 = vmul.f32 %v5522, %v5446
      %v5535 = vmul.f32 %v5526, %v5447
      %v5536 = vadd.f32 %v5336, %v5528
      %v5537 = vadd.f32 %v5337, %v5529
      %v5538 = vadd.f32 %v5338, %v5530
      %v5539 = vadd.f32 %v5339, %v5531
      %v5540 = vadd.f32 %v5340, %v5532
      %v5541 = vadd.f32 %v5341, %v5533
      %v5542 = vadd.f32 %v5342, %v5534
      %v5543 = vadd.f32 %v5343, %v5535
      %5544 = vset.pattern.permute.xlu0 74
      %5545 = vperm.xlu0 %5544, %v3234
      %v5546 = vpop.permute.xlu0 %5545
      %5548 = vset.pattern.permute.xlu0 74
      %5549 = vperm.xlu0 %5548, %v3235
      %v5550 = vpop.permute.xlu0 %5549
      %5552 = vset.pattern.permute.xlu0 74
      %5553 = vperm.xlu0 %5552, %v3236
      %v5554 = vpop.permute.xlu0 %5553
      %5556 = vset.pattern.permute.xlu0 74
      %5557 = vperm.xlu0 %5556, %v3237
      %v5558 = vpop.permute.xlu0 %5557
      %5560 = vset.pattern.permute.xlu0 74
      %5561 = vperm.xlu0 %5560, %v3238
      %v5562 = vpop.permute.xlu0 %5561
      %5564 = vset.pattern.permute.xlu0 74
      %5565 = vperm.xlu0 %5564, %v3239
      %v5566 = vpop.permute.xlu0 %5565
      %5568 = vset.pattern.permute.xlu0 74
      %5569 = vperm.xlu0 %5568, %v3240
      %v5570 = vpop.permute.xlu0 %5569
      %5572 = vset.pattern.permute.xlu0 74
      %5573 = vperm.xlu0 %5572, %v3241
      %v5574 = vpop.permute.xlu0 %5573
      %v5576 = vmul.f32 %v5546, %v5440
      %v5577 = vmul.f32 %v5550, %v5441
      %v5578 = vmul.f32 %v5554, %v5442
      %v5579 = vmul.f32 %v5558, %v5443
      %v5580 = vmul.f32 %v5562, %v5444
      %v5581 = vmul.f32 %v5566, %v5445
      %v5582 = vmul.f32 %v5570, %v5446
      %v5583 = vmul.f32 %v5574, %v5447
      %v5584 = vadd.f32 %v5384, %v5576
      %v5585 = vadd.f32 %v5385, %v5577
      %v5586 = vadd.f32 %v5386, %v5578
      %v5587 = vadd.f32 %v5387, %v5579
      %v5588 = vadd.f32 %v5388, %v5580
      %v5589 = vadd.f32 %v5389, %v5581
      %v5590 = vadd.f32 %v5390, %v5582
      %v5591 = vadd.f32 %v5391, %v5583
      %5592 = vset.pattern.permute.xlu0 106
      %5593 = vperm.xlu0 %5592, %v3355
      %v5594 = vpop.permute.xlu0 %5593
      %5596 = vset.pattern.permute.xlu0 106
      %5597 = vperm.xlu0 %5596, %v3356
      %v5598 = vpop.permute.xlu0 %5597
      %5600 = vset.pattern.permute.xlu0 106
      %5601 = vperm.xlu0 %5600, %v3357
      %v5602 = vpop.permute.xlu0 %5601
      %5604 = vset.pattern.permute.xlu0 106
      %5605 = vperm.xlu0 %5604, %v3358
      %v5606 = vpop.permute.xlu0 %5605
      %5608 = vset.pattern.permute.xlu0 106
      %5609 = vperm.xlu0 %5608, %v3359
      %v5610 = vpop.permute.xlu0 %5609
      %5612 = vset.pattern.permute.xlu0 106
      %5613 = vperm.xlu0 %5612, %v3360
      %v5614 = vpop.permute.xlu0 %5613
      %5616 = vset.pattern.permute.xlu0 106
      %5617 = vperm.xlu0 %5616, %v3361
      %v5618 = vpop.permute.xlu0 %5617
      %5620 = vset.pattern.permute.xlu0 106
      %5621 = vperm.xlu0 %5620, %v3362
      %v5622 = vpop.permute.xlu0 %5621
      %v5624 = vmul.f32 %v5594, %v5440
      %v5625 = vmul.f32 %v5598, %v5441
      %v5626 = vmul.f32 %v5602, %v5442
      %v5627 = vmul.f32 %v5606, %v5443
      %v5628 = vmul.f32 %v5610, %v5444
      %v5629 = vmul.f32 %v5614, %v5445
      %v5630 = vmul.f32 %v5618, %v5446
      %v5631 = vmul.f32 %v5622, %v5447
      %v5632 = vadd.f32 %v5432, %v5624
      %v5633 = vadd.f32 %v5433, %v5625
      %v5634 = vadd.f32 %v5434, %v5626
      %v5635 = vadd.f32 %v5435, %v5627
      %v5636 = vadd.f32 %v5436, %v5628
      %v5637 = vadd.f32 %v5437, %v5629
      %v5638 = vadd.f32 %v5438, %v5630
      %v5639 = vadd.f32 %v5439, %v5631
      %v5640 = vld [vmem:[%s3398 + $0x1] sm:$0xff]
      %v5641 = vld [vmem:[%s3398 + $0x11] sm:$0xff]
      %v5642 = vld [vmem:[%s3398 + $0x21] sm:$0xff]
      %v5643 = vld [vmem:[%s3398 + $0x31] sm:$0xff]
      %v5644 = vld [vmem:[%s3398 + $0x41] sm:$0xff]
      %v5645 = vld [vmem:[%s3398 + $0x51] sm:$0xff]
      %v5646 = vld [vmem:[%s3398 + $0x61] sm:$0xff]
      %v5647 = vld [vmem:[%s3398 + $0x71] sm:$0xff]
      %5648 = vset.pattern.permute.xlu0 11
      %5649 = vperm.xlu0 %5648, %v2992
      %v5650 = vpop.permute.xlu0 %5649
      %5652 = vset.pattern.permute.xlu0 11
      %5653 = vperm.xlu0 %5652, %v2993
      %v5654 = vpop.permute.xlu0 %5653
      %5656 = vset.pattern.permute.xlu0 11
      %5657 = vperm.xlu0 %5656, %v2994
      %v5658 = vpop.permute.xlu0 %5657
      %5660 = vset.pattern.permute.xlu0 11
      %5661 = vperm.xlu0 %5660, %v2995
      %v5662 = vpop.permute.xlu0 %5661
      %5664 = vset.pattern.permute.xlu0 11
      %5665 = vperm.xlu0 %5664, %v2996
      %v5666 = vpop.permute.xlu0 %5665
      %5668 = vset.pattern.permute.xlu0 11
      %5669 = vperm.xlu0 %5668, %v2997
      %v5670 = vpop.permute.xlu0 %5669
      %5672 = vset.pattern.permute.xlu0 11
      %5673 = vperm.xlu0 %5672, %v2998
      %v5674 = vpop.permute.xlu0 %5673
      %5676 = vset.pattern.permute.xlu0 11
      %5677 = vperm.xlu0 %5676, %v2999
      %v5678 = vpop.permute.xlu0 %5677
      %v5680 = vmul.f32 %v5650, %v5640
      %v5681 = vmul.f32 %v5654, %v5641
      %v5682 = vmul.f32 %v5658, %v5642
      %v5683 = vmul.f32 %v5662, %v5643
      %v5684 = vmul.f32 %v5666, %v5644
      %v5685 = vmul.f32 %v5670, %v5645
      %v5686 = vmul.f32 %v5674, %v5646
      %v5687 = vmul.f32 %v5678, %v5647
      %v5688 = vadd.f32 %v5488, %v5680
      %v5689 = vadd.f32 %v5489, %v5681
      %v5690 = vadd.f32 %v5490, %v5682
      %v5691 = vadd.f32 %v5491, %v5683
      %v5692 = vadd.f32 %v5492, %v5684
      %v5693 = vadd.f32 %v5493, %v5685
      %v5694 = vadd.f32 %v5494, %v5686
      %v5695 = vadd.f32 %v5495, %v5687
      %5696 = vset.pattern.permute.xlu0 43
      %5697 = vperm.xlu0 %5696, %v3113
      %v5698 = vpop.permute.xlu0 %5697
      %5700 = vset.pattern.permute.xlu0 43
      %5701 = vperm.xlu0 %5700, %v3114
      %v5702 = vpop.permute.xlu0 %5701
      %5704 = vset.pattern.permute.xlu0 43
      %5705 = vperm.xlu0 %5704, %v3115
      %v5706 = vpop.permute.xlu0 %5705
      %5708 = vset.pattern.permute.xlu0 43
      %5709 = vperm.xlu0 %5708, %v3116
      %v5710 = vpop.permute.xlu0 %5709
      %5712 = vset.pattern.permute.xlu0 43
      %5713 = vperm.xlu0 %5712, %v3117
      %v5714 = vpop.permute.xlu0 %5713
      %5716 = vset.pattern.permute.xlu0 43
      %5717 = vperm.xlu0 %5716, %v3118
      %v5718 = vpop.permute.xlu0 %5717
      %5720 = vset.pattern.permute.xlu0 43
      %5721 = vperm.xlu0 %5720, %v3119
      %v5722 = vpop.permute.xlu0 %5721
      %5724 = vset.pattern.permute.xlu0 43
      %5725 = vperm.xlu0 %5724, %v3120
      %v5726 = vpop.permute.xlu0 %5725
      %v5728 = vmul.f32 %v5698, %v5640
      %v5729 = vmul.f32 %v5702, %v5641
      %v5730 = vmul.f32 %v5706, %v5642
      %v5731 = vmul.f32 %v5710, %v5643
      %v5732 = vmul.f32 %v5714, %v5644
      %v5733 = vmul.f32 %v5718, %v5645
      %v5734 = vmul.f32 %v5722, %v5646
      %v5735 = vmul.f32 %v5726, %v5647
      %v5736 = vadd.f32 %v5536, %v5728
      %v5737 = vadd.f32 %v5537, %v5729
      %v5738 = vadd.f32 %v5538, %v5730
      %v5739 = vadd.f32 %v5539, %v5731
      %v5740 = vadd.f32 %v5540, %v5732
      %v5741 = vadd.f32 %v5541, %v5733
      %v5742 = vadd.f32 %v5542, %v5734
      %v5743 = vadd.f32 %v5543, %v5735
      %5744 = vset.pattern.permute.xlu0 75
      %5745 = vperm.xlu0 %5744, %v3234
      %v5746 = vpop.permute.xlu0 %5745
      %5748 = vset.pattern.permute.xlu0 75
      %5749 = vperm.xlu0 %5748, %v3235
      %v5750 = vpop.permute.xlu0 %5749
      %5752 = vset.pattern.permute.xlu0 75
      %5753 = vperm.xlu0 %5752, %v3236
      %v5754 = vpop.permute.xlu0 %5753
      %5756 = vset.pattern.permute.xlu0 75
      %5757 = vperm.xlu0 %5756, %v3237
      %v5758 = vpop.permute.xlu0 %5757
      %5760 = vset.pattern.permute.xlu0 75
      %5761 = vperm.xlu0 %5760, %v3238
      %v5762 = vpop.permute.xlu0 %5761
      %5764 = vset.pattern.permute.xlu0 75
      %5765 = vperm.xlu0 %5764, %v3239
      %v5766 = vpop.permute.xlu0 %5765
      %5768 = vset.pattern.permute.xlu0 75
      %5769 = vperm.xlu0 %5768, %v3240
      %v5770 = vpop.permute.xlu0 %5769
      %5772 = vset.pattern.permute.xlu0 75
      %5773 = vperm.xlu0 %5772, %v3241
      %v5774 = vpop.permute.xlu0 %5773
      %v5776 = vmul.f32 %v5746, %v5640
      %v5777 = vmul.f32 %v5750, %v5641
      %v5778 = vmul.f32 %v5754, %v5642
      %v5779 = vmul.f32 %v5758, %v5643
      %v5780 = vmul.f32 %v5762, %v5644
      %v5781 = vmul.f32 %v5766, %v5645
      %v5782 = vmul.f32 %v5770, %v5646
      %v5783 = vmul.f32 %v5774, %v5647
      %v5784 = vadd.f32 %v5584, %v5776
      %v5785 = vadd.f32 %v5585, %v5777
      %v5786 = vadd.f32 %v5586, %v5778
      %v5787 = vadd.f32 %v5587, %v5779
      %v5788 = vadd.f32 %v5588, %v5780
      %v5789 = vadd.f32 %v5589, %v5781
      %v5790 = vadd.f32 %v5590, %v5782
      %v5791 = vadd.f32 %v5591, %v5783
      %5792 = vset.pattern.permute.xlu0 107
      %5793 = vperm.xlu0 %5792, %v3355
      %v5794 = vpop.permute.xlu0 %5793
      %5796 = vset.pattern.permute.xlu0 107
      %5797 = vperm.xlu0 %5796, %v3356
      %v5798 = vpop.permute.xlu0 %5797
      %5800 = vset.pattern.permute.xlu0 107
      %5801 = vperm.xlu0 %5800, %v3357
      %v5802 = vpop.permute.xlu0 %5801
      %5804 = vset.pattern.permute.xlu0 107
      %5805 = vperm.xlu0 %5804, %v3358
      %v5806 = vpop.permute.xlu0 %5805
      %5808 = vset.pattern.permute.xlu0 107
      %5809 = vperm.xlu0 %5808, %v3359
      %v5810 = vpop.permute.xlu0 %5809
      %5812 = vset.pattern.permute.xlu0 107
      %5813 = vperm.xlu0 %5812, %v3360
      %v5814 = vpop.permute.xlu0 %5813
      %5816 = vset.pattern.permute.xlu0 107
      %5817 = vperm.xlu0 %5816, %v3361
      %v5818 = vpop.permute.xlu0 %5817
      %5820 = vset.pattern.permute.xlu0 107
      %5821 = vperm.xlu0 %5820, %v3362
      %v5822 = vpop.permute.xlu0 %5821
      %v5824 = vmul.f32 %v5794, %v5640
      %v5825 = vmul.f32 %v5798, %v5641
      %v5826 = vmul.f32 %v5802, %v5642
      %v5827 = vmul.f32 %v5806, %v5643
      %v5828 = vmul.f32 %v5810, %v5644
      %v5829 = vmul.f32 %v5814, %v5645
      %v5830 = vmul.f32 %v5818, %v5646
      %v5831 = vmul.f32 %v5822, %v5647
      %v5832 = vadd.f32 %v5632, %v5824
      %v5833 = vadd.f32 %v5633, %v5825
      %v5834 = vadd.f32 %v5634, %v5826
      %v5835 = vadd.f32 %v5635, %v5827
      %v5836 = vadd.f32 %v5636, %v5828
      %v5837 = vadd.f32 %v5637, %v5829
      %v5838 = vadd.f32 %v5638, %v5830
      %v5839 = vadd.f32 %v5639, %v5831
      %v5840 = vld [vmem:[%s3398 + $0x2] sm:$0xff]
      %v5841 = vld [vmem:[%s3398 + $0x12] sm:$0xff]
      %v5842 = vld [vmem:[%s3398 + $0x22] sm:$0xff]
      %v5843 = vld [vmem:[%s3398 + $0x32] sm:$0xff]
      %v5844 = vld [vmem:[%s3398 + $0x42] sm:$0xff]
      %v5845 = vld [vmem:[%s3398 + $0x52] sm:$0xff]
      %v5846 = vld [vmem:[%s3398 + $0x62] sm:$0xff]
      %v5847 = vld [vmem:[%s3398 + $0x72] sm:$0xff]
      %5848 = vset.pattern.permute.xlu0 12
      %5849 = vperm.xlu0 %5848, %v2992
      %v5850 = vpop.permute.xlu0 %5849
      %5852 = vset.pattern.permute.xlu0 12
      %5853 = vperm.xlu0 %5852, %v2993
      %v5854 = vpop.permute.xlu0 %5853
      %5856 = vset.pattern.permute.xlu0 12
      %5857 = vperm.xlu0 %5856, %v2994
      %v5858 = vpop.permute.xlu0 %5857
      %5860 = vset.pattern.permute.xlu0 12
      %5861 = vperm.xlu0 %5860, %v2995
      %v5862 = vpop.permute.xlu0 %5861
      %5864 = vset.pattern.permute.xlu0 12
      %5865 = vperm.xlu0 %5864, %v2996
      %v5866 = vpop.permute.xlu0 %5865
      %5868 = vset.pattern.permute.xlu0 12
      %5869 = vperm.xlu0 %5868, %v2997
      %v5870 = vpop.permute.xlu0 %5869
      %5872 = vset.pattern.permute.xlu0 12
      %5873 = vperm.xlu0 %5872, %v2998
      %v5874 = vpop.permute.xlu0 %5873
      %5876 = vset.pattern.permute.xlu0 12
      %5877 = vperm.xlu0 %5876, %v2999
      %v5878 = vpop.permute.xlu0 %5877
      %v5880 = vmul.f32 %v5850, %v5840
      %v5881 = vmul.f32 %v5854, %v5841
      %v5882 = vmul.f32 %v5858, %v5842
      %v5883 = vmul.f32 %v5862, %v5843
      %v5884 = vmul.f32 %v5866, %v5844
      %v5885 = vmul.f32 %v5870, %v5845
      %v5886 = vmul.f32 %v5874, %v5846
      %v5887 = vmul.f32 %v5878, %v5847
      %v5888 = vadd.f32 %v5688, %v5880
      %v5889 = vadd.f32 %v5689, %v5881
      %v5890 = vadd.f32 %v5690, %v5882
      %v5891 = vadd.f32 %v5691, %v5883
      %v5892 = vadd.f32 %v5692, %v5884
      %v5893 = vadd.f32 %v5693, %v5885
      %v5894 = vadd.f32 %v5694, %v5886
      %v5895 = vadd.f32 %v5695, %v5887
      %5896 = vset.pattern.permute.xlu0 44
      %5897 = vperm.xlu0 %5896, %v3113
      %v5898 = vpop.permute.xlu0 %5897
      %5900 = vset.pattern.permute.xlu0 44
      %5901 = vperm.xlu0 %5900, %v3114
      %v5902 = vpop.permute.xlu0 %5901
      %5904 = vset.pattern.permute.xlu0 44
      %5905 = vperm.xlu0 %5904, %v3115
      %v5906 = vpop.permute.xlu0 %5905
      %5908 = vset.pattern.permute.xlu0 44
      %5909 = vperm.xlu0 %5908, %v3116
      %v5910 = vpop.permute.xlu0 %5909
      %5912 = vset.pattern.permute.xlu0 44
      %5913 = vperm.xlu0 %5912, %v3117
      %v5914 = vpop.permute.xlu0 %5913
      %5916 = vset.pattern.permute.xlu0 44
      %5917 = vperm.xlu0 %5916, %v3118
      %v5918 = vpop.permute.xlu0 %5917
      %5920 = vset.pattern.permute.xlu0 44
      %5921 = vperm.xlu0 %5920, %v3119
      %v5922 = vpop.permute.xlu0 %5921
      %5924 = vset.pattern.permute.xlu0 44
      %5925 = vperm.xlu0 %5924, %v3120
      %v5926 = vpop.permute.xlu0 %5925
      %v5928 = vmul.f32 %v5898, %v5840
      %v5929 = vmul.f32 %v5902, %v5841
      %v5930 = vmul.f32 %v5906, %v5842
      %v5931 = vmul.f32 %v5910, %v5843
      %v5932 = vmul.f32 %v5914, %v5844
      %v5933 = vmul.f32 %v5918, %v5845
      %v5934 = vmul.f32 %v5922, %v5846
      %v5935 = vmul.f32 %v5926, %v5847
      %v5936 = vadd.f32 %v5736, %v5928
      %v5937 = vadd.f32 %v5737, %v5929
      %v5938 = vadd.f32 %v5738, %v5930
      %v5939 = vadd.f32 %v5739, %v5931
      %v5940 = vadd.f32 %v5740, %v5932
      %v5941 = vadd.f32 %v5741, %v5933
      %v5942 = vadd.f32 %v5742, %v5934
      %v5943 = vadd.f32 %v5743, %v5935
      %5944 = vset.pattern.permute.xlu0 76
      %5945 = vperm.xlu0 %5944, %v3234
      %v5946 = vpop.permute.xlu0 %5945
      %5948 = vset.pattern.permute.xlu0 76
      %5949 = vperm.xlu0 %5948, %v3235
      %v5950 = vpop.permute.xlu0 %5949
      %5952 = vset.pattern.permute.xlu0 76
      %5953 = vperm.xlu0 %5952, %v3236
      %v5954 = vpop.permute.xlu0 %5953
      %5956 = vset.pattern.permute.xlu0 76
      %5957 = vperm.xlu0 %5956, %v3237
      %v5958 = vpop.permute.xlu0 %5957
      %5960 = vset.pattern.permute.xlu0 76
      %5961 = vperm.xlu0 %5960, %v3238
      %v5962 = vpop.permute.xlu0 %5961
      %5964 = vset.pattern.permute.xlu0 76
      %5965 = vperm.xlu0 %5964, %v3239
      %v5966 = vpop.permute.xlu0 %5965
      %5968 = vset.pattern.permute.xlu0 76
      %5969 = vperm.xlu0 %5968, %v3240
      %v5970 = vpop.permute.xlu0 %5969
      %5972 = vset.pattern.permute.xlu0 76
      %5973 = vperm.xlu0 %5972, %v3241
      %v5974 = vpop.permute.xlu0 %5973
      %v5976 = vmul.f32 %v5946, %v5840
      %v5977 = vmul.f32 %v5950, %v5841
      %v5978 = vmul.f32 %v5954, %v5842
      %v5979 = vmul.f32 %v5958, %v5843
      %v5980 = vmul.f32 %v5962, %v5844
      %v5981 = vmul.f32 %v5966, %v5845
      %v5982 = vmul.f32 %v5970, %v5846
      %v5983 = vmul.f32 %v5974, %v5847
      %v5984 = vadd.f32 %v5784, %v5976
      %v5985 = vadd.f32 %v5785, %v5977
      %v5986 = vadd.f32 %v5786, %v5978
      %v5987 = vadd.f32 %v5787, %v5979
      %v5988 = vadd.f32 %v5788, %v5980
      %v5989 = vadd.f32 %v5789, %v5981
      %v5990 = vadd.f32 %v5790, %v5982
      %v5991 = vadd.f32 %v5791, %v5983
      %5992 = vset.pattern.permute.xlu0 108
      %5993 = vperm.xlu0 %5992, %v3355
      %v5994 = vpop.permute.xlu0 %5993
      %5996 = vset.pattern.permute.xlu0 108
      %5997 = vperm.xlu0 %5996, %v3356
      %v5998 = vpop.permute.xlu0 %5997
      %6000 = vset.pattern.permute.xlu0 108
      %6001 = vperm.xlu0 %6000, %v3357
      %v6002 = vpop.permute.xlu0 %6001
      %6004 = vset.pattern.permute.xlu0 108
      %6005 = vperm.xlu0 %6004, %v3358
      %v6006 = vpop.permute.xlu0 %6005
      %6008 = vset.pattern.permute.xlu0 108
      %6009 = vperm.xlu0 %6008, %v3359
      %v6010 = vpop.permute.xlu0 %6009
      %6012 = vset.pattern.permute.xlu0 108
      %6013 = vperm.xlu0 %6012, %v3360
      %v6014 = vpop.permute.xlu0 %6013
      %6016 = vset.pattern.permute.xlu0 108
      %6017 = vperm.xlu0 %6016, %v3361
      %v6018 = vpop.permute.xlu0 %6017
      %6020 = vset.pattern.permute.xlu0 108
      %6021 = vperm.xlu0 %6020, %v3362
      %v6022 = vpop.permute.xlu0 %6021
      %v6024 = vmul.f32 %v5994, %v5840
      %v6025 = vmul.f32 %v5998, %v5841
      %v6026 = vmul.f32 %v6002, %v5842
      %v6027 = vmul.f32 %v6006, %v5843
      %v6028 = vmul.f32 %v6010, %v5844
      %v6029 = vmul.f32 %v6014, %v5845
      %v6030 = vmul.f32 %v6018, %v5846
      %v6031 = vmul.f32 %v6022, %v5847
      %v6032 = vadd.f32 %v5832, %v6024
      %v6033 = vadd.f32 %v5833, %v6025
      %v6034 = vadd.f32 %v5834, %v6026
      %v6035 = vadd.f32 %v5835, %v6027
      %v6036 = vadd.f32 %v5836, %v6028
      %v6037 = vadd.f32 %v5837, %v6029
      %v6038 = vadd.f32 %v5838, %v6030
      %v6039 = vadd.f32 %v5839, %v6031
      %v6040 = vld [vmem:[%s3398 + $0x3] sm:$0xff]
      %v6041 = vld [vmem:[%s3398 + $0x13] sm:$0xff]
      %v6042 = vld [vmem:[%s3398 + $0x23] sm:$0xff]
      %v6043 = vld [vmem:[%s3398 + $0x33] sm:$0xff]
      %v6044 = vld [vmem:[%s3398 + $0x43] sm:$0xff]
      %v6045 = vld [vmem:[%s3398 + $0x53] sm:$0xff]
      %v6046 = vld [vmem:[%s3398 + $0x63] sm:$0xff]
      %v6047 = vld [vmem:[%s3398 + $0x73] sm:$0xff]
      %6048 = vset.pattern.permute.xlu0 13
      %6049 = vperm.xlu0 %6048, %v2992
      %v6050 = vpop.permute.xlu0 %6049
      %6052 = vset.pattern.permute.xlu0 13
      %6053 = vperm.xlu0 %6052, %v2993
      %v6054 = vpop.permute.xlu0 %6053
      %6056 = vset.pattern.permute.xlu0 13
      %6057 = vperm.xlu0 %6056, %v2994
      %v6058 = vpop.permute.xlu0 %6057
      %6060 = vset.pattern.permute.xlu0 13
      %6061 = vperm.xlu0 %6060, %v2995
      %v6062 = vpop.permute.xlu0 %6061
      %6064 = vset.pattern.permute.xlu0 13
      %6065 = vperm.xlu0 %6064, %v2996
      %v6066 = vpop.permute.xlu0 %6065
      %6068 = vset.pattern.permute.xlu0 13
      %6069 = vperm.xlu0 %6068, %v2997
      %v6070 = vpop.permute.xlu0 %6069
      %6072 = vset.pattern.permute.xlu0 13
      %6073 = vperm.xlu0 %6072, %v2998
      %v6074 = vpop.permute.xlu0 %6073
      %6076 = vset.pattern.permute.xlu0 13
      %6077 = vperm.xlu0 %6076, %v2999
      %v6078 = vpop.permute.xlu0 %6077
      %v6080 = vmul.f32 %v6050, %v6040
      %v6081 = vmul.f32 %v6054, %v6041
      %v6082 = vmul.f32 %v6058, %v6042
      %v6083 = vmul.f32 %v6062, %v6043
      %v6084 = vmul.f32 %v6066, %v6044
      %v6085 = vmul.f32 %v6070, %v6045
      %v6086 = vmul.f32 %v6074, %v6046
      %v6087 = vmul.f32 %v6078, %v6047
      %v6088 = vadd.f32 %v5888, %v6080
      %v6089 = vadd.f32 %v5889, %v6081
      %v6090 = vadd.f32 %v5890, %v6082
      %v6091 = vadd.f32 %v5891, %v6083
      %v6092 = vadd.f32 %v5892, %v6084
      %v6093 = vadd.f32 %v5893, %v6085
      %v6094 = vadd.f32 %v5894, %v6086
      %v6095 = vadd.f32 %v5895, %v6087
      %6096 = vset.pattern.permute.xlu0 45
      %6097 = vperm.xlu0 %6096, %v3113
      %v6098 = vpop.permute.xlu0 %6097
      %6100 = vset.pattern.permute.xlu0 45
      %6101 = vperm.xlu0 %6100, %v3114
      %v6102 = vpop.permute.xlu0 %6101
      %6104 = vset.pattern.permute.xlu0 45
      %6105 = vperm.xlu0 %6104, %v3115
      %v6106 = vpop.permute.xlu0 %6105
      %6108 = vset.pattern.permute.xlu0 45
      %6109 = vperm.xlu0 %6108, %v3116
      %v6110 = vpop.permute.xlu0 %6109
      %6112 = vset.pattern.permute.xlu0 45
      %6113 = vperm.xlu0 %6112, %v3117
      %v6114 = vpop.permute.xlu0 %6113
      %6116 = vset.pattern.permute.xlu0 45
      %6117 = vperm.xlu0 %6116, %v3118
      %v6118 = vpop.permute.xlu0 %6117
      %6120 = vset.pattern.permute.xlu0 45
      %6121 = vperm.xlu0 %6120, %v3119
      %v6122 = vpop.permute.xlu0 %6121
      %6124 = vset.pattern.permute.xlu0 45
      %6125 = vperm.xlu0 %6124, %v3120
      %v6126 = vpop.permute.xlu0 %6125
      %v6128 = vmul.f32 %v6098, %v6040
      %v6129 = vmul.f32 %v6102, %v6041
      %v6130 = vmul.f32 %v6106, %v6042
      %v6131 = vmul.f32 %v6110, %v6043
      %v6132 = vmul.f32 %v6114, %v6044
      %v6133 = vmul.f32 %v6118, %v6045
      %v6134 = vmul.f32 %v6122, %v6046
      %v6135 = vmul.f32 %v6126, %v6047
      %v6136 = vadd.f32 %v5936, %v6128
      %v6137 = vadd.f32 %v5937, %v6129
      %v6138 = vadd.f32 %v5938, %v6130
      %v6139 = vadd.f32 %v5939, %v6131
      %v6140 = vadd.f32 %v5940, %v6132
      %v6141 = vadd.f32 %v5941, %v6133
      %v6142 = vadd.f32 %v5942, %v6134
      %v6143 = vadd.f32 %v5943, %v6135
      %6144 = vset.pattern.permute.xlu0 77
      %6145 = vperm.xlu0 %6144, %v3234
      %v6146 = vpop.permute.xlu0 %6145
      %6148 = vset.pattern.permute.xlu0 77
      %6149 = vperm.xlu0 %6148, %v3235
      %v6150 = vpop.permute.xlu0 %6149
      %6152 = vset.pattern.permute.xlu0 77
      %6153 = vperm.xlu0 %6152, %v3236
      %v6154 = vpop.permute.xlu0 %6153
      %6156 = vset.pattern.permute.xlu0 77
      %6157 = vperm.xlu0 %6156, %v3237
      %v6158 = vpop.permute.xlu0 %6157
      %6160 = vset.pattern.permute.xlu0 77
      %6161 = vperm.xlu0 %6160, %v3238
      %v6162 = vpop.permute.xlu0 %6161
      %6164 = vset.pattern.permute.xlu0 77
      %6165 = vperm.xlu0 %6164, %v3239
      %v6166 = vpop.permute.xlu0 %6165
      %6168 = vset.pattern.permute.xlu0 77
      %6169 = vperm.xlu0 %6168, %v3240
      %v6170 = vpop.permute.xlu0 %6169
      %6172 = vset.pattern.permute.xlu0 77
      %6173 = vperm.xlu0 %6172, %v3241
      %v6174 = vpop.permute.xlu0 %6173
      %v6176 = vmul.f32 %v6146, %v6040
      %v6177 = vmul.f32 %v6150, %v6041
      %v6178 = vmul.f32 %v6154, %v6042
      %v6179 = vmul.f32 %v6158, %v6043
      %v6180 = vmul.f32 %v6162, %v6044
      %v6181 = vmul.f32 %v6166, %v6045
      %v6182 = vmul.f32 %v6170, %v6046
      %v6183 = vmul.f32 %v6174, %v6047
      %v6184 = vadd.f32 %v5984, %v6176
      %v6185 = vadd.f32 %v5985, %v6177
      %v6186 = vadd.f32 %v5986, %v6178
      %v6187 = vadd.f32 %v5987, %v6179
      %v6188 = vadd.f32 %v5988, %v6180
      %v6189 = vadd.f32 %v5989, %v6181
      %v6190 = vadd.f32 %v5990, %v6182
      %v6191 = vadd.f32 %v5991, %v6183
      %6192 = vset.pattern.permute.xlu0 109
      %6193 = vperm.xlu0 %6192, %v3355
      %v6194 = vpop.permute.xlu0 %6193
      %6196 = vset.pattern.permute.xlu0 109
      %6197 = vperm.xlu0 %6196, %v3356
      %v6198 = vpop.permute.xlu0 %6197
      %6200 = vset.pattern.permute.xlu0 109
      %6201 = vperm.xlu0 %6200, %v3357
      %v6202 = vpop.permute.xlu0 %6201
      %6204 = vset.pattern.permute.xlu0 109
      %6205 = vperm.xlu0 %6204, %v3358
      %v6206 = vpop.permute.xlu0 %6205
      %6208 = vset.pattern.permute.xlu0 109
      %6209 = vperm.xlu0 %6208, %v3359
      %v6210 = vpop.permute.xlu0 %6209
      %6212 = vset.pattern.permute.xlu0 109
      %6213 = vperm.xlu0 %6212, %v3360
      %v6214 = vpop.permute.xlu0 %6213
      %6216 = vset.pattern.permute.xlu0 109
      %6217 = vperm.xlu0 %6216, %v3361
      %v6218 = vpop.permute.xlu0 %6217
      %6220 = vset.pattern.permute.xlu0 109
      %6221 = vperm.xlu0 %6220, %v3362
      %v6222 = vpop.permute.xlu0 %6221
      %v6224 = vmul.f32 %v6194, %v6040
      %v6225 = vmul.f32 %v6198, %v6041
      %v6226 = vmul.f32 %v6202, %v6042
      %v6227 = vmul.f32 %v6206, %v6043
      %v6228 = vmul.f32 %v6210, %v6044
      %v6229 = vmul.f32 %v6214, %v6045
      %v6230 = vmul.f32 %v6218, %v6046
      %v6231 = vmul.f32 %v6222, %v6047
      %v6232 = vadd.f32 %v6032, %v6224
      %v6233 = vadd.f32 %v6033, %v6225
      %v6234 = vadd.f32 %v6034, %v6226
      %v6235 = vadd.f32 %v6035, %v6227
      %v6236 = vadd.f32 %v6036, %v6228
      %v6237 = vadd.f32 %v6037, %v6229
      %v6238 = vadd.f32 %v6038, %v6230
      %v6239 = vadd.f32 %v6039, %v6231
      %v6240 = vld [vmem:[%s3398 + $0x4] sm:$0xff]
      %v6241 = vld [vmem:[%s3398 + $0x14] sm:$0xff]
      %v6242 = vld [vmem:[%s3398 + $0x24] sm:$0xff]
      %v6243 = vld [vmem:[%s3398 + $0x34] sm:$0xff]
      %v6244 = vld [vmem:[%s3398 + $0x44] sm:$0xff]
      %v6245 = vld [vmem:[%s3398 + $0x54] sm:$0xff]
      %v6246 = vld [vmem:[%s3398 + $0x64] sm:$0xff]
      %v6247 = vld [vmem:[%s3398 + $0x74] sm:$0xff]
      %6248 = vset.pattern.permute.xlu0 14
      %6249 = vperm.xlu0 %6248, %v2992
      %v6250 = vpop.permute.xlu0 %6249
      %6252 = vset.pattern.permute.xlu0 14
      %6253 = vperm.xlu0 %6252, %v2993
      %v6254 = vpop.permute.xlu0 %6253
      %6256 = vset.pattern.permute.xlu0 14
      %6257 = vperm.xlu0 %6256, %v2994
      %v6258 = vpop.permute.xlu0 %6257
      %6260 = vset.pattern.permute.xlu0 14
      %6261 = vperm.xlu0 %6260, %v2995
      %v6262 = vpop.permute.xlu0 %6261
      %6264 = vset.pattern.permute.xlu0 14
      %6265 = vperm.xlu0 %6264, %v2996
      %v6266 = vpop.permute.xlu0 %6265
      %6268 = vset.pattern.permute.xlu0 14
      %6269 = vperm.xlu0 %6268, %v2997
      %v6270 = vpop.permute.xlu0 %6269
      %6272 = vset.pattern.permute.xlu0 14
      %6273 = vperm.xlu0 %6272, %v2998
      %v6274 = vpop.permute.xlu0 %6273
      %6276 = vset.pattern.permute.xlu0 14
      %6277 = vperm.xlu0 %6276, %v2999
      %v6278 = vpop.permute.xlu0 %6277
      %v6280 = vmul.f32 %v6250, %v6240
      %v6281 = vmul.f32 %v6254, %v6241
      %v6282 = vmul.f32 %v6258, %v6242
      %v6283 = vmul.f32 %v6262, %v6243
      %v6284 = vmul.f32 %v6266, %v6244
      %v6285 = vmul.f32 %v6270, %v6245
      %v6286 = vmul.f32 %v6274, %v6246
      %v6287 = vmul.f32 %v6278, %v6247
      %v6288 = vadd.f32 %v6088, %v6280
      %v6289 = vadd.f32 %v6089, %v6281
      %v6290 = vadd.f32 %v6090, %v6282
      %v6291 = vadd.f32 %v6091, %v6283
      %v6292 = vadd.f32 %v6092, %v6284
      %v6293 = vadd.f32 %v6093, %v6285
      %v6294 = vadd.f32 %v6094, %v6286
      %v6295 = vadd.f32 %v6095, %v6287
      %6296 = vset.pattern.permute.xlu0 46
      %6297 = vperm.xlu0 %6296, %v3113
      %v6298 = vpop.permute.xlu0 %6297
      %6300 = vset.pattern.permute.xlu0 46
      %6301 = vperm.xlu0 %6300, %v3114
      %v6302 = vpop.permute.xlu0 %6301
      %6304 = vset.pattern.permute.xlu0 46
      %6305 = vperm.xlu0 %6304, %v3115
      %v6306 = vpop.permute.xlu0 %6305
      %6308 = vset.pattern.permute.xlu0 46
      %6309 = vperm.xlu0 %6308, %v3116
      %v6310 = vpop.permute.xlu0 %6309
      %6312 = vset.pattern.permute.xlu0 46
      %6313 = vperm.xlu0 %6312, %v3117
      %v6314 = vpop.permute.xlu0 %6313
      %6316 = vset.pattern.permute.xlu0 46
      %6317 = vperm.xlu0 %6316, %v3118
      %v6318 = vpop.permute.xlu0 %6317
      %6320 = vset.pattern.permute.xlu0 46
      %6321 = vperm.xlu0 %6320, %v3119
      %v6322 = vpop.permute.xlu0 %6321
      %6324 = vset.pattern.permute.xlu0 46
      %6325 = vperm.xlu0 %6324, %v3120
      %v6326 = vpop.permute.xlu0 %6325
      %v6328 = vmul.f32 %v6298, %v6240
      %v6329 = vmul.f32 %v6302, %v6241
      %v6330 = vmul.f32 %v6306, %v6242
      %v6331 = vmul.f32 %v6310, %v6243
      %v6332 = vmul.f32 %v6314, %v6244
      %v6333 = vmul.f32 %v6318, %v6245
      %v6334 = vmul.f32 %v6322, %v6246
      %v6335 = vmul.f32 %v6326, %v6247
      %v6336 = vadd.f32 %v6136, %v6328
      %v6337 = vadd.f32 %v6137, %v6329
      %v6338 = vadd.f32 %v6138, %v6330
      %v6339 = vadd.f32 %v6139, %v6331
      %v6340 = vadd.f32 %v6140, %v6332
      %v6341 = vadd.f32 %v6141, %v6333
      %v6342 = vadd.f32 %v6142, %v6334
      %v6343 = vadd.f32 %v6143, %v6335
      %6344 = vset.pattern.permute.xlu0 78
      %6345 = vperm.xlu0 %6344, %v3234
      %v6346 = vpop.permute.xlu0 %6345
      %6348 = vset.pattern.permute.xlu0 78
      %6349 = vperm.xlu0 %6348, %v3235
      %v6350 = vpop.permute.xlu0 %6349
      %6352 = vset.pattern.permute.xlu0 78
      %6353 = vperm.xlu0 %6352, %v3236
      %v6354 = vpop.permute.xlu0 %6353
      %6356 = vset.pattern.permute.xlu0 78
      %6357 = vperm.xlu0 %6356, %v3237
      %v6358 = vpop.permute.xlu0 %6357
      %6360 = vset.pattern.permute.xlu0 78
      %6361 = vperm.xlu0 %6360, %v3238
      %v6362 = vpop.permute.xlu0 %6361
      %6364 = vset.pattern.permute.xlu0 78
      %6365 = vperm.xlu0 %6364, %v3239
      %v6366 = vpop.permute.xlu0 %6365
      %6368 = vset.pattern.permute.xlu0 78
      %6369 = vperm.xlu0 %6368, %v3240
      %v6370 = vpop.permute.xlu0 %6369
      %6372 = vset.pattern.permute.xlu0 78
      %6373 = vperm.xlu0 %6372, %v3241
      %v6374 = vpop.permute.xlu0 %6373
      %v6376 = vmul.f32 %v6346, %v6240
      %v6377 = vmul.f32 %v6350, %v6241
      %v6378 = vmul.f32 %v6354, %v6242
      %v6379 = vmul.f32 %v6358, %v6243
      %v6380 = vmul.f32 %v6362, %v6244
      %v6381 = vmul.f32 %v6366, %v6245
      %v6382 = vmul.f32 %v6370, %v6246
      %v6383 = vmul.f32 %v6374, %v6247
      %v6384 = vadd.f32 %v6184, %v6376
      %v6385 = vadd.f32 %v6185, %v6377
      %v6386 = vadd.f32 %v6186, %v6378
      %v6387 = vadd.f32 %v6187, %v6379
      %v6388 = vadd.f32 %v6188, %v6380
      %v6389 = vadd.f32 %v6189, %v6381
      %v6390 = vadd.f32 %v6190, %v6382
      %v6391 = vadd.f32 %v6191, %v6383
      %6392 = vset.pattern.permute.xlu0 110
      %6393 = vperm.xlu0 %6392, %v3355
      %v6394 = vpop.permute.xlu0 %6393
      %6396 = vset.pattern.permute.xlu0 110
      %6397 = vperm.xlu0 %6396, %v3356
      %v6398 = vpop.permute.xlu0 %6397
      %6400 = vset.pattern.permute.xlu0 110
      %6401 = vperm.xlu0 %6400, %v3357
      %v6402 = vpop.permute.xlu0 %6401
      %6404 = vset.pattern.permute.xlu0 110
      %6405 = vperm.xlu0 %6404, %v3358
      %v6406 = vpop.permute.xlu0 %6405
      %6408 = vset.pattern.permute.xlu0 110
      %6409 = vperm.xlu0 %6408, %v3359
      %v6410 = vpop.permute.xlu0 %6409
      %6412 = vset.pattern.permute.xlu0 110
      %6413 = vperm.xlu0 %6412, %v3360
      %v6414 = vpop.permute.xlu0 %6413
      %6416 = vset.pattern.permute.xlu0 110
      %6417 = vperm.xlu0 %6416, %v3361
      %v6418 = vpop.permute.xlu0 %6417
      %6420 = vset.pattern.permute.xlu0 110
      %6421 = vperm.xlu0 %6420, %v3362
      %v6422 = vpop.permute.xlu0 %6421
      %v6424 = vmul.f32 %v6394, %v6240
      %v6425 = vmul.f32 %v6398, %v6241
      %v6426 = vmul.f32 %v6402, %v6242
      %v6427 = vmul.f32 %v6406, %v6243
      %v6428 = vmul.f32 %v6410, %v6244
      %v6429 = vmul.f32 %v6414, %v6245
      %v6430 = vmul.f32 %v6418, %v6246
      %v6431 = vmul.f32 %v6422, %v6247
      %v6432 = vadd.f32 %v6232, %v6424
      %v6433 = vadd.f32 %v6233, %v6425
      %v6434 = vadd.f32 %v6234, %v6426
      %v6435 = vadd.f32 %v6235, %v6427
      %v6436 = vadd.f32 %v6236, %v6428
      %v6437 = vadd.f32 %v6237, %v6429
      %v6438 = vadd.f32 %v6238, %v6430
      %v6439 = vadd.f32 %v6239, %v6431
      %s6440 = scalar_lea.vmem [#allocation3], 48
      %v6441 = vld [vmem:[%s6440] sm:$0xff]
      %v6442 = vld [vmem:[%s6440 + $0x10] sm:$0xff]
      %v6443 = vld [vmem:[%s6440 + $0x20] sm:$0xff]
      %v6444 = vld [vmem:[%s6440 + $0x30] sm:$0xff]
      %v6445 = vld [vmem:[%s6440 + $0x40] sm:$0xff]
      %v6446 = vld [vmem:[%s6440 + $0x50] sm:$0xff]
      %v6447 = vld [vmem:[%s6440 + $0x60] sm:$0xff]
      %v6448 = vld [vmem:[%s6440 + $0x70] sm:$0xff]
      %6449 = vset.pattern.permute.xlu0 15
      %6450 = vperm.xlu0 %6449, %v2992
      %v6451 = vpop.permute.xlu0 %6450
      %6453 = vset.pattern.permute.xlu0 15
      %6454 = vperm.xlu0 %6453, %v2993
      %v6455 = vpop.permute.xlu0 %6454
      %6457 = vset.pattern.permute.xlu0 15
      %6458 = vperm.xlu0 %6457, %v2994
      %v6459 = vpop.permute.xlu0 %6458
      %6461 = vset.pattern.permute.xlu0 15
      %6462 = vperm.xlu0 %6461, %v2995
      %v6463 = vpop.permute.xlu0 %6462
      %6465 = vset.pattern.permute.xlu0 15
      %6466 = vperm.xlu0 %6465, %v2996
      %v6467 = vpop.permute.xlu0 %6466
      %6469 = vset.pattern.permute.xlu0 15
      %6470 = vperm.xlu0 %6469, %v2997
      %v6471 = vpop.permute.xlu0 %6470
      %6473 = vset.pattern.permute.xlu0 15
      %6474 = vperm.xlu0 %6473, %v2998
      %v6475 = vpop.permute.xlu0 %6474
      %6477 = vset.pattern.permute.xlu0 15
      %6478 = vperm.xlu0 %6477, %v2999
      %v6479 = vpop.permute.xlu0 %6478
      %v6481 = vmul.f32 %v6451, %v6441
      %v6482 = vmul.f32 %v6455, %v6442
      %v6483 = vmul.f32 %v6459, %v6443
      %v6484 = vmul.f32 %v6463, %v6444
      %v6485 = vmul.f32 %v6467, %v6445
      %v6486 = vmul.f32 %v6471, %v6446
      %v6487 = vmul.f32 %v6475, %v6447
      %v6488 = vmul.f32 %v6479, %v6448
      %v6489 = vadd.f32 %v6288, %v6481
      %v6490 = vadd.f32 %v6289, %v6482
      %v6491 = vadd.f32 %v6290, %v6483
      %v6492 = vadd.f32 %v6291, %v6484
      %v6493 = vadd.f32 %v6292, %v6485
      %v6494 = vadd.f32 %v6293, %v6486
      %v6495 = vadd.f32 %v6294, %v6487
      %v6496 = vadd.f32 %v6295, %v6488
      %6497 = vset.pattern.permute.xlu0 47
      %6498 = vperm.xlu0 %6497, %v3113
      %v6499 = vpop.permute.xlu0 %6498
      %6501 = vset.pattern.permute.xlu0 47
      %6502 = vperm.xlu0 %6501, %v3114
      %v6503 = vpop.permute.xlu0 %6502
      %6505 = vset.pattern.permute.xlu0 47
      %6506 = vperm.xlu0 %6505, %v3115
      %v6507 = vpop.permute.xlu0 %6506
      %6509 = vset.pattern.permute.xlu0 47
      %6510 = vperm.xlu0 %6509, %v3116
      %v6511 = vpop.permute.xlu0 %6510
      %6513 = vset.pattern.permute.xlu0 47
      %6514 = vperm.xlu0 %6513, %v3117
      %v6515 = vpop.permute.xlu0 %6514
      %6517 = vset.pattern.permute.xlu0 47
      %6518 = vperm.xlu0 %6517, %v3118
      %v6519 = vpop.permute.xlu0 %6518
      %6521 = vset.pattern.permute.xlu0 47
      %6522 = vperm.xlu0 %6521, %v3119
      %v6523 = vpop.permute.xlu0 %6522
      %6525 = vset.pattern.permute.xlu0 47
      %6526 = vperm.xlu0 %6525, %v3120
      %v6527 = vpop.permute.xlu0 %6526
      %v6529 = vmul.f32 %v6499, %v6441
      %v6530 = vmul.f32 %v6503, %v6442
      %v6531 = vmul.f32 %v6507, %v6443
      %v6532 = vmul.f32 %v6511, %v6444
      %v6533 = vmul.f32 %v6515, %v6445
      %v6534 = vmul.f32 %v6519, %v6446
      %v6535 = vmul.f32 %v6523, %v6447
      %v6536 = vmul.f32 %v6527, %v6448
      %v6537 = vadd.f32 %v6336, %v6529
      %v6538 = vadd.f32 %v6337, %v6530
      %v6539 = vadd.f32 %v6338, %v6531
      %v6540 = vadd.f32 %v6339, %v6532
      %v6541 = vadd.f32 %v6340, %v6533
      %v6542 = vadd.f32 %v6341, %v6534
      %v6543 = vadd.f32 %v6342, %v6535
      %v6544 = vadd.f32 %v6343, %v6536
      %6545 = vset.pattern.permute.xlu0 79
      %6546 = vperm.xlu0 %6545, %v3234
      %v6547 = vpop.permute.xlu0 %6546
      %6549 = vset.pattern.permute.xlu0 79
      %6550 = vperm.xlu0 %6549, %v3235
      %v6551 = vpop.permute.xlu0 %6550
      %6553 = vset.pattern.permute.xlu0 79
      %6554 = vperm.xlu0 %6553, %v3236
      %v6555 = vpop.permute.xlu0 %6554
      %6557 = vset.pattern.permute.xlu0 79
      %6558 = vperm.xlu0 %6557, %v3237
      %v6559 = vpop.permute.xlu0 %6558
      %6561 = vset.pattern.permute.xlu0 79
      %6562 = vperm.xlu0 %6561, %v3238
      %v6563 = vpop.permute.xlu0 %6562
      %6565 = vset.pattern.permute.xlu0 79
      %6566 = vperm.xlu0 %6565, %v3239
      %v6567 = vpop.permute.xlu0 %6566
      %6569 = vset.pattern.permute.xlu0 79
      %6570 = vperm.xlu0 %6569, %v3240
      %v6571 = vpop.permute.xlu0 %6570
      %6573 = vset.pattern.permute.xlu0 79
      %6574 = vperm.xlu0 %6573, %v3241
      %v6575 = vpop.permute.xlu0 %6574
      %v6577 = vmul.f32 %v6547, %v6441
      %v6578 = vmul.f32 %v6551, %v6442
      %v6579 = vmul.f32 %v6555, %v6443
      %v6580 = vmul.f32 %v6559, %v6444
      %v6581 = vmul.f32 %v6563, %v6445
      %v6582 = vmul.f32 %v6567, %v6446
      %v6583 = vmul.f32 %v6571, %v6447
      %v6584 = vmul.f32 %v6575, %v6448
      %v6585 = vadd.f32 %v6384, %v6577
      %v6586 = vadd.f32 %v6385, %v6578
      %v6587 = vadd.f32 %v6386, %v6579
      %v6588 = vadd.f32 %v6387, %v6580
      %v6589 = vadd.f32 %v6388, %v6581
      %v6590 = vadd.f32 %v6389, %v6582
      %v6591 = vadd.f32 %v6390, %v6583
      %v6592 = vadd.f32 %v6391, %v6584
      %6593 = vset.pattern.permute.xlu0 111
      %6594 = vperm.xlu0 %6593, %v3355
      %v6595 = vpop.permute.xlu0 %6594
      %6597 = vset.pattern.permute.xlu0 111
      %6598 = vperm.xlu0 %6597, %v3356
      %v6599 = vpop.permute.xlu0 %6598
      %6601 = vset.pattern.permute.xlu0 111
      %6602 = vperm.xlu0 %6601, %v3357
      %v6603 = vpop.permute.xlu0 %6602
      %6605 = vset.pattern.permute.xlu0 111
      %6606 = vperm.xlu0 %6605, %v3358
      %v6607 = vpop.permute.xlu0 %6606
      %6609 = vset.pattern.permute.xlu0 111
      %6610 = vperm.xlu0 %6609, %v3359
      %v6611 = vpop.permute.xlu0 %6610
      %6613 = vset.pattern.permute.xlu0 111
      %6614 = vperm.xlu0 %6613, %v3360
      %v6615 = vpop.permute.xlu0 %6614
      %6617 = vset.pattern.permute.xlu0 111
      %6618 = vperm.xlu0 %6617, %v3361
      %v6619 = vpop.permute.xlu0 %6618
      %6621 = vset.pattern.permute.xlu0 111
      %6622 = vperm.xlu0 %6621, %v3362
      %v6623 = vpop.permute.xlu0 %6622
      %v6625 = vmul.f32 %v6595, %v6441
      %v6626 = vmul.f32 %v6599, %v6442
      %v6627 = vmul.f32 %v6603, %v6443
      %v6628 = vmul.f32 %v6607, %v6444
      %v6629 = vmul.f32 %v6611, %v6445
      %v6630 = vmul.f32 %v6615, %v6446
      %v6631 = vmul.f32 %v6619, %v6447
      %v6632 = vmul.f32 %v6623, %v6448
      %v6633 = vadd.f32 %v6432, %v6625
      %v6634 = vadd.f32 %v6433, %v6626
      %v6635 = vadd.f32 %v6434, %v6627
      %v6636 = vadd.f32 %v6435, %v6628
      %v6637 = vadd.f32 %v6436, %v6629
      %v6638 = vadd.f32 %v6437, %v6630
      %v6639 = vadd.f32 %v6438, %v6631
      %v6640 = vadd.f32 %v6439, %v6632
      %v6641 = vld [vmem:[%s6440 + $0x1] sm:$0xff]
      %v6642 = vld [vmem:[%s6440 + $0x11] sm:$0xff]
      %v6643 = vld [vmem:[%s6440 + $0x21] sm:$0xff]
      %v6644 = vld [vmem:[%s6440 + $0x31] sm:$0xff]
      %v6645 = vld [vmem:[%s6440 + $0x41] sm:$0xff]
      %v6646 = vld [vmem:[%s6440 + $0x51] sm:$0xff]
      %v6647 = vld [vmem:[%s6440 + $0x61] sm:$0xff]
      %v6648 = vld [vmem:[%s6440 + $0x71] sm:$0xff]
      %6649 = vset.pattern.permute.xlu0 16
      %6650 = vperm.xlu0 %6649, %v2992
      %v6651 = vpop.permute.xlu0 %6650
      %6653 = vset.pattern.permute.xlu0 16
      %6654 = vperm.xlu0 %6653, %v2993
      %v6655 = vpop.permute.xlu0 %6654
      %6657 = vset.pattern.permute.xlu0 16
      %6658 = vperm.xlu0 %6657, %v2994
      %v6659 = vpop.permute.xlu0 %6658
      %6661 = vset.pattern.permute.xlu0 16
      %6662 = vperm.xlu0 %6661, %v2995
      %v6663 = vpop.permute.xlu0 %6662
      %6665 = vset.pattern.permute.xlu0 16
      %6666 = vperm.xlu0 %6665, %v2996
      %v6667 = vpop.permute.xlu0 %6666
      %6669 = vset.pattern.permute.xlu0 16
      %6670 = vperm.xlu0 %6669, %v2997
      %v6671 = vpop.permute.xlu0 %6670
      %6673 = vset.pattern.permute.xlu0 16
      %6674 = vperm.xlu0 %6673, %v2998
      %v6675 = vpop.permute.xlu0 %6674
      %6677 = vset.pattern.permute.xlu0 16
      %6678 = vperm.xlu0 %6677, %v2999
      %v6679 = vpop.permute.xlu0 %6678
      %v6681 = vmul.f32 %v6651, %v6641
      %v6682 = vmul.f32 %v6655, %v6642
      %v6683 = vmul.f32 %v6659, %v6643
      %v6684 = vmul.f32 %v6663, %v6644
      %v6685 = vmul.f32 %v6667, %v6645
      %v6686 = vmul.f32 %v6671, %v6646
      %v6687 = vmul.f32 %v6675, %v6647
      %v6688 = vmul.f32 %v6679, %v6648
      %v6689 = vadd.f32 %v6489, %v6681
      %v6690 = vadd.f32 %v6490, %v6682
      %v6691 = vadd.f32 %v6491, %v6683
      %v6692 = vadd.f32 %v6492, %v6684
      %v6693 = vadd.f32 %v6493, %v6685
      %v6694 = vadd.f32 %v6494, %v6686
      %v6695 = vadd.f32 %v6495, %v6687
      %v6696 = vadd.f32 %v6496, %v6688
      %6697 = vset.pattern.permute.xlu0 48
      %6698 = vperm.xlu0 %6697, %v3113
      %v6699 = vpop.permute.xlu0 %6698
      %6701 = vset.pattern.permute.xlu0 48
      %6702 = vperm.xlu0 %6701, %v3114
      %v6703 = vpop.permute.xlu0 %6702
      %6705 = vset.pattern.permute.xlu0 48
      %6706 = vperm.xlu0 %6705, %v3115
      %v6707 = vpop.permute.xlu0 %6706
      %6709 = vset.pattern.permute.xlu0 48
      %6710 = vperm.xlu0 %6709, %v3116
      %v6711 = vpop.permute.xlu0 %6710
      %6713 = vset.pattern.permute.xlu0 48
      %6714 = vperm.xlu0 %6713, %v3117
      %v6715 = vpop.permute.xlu0 %6714
      %6717 = vset.pattern.permute.xlu0 48
      %6718 = vperm.xlu0 %6717, %v3118
      %v6719 = vpop.permute.xlu0 %6718
      %6721 = vset.pattern.permute.xlu0 48
      %6722 = vperm.xlu0 %6721, %v3119
      %v6723 = vpop.permute.xlu0 %6722
      %6725 = vset.pattern.permute.xlu0 48
      %6726 = vperm.xlu0 %6725, %v3120
      %v6727 = vpop.permute.xlu0 %6726
      %v6729 = vmul.f32 %v6699, %v6641
      %v6730 = vmul.f32 %v6703, %v6642
      %v6731 = vmul.f32 %v6707, %v6643
      %v6732 = vmul.f32 %v6711, %v6644
      %v6733 = vmul.f32 %v6715, %v6645
      %v6734 = vmul.f32 %v6719, %v6646
      %v6735 = vmul.f32 %v6723, %v6647
      %v6736 = vmul.f32 %v6727, %v6648
      %v6737 = vadd.f32 %v6537, %v6729
      %v6738 = vadd.f32 %v6538, %v6730
      %v6739 = vadd.f32 %v6539, %v6731
      %v6740 = vadd.f32 %v6540, %v6732
      %v6741 = vadd.f32 %v6541, %v6733
      %v6742 = vadd.f32 %v6542, %v6734
      %v6743 = vadd.f32 %v6543, %v6735
      %v6744 = vadd.f32 %v6544, %v6736
      %6745 = vset.pattern.permute.xlu0 80
      %6746 = vperm.xlu0 %6745, %v3234
      %v6747 = vpop.permute.xlu0 %6746
      %6749 = vset.pattern.permute.xlu0 80
      %6750 = vperm.xlu0 %6749, %v3235
      %v6751 = vpop.permute.xlu0 %6750
      %6753 = vset.pattern.permute.xlu0 80
      %6754 = vperm.xlu0 %6753, %v3236
      %v6755 = vpop.permute.xlu0 %6754
      %6757 = vset.pattern.permute.xlu0 80
      %6758 = vperm.xlu0 %6757, %v3237
      %v6759 = vpop.permute.xlu0 %6758
      %6761 = vset.pattern.permute.xlu0 80
      %6762 = vperm.xlu0 %6761, %v3238
      %v6763 = vpop.permute.xlu0 %6762
      %6765 = vset.pattern.permute.xlu0 80
      %6766 = vperm.xlu0 %6765, %v3239
      %v6767 = vpop.permute.xlu0 %6766
      %6769 = vset.pattern.permute.xlu0 80
      %6770 = vperm.xlu0 %6769, %v3240
      %v6771 = vpop.permute.xlu0 %6770
      %6773 = vset.pattern.permute.xlu0 80
      %6774 = vperm.xlu0 %6773, %v3241
      %v6775 = vpop.permute.xlu0 %6774
      %v6777 = vmul.f32 %v6747, %v6641
      %v6778 = vmul.f32 %v6751, %v6642
      %v6779 = vmul.f32 %v6755, %v6643
      %v6780 = vmul.f32 %v6759, %v6644
      %v6781 = vmul.f32 %v6763, %v6645
      %v6782 = vmul.f32 %v6767, %v6646
      %v6783 = vmul.f32 %v6771, %v6647
      %v6784 = vmul.f32 %v6775, %v6648
      %v6785 = vadd.f32 %v6585, %v6777
      %v6786 = vadd.f32 %v6586, %v6778
      %v6787 = vadd.f32 %v6587, %v6779
      %v6788 = vadd.f32 %v6588, %v6780
      %v6789 = vadd.f32 %v6589, %v6781
      %v6790 = vadd.f32 %v6590, %v6782
      %v6791 = vadd.f32 %v6591, %v6783
      %v6792 = vadd.f32 %v6592, %v6784
      %6793 = vset.pattern.permute.xlu0 112
      %6794 = vperm.xlu0 %6793, %v3355
      %v6795 = vpop.permute.xlu0 %6794
      %6797 = vset.pattern.permute.xlu0 112
      %6798 = vperm.xlu0 %6797, %v3356
      %v6799 = vpop.permute.xlu0 %6798
      %6801 = vset.pattern.permute.xlu0 112
      %6802 = vperm.xlu0 %6801, %v3357
      %v6803 = vpop.permute.xlu0 %6802
      %6805 = vset.pattern.permute.xlu0 112
      %6806 = vperm.xlu0 %6805, %v3358
      %v6807 = vpop.permute.xlu0 %6806
      %6809 = vset.pattern.permute.xlu0 112
      %6810 = vperm.xlu0 %6809, %v3359
      %v6811 = vpop.permute.xlu0 %6810
      %6813 = vset.pattern.permute.xlu0 112
      %6814 = vperm.xlu0 %6813, %v3360
      %v6815 = vpop.permute.xlu0 %6814
      %6817 = vset.pattern.permute.xlu0 112
      %6818 = vperm.xlu0 %6817, %v3361
      %v6819 = vpop.permute.xlu0 %6818
      %6821 = vset.pattern.permute.xlu0 112
      %6822 = vperm.xlu0 %6821, %v3362
      %v6823 = vpop.permute.xlu0 %6822
      %v6825 = vmul.f32 %v6795, %v6641
      %v6826 = vmul.f32 %v6799, %v6642
      %v6827 = vmul.f32 %v6803, %v6643
      %v6828 = vmul.f32 %v6807, %v6644
      %v6829 = vmul.f32 %v6811, %v6645
      %v6830 = vmul.f32 %v6815, %v6646
      %v6831 = vmul.f32 %v6819, %v6647
      %v6832 = vmul.f32 %v6823, %v6648
      %v6833 = vadd.f32 %v6633, %v6825
      %v6834 = vadd.f32 %v6634, %v6826
      %v6835 = vadd.f32 %v6635, %v6827
      %v6836 = vadd.f32 %v6636, %v6828
      %v6837 = vadd.f32 %v6637, %v6829
      %v6838 = vadd.f32 %v6638, %v6830
      %v6839 = vadd.f32 %v6639, %v6831
      %v6840 = vadd.f32 %v6640, %v6832
      %v6841 = vld [vmem:[%s6440 + $0x2] sm:$0xff]
      %v6842 = vld [vmem:[%s6440 + $0x12] sm:$0xff]
      %v6843 = vld [vmem:[%s6440 + $0x22] sm:$0xff]
      %v6844 = vld [vmem:[%s6440 + $0x32] sm:$0xff]
      %v6845 = vld [vmem:[%s6440 + $0x42] sm:$0xff]
      %v6846 = vld [vmem:[%s6440 + $0x52] sm:$0xff]
      %v6847 = vld [vmem:[%s6440 + $0x62] sm:$0xff]
      %v6848 = vld [vmem:[%s6440 + $0x72] sm:$0xff]
      %6849 = vset.pattern.permute.xlu0 17
      %6850 = vperm.xlu0 %6849, %v2992
      %v6851 = vpop.permute.xlu0 %6850
      %6853 = vset.pattern.permute.xlu0 17
      %6854 = vperm.xlu0 %6853, %v2993
      %v6855 = vpop.permute.xlu0 %6854
      %6857 = vset.pattern.permute.xlu0 17
      %6858 = vperm.xlu0 %6857, %v2994
      %v6859 = vpop.permute.xlu0 %6858
      %6861 = vset.pattern.permute.xlu0 17
      %6862 = vperm.xlu0 %6861, %v2995
      %v6863 = vpop.permute.xlu0 %6862
      %6865 = vset.pattern.permute.xlu0 17
      %6866 = vperm.xlu0 %6865, %v2996
      %v6867 = vpop.permute.xlu0 %6866
      %6869 = vset.pattern.permute.xlu0 17
      %6870 = vperm.xlu0 %6869, %v2997
      %v6871 = vpop.permute.xlu0 %6870
      %6873 = vset.pattern.permute.xlu0 17
      %6874 = vperm.xlu0 %6873, %v2998
      %v6875 = vpop.permute.xlu0 %6874
      %6877 = vset.pattern.permute.xlu0 17
      %6878 = vperm.xlu0 %6877, %v2999
      %v6879 = vpop.permute.xlu0 %6878
      %v6881 = vmul.f32 %v6851, %v6841
      %v6882 = vmul.f32 %v6855, %v6842
      %v6883 = vmul.f32 %v6859, %v6843
      %v6884 = vmul.f32 %v6863, %v6844
      %v6885 = vmul.f32 %v6867, %v6845
      %v6886 = vmul.f32 %v6871, %v6846
      %v6887 = vmul.f32 %v6875, %v6847
      %v6888 = vmul.f32 %v6879, %v6848
      %v6889 = vadd.f32 %v6689, %v6881
      %v6890 = vadd.f32 %v6690, %v6882
      %v6891 = vadd.f32 %v6691, %v6883
      %v6892 = vadd.f32 %v6692, %v6884
      %v6893 = vadd.f32 %v6693, %v6885
      %v6894 = vadd.f32 %v6694, %v6886
      %v6895 = vadd.f32 %v6695, %v6887
      %v6896 = vadd.f32 %v6696, %v6888
      %6897 = vset.pattern.permute.xlu0 49
      %6898 = vperm.xlu0 %6897, %v3113
      %v6899 = vpop.permute.xlu0 %6898
      %6901 = vset.pattern.permute.xlu0 49
      %6902 = vperm.xlu0 %6901, %v3114
      %v6903 = vpop.permute.xlu0 %6902
      %6905 = vset.pattern.permute.xlu0 49
      %6906 = vperm.xlu0 %6905, %v3115
      %v6907 = vpop.permute.xlu0 %6906
      %6909 = vset.pattern.permute.xlu0 49
      %6910 = vperm.xlu0 %6909, %v3116
      %v6911 = vpop.permute.xlu0 %6910
      %6913 = vset.pattern.permute.xlu0 49
      %6914 = vperm.xlu0 %6913, %v3117
      %v6915 = vpop.permute.xlu0 %6914
      %6917 = vset.pattern.permute.xlu0 49
      %6918 = vperm.xlu0 %6917, %v3118
      %v6919 = vpop.permute.xlu0 %6918
      %6921 = vset.pattern.permute.xlu0 49
      %6922 = vperm.xlu0 %6921, %v3119
      %v6923 = vpop.permute.xlu0 %6922
      %6925 = vset.pattern.permute.xlu0 49
      %6926 = vperm.xlu0 %6925, %v3120
      %v6927 = vpop.permute.xlu0 %6926
      %v6929 = vmul.f32 %v6899, %v6841
      %v6930 = vmul.f32 %v6903, %v6842
      %v6931 = vmul.f32 %v6907, %v6843
      %v6932 = vmul.f32 %v6911, %v6844
      %v6933 = vmul.f32 %v6915, %v6845
      %v6934 = vmul.f32 %v6919, %v6846
      %v6935 = vmul.f32 %v6923, %v6847
      %v6936 = vmul.f32 %v6927, %v6848
      %v6937 = vadd.f32 %v6737, %v6929
      %v6938 = vadd.f32 %v6738, %v6930
      %v6939 = vadd.f32 %v6739, %v6931
      %v6940 = vadd.f32 %v6740, %v6932
      %v6941 = vadd.f32 %v6741, %v6933
      %v6942 = vadd.f32 %v6742, %v6934
      %v6943 = vadd.f32 %v6743, %v6935
      %v6944 = vadd.f32 %v6744, %v6936
      %6945 = vset.pattern.permute.xlu0 81
      %6946 = vperm.xlu0 %6945, %v3234
      %v6947 = vpop.permute.xlu0 %6946
      %6949 = vset.pattern.permute.xlu0 81
      %6950 = vperm.xlu0 %6949, %v3235
      %v6951 = vpop.permute.xlu0 %6950
      %6953 = vset.pattern.permute.xlu0 81
      %6954 = vperm.xlu0 %6953, %v3236
      %v6955 = vpop.permute.xlu0 %6954
      %6957 = vset.pattern.permute.xlu0 81
      %6958 = vperm.xlu0 %6957, %v3237
      %v6959 = vpop.permute.xlu0 %6958
      %6961 = vset.pattern.permute.xlu0 81
      %6962 = vperm.xlu0 %6961, %v3238
      %v6963 = vpop.permute.xlu0 %6962
      %6965 = vset.pattern.permute.xlu0 81
      %6966 = vperm.xlu0 %6965, %v3239
      %v6967 = vpop.permute.xlu0 %6966
      %6969 = vset.pattern.permute.xlu0 81
      %6970 = vperm.xlu0 %6969, %v3240
      %v6971 = vpop.permute.xlu0 %6970
      %6973 = vset.pattern.permute.xlu0 81
      %6974 = vperm.xlu0 %6973, %v3241
      %v6975 = vpop.permute.xlu0 %6974
      %v6977 = vmul.f32 %v6947, %v6841
      %v6978 = vmul.f32 %v6951, %v6842
      %v6979 = vmul.f32 %v6955, %v6843
      %v6980 = vmul.f32 %v6959, %v6844
      %v6981 = vmul.f32 %v6963, %v6845
      %v6982 = vmul.f32 %v6967, %v6846
      %v6983 = vmul.f32 %v6971, %v6847
      %v6984 = vmul.f32 %v6975, %v6848
      %v6985 = vadd.f32 %v6785, %v6977
      %v6986 = vadd.f32 %v6786, %v6978
      %v6987 = vadd.f32 %v6787, %v6979
      %v6988 = vadd.f32 %v6788, %v6980
      %v6989 = vadd.f32 %v6789, %v6981
      %v6990 = vadd.f32 %v6790, %v6982
      %v6991 = vadd.f32 %v6791, %v6983
      %v6992 = vadd.f32 %v6792, %v6984
      %6993 = vset.pattern.permute.xlu0 113
      %6994 = vperm.xlu0 %6993, %v3355
      %v6995 = vpop.permute.xlu0 %6994
      %6997 = vset.pattern.permute.xlu0 113
      %6998 = vperm.xlu0 %6997, %v3356
      %v6999 = vpop.permute.xlu0 %6998
      %7001 = vset.pattern.permute.xlu0 113
      %7002 = vperm.xlu0 %7001, %v3357
      %v7003 = vpop.permute.xlu0 %7002
      %7005 = vset.pattern.permute.xlu0 113
      %7006 = vperm.xlu0 %7005, %v3358
      %v7007 = vpop.permute.xlu0 %7006
      %7009 = vset.pattern.permute.xlu0 113
      %7010 = vperm.xlu0 %7009, %v3359
      %v7011 = vpop.permute.xlu0 %7010
      %7013 = vset.pattern.permute.xlu0 113
      %7014 = vperm.xlu0 %7013, %v3360
      %v7015 = vpop.permute.xlu0 %7014
      %7017 = vset.pattern.permute.xlu0 113
      %7018 = vperm.xlu0 %7017, %v3361
      %v7019 = vpop.permute.xlu0 %7018
      %7021 = vset.pattern.permute.xlu0 113
      %7022 = vperm.xlu0 %7021, %v3362
      %v7023 = vpop.permute.xlu0 %7022
      %v7025 = vmul.f32 %v6995, %v6841
      %v7026 = vmul.f32 %v6999, %v6842
      %v7027 = vmul.f32 %v7003, %v6843
      %v7028 = vmul.f32 %v7007, %v6844
      %v7029 = vmul.f32 %v7011, %v6845
      %v7030 = vmul.f32 %v7015, %v6846
      %v7031 = vmul.f32 %v7019, %v6847
      %v7032 = vmul.f32 %v7023, %v6848
      %v7033 = vadd.f32 %v6833, %v7025
      %v7034 = vadd.f32 %v6834, %v7026
      %v7035 = vadd.f32 %v6835, %v7027
      %v7036 = vadd.f32 %v6836, %v7028
      %v7037 = vadd.f32 %v6837, %v7029
      %v7038 = vadd.f32 %v6838, %v7030
      %v7039 = vadd.f32 %v6839, %v7031
      %v7040 = vadd.f32 %v6840, %v7032
      %v7041 = vld [vmem:[%s6440 + $0x3] sm:$0xff]
      %v7042 = vld [vmem:[%s6440 + $0x13] sm:$0xff]
      %v7043 = vld [vmem:[%s6440 + $0x23] sm:$0xff]
      %v7044 = vld [vmem:[%s6440 + $0x33] sm:$0xff]
      %v7045 = vld [vmem:[%s6440 + $0x43] sm:$0xff]
      %v7046 = vld [vmem:[%s6440 + $0x53] sm:$0xff]
      %v7047 = vld [vmem:[%s6440 + $0x63] sm:$0xff]
      %v7048 = vld [vmem:[%s6440 + $0x73] sm:$0xff]
      %7049 = vset.pattern.permute.xlu0 18
      %7050 = vperm.xlu0 %7049, %v2992
      %v7051 = vpop.permute.xlu0 %7050
      %7053 = vset.pattern.permute.xlu0 18
      %7054 = vperm.xlu0 %7053, %v2993
      %v7055 = vpop.permute.xlu0 %7054
      %7057 = vset.pattern.permute.xlu0 18
      %7058 = vperm.xlu0 %7057, %v2994
      %v7059 = vpop.permute.xlu0 %7058
      %7061 = vset.pattern.permute.xlu0 18
      %7062 = vperm.xlu0 %7061, %v2995
      %v7063 = vpop.permute.xlu0 %7062
      %7065 = vset.pattern.permute.xlu0 18
      %7066 = vperm.xlu0 %7065, %v2996
      %v7067 = vpop.permute.xlu0 %7066
      %7069 = vset.pattern.permute.xlu0 18
      %7070 = vperm.xlu0 %7069, %v2997
      %v7071 = vpop.permute.xlu0 %7070
      %7073 = vset.pattern.permute.xlu0 18
      %7074 = vperm.xlu0 %7073, %v2998
      %v7075 = vpop.permute.xlu0 %7074
      %7077 = vset.pattern.permute.xlu0 18
      %7078 = vperm.xlu0 %7077, %v2999
      %v7079 = vpop.permute.xlu0 %7078
      %v7081 = vmul.f32 %v7051, %v7041
      %v7082 = vmul.f32 %v7055, %v7042
      %v7083 = vmul.f32 %v7059, %v7043
      %v7084 = vmul.f32 %v7063, %v7044
      %v7085 = vmul.f32 %v7067, %v7045
      %v7086 = vmul.f32 %v7071, %v7046
      %v7087 = vmul.f32 %v7075, %v7047
      %v7088 = vmul.f32 %v7079, %v7048
      %v7089 = vadd.f32 %v6889, %v7081
      %v7090 = vadd.f32 %v6890, %v7082
      %v7091 = vadd.f32 %v6891, %v7083
      %v7092 = vadd.f32 %v6892, %v7084
      %v7093 = vadd.f32 %v6893, %v7085
      %v7094 = vadd.f32 %v6894, %v7086
      %v7095 = vadd.f32 %v6895, %v7087
      %v7096 = vadd.f32 %v6896, %v7088
      %7097 = vset.pattern.permute.xlu0 50
      %7098 = vperm.xlu0 %7097, %v3113
      %v7099 = vpop.permute.xlu0 %7098
      %7101 = vset.pattern.permute.xlu0 50
      %7102 = vperm.xlu0 %7101, %v3114
      %v7103 = vpop.permute.xlu0 %7102
      %7105 = vset.pattern.permute.xlu0 50
      %7106 = vperm.xlu0 %7105, %v3115
      %v7107 = vpop.permute.xlu0 %7106
      %7109 = vset.pattern.permute.xlu0 50
      %7110 = vperm.xlu0 %7109, %v3116
      %v7111 = vpop.permute.xlu0 %7110
      %7113 = vset.pattern.permute.xlu0 50
      %7114 = vperm.xlu0 %7113, %v3117
      %v7115 = vpop.permute.xlu0 %7114
      %7117 = vset.pattern.permute.xlu0 50
      %7118 = vperm.xlu0 %7117, %v3118
      %v7119 = vpop.permute.xlu0 %7118
      %7121 = vset.pattern.permute.xlu0 50
      %7122 = vperm.xlu0 %7121, %v3119
      %v7123 = vpop.permute.xlu0 %7122
      %7125 = vset.pattern.permute.xlu0 50
      %7126 = vperm.xlu0 %7125, %v3120
      %v7127 = vpop.permute.xlu0 %7126
      %v7129 = vmul.f32 %v7099, %v7041
      %v7130 = vmul.f32 %v7103, %v7042
      %v7131 = vmul.f32 %v7107, %v7043
      %v7132 = vmul.f32 %v7111, %v7044
      %v7133 = vmul.f32 %v7115, %v7045
      %v7134 = vmul.f32 %v7119, %v7046
      %v7135 = vmul.f32 %v7123, %v7047
      %v7136 = vmul.f32 %v7127, %v7048
      %v7137 = vadd.f32 %v6937, %v7129
      %v7138 = vadd.f32 %v6938, %v7130
      %v7139 = vadd.f32 %v6939, %v7131
      %v7140 = vadd.f32 %v6940, %v7132
      %v7141 = vadd.f32 %v6941, %v7133
      %v7142 = vadd.f32 %v6942, %v7134
      %v7143 = vadd.f32 %v6943, %v7135
      %v7144 = vadd.f32 %v6944, %v7136
      %7145 = vset.pattern.permute.xlu0 82
      %7146 = vperm.xlu0 %7145, %v3234
      %v7147 = vpop.permute.xlu0 %7146
      %7149 = vset.pattern.permute.xlu0 82
      %7150 = vperm.xlu0 %7149, %v3235
      %v7151 = vpop.permute.xlu0 %7150
      %7153 = vset.pattern.permute.xlu0 82
      %7154 = vperm.xlu0 %7153, %v3236
      %v7155 = vpop.permute.xlu0 %7154
      %7157 = vset.pattern.permute.xlu0 82
      %7158 = vperm.xlu0 %7157, %v3237
      %v7159 = vpop.permute.xlu0 %7158
      %7161 = vset.pattern.permute.xlu0 82
      %7162 = vperm.xlu0 %7161, %v3238
      %v7163 = vpop.permute.xlu0 %7162
      %7165 = vset.pattern.permute.xlu0 82
      %7166 = vperm.xlu0 %7165, %v3239
      %v7167 = vpop.permute.xlu0 %7166
      %7169 = vset.pattern.permute.xlu0 82
      %7170 = vperm.xlu0 %7169, %v3240
      %v7171 = vpop.permute.xlu0 %7170
      %7173 = vset.pattern.permute.xlu0 82
      %7174 = vperm.xlu0 %7173, %v3241
      %v7175 = vpop.permute.xlu0 %7174
      %v7177 = vmul.f32 %v7147, %v7041
      %v7178 = vmul.f32 %v7151, %v7042
      %v7179 = vmul.f32 %v7155, %v7043
      %v7180 = vmul.f32 %v7159, %v7044
      %v7181 = vmul.f32 %v7163, %v7045
      %v7182 = vmul.f32 %v7167, %v7046
      %v7183 = vmul.f32 %v7171, %v7047
      %v7184 = vmul.f32 %v7175, %v7048
      %v7185 = vadd.f32 %v6985, %v7177
      %v7186 = vadd.f32 %v6986, %v7178
      %v7187 = vadd.f32 %v6987, %v7179
      %v7188 = vadd.f32 %v6988, %v7180
      %v7189 = vadd.f32 %v6989, %v7181
      %v7190 = vadd.f32 %v6990, %v7182
      %v7191 = vadd.f32 %v6991, %v7183
      %v7192 = vadd.f32 %v6992, %v7184
      %7193 = vset.pattern.permute.xlu0 114
      %7194 = vperm.xlu0 %7193, %v3355
      %v7195 = vpop.permute.xlu0 %7194
      %7197 = vset.pattern.permute.xlu0 114
      %7198 = vperm.xlu0 %7197, %v3356
      %v7199 = vpop.permute.xlu0 %7198
      %7201 = vset.pattern.permute.xlu0 114
      %7202 = vperm.xlu0 %7201, %v3357
      %v7203 = vpop.permute.xlu0 %7202
      %7205 = vset.pattern.permute.xlu0 114
      %7206 = vperm.xlu0 %7205, %v3358
      %v7207 = vpop.permute.xlu0 %7206
      %7209 = vset.pattern.permute.xlu0 114
      %7210 = vperm.xlu0 %7209, %v3359
      %v7211 = vpop.permute.xlu0 %7210
      %7213 = vset.pattern.permute.xlu0 114
      %7214 = vperm.xlu0 %7213, %v3360
      %v7215 = vpop.permute.xlu0 %7214
      %7217 = vset.pattern.permute.xlu0 114
      %7218 = vperm.xlu0 %7217, %v3361
      %v7219 = vpop.permute.xlu0 %7218
      %7221 = vset.pattern.permute.xlu0 114
      %7222 = vperm.xlu0 %7221, %v3362
      %v7223 = vpop.permute.xlu0 %7222
      %v7225 = vmul.f32 %v7195, %v7041
      %v7226 = vmul.f32 %v7199, %v7042
      %v7227 = vmul.f32 %v7203, %v7043
      %v7228 = vmul.f32 %v7207, %v7044
      %v7229 = vmul.f32 %v7211, %v7045
      %v7230 = vmul.f32 %v7215, %v7046
      %v7231 = vmul.f32 %v7219, %v7047
      %v7232 = vmul.f32 %v7223, %v7048
      %v7233 = vadd.f32 %v7033, %v7225
      %v7234 = vadd.f32 %v7034, %v7226
      %v7235 = vadd.f32 %v7035, %v7227
      %v7236 = vadd.f32 %v7036, %v7228
      %v7237 = vadd.f32 %v7037, %v7229
      %v7238 = vadd.f32 %v7038, %v7230
      %v7239 = vadd.f32 %v7039, %v7231
      %v7240 = vadd.f32 %v7040, %v7232
      %v7241 = vld [vmem:[%s6440 + $0x4] sm:$0xff]
      %v7242 = vld [vmem:[%s6440 + $0x14] sm:$0xff]
      %v7243 = vld [vmem:[%s6440 + $0x24] sm:$0xff]
      %v7244 = vld [vmem:[%s6440 + $0x34] sm:$0xff]
      %v7245 = vld [vmem:[%s6440 + $0x44] sm:$0xff]
      %v7246 = vld [vmem:[%s6440 + $0x54] sm:$0xff]
      %v7247 = vld [vmem:[%s6440 + $0x64] sm:$0xff]
      %v7248 = vld [vmem:[%s6440 + $0x74] sm:$0xff]
      %7249 = vset.pattern.permute.xlu0 19
      %7250 = vperm.xlu0 %7249, %v2992
      %v7251 = vpop.permute.xlu0 %7250
      %7253 = vset.pattern.permute.xlu0 19
      %7254 = vperm.xlu0 %7253, %v2993
      %v7255 = vpop.permute.xlu0 %7254
      %7257 = vset.pattern.permute.xlu0 19
      %7258 = vperm.xlu0 %7257, %v2994
      %v7259 = vpop.permute.xlu0 %7258
      %7261 = vset.pattern.permute.xlu0 19
      %7262 = vperm.xlu0 %7261, %v2995
      %v7263 = vpop.permute.xlu0 %7262
      %7265 = vset.pattern.permute.xlu0 19
      %7266 = vperm.xlu0 %7265, %v2996
      %v7267 = vpop.permute.xlu0 %7266
      %7269 = vset.pattern.permute.xlu0 19
      %7270 = vperm.xlu0 %7269, %v2997
      %v7271 = vpop.permute.xlu0 %7270
      %7273 = vset.pattern.permute.xlu0 19
      %7274 = vperm.xlu0 %7273, %v2998
      %v7275 = vpop.permute.xlu0 %7274
      %7277 = vset.pattern.permute.xlu0 19
      %7278 = vperm.xlu0 %7277, %v2999
      %v7279 = vpop.permute.xlu0 %7278
      %v7281 = vmul.f32 %v7251, %v7241
      %v7282 = vmul.f32 %v7255, %v7242
      %v7283 = vmul.f32 %v7259, %v7243
      %v7284 = vmul.f32 %v7263, %v7244
      %v7285 = vmul.f32 %v7267, %v7245
      %v7286 = vmul.f32 %v7271, %v7246
      %v7287 = vmul.f32 %v7275, %v7247
      %v7288 = vmul.f32 %v7279, %v7248
      %v7289 = vadd.f32 %v7089, %v7281
      %v7290 = vadd.f32 %v7090, %v7282
      %v7291 = vadd.f32 %v7091, %v7283
      %v7292 = vadd.f32 %v7092, %v7284
      %v7293 = vadd.f32 %v7093, %v7285
      %v7294 = vadd.f32 %v7094, %v7286
      %v7295 = vadd.f32 %v7095, %v7287
      %v7296 = vadd.f32 %v7096, %v7288
      %7297 = vset.pattern.permute.xlu0 51
      %7298 = vperm.xlu0 %7297, %v3113
      %v7299 = vpop.permute.xlu0 %7298
      %7301 = vset.pattern.permute.xlu0 51
      %7302 = vperm.xlu0 %7301, %v3114
      %v7303 = vpop.permute.xlu0 %7302
      %7305 = vset.pattern.permute.xlu0 51
      %7306 = vperm.xlu0 %7305, %v3115
      %v7307 = vpop.permute.xlu0 %7306
      %7309 = vset.pattern.permute.xlu0 51
      %7310 = vperm.xlu0 %7309, %v3116
      %v7311 = vpop.permute.xlu0 %7310
      %7313 = vset.pattern.permute.xlu0 51
      %7314 = vperm.xlu0 %7313, %v3117
      %v7315 = vpop.permute.xlu0 %7314
      %7317 = vset.pattern.permute.xlu0 51
      %7318 = vperm.xlu0 %7317, %v3118
      %v7319 = vpop.permute.xlu0 %7318
      %7321 = vset.pattern.permute.xlu0 51
      %7322 = vperm.xlu0 %7321, %v3119
      %v7323 = vpop.permute.xlu0 %7322
      %7325 = vset.pattern.permute.xlu0 51
      %7326 = vperm.xlu0 %7325, %v3120
      %v7327 = vpop.permute.xlu0 %7326
      %v7329 = vmul.f32 %v7299, %v7241
      %v7330 = vmul.f32 %v7303, %v7242
      %v7331 = vmul.f32 %v7307, %v7243
      %v7332 = vmul.f32 %v7311, %v7244
      %v7333 = vmul.f32 %v7315, %v7245
      %v7334 = vmul.f32 %v7319, %v7246
      %v7335 = vmul.f32 %v7323, %v7247
      %v7336 = vmul.f32 %v7327, %v7248
      %v7337 = vadd.f32 %v7137, %v7329
      %v7338 = vadd.f32 %v7138, %v7330
      %v7339 = vadd.f32 %v7139, %v7331
      %v7340 = vadd.f32 %v7140, %v7332
      %v7341 = vadd.f32 %v7141, %v7333
      %v7342 = vadd.f32 %v7142, %v7334
      %v7343 = vadd.f32 %v7143, %v7335
      %v7344 = vadd.f32 %v7144, %v7336
      %7345 = vset.pattern.permute.xlu0 83
      %7346 = vperm.xlu0 %7345, %v3234
      %v7347 = vpop.permute.xlu0 %7346
      %7349 = vset.pattern.permute.xlu0 83
      %7350 = vperm.xlu0 %7349, %v3235
      %v7351 = vpop.permute.xlu0 %7350
      %7353 = vset.pattern.permute.xlu0 83
      %7354 = vperm.xlu0 %7353, %v3236
      %v7355 = vpop.permute.xlu0 %7354
      %7357 = vset.pattern.permute.xlu0 83
      %7358 = vperm.xlu0 %7357, %v3237
      %v7359 = vpop.permute.xlu0 %7358
      %7361 = vset.pattern.permute.xlu0 83
      %7362 = vperm.xlu0 %7361, %v3238
      %v7363 = vpop.permute.xlu0 %7362
      %7365 = vset.pattern.permute.xlu0 83
      %7366 = vperm.xlu0 %7365, %v3239
      %v7367 = vpop.permute.xlu0 %7366
      %7369 = vset.pattern.permute.xlu0 83
      %7370 = vperm.xlu0 %7369, %v3240
      %v7371 = vpop.permute.xlu0 %7370
      %7373 = vset.pattern.permute.xlu0 83
      %7374 = vperm.xlu0 %7373, %v3241
      %v7375 = vpop.permute.xlu0 %7374
      %v7377 = vmul.f32 %v7347, %v7241
      %v7378 = vmul.f32 %v7351, %v7242
      %v7379 = vmul.f32 %v7355, %v7243
      %v7380 = vmul.f32 %v7359, %v7244
      %v7381 = vmul.f32 %v7363, %v7245
      %v7382 = vmul.f32 %v7367, %v7246
      %v7383 = vmul.f32 %v7371, %v7247
      %v7384 = vmul.f32 %v7375, %v7248
      %v7385 = vadd.f32 %v7185, %v7377
      %v7386 = vadd.f32 %v7186, %v7378
      %v7387 = vadd.f32 %v7187, %v7379
      %v7388 = vadd.f32 %v7188, %v7380
      %v7389 = vadd.f32 %v7189, %v7381
      %v7390 = vadd.f32 %v7190, %v7382
      %v7391 = vadd.f32 %v7191, %v7383
      %v7392 = vadd.f32 %v7192, %v7384
      %7393 = vset.pattern.permute.xlu0 115
      %7394 = vperm.xlu0 %7393, %v3355
      %v7395 = vpop.permute.xlu0 %7394
      %7397 = vset.pattern.permute.xlu0 115
      %7398 = vperm.xlu0 %7397, %v3356
      %v7399 = vpop.permute.xlu0 %7398
      %7401 = vset.pattern.permute.xlu0 115
      %7402 = vperm.xlu0 %7401, %v3357
      %v7403 = vpop.permute.xlu0 %7402
      %7405 = vset.pattern.permute.xlu0 115
      %7406 = vperm.xlu0 %7405, %v3358
      %v7407 = vpop.permute.xlu0 %7406
      %7409 = vset.pattern.permute.xlu0 115
      %7410 = vperm.xlu0 %7409, %v3359
      %v7411 = vpop.permute.xlu0 %7410
      %7413 = vset.pattern.permute.xlu0 115
      %7414 = vperm.xlu0 %7413, %v3360
      %v7415 = vpop.permute.xlu0 %7414
      %7417 = vset.pattern.permute.xlu0 115
      %7418 = vperm.xlu0 %7417, %v3361
      %v7419 = vpop.permute.xlu0 %7418
      %7421 = vset.pattern.permute.xlu0 115
      %7422 = vperm.xlu0 %7421, %v3362
      %v7423 = vpop.permute.xlu0 %7422
      %v7425 = vmul.f32 %v7395, %v7241
      %v7426 = vmul.f32 %v7399, %v7242
      %v7427 = vmul.f32 %v7403, %v7243
      %v7428 = vmul.f32 %v7407, %v7244
      %v7429 = vmul.f32 %v7411, %v7245
      %v7430 = vmul.f32 %v7415, %v7246
      %v7431 = vmul.f32 %v7419, %v7247
      %v7432 = vmul.f32 %v7423, %v7248
      %v7433 = vadd.f32 %v7233, %v7425
      %v7434 = vadd.f32 %v7234, %v7426
      %v7435 = vadd.f32 %v7235, %v7427
      %v7436 = vadd.f32 %v7236, %v7428
      %v7437 = vadd.f32 %v7237, %v7429
      %v7438 = vadd.f32 %v7238, %v7430
      %v7439 = vadd.f32 %v7239, %v7431
      %v7440 = vadd.f32 %v7240, %v7432
      %s7441 = scalar_lea.vmem [#allocation3], 64
      %v7442 = vld [vmem:[%s7441] sm:$0xff]
      %v7443 = vld [vmem:[%s7441 + $0x10] sm:$0xff]
      %v7444 = vld [vmem:[%s7441 + $0x20] sm:$0xff]
      %v7445 = vld [vmem:[%s7441 + $0x30] sm:$0xff]
      %v7446 = vld [vmem:[%s7441 + $0x40] sm:$0xff]
      %v7447 = vld [vmem:[%s7441 + $0x50] sm:$0xff]
      %v7448 = vld [vmem:[%s7441 + $0x60] sm:$0xff]
      %v7449 = vld [vmem:[%s7441 + $0x70] sm:$0xff]
      %7450 = vset.pattern.permute.xlu0 20
      %7451 = vperm.xlu0 %7450, %v2992
      %v7452 = vpop.permute.xlu0 %7451
      %7454 = vset.pattern.permute.xlu0 20
      %7455 = vperm.xlu0 %7454, %v2993
      %v7456 = vpop.permute.xlu0 %7455
      %7458 = vset.pattern.permute.xlu0 20
      %7459 = vperm.xlu0 %7458, %v2994
      %v7460 = vpop.permute.xlu0 %7459
      %7462 = vset.pattern.permute.xlu0 20
      %7463 = vperm.xlu0 %7462, %v2995
      %v7464 = vpop.permute.xlu0 %7463
      %7466 = vset.pattern.permute.xlu0 20
      %7467 = vperm.xlu0 %7466, %v2996
      %v7468 = vpop.permute.xlu0 %7467
      %7470 = vset.pattern.permute.xlu0 20
      %7471 = vperm.xlu0 %7470, %v2997
      %v7472 = vpop.permute.xlu0 %7471
      %7474 = vset.pattern.permute.xlu0 20
      %7475 = vperm.xlu0 %7474, %v2998
      %v7476 = vpop.permute.xlu0 %7475
      %7478 = vset.pattern.permute.xlu0 20
      %7479 = vperm.xlu0 %7478, %v2999
      %v7480 = vpop.permute.xlu0 %7479
      %v7482 = vmul.f32 %v7452, %v7442
      %v7483 = vmul.f32 %v7456, %v7443
      %v7484 = vmul.f32 %v7460, %v7444
      %v7485 = vmul.f32 %v7464, %v7445
      %v7486 = vmul.f32 %v7468, %v7446
      %v7487 = vmul.f32 %v7472, %v7447
      %v7488 = vmul.f32 %v7476, %v7448
      %v7489 = vmul.f32 %v7480, %v7449
      %v7490 = vadd.f32 %v7289, %v7482
      %v7491 = vadd.f32 %v7290, %v7483
      %v7492 = vadd.f32 %v7291, %v7484
      %v7493 = vadd.f32 %v7292, %v7485
      %v7494 = vadd.f32 %v7293, %v7486
      %v7495 = vadd.f32 %v7294, %v7487
      %v7496 = vadd.f32 %v7295, %v7488
      %v7497 = vadd.f32 %v7296, %v7489
      %7498 = vset.pattern.permute.xlu0 52
      %7499 = vperm.xlu0 %7498, %v3113
      %v7500 = vpop.permute.xlu0 %7499
      %7502 = vset.pattern.permute.xlu0 52
      %7503 = vperm.xlu0 %7502, %v3114
      %v7504 = vpop.permute.xlu0 %7503
      %7506 = vset.pattern.permute.xlu0 52
      %7507 = vperm.xlu0 %7506, %v3115
      %v7508 = vpop.permute.xlu0 %7507
      %7510 = vset.pattern.permute.xlu0 52
      %7511 = vperm.xlu0 %7510, %v3116
      %v7512 = vpop.permute.xlu0 %7511
      %7514 = vset.pattern.permute.xlu0 52
      %7515 = vperm.xlu0 %7514, %v3117
      %v7516 = vpop.permute.xlu0 %7515
      %7518 = vset.pattern.permute.xlu0 52
      %7519 = vperm.xlu0 %7518, %v3118
      %v7520 = vpop.permute.xlu0 %7519
      %7522 = vset.pattern.permute.xlu0 52
      %7523 = vperm.xlu0 %7522, %v3119
      %v7524 = vpop.permute.xlu0 %7523
      %7526 = vset.pattern.permute.xlu0 52
      %7527 = vperm.xlu0 %7526, %v3120
      %v7528 = vpop.permute.xlu0 %7527
      %v7530 = vmul.f32 %v7500, %v7442
      %v7531 = vmul.f32 %v7504, %v7443
      %v7532 = vmul.f32 %v7508, %v7444
      %v7533 = vmul.f32 %v7512, %v7445
      %v7534 = vmul.f32 %v7516, %v7446
      %v7535 = vmul.f32 %v7520, %v7447
      %v7536 = vmul.f32 %v7524, %v7448
      %v7537 = vmul.f32 %v7528, %v7449
      %v7538 = vadd.f32 %v7337, %v7530
      %v7539 = vadd.f32 %v7338, %v7531
      %v7540 = vadd.f32 %v7339, %v7532
      %v7541 = vadd.f32 %v7340, %v7533
      %v7542 = vadd.f32 %v7341, %v7534
      %v7543 = vadd.f32 %v7342, %v7535
      %v7544 = vadd.f32 %v7343, %v7536
      %v7545 = vadd.f32 %v7344, %v7537
      %7546 = vset.pattern.permute.xlu0 84
      %7547 = vperm.xlu0 %7546, %v3234
      %v7548 = vpop.permute.xlu0 %7547
      %7550 = vset.pattern.permute.xlu0 84
      %7551 = vperm.xlu0 %7550, %v3235
      %v7552 = vpop.permute.xlu0 %7551
      %7554 = vset.pattern.permute.xlu0 84
      %7555 = vperm.xlu0 %7554, %v3236
      %v7556 = vpop.permute.xlu0 %7555
      %7558 = vset.pattern.permute.xlu0 84
      %7559 = vperm.xlu0 %7558, %v3237
      %v7560 = vpop.permute.xlu0 %7559
      %7562 = vset.pattern.permute.xlu0 84
      %7563 = vperm.xlu0 %7562, %v3238
      %v7564 = vpop.permute.xlu0 %7563
      %7566 = vset.pattern.permute.xlu0 84
      %7567 = vperm.xlu0 %7566, %v3239
      %v7568 = vpop.permute.xlu0 %7567
      %7570 = vset.pattern.permute.xlu0 84
      %7571 = vperm.xlu0 %7570, %v3240
      %v7572 = vpop.permute.xlu0 %7571
      %7574 = vset.pattern.permute.xlu0 84
      %7575 = vperm.xlu0 %7574, %v3241
      %v7576 = vpop.permute.xlu0 %7575
      %v7578 = vmul.f32 %v7548, %v7442
      %v7579 = vmul.f32 %v7552, %v7443
      %v7580 = vmul.f32 %v7556, %v7444
      %v7581 = vmul.f32 %v7560, %v7445
      %v7582 = vmul.f32 %v7564, %v7446
      %v7583 = vmul.f32 %v7568, %v7447
      %v7584 = vmul.f32 %v7572, %v7448
      %v7585 = vmul.f32 %v7576, %v7449
      %v7586 = vadd.f32 %v7385, %v7578
      %v7587 = vadd.f32 %v7386, %v7579
      %v7588 = vadd.f32 %v7387, %v7580
      %v7589 = vadd.f32 %v7388, %v7581
      %v7590 = vadd.f32 %v7389, %v7582
      %v7591 = vadd.f32 %v7390, %v7583
      %v7592 = vadd.f32 %v7391, %v7584
      %v7593 = vadd.f32 %v7392, %v7585
      %7594 = vset.pattern.permute.xlu0 116
      %7595 = vperm.xlu0 %7594, %v3355
      %v7596 = vpop.permute.xlu0 %7595
      %7598 = vset.pattern.permute.xlu0 116
      %7599 = vperm.xlu0 %7598, %v3356
      %v7600 = vpop.permute.xlu0 %7599
      %7602 = vset.pattern.permute.xlu0 116
      %7603 = vperm.xlu0 %7602, %v3357
      %v7604 = vpop.permute.xlu0 %7603
      %7606 = vset.pattern.permute.xlu0 116
      %7607 = vperm.xlu0 %7606, %v3358
      %v7608 = vpop.permute.xlu0 %7607
      %7610 = vset.pattern.permute.xlu0 116
      %7611 = vperm.xlu0 %7610, %v3359
      %v7612 = vpop.permute.xlu0 %7611
      %7614 = vset.pattern.permute.xlu0 116
      %7615 = vperm.xlu0 %7614, %v3360
      %v7616 = vpop.permute.xlu0 %7615
      %7618 = vset.pattern.permute.xlu0 116
      %7619 = vperm.xlu0 %7618, %v3361
      %v7620 = vpop.permute.xlu0 %7619
      %7622 = vset.pattern.permute.xlu0 116
      %7623 = vperm.xlu0 %7622, %v3362
      %v7624 = vpop.permute.xlu0 %7623
      %v7626 = vmul.f32 %v7596, %v7442
      %v7627 = vmul.f32 %v7600, %v7443
      %v7628 = vmul.f32 %v7604, %v7444
      %v7629 = vmul.f32 %v7608, %v7445
      %v7630 = vmul.f32 %v7612, %v7446
      %v7631 = vmul.f32 %v7616, %v7447
      %v7632 = vmul.f32 %v7620, %v7448
      %v7633 = vmul.f32 %v7624, %v7449
      %v7634 = vadd.f32 %v7433, %v7626
      %v7635 = vadd.f32 %v7434, %v7627
      %v7636 = vadd.f32 %v7435, %v7628
      %v7637 = vadd.f32 %v7436, %v7629
      %v7638 = vadd.f32 %v7437, %v7630
      %v7639 = vadd.f32 %v7438, %v7631
      %v7640 = vadd.f32 %v7439, %v7632
      %v7641 = vadd.f32 %v7440, %v7633
      %v7642 = vld [vmem:[%s7441 + $0x1] sm:$0xff]
      %v7643 = vld [vmem:[%s7441 + $0x11] sm:$0xff]
      %v7644 = vld [vmem:[%s7441 + $0x21] sm:$0xff]
      %v7645 = vld [vmem:[%s7441 + $0x31] sm:$0xff]
      %v7646 = vld [vmem:[%s7441 + $0x41] sm:$0xff]
      %v7647 = vld [vmem:[%s7441 + $0x51] sm:$0xff]
      %v7648 = vld [vmem:[%s7441 + $0x61] sm:$0xff]
      %v7649 = vld [vmem:[%s7441 + $0x71] sm:$0xff]
      %7650 = vset.pattern.permute.xlu0 21
      %7651 = vperm.xlu0 %7650, %v2992
      %v7652 = vpop.permute.xlu0 %7651
      %7654 = vset.pattern.permute.xlu0 21
      %7655 = vperm.xlu0 %7654, %v2993
      %v7656 = vpop.permute.xlu0 %7655
      %7658 = vset.pattern.permute.xlu0 21
      %7659 = vperm.xlu0 %7658, %v2994
      %v7660 = vpop.permute.xlu0 %7659
      %7662 = vset.pattern.permute.xlu0 21
      %7663 = vperm.xlu0 %7662, %v2995
      %v7664 = vpop.permute.xlu0 %7663
      %7666 = vset.pattern.permute.xlu0 21
      %7667 = vperm.xlu0 %7666, %v2996
      %v7668 = vpop.permute.xlu0 %7667
      %7670 = vset.pattern.permute.xlu0 21
      %7671 = vperm.xlu0 %7670, %v2997
      %v7672 = vpop.permute.xlu0 %7671
      %7674 = vset.pattern.permute.xlu0 21
      %7675 = vperm.xlu0 %7674, %v2998
      %v7676 = vpop.permute.xlu0 %7675
      %7678 = vset.pattern.permute.xlu0 21
      %7679 = vperm.xlu0 %7678, %v2999
      %v7680 = vpop.permute.xlu0 %7679
      %v7682 = vmul.f32 %v7652, %v7642
      %v7683 = vmul.f32 %v7656, %v7643
      %v7684 = vmul.f32 %v7660, %v7644
      %v7685 = vmul.f32 %v7664, %v7645
      %v7686 = vmul.f32 %v7668, %v7646
      %v7687 = vmul.f32 %v7672, %v7647
      %v7688 = vmul.f32 %v7676, %v7648
      %v7689 = vmul.f32 %v7680, %v7649
      %v7690 = vadd.f32 %v7490, %v7682
      %v7691 = vadd.f32 %v7491, %v7683
      %v7692 = vadd.f32 %v7492, %v7684
      %v7693 = vadd.f32 %v7493, %v7685
      %v7694 = vadd.f32 %v7494, %v7686
      %v7695 = vadd.f32 %v7495, %v7687
      %v7696 = vadd.f32 %v7496, %v7688
      %v7697 = vadd.f32 %v7497, %v7689
      %7698 = vset.pattern.permute.xlu0 53
      %7699 = vperm.xlu0 %7698, %v3113
      %v7700 = vpop.permute.xlu0 %7699
      %7702 = vset.pattern.permute.xlu0 53
      %7703 = vperm.xlu0 %7702, %v3114
      %v7704 = vpop.permute.xlu0 %7703
      %7706 = vset.pattern.permute.xlu0 53
      %7707 = vperm.xlu0 %7706, %v3115
      %v7708 = vpop.permute.xlu0 %7707
      %7710 = vset.pattern.permute.xlu0 53
      %7711 = vperm.xlu0 %7710, %v3116
      %v7712 = vpop.permute.xlu0 %7711
      %7714 = vset.pattern.permute.xlu0 53
      %7715 = vperm.xlu0 %7714, %v3117
      %v7716 = vpop.permute.xlu0 %7715
      %7718 = vset.pattern.permute.xlu0 53
      %7719 = vperm.xlu0 %7718, %v3118
      %v7720 = vpop.permute.xlu0 %7719
      %7722 = vset.pattern.permute.xlu0 53
      %7723 = vperm.xlu0 %7722, %v3119
      %v7724 = vpop.permute.xlu0 %7723
      %7726 = vset.pattern.permute.xlu0 53
      %7727 = vperm.xlu0 %7726, %v3120
      %v7728 = vpop.permute.xlu0 %7727
      %v7730 = vmul.f32 %v7700, %v7642
      %v7731 = vmul.f32 %v7704, %v7643
      %v7732 = vmul.f32 %v7708, %v7644
      %v7733 = vmul.f32 %v7712, %v7645
      %v7734 = vmul.f32 %v7716, %v7646
      %v7735 = vmul.f32 %v7720, %v7647
      %v7736 = vmul.f32 %v7724, %v7648
      %v7737 = vmul.f32 %v7728, %v7649
      %v7738 = vadd.f32 %v7538, %v7730
      %v7739 = vadd.f32 %v7539, %v7731
      %v7740 = vadd.f32 %v7540, %v7732
      %v7741 = vadd.f32 %v7541, %v7733
      %v7742 = vadd.f32 %v7542, %v7734
      %v7743 = vadd.f32 %v7543, %v7735
      %v7744 = vadd.f32 %v7544, %v7736
      %v7745 = vadd.f32 %v7545, %v7737
      %7746 = vset.pattern.permute.xlu0 85
      %7747 = vperm.xlu0 %7746, %v3234
      %v7748 = vpop.permute.xlu0 %7747
      %7750 = vset.pattern.permute.xlu0 85
      %7751 = vperm.xlu0 %7750, %v3235
      %v7752 = vpop.permute.xlu0 %7751
      %7754 = vset.pattern.permute.xlu0 85
      %7755 = vperm.xlu0 %7754, %v3236
      %v7756 = vpop.permute.xlu0 %7755
      %7758 = vset.pattern.permute.xlu0 85
      %7759 = vperm.xlu0 %7758, %v3237
      %v7760 = vpop.permute.xlu0 %7759
      %7762 = vset.pattern.permute.xlu0 85
      %7763 = vperm.xlu0 %7762, %v3238
      %v7764 = vpop.permute.xlu0 %7763
      %7766 = vset.pattern.permute.xlu0 85
      %7767 = vperm.xlu0 %7766, %v3239
      %v7768 = vpop.permute.xlu0 %7767
      %7770 = vset.pattern.permute.xlu0 85
      %7771 = vperm.xlu0 %7770, %v3240
      %v7772 = vpop.permute.xlu0 %7771
      %7774 = vset.pattern.permute.xlu0 85
      %7775 = vperm.xlu0 %7774, %v3241
      %v7776 = vpop.permute.xlu0 %7775
      %v7778 = vmul.f32 %v7748, %v7642
      %v7779 = vmul.f32 %v7752, %v7643
      %v7780 = vmul.f32 %v7756, %v7644
      %v7781 = vmul.f32 %v7760, %v7645
      %v7782 = vmul.f32 %v7764, %v7646
      %v7783 = vmul.f32 %v7768, %v7647
      %v7784 = vmul.f32 %v7772, %v7648
      %v7785 = vmul.f32 %v7776, %v7649
      %v7786 = vadd.f32 %v7586, %v7778
      %v7787 = vadd.f32 %v7587, %v7779
      %v7788 = vadd.f32 %v7588, %v7780
      %v7789 = vadd.f32 %v7589, %v7781
      %v7790 = vadd.f32 %v7590, %v7782
      %v7791 = vadd.f32 %v7591, %v7783
      %v7792 = vadd.f32 %v7592, %v7784
      %v7793 = vadd.f32 %v7593, %v7785
      %7794 = vset.pattern.permute.xlu0 117
      %7795 = vperm.xlu0 %7794, %v3355
      %v7796 = vpop.permute.xlu0 %7795
      %7798 = vset.pattern.permute.xlu0 117
      %7799 = vperm.xlu0 %7798, %v3356
      %v7800 = vpop.permute.xlu0 %7799
      %7802 = vset.pattern.permute.xlu0 117
      %7803 = vperm.xlu0 %7802, %v3357
      %v7804 = vpop.permute.xlu0 %7803
      %7806 = vset.pattern.permute.xlu0 117
      %7807 = vperm.xlu0 %7806, %v3358
      %v7808 = vpop.permute.xlu0 %7807
      %7810 = vset.pattern.permute.xlu0 117
      %7811 = vperm.xlu0 %7810, %v3359
      %v7812 = vpop.permute.xlu0 %7811
      %7814 = vset.pattern.permute.xlu0 117
      %7815 = vperm.xlu0 %7814, %v3360
      %v7816 = vpop.permute.xlu0 %7815
      %7818 = vset.pattern.permute.xlu0 117
      %7819 = vperm.xlu0 %7818, %v3361
      %v7820 = vpop.permute.xlu0 %7819
      %7822 = vset.pattern.permute.xlu0 117
      %7823 = vperm.xlu0 %7822, %v3362
      %v7824 = vpop.permute.xlu0 %7823
      %v7826 = vmul.f32 %v7796, %v7642
      %v7827 = vmul.f32 %v7800, %v7643
      %v7828 = vmul.f32 %v7804, %v7644
      %v7829 = vmul.f32 %v7808, %v7645
      %v7830 = vmul.f32 %v7812, %v7646
      %v7831 = vmul.f32 %v7816, %v7647
      %v7832 = vmul.f32 %v7820, %v7648
      %v7833 = vmul.f32 %v7824, %v7649
      %v7834 = vadd.f32 %v7634, %v7826
      %v7835 = vadd.f32 %v7635, %v7827
      %v7836 = vadd.f32 %v7636, %v7828
      %v7837 = vadd.f32 %v7637, %v7829
      %v7838 = vadd.f32 %v7638, %v7830
      %v7839 = vadd.f32 %v7639, %v7831
      %v7840 = vadd.f32 %v7640, %v7832
      %v7841 = vadd.f32 %v7641, %v7833
      %v7842 = vld [vmem:[%s7441 + $0x2] sm:$0xff]
      %v7843 = vld [vmem:[%s7441 + $0x12] sm:$0xff]
      %v7844 = vld [vmem:[%s7441 + $0x22] sm:$0xff]
      %v7845 = vld [vmem:[%s7441 + $0x32] sm:$0xff]
      %v7846 = vld [vmem:[%s7441 + $0x42] sm:$0xff]
      %v7847 = vld [vmem:[%s7441 + $0x52] sm:$0xff]
      %v7848 = vld [vmem:[%s7441 + $0x62] sm:$0xff]
      %v7849 = vld [vmem:[%s7441 + $0x72] sm:$0xff]
      %7850 = vset.pattern.permute.xlu0 22
      %7851 = vperm.xlu0 %7850, %v2992
      %v7852 = vpop.permute.xlu0 %7851
      %7854 = vset.pattern.permute.xlu0 22
      %7855 = vperm.xlu0 %7854, %v2993
      %v7856 = vpop.permute.xlu0 %7855
      %7858 = vset.pattern.permute.xlu0 22
      %7859 = vperm.xlu0 %7858, %v2994
      %v7860 = vpop.permute.xlu0 %7859
      %7862 = vset.pattern.permute.xlu0 22
      %7863 = vperm.xlu0 %7862, %v2995
      %v7864 = vpop.permute.xlu0 %7863
      %7866 = vset.pattern.permute.xlu0 22
      %7867 = vperm.xlu0 %7866, %v2996
      %v7868 = vpop.permute.xlu0 %7867
      %7870 = vset.pattern.permute.xlu0 22
      %7871 = vperm.xlu0 %7870, %v2997
      %v7872 = vpop.permute.xlu0 %7871
      %7874 = vset.pattern.permute.xlu0 22
      %7875 = vperm.xlu0 %7874, %v2998
      %v7876 = vpop.permute.xlu0 %7875
      %7878 = vset.pattern.permute.xlu0 22
      %7879 = vperm.xlu0 %7878, %v2999
      %v7880 = vpop.permute.xlu0 %7879
      %v7882 = vmul.f32 %v7852, %v7842
      %v7883 = vmul.f32 %v7856, %v7843
      %v7884 = vmul.f32 %v7860, %v7844
      %v7885 = vmul.f32 %v7864, %v7845
      %v7886 = vmul.f32 %v7868, %v7846
      %v7887 = vmul.f32 %v7872, %v7847
      %v7888 = vmul.f32 %v7876, %v7848
      %v7889 = vmul.f32 %v7880, %v7849
      %v7890 = vadd.f32 %v7690, %v7882
      %v7891 = vadd.f32 %v7691, %v7883
      %v7892 = vadd.f32 %v7692, %v7884
      %v7893 = vadd.f32 %v7693, %v7885
      %v7894 = vadd.f32 %v7694, %v7886
      %v7895 = vadd.f32 %v7695, %v7887
      %v7896 = vadd.f32 %v7696, %v7888
      %v7897 = vadd.f32 %v7697, %v7889
      %7898 = vset.pattern.permute.xlu0 54
      %7899 = vperm.xlu0 %7898, %v3113
      %v7900 = vpop.permute.xlu0 %7899
      %7902 = vset.pattern.permute.xlu0 54
      %7903 = vperm.xlu0 %7902, %v3114
      %v7904 = vpop.permute.xlu0 %7903
      %7906 = vset.pattern.permute.xlu0 54
      %7907 = vperm.xlu0 %7906, %v3115
      %v7908 = vpop.permute.xlu0 %7907
      %7910 = vset.pattern.permute.xlu0 54
      %7911 = vperm.xlu0 %7910, %v3116
      %v7912 = vpop.permute.xlu0 %7911
      %7914 = vset.pattern.permute.xlu0 54
      %7915 = vperm.xlu0 %7914, %v3117
      %v7916 = vpop.permute.xlu0 %7915
      %7918 = vset.pattern.permute.xlu0 54
      %7919 = vperm.xlu0 %7918, %v3118
      %v7920 = vpop.permute.xlu0 %7919
      %7922 = vset.pattern.permute.xlu0 54
      %7923 = vperm.xlu0 %7922, %v3119
      %v7924 = vpop.permute.xlu0 %7923
      %7926 = vset.pattern.permute.xlu0 54
      %7927 = vperm.xlu0 %7926, %v3120
      %v7928 = vpop.permute.xlu0 %7927
      %v7930 = vmul.f32 %v7900, %v7842
      %v7931 = vmul.f32 %v7904, %v7843
      %v7932 = vmul.f32 %v7908, %v7844
      %v7933 = vmul.f32 %v7912, %v7845
      %v7934 = vmul.f32 %v7916, %v7846
      %v7935 = vmul.f32 %v7920, %v7847
      %v7936 = vmul.f32 %v7924, %v7848
      %v7937 = vmul.f32 %v7928, %v7849
      %v7938 = vadd.f32 %v7738, %v7930
      %v7939 = vadd.f32 %v7739, %v7931
      %v7940 = vadd.f32 %v7740, %v7932
      %v7941 = vadd.f32 %v7741, %v7933
      %v7942 = vadd.f32 %v7742, %v7934
      %v7943 = vadd.f32 %v7743, %v7935
      %v7944 = vadd.f32 %v7744, %v7936
      %v7945 = vadd.f32 %v7745, %v7937
      %7946 = vset.pattern.permute.xlu0 86
      %7947 = vperm.xlu0 %7946, %v3234
      %v7948 = vpop.permute.xlu0 %7947
      %7950 = vset.pattern.permute.xlu0 86
      %7951 = vperm.xlu0 %7950, %v3235
      %v7952 = vpop.permute.xlu0 %7951
      %7954 = vset.pattern.permute.xlu0 86
      %7955 = vperm.xlu0 %7954, %v3236
      %v7956 = vpop.permute.xlu0 %7955
      %7958 = vset.pattern.permute.xlu0 86
      %7959 = vperm.xlu0 %7958, %v3237
      %v7960 = vpop.permute.xlu0 %7959
      %7962 = vset.pattern.permute.xlu0 86
      %7963 = vperm.xlu0 %7962, %v3238
      %v7964 = vpop.permute.xlu0 %7963
      %7966 = vset.pattern.permute.xlu0 86
      %7967 = vperm.xlu0 %7966, %v3239
      %v7968 = vpop.permute.xlu0 %7967
      %7970 = vset.pattern.permute.xlu0 86
      %7971 = vperm.xlu0 %7970, %v3240
      %v7972 = vpop.permute.xlu0 %7971
      %7974 = vset.pattern.permute.xlu0 86
      %7975 = vperm.xlu0 %7974, %v3241
      %v7976 = vpop.permute.xlu0 %7975
      %v7978 = vmul.f32 %v7948, %v7842
      %v7979 = vmul.f32 %v7952, %v7843
      %v7980 = vmul.f32 %v7956, %v7844
      %v7981 = vmul.f32 %v7960, %v7845
      %v7982 = vmul.f32 %v7964, %v7846
      %v7983 = vmul.f32 %v7968, %v7847
      %v7984 = vmul.f32 %v7972, %v7848
      %v7985 = vmul.f32 %v7976, %v7849
      %v7986 = vadd.f32 %v7786, %v7978
      %v7987 = vadd.f32 %v7787, %v7979
      %v7988 = vadd.f32 %v7788, %v7980
      %v7989 = vadd.f32 %v7789, %v7981
      %v7990 = vadd.f32 %v7790, %v7982
      %v7991 = vadd.f32 %v7791, %v7983
      %v7992 = vadd.f32 %v7792, %v7984
      %v7993 = vadd.f32 %v7793, %v7985
      %7994 = vset.pattern.permute.xlu0 118
      %7995 = vperm.xlu0 %7994, %v3355
      %v7996 = vpop.permute.xlu0 %7995
      %7998 = vset.pattern.permute.xlu0 118
      %7999 = vperm.xlu0 %7998, %v3356
      %v8000 = vpop.permute.xlu0 %7999
      %8002 = vset.pattern.permute.xlu0 118
      %8003 = vperm.xlu0 %8002, %v3357
      %v8004 = vpop.permute.xlu0 %8003
      %8006 = vset.pattern.permute.xlu0 118
      %8007 = vperm.xlu0 %8006, %v3358
      %v8008 = vpop.permute.xlu0 %8007
      %8010 = vset.pattern.permute.xlu0 118
      %8011 = vperm.xlu0 %8010, %v3359
      %v8012 = vpop.permute.xlu0 %8011
      %8014 = vset.pattern.permute.xlu0 118
      %8015 = vperm.xlu0 %8014, %v3360
      %v8016 = vpop.permute.xlu0 %8015
      %8018 = vset.pattern.permute.xlu0 118
      %8019 = vperm.xlu0 %8018, %v3361
      %v8020 = vpop.permute.xlu0 %8019
      %8022 = vset.pattern.permute.xlu0 118
      %8023 = vperm.xlu0 %8022, %v3362
      %v8024 = vpop.permute.xlu0 %8023
      %v8026 = vmul.f32 %v7996, %v7842
      %v8027 = vmul.f32 %v8000, %v7843
      %v8028 = vmul.f32 %v8004, %v7844
      %v8029 = vmul.f32 %v8008, %v7845
      %v8030 = vmul.f32 %v8012, %v7846
      %v8031 = vmul.f32 %v8016, %v7847
      %v8032 = vmul.f32 %v8020, %v7848
      %v8033 = vmul.f32 %v8024, %v7849
      %v8034 = vadd.f32 %v7834, %v8026
      %v8035 = vadd.f32 %v7835, %v8027
      %v8036 = vadd.f32 %v7836, %v8028
      %v8037 = vadd.f32 %v7837, %v8029
      %v8038 = vadd.f32 %v7838, %v8030
      %v8039 = vadd.f32 %v7839, %v8031
      %v8040 = vadd.f32 %v7840, %v8032
      %v8041 = vadd.f32 %v7841, %v8033
      %v8042 = vld [vmem:[%s7441 + $0x3] sm:$0xff]
      %v8043 = vld [vmem:[%s7441 + $0x13] sm:$0xff]
      %v8044 = vld [vmem:[%s7441 + $0x23] sm:$0xff]
      %v8045 = vld [vmem:[%s7441 + $0x33] sm:$0xff]
      %v8046 = vld [vmem:[%s7441 + $0x43] sm:$0xff]
      %v8047 = vld [vmem:[%s7441 + $0x53] sm:$0xff]
      %v8048 = vld [vmem:[%s7441 + $0x63] sm:$0xff]
      %v8049 = vld [vmem:[%s7441 + $0x73] sm:$0xff]
      %8050 = vset.pattern.permute.xlu0 23
      %8051 = vperm.xlu0 %8050, %v2992
      %v8052 = vpop.permute.xlu0 %8051
      %8054 = vset.pattern.permute.xlu0 23
      %8055 = vperm.xlu0 %8054, %v2993
      %v8056 = vpop.permute.xlu0 %8055
      %8058 = vset.pattern.permute.xlu0 23
      %8059 = vperm.xlu0 %8058, %v2994
      %v8060 = vpop.permute.xlu0 %8059
      %8062 = vset.pattern.permute.xlu0 23
      %8063 = vperm.xlu0 %8062, %v2995
      %v8064 = vpop.permute.xlu0 %8063
      %8066 = vset.pattern.permute.xlu0 23
      %8067 = vperm.xlu0 %8066, %v2996
      %v8068 = vpop.permute.xlu0 %8067
      %8070 = vset.pattern.permute.xlu0 23
      %8071 = vperm.xlu0 %8070, %v2997
      %v8072 = vpop.permute.xlu0 %8071
      %8074 = vset.pattern.permute.xlu0 23
      %8075 = vperm.xlu0 %8074, %v2998
      %v8076 = vpop.permute.xlu0 %8075
      %8078 = vset.pattern.permute.xlu0 23
      %8079 = vperm.xlu0 %8078, %v2999
      %v8080 = vpop.permute.xlu0 %8079
      %v8082 = vmul.f32 %v8052, %v8042
      %v8083 = vmul.f32 %v8056, %v8043
      %v8084 = vmul.f32 %v8060, %v8044
      %v8085 = vmul.f32 %v8064, %v8045
      %v8086 = vmul.f32 %v8068, %v8046
      %v8087 = vmul.f32 %v8072, %v8047
      %v8088 = vmul.f32 %v8076, %v8048
      %v8089 = vmul.f32 %v8080, %v8049
      %v8090 = vadd.f32 %v7890, %v8082
      %v8091 = vadd.f32 %v7891, %v8083
      %v8092 = vadd.f32 %v7892, %v8084
      %v8093 = vadd.f32 %v7893, %v8085
      %v8094 = vadd.f32 %v7894, %v8086
      %v8095 = vadd.f32 %v7895, %v8087
      %v8096 = vadd.f32 %v7896, %v8088
      %v8097 = vadd.f32 %v7897, %v8089
      %8098 = vset.pattern.permute.xlu0 55
      %8099 = vperm.xlu0 %8098, %v3113
      %v8100 = vpop.permute.xlu0 %8099
      %8102 = vset.pattern.permute.xlu0 55
      %8103 = vperm.xlu0 %8102, %v3114
      %v8104 = vpop.permute.xlu0 %8103
      %8106 = vset.pattern.permute.xlu0 55
      %8107 = vperm.xlu0 %8106, %v3115
      %v8108 = vpop.permute.xlu0 %8107
      %8110 = vset.pattern.permute.xlu0 55
      %8111 = vperm.xlu0 %8110, %v3116
      %v8112 = vpop.permute.xlu0 %8111
      %8114 = vset.pattern.permute.xlu0 55
      %8115 = vperm.xlu0 %8114, %v3117
      %v8116 = vpop.permute.xlu0 %8115
      %8118 = vset.pattern.permute.xlu0 55
      %8119 = vperm.xlu0 %8118, %v3118
      %v8120 = vpop.permute.xlu0 %8119
      %8122 = vset.pattern.permute.xlu0 55
      %8123 = vperm.xlu0 %8122, %v3119
      %v8124 = vpop.permute.xlu0 %8123
      %8126 = vset.pattern.permute.xlu0 55
      %8127 = vperm.xlu0 %8126, %v3120
      %v8128 = vpop.permute.xlu0 %8127
      %v8130 = vmul.f32 %v8100, %v8042
      %v8131 = vmul.f32 %v8104, %v8043
      %v8132 = vmul.f32 %v8108, %v8044
      %v8133 = vmul.f32 %v8112, %v8045
      %v8134 = vmul.f32 %v8116, %v8046
      %v8135 = vmul.f32 %v8120, %v8047
      %v8136 = vmul.f32 %v8124, %v8048
      %v8137 = vmul.f32 %v8128, %v8049
      %v8138 = vadd.f32 %v7938, %v8130
      %v8139 = vadd.f32 %v7939, %v8131
      %v8140 = vadd.f32 %v7940, %v8132
      %v8141 = vadd.f32 %v7941, %v8133
      %v8142 = vadd.f32 %v7942, %v8134
      %v8143 = vadd.f32 %v7943, %v8135
      %v8144 = vadd.f32 %v7944, %v8136
      %v8145 = vadd.f32 %v7945, %v8137
      %8146 = vset.pattern.permute.xlu0 87
      %8147 = vperm.xlu0 %8146, %v3234
      %v8148 = vpop.permute.xlu0 %8147
      %8150 = vset.pattern.permute.xlu0 87
      %8151 = vperm.xlu0 %8150, %v3235
      %v8152 = vpop.permute.xlu0 %8151
      %8154 = vset.pattern.permute.xlu0 87
      %8155 = vperm.xlu0 %8154, %v3236
      %v8156 = vpop.permute.xlu0 %8155
      %8158 = vset.pattern.permute.xlu0 87
      %8159 = vperm.xlu0 %8158, %v3237
      %v8160 = vpop.permute.xlu0 %8159
      %8162 = vset.pattern.permute.xlu0 87
      %8163 = vperm.xlu0 %8162, %v3238
      %v8164 = vpop.permute.xlu0 %8163
      %8166 = vset.pattern.permute.xlu0 87
      %8167 = vperm.xlu0 %8166, %v3239
      %v8168 = vpop.permute.xlu0 %8167
      %8170 = vset.pattern.permute.xlu0 87
      %8171 = vperm.xlu0 %8170, %v3240
      %v8172 = vpop.permute.xlu0 %8171
      %8174 = vset.pattern.permute.xlu0 87
      %8175 = vperm.xlu0 %8174, %v3241
      %v8176 = vpop.permute.xlu0 %8175
      %v8178 = vmul.f32 %v8148, %v8042
      %v8179 = vmul.f32 %v8152, %v8043
      %v8180 = vmul.f32 %v8156, %v8044
      %v8181 = vmul.f32 %v8160, %v8045
      %v8182 = vmul.f32 %v8164, %v8046
      %v8183 = vmul.f32 %v8168, %v8047
      %v8184 = vmul.f32 %v8172, %v8048
      %v8185 = vmul.f32 %v8176, %v8049
      %v8186 = vadd.f32 %v7986, %v8178
      %v8187 = vadd.f32 %v7987, %v8179
      %v8188 = vadd.f32 %v7988, %v8180
      %v8189 = vadd.f32 %v7989, %v8181
      %v8190 = vadd.f32 %v7990, %v8182
      %v8191 = vadd.f32 %v7991, %v8183
      %v8192 = vadd.f32 %v7992, %v8184
      %v8193 = vadd.f32 %v7993, %v8185
      %8194 = vset.pattern.permute.xlu0 119
      %8195 = vperm.xlu0 %8194, %v3355
      %v8196 = vpop.permute.xlu0 %8195
      %8198 = vset.pattern.permute.xlu0 119
      %8199 = vperm.xlu0 %8198, %v3356
      %v8200 = vpop.permute.xlu0 %8199
      %8202 = vset.pattern.permute.xlu0 119
      %8203 = vperm.xlu0 %8202, %v3357
      %v8204 = vpop.permute.xlu0 %8203
      %8206 = vset.pattern.permute.xlu0 119
      %8207 = vperm.xlu0 %8206, %v3358
      %v8208 = vpop.permute.xlu0 %8207
      %8210 = vset.pattern.permute.xlu0 119
      %8211 = vperm.xlu0 %8210, %v3359
      %v8212 = vpop.permute.xlu0 %8211
      %8214 = vset.pattern.permute.xlu0 119
      %8215 = vperm.xlu0 %8214, %v3360
      %v8216 = vpop.permute.xlu0 %8215
      %8218 = vset.pattern.permute.xlu0 119
      %8219 = vperm.xlu0 %8218, %v3361
      %v8220 = vpop.permute.xlu0 %8219
      %8222 = vset.pattern.permute.xlu0 119
      %8223 = vperm.xlu0 %8222, %v3362
      %v8224 = vpop.permute.xlu0 %8223
      %v8226 = vmul.f32 %v8196, %v8042
      %v8227 = vmul.f32 %v8200, %v8043
      %v8228 = vmul.f32 %v8204, %v8044
      %v8229 = vmul.f32 %v8208, %v8045
      %v8230 = vmul.f32 %v8212, %v8046
      %v8231 = vmul.f32 %v8216, %v8047
      %v8232 = vmul.f32 %v8220, %v8048
      %v8233 = vmul.f32 %v8224, %v8049
      %v8234 = vadd.f32 %v8034, %v8226
      %v8235 = vadd.f32 %v8035, %v8227
      %v8236 = vadd.f32 %v8036, %v8228
      %v8237 = vadd.f32 %v8037, %v8229
      %v8238 = vadd.f32 %v8038, %v8230
      %v8239 = vadd.f32 %v8039, %v8231
      %v8240 = vadd.f32 %v8040, %v8232
      %v8241 = vadd.f32 %v8041, %v8233
      %v8242 = vld [vmem:[%s7441 + $0x4] sm:$0xff]
      %v8243 = vld [vmem:[%s7441 + $0x14] sm:$0xff]
      %v8244 = vld [vmem:[%s7441 + $0x24] sm:$0xff]
      %v8245 = vld [vmem:[%s7441 + $0x34] sm:$0xff]
      %v8246 = vld [vmem:[%s7441 + $0x44] sm:$0xff]
      %v8247 = vld [vmem:[%s7441 + $0x54] sm:$0xff]
      %v8248 = vld [vmem:[%s7441 + $0x64] sm:$0xff]
      %v8249 = vld [vmem:[%s7441 + $0x74] sm:$0xff]
      %8250 = vset.pattern.permute.xlu0 24
      %8251 = vperm.xlu0 %8250, %v2992
      %v8252 = vpop.permute.xlu0 %8251
      %8254 = vset.pattern.permute.xlu0 24
      %8255 = vperm.xlu0 %8254, %v2993
      %v8256 = vpop.permute.xlu0 %8255
      %8258 = vset.pattern.permute.xlu0 24
      %8259 = vperm.xlu0 %8258, %v2994
      %v8260 = vpop.permute.xlu0 %8259
      %8262 = vset.pattern.permute.xlu0 24
      %8263 = vperm.xlu0 %8262, %v2995
      %v8264 = vpop.permute.xlu0 %8263
      %8266 = vset.pattern.permute.xlu0 24
      %8267 = vperm.xlu0 %8266, %v2996
      %v8268 = vpop.permute.xlu0 %8267
      %8270 = vset.pattern.permute.xlu0 24
      %8271 = vperm.xlu0 %8270, %v2997
      %v8272 = vpop.permute.xlu0 %8271
      %8274 = vset.pattern.permute.xlu0 24
      %8275 = vperm.xlu0 %8274, %v2998
      %v8276 = vpop.permute.xlu0 %8275
      %8278 = vset.pattern.permute.xlu0 24
      %8279 = vperm.xlu0 %8278, %v2999
      %v8280 = vpop.permute.xlu0 %8279
      %v8282 = vmul.f32 %v8252, %v8242
      %v8283 = vmul.f32 %v8256, %v8243
      %v8284 = vmul.f32 %v8260, %v8244
      %v8285 = vmul.f32 %v8264, %v8245
      %v8286 = vmul.f32 %v8268, %v8246
      %v8287 = vmul.f32 %v8272, %v8247
      %v8288 = vmul.f32 %v8276, %v8248
      %v8289 = vmul.f32 %v8280, %v8249
      %v8290 = vadd.f32 %v8090, %v8282
      %v8291 = vadd.f32 %v8091, %v8283
      %v8292 = vadd.f32 %v8092, %v8284
      %v8293 = vadd.f32 %v8093, %v8285
      %v8294 = vadd.f32 %v8094, %v8286
      %v8295 = vadd.f32 %v8095, %v8287
      %v8296 = vadd.f32 %v8096, %v8288
      %v8297 = vadd.f32 %v8097, %v8289
      %8298 = vset.pattern.permute.xlu0 56
      %8299 = vperm.xlu0 %8298, %v3113
      %v8300 = vpop.permute.xlu0 %8299
      %8302 = vset.pattern.permute.xlu0 56
      %8303 = vperm.xlu0 %8302, %v3114
      %v8304 = vpop.permute.xlu0 %8303
      %8306 = vset.pattern.permute.xlu0 56
      %8307 = vperm.xlu0 %8306, %v3115
      %v8308 = vpop.permute.xlu0 %8307
      %8310 = vset.pattern.permute.xlu0 56
      %8311 = vperm.xlu0 %8310, %v3116
      %v8312 = vpop.permute.xlu0 %8311
      %8314 = vset.pattern.permute.xlu0 56
      %8315 = vperm.xlu0 %8314, %v3117
      %v8316 = vpop.permute.xlu0 %8315
      %8318 = vset.pattern.permute.xlu0 56
      %8319 = vperm.xlu0 %8318, %v3118
      %v8320 = vpop.permute.xlu0 %8319
      %8322 = vset.pattern.permute.xlu0 56
      %8323 = vperm.xlu0 %8322, %v3119
      %v8324 = vpop.permute.xlu0 %8323
      %8326 = vset.pattern.permute.xlu0 56
      %8327 = vperm.xlu0 %8326, %v3120
      %v8328 = vpop.permute.xlu0 %8327
      %v8330 = vmul.f32 %v8300, %v8242
      %v8331 = vmul.f32 %v8304, %v8243
      %v8332 = vmul.f32 %v8308, %v8244
      %v8333 = vmul.f32 %v8312, %v8245
      %v8334 = vmul.f32 %v8316, %v8246
      %v8335 = vmul.f32 %v8320, %v8247
      %v8336 = vmul.f32 %v8324, %v8248
      %v8337 = vmul.f32 %v8328, %v8249
      %v8338 = vadd.f32 %v8138, %v8330
      %v8339 = vadd.f32 %v8139, %v8331
      %v8340 = vadd.f32 %v8140, %v8332
      %v8341 = vadd.f32 %v8141, %v8333
      %v8342 = vadd.f32 %v8142, %v8334
      %v8343 = vadd.f32 %v8143, %v8335
      %v8344 = vadd.f32 %v8144, %v8336
      %v8345 = vadd.f32 %v8145, %v8337
      %8346 = vset.pattern.permute.xlu0 88
      %8347 = vperm.xlu0 %8346, %v3234
      %v8348 = vpop.permute.xlu0 %8347
      %8350 = vset.pattern.permute.xlu0 88
      %8351 = vperm.xlu0 %8350, %v3235
      %v8352 = vpop.permute.xlu0 %8351
      %8354 = vset.pattern.permute.xlu0 88
      %8355 = vperm.xlu0 %8354, %v3236
      %v8356 = vpop.permute.xlu0 %8355
      %8358 = vset.pattern.permute.xlu0 88
      %8359 = vperm.xlu0 %8358, %v3237
      %v8360 = vpop.permute.xlu0 %8359
      %8362 = vset.pattern.permute.xlu0 88
      %8363 = vperm.xlu0 %8362, %v3238
      %v8364 = vpop.permute.xlu0 %8363
      %8366 = vset.pattern.permute.xlu0 88
      %8367 = vperm.xlu0 %8366, %v3239
      %v8368 = vpop.permute.xlu0 %8367
      %8370 = vset.pattern.permute.xlu0 88
      %8371 = vperm.xlu0 %8370, %v3240
      %v8372 = vpop.permute.xlu0 %8371
      %8374 = vset.pattern.permute.xlu0 88
      %8375 = vperm.xlu0 %8374, %v3241
      %v8376 = vpop.permute.xlu0 %8375
      %v8378 = vmul.f32 %v8348, %v8242
      %v8379 = vmul.f32 %v8352, %v8243
      %v8380 = vmul.f32 %v8356, %v8244
      %v8381 = vmul.f32 %v8360, %v8245
      %v8382 = vmul.f32 %v8364, %v8246
      %v8383 = vmul.f32 %v8368, %v8247
      %v8384 = vmul.f32 %v8372, %v8248
      %v8385 = vmul.f32 %v8376, %v8249
      %v8386 = vadd.f32 %v8186, %v8378
      %v8387 = vadd.f32 %v8187, %v8379
      %v8388 = vadd.f32 %v8188, %v8380
      %v8389 = vadd.f32 %v8189, %v8381
      %v8390 = vadd.f32 %v8190, %v8382
      %v8391 = vadd.f32 %v8191, %v8383
      %v8392 = vadd.f32 %v8192, %v8384
      %v8393 = vadd.f32 %v8193, %v8385
      %8394 = vset.pattern.permute.xlu0 120
      %8395 = vperm.xlu0 %8394, %v3355
      %v8396 = vpop.permute.xlu0 %8395
      %8398 = vset.pattern.permute.xlu0 120
      %8399 = vperm.xlu0 %8398, %v3356
      %v8400 = vpop.permute.xlu0 %8399
      %8402 = vset.pattern.permute.xlu0 120
      %8403 = vperm.xlu0 %8402, %v3357
      %v8404 = vpop.permute.xlu0 %8403
      %8406 = vset.pattern.permute.xlu0 120
      %8407 = vperm.xlu0 %8406, %v3358
      %v8408 = vpop.permute.xlu0 %8407
      %8410 = vset.pattern.permute.xlu0 120
      %8411 = vperm.xlu0 %8410, %v3359
      %v8412 = vpop.permute.xlu0 %8411
      %8414 = vset.pattern.permute.xlu0 120
      %8415 = vperm.xlu0 %8414, %v3360
      %v8416 = vpop.permute.xlu0 %8415
      %8418 = vset.pattern.permute.xlu0 120
      %8419 = vperm.xlu0 %8418, %v3361
      %v8420 = vpop.permute.xlu0 %8419
      %8422 = vset.pattern.permute.xlu0 120
      %8423 = vperm.xlu0 %8422, %v3362
      %v8424 = vpop.permute.xlu0 %8423
      %v8426 = vmul.f32 %v8396, %v8242
      %v8427 = vmul.f32 %v8400, %v8243
      %v8428 = vmul.f32 %v8404, %v8244
      %v8429 = vmul.f32 %v8408, %v8245
      %v8430 = vmul.f32 %v8412, %v8246
      %v8431 = vmul.f32 %v8416, %v8247
      %v8432 = vmul.f32 %v8420, %v8248
      %v8433 = vmul.f32 %v8424, %v8249
      %v8434 = vadd.f32 %v8234, %v8426
      %v8435 = vadd.f32 %v8235, %v8427
      %v8436 = vadd.f32 %v8236, %v8428
      %v8437 = vadd.f32 %v8237, %v8429
      %v8438 = vadd.f32 %v8238, %v8430
      %v8439 = vadd.f32 %v8239, %v8431
      %v8440 = vadd.f32 %v8240, %v8432
      %v8441 = vadd.f32 %v8241, %v8433
      %v8442 = vpack.c.bf16 %v8291, %v8290
      %v8443 = vpack.c.bf16 %v8293, %v8292
      %v8444 = vpack.c.bf16 %v8295, %v8294
      %v8445 = vpack.c.bf16 %v8297, %v8296
      %v8446 = vld [vmem:[%s10] sm:$0x3]
      %v8447 = vpack.c.bf16 %v8339, %v8338
      %v8448 = vpack.c.bf16 %v8341, %v8340
      %v8449 = vpack.c.bf16 %v8343, %v8342
      %v8450 = vpack.c.bf16 %v8345, %v8344
      %s8451 = scalar_lea.vmem %s10, 2
      %v8452 = vld [vmem:[%s8451] sm:$0x3]
      %v8454 = vsel %vm758, %v8447, 0
      %v8457 = vsel %vm758, %v8448, 0
      %v8460 = vsel %vm758, %v8449, 0
      %v8463 = vsel %vm758, %v8450, 0
      %v8466 = vsel %vm791, %v8452, 0
      %8468 = vmatprep.subr.bf16.mxu0 0
      %8469 = vmatpush1.bf16.msra.mxu0 0
      %8470 = vmatprep.subr.bf16.mxu0 0
      %8471 = vmatpush1.bf16.msra.mxu0 0
      %8472 = vmatprep.subr.bf16.mxu0 0
      %8473 = vmatpush1.bf16.msra.mxu0 0
      %8474 = vmatprep.subr.bf16.mxu0 0
      %8475 = vmatpush1.bf16.msra.mxu0 0
      %8476 = vmatprep.subr.bf16.mxu0 0
      %8477 = vmatpush1.bf16.msra.mxu0 0
      %8478 = vmatprep.subr.bf16.mxu0 0
      %8479 = vmatpush1.bf16.msra.mxu0 0
      %8480 = vmatprep.subr.bf16.mxu0 0
      %8481 = vmatpush1.bf16.msra.mxu0 0
      %8482 = vmatprep.subr.bf16.mxu0 0
      %8483 = vmatpush1.bf16.msra.mxu0 %v8466
      %8484 = vmatprep.subr.bf16.mxu0 0
      %8485 = vmatpush2.bf16.msra.mxu0 0
      %8486 = vmatprep.subr.bf16.mxu0 0
      %8487 = vmatpush2.bf16.msra.mxu0 0
      %8488 = vmatprep.subr.bf16.mxu0 0
      %8489 = vmatpush2.bf16.msra.mxu0 0
      %8490 = vmatprep.subr.bf16.mxu0 0
      %8491 = vmatpush2.bf16.msra.mxu0 0
      %8492 = vmatprep.subr.bf16.mxu0 0
      %8493 = vmatpush2.bf16.msra.mxu0 0
      %8494 = vmatprep.subr.bf16.mxu0 0
      %8495 = vmatpush2.bf16.msra.mxu0 0
      %8496 = vmatprep.subr.bf16.mxu0 0
      %8497 = vmatpush2.bf16.msra.mxu0 0
      %8498 = vmatprep.subr.bf16.mxu0 0
      %8499 = vmatpush2.bf16.msra.mxu0 0
      %8500 = vmatprep.mubr.bf16.mxu0 0
      %8501 = vmatmul.mubr.bf16.gmra.mxu0 %v8454
      %v8502 = vpop.f32.mrf.mxu0
      %v8503 = vadd.f32 0.0, %v8502
      %v8504 = vpop.f32.mrf.mxu0
      %v8505 = vpop.f32.mrf.mxu0
      %v8506 = vadd.f32 0.0, %v8505
      %v8507 = vpop.f32.mrf.mxu0
      %8508 = vmatprep.mubr.bf16.mxu0 0
      %8509 = vmatmul.mubr.bf16.gmra.mxu0 %v8457
      %v8510 = vpop.f32.mrf.mxu0
      %v8511 = vadd.f32 0.0, %v8510
      %v8512 = vpop.f32.mrf.mxu0
      %v8513 = vpop.f32.mrf.mxu0
      %v8514 = vadd.f32 0.0, %v8513
      %v8515 = vpop.f32.mrf.mxu0
      %8516 = vmatprep.mubr.bf16.mxu0 0
      %8517 = vmatmul.mubr.bf16.gmra.mxu0 %v8460
      %v8518 = vpop.f32.mrf.mxu0
      %v8519 = vadd.f32 0.0, %v8518
      %v8520 = vpop.f32.mrf.mxu0
      %v8521 = vpop.f32.mrf.mxu0
      %v8522 = vadd.f32 0.0, %v8521
      %v8523 = vpop.f32.mrf.mxu0
      %8524 = vmatprep.mubr.bf16.mxu0 0
      %8525 = vmatmul.mubr.bf16.gmra.mxu0 %v8463
      %v8526 = vpop.f32.mrf.mxu0
      %v8527 = vadd.f32 0.0, %v8526
      %v8528 = vpop.f32.mrf.mxu0
      %v8529 = vpop.f32.mrf.mxu0
      %v8530 = vadd.f32 0.0, %v8529
      %v8531 = vpop.f32.mrf.mxu0
      %8532 = vdwg.mxu0
      %v8534 = vsel %vm758, %v8442, 0
      %v8537 = vsel %vm758, %v8443, 0
      %v8540 = vsel %vm758, %v8444, 0
      %v8543 = vsel %vm758, %v8445, 0
      %v8546 = vsel %vm791, %v8446, 0
      %8548 = vmatprep.subr.bf16.mxu0 0
      %8549 = vmatpush1.bf16.msra.mxu0 0
      %8550 = vmatprep.subr.bf16.mxu0 0
      %8551 = vmatpush1.bf16.msra.mxu0 0
      %8552 = vmatprep.subr.bf16.mxu0 0
      %8553 = vmatpush1.bf16.msra.mxu0 0
      %8554 = vmatprep.subr.bf16.mxu0 0
      %8555 = vmatpush1.bf16.msra.mxu0 0
      %8556 = vmatprep.subr.bf16.mxu0 0
      %8557 = vmatpush1.bf16.msra.mxu0 0
      %8558 = vmatprep.subr.bf16.mxu0 0
      %8559 = vmatpush1.bf16.msra.mxu0 0
      %8560 = vmatprep.subr.bf16.mxu0 0
      %8561 = vmatpush1.bf16.msra.mxu0 0
      %8562 = vmatprep.subr.bf16.mxu0 0
      %8563 = vmatpush1.bf16.msra.mxu0 %v8546
      %8564 = vmatprep.subr.bf16.mxu0 0
      %8565 = vmatpush2.bf16.msra.mxu0 0
      %8566 = vmatprep.subr.bf16.mxu0 0
      %8567 = vmatpush2.bf16.msra.mxu0 0
      %8568 = vmatprep.subr.bf16.mxu0 0
      %8569 = vmatpush2.bf16.msra.mxu0 0
      %8570 = vmatprep.subr.bf16.mxu0 0
      %8571 = vmatpush2.bf16.msra.mxu0 0
      %8572 = vmatprep.subr.bf16.mxu0 0
      %8573 = vmatpush2.bf16.msra.mxu0 0
      %8574 = vmatprep.subr.bf16.mxu0 0
      %8575 = vmatpush2.bf16.msra.mxu0 0
      %8576 = vmatprep.subr.bf16.mxu0 0
      %8577 = vmatpush2.bf16.msra.mxu0 0
      %8578 = vmatprep.subr.bf16.mxu0 0
      %8579 = vmatpush2.bf16.msra.mxu0 0
      %8580 = vmatprep.mubr.bf16.mxu0 0
      %8581 = vmatmul.mubr.bf16.gmra.mxu0 %v8534
      %v8582 = vpop.f32.mrf.mxu0
      %v8583 = vadd.f32 %v8503, %v8582
      %v8584 = vpop.f32.mrf.mxu0
      %v8585 = vpop.f32.mrf.mxu0
      %v8586 = vadd.f32 %v8506, %v8585
      %v8587 = vpop.f32.mrf.mxu0
      %8588 = vmatprep.mubr.bf16.mxu0 0
      %8589 = vmatmul.mubr.bf16.gmra.mxu0 %v8537
      %v8590 = vpop.f32.mrf.mxu0
      %v8591 = vadd.f32 %v8511, %v8590
      %v8592 = vpop.f32.mrf.mxu0
      %v8593 = vpop.f32.mrf.mxu0
      %v8594 = vadd.f32 %v8514, %v8593
      %v8595 = vpop.f32.mrf.mxu0
      %8596 = vmatprep.mubr.bf16.mxu0 0
      %8597 = vmatmul.mubr.bf16.gmra.mxu0 %v8540
      %v8598 = vpop.f32.mrf.mxu0
      %v8599 = vadd.f32 %v8519, %v8598
      %v8600 = vpop.f32.mrf.mxu0
      %v8601 = vpop.f32.mrf.mxu0
      %v8602 = vadd.f32 %v8522, %v8601
      %v8603 = vpop.f32.mrf.mxu0
      %8604 = vmatprep.mubr.bf16.mxu0 0
      %8605 = vmatmul.mubr.bf16.gmra.mxu0 %v8543
      %v8606 = vpop.f32.mrf.mxu0
      %v8607 = vadd.f32 %v8527, %v8606
      %v8608 = vpop.f32.mrf.mxu0
      %v8609 = vpop.f32.mrf.mxu0
      %v8610 = vadd.f32 %v8530, %v8609
      %v8611 = vpop.f32.mrf.mxu0
      %8612 = vdwg.mxu0
      %v8613 = vpack.c.bf16 %v8387, %v8386
      %v8614 = vpack.c.bf16 %v8389, %v8388
      %v8615 = vpack.c.bf16 %v8391, %v8390
      %v8616 = vpack.c.bf16 %v8393, %v8392
      %s8617 = scalar_lea.vmem %s10, 4
      %v8618 = vld [vmem:[%s8617] sm:$0x3]
      %v8620 = vsel %vm758, %v8613, 0
      %v8623 = vsel %vm758, %v8614, 0
      %v8626 = vsel %vm758, %v8615, 0
      %v8629 = vsel %vm758, %v8616, 0
      %v8632 = vsel %vm791, %v8618, 0
      %8634 = vmatprep.subr.bf16.mxu0 0
      %8635 = vmatpush1.bf16.msra.mxu0 0
      %8636 = vmatprep.subr.bf16.mxu0 0
      %8637 = vmatpush1.bf16.msra.mxu0 0
      %8638 = vmatprep.subr.bf16.mxu0 0
      %8639 = vmatpush1.bf16.msra.mxu0 0
      %8640 = vmatprep.subr.bf16.mxu0 0
      %8641 = vmatpush1.bf16.msra.mxu0 0
      %8642 = vmatprep.subr.bf16.mxu0 0
      %8643 = vmatpush1.bf16.msra.mxu0 0
      %8644 = vmatprep.subr.bf16.mxu0 0
      %8645 = vmatpush1.bf16.msra.mxu0 0
      %8646 = vmatprep.subr.bf16.mxu0 0
      %8647 = vmatpush1.bf16.msra.mxu0 0
      %8648 = vmatprep.subr.bf16.mxu0 0
      %8649 = vmatpush1.bf16.msra.mxu0 %v8632
      %8650 = vmatprep.subr.bf16.mxu0 0
      %8651 = vmatpush2.bf16.msra.mxu0 0
      %8652 = vmatprep.subr.bf16.mxu0 0
      %8653 = vmatpush2.bf16.msra.mxu0 0
      %8654 = vmatprep.subr.bf16.mxu0 0
      %8655 = vmatpush2.bf16.msra.mxu0 0
      %8656 = vmatprep.subr.bf16.mxu0 0
      %8657 = vmatpush2.bf16.msra.mxu0 0
      %8658 = vmatprep.subr.bf16.mxu0 0
      %8659 = vmatpush2.bf16.msra.mxu0 0
      %8660 = vmatprep.subr.bf16.mxu0 0
      %8661 = vmatpush2.bf16.msra.mxu0 0
      %8662 = vmatprep.subr.bf16.mxu0 0
      %8663 = vmatpush2.bf16.msra.mxu0 0
      %8664 = vmatprep.subr.bf16.mxu0 0
      %8665 = vmatpush2.bf16.msra.mxu0 0
      %8666 = vmatprep.mubr.bf16.mxu0 0
      %8667 = vmatmul.mubr.bf16.gmra.mxu0 %v8620
      %v8668 = vpop.f32.mrf.mxu0
      %v8669 = vadd.f32 0.0, %v8668
      %v8670 = vpop.f32.mrf.mxu0
      %v8671 = vpop.f32.mrf.mxu0
      %v8672 = vadd.f32 0.0, %v8671
      %v8673 = vpop.f32.mrf.mxu0
      %8674 = vmatprep.mubr.bf16.mxu0 0
      %8675 = vmatmul.mubr.bf16.gmra.mxu0 %v8623
      %v8676 = vpop.f32.mrf.mxu0
      %v8677 = vadd.f32 0.0, %v8676
      %v8678 = vpop.f32.mrf.mxu0
      %v8679 = vpop.f32.mrf.mxu0
      %v8680 = vadd.f32 0.0, %v8679
      %v8681 = vpop.f32.mrf.mxu0
      %8682 = vmatprep.mubr.bf16.mxu0 0
      %8683 = vmatmul.mubr.bf16.gmra.mxu0 %v8626
      %v8684 = vpop.f32.mrf.mxu0
      %v8685 = vadd.f32 0.0, %v8684
      %v8686 = vpop.f32.mrf.mxu0
      %v8687 = vpop.f32.mrf.mxu0
      %v8688 = vadd.f32 0.0, %v8687
      %v8689 = vpop.f32.mrf.mxu0
      %8690 = vmatprep.mubr.bf16.mxu0 0
      %8691 = vmatmul.mubr.bf16.gmra.mxu0 %v8629
      %v8692 = vpop.f32.mrf.mxu0
      %v8693 = vadd.f32 0.0, %v8692
      %v8694 = vpop.f32.mrf.mxu0
      %v8695 = vpop.f32.mrf.mxu0
      %v8696 = vadd.f32 0.0, %v8695
      %v8697 = vpop.f32.mrf.mxu0
      %8698 = vdwg.mxu0
      %v8699 = vadd.f32 %v8583, %v8669
      %v8700 = vadd.f32 %v8586, %v8672
      %v8701 = vadd.f32 %v8591, %v8677
      %v8702 = vadd.f32 %v8594, %v8680
      %v8703 = vadd.f32 %v8599, %v8685
      %v8704 = vadd.f32 %v8602, %v8688
      %v8705 = vadd.f32 %v8607, %v8693
      %v8706 = vadd.f32 %v8610, %v8696
      %v8707 = vpack.c.bf16 %v8435, %v8434
      %v8708 = vpack.c.bf16 %v8437, %v8436
      %v8709 = vpack.c.bf16 %v8439, %v8438
      %v8710 = vpack.c.bf16 %v8441, %v8440
      %s8711 = scalar_lea.vmem %s10, 6
      %v8712 = vld [vmem:[%s8711] sm:$0x3]
      %v8714 = vsel %vm758, %v8707, 0
      %v8717 = vsel %vm758, %v8708, 0
      %v8720 = vsel %vm758, %v8709, 0
      %v8723 = vsel %vm758, %v8710, 0
      %v8726 = vsel %vm791, %v8712, 0
      %8728 = vmatprep.subr.bf16.mxu0 0
      %8729 = vmatpush1.bf16.msra.mxu0 0
      %8730 = vmatprep.subr.bf16.mxu0 0
      %8731 = vmatpush1.bf16.msra.mxu0 0
      %8732 = vmatprep.subr.bf16.mxu0 0
      %8733 = vmatpush1.bf16.msra.mxu0 0
      %8734 = vmatprep.subr.bf16.mxu0 0
      %8735 = vmatpush1.bf16.msra.mxu0 0
      %8736 = vmatprep.subr.bf16.mxu0 0
      %8737 = vmatpush1.bf16.msra.mxu0 0
      %8738 = vmatprep.subr.bf16.mxu0 0
      %8739 = vmatpush1.bf16.msra.mxu0 0
      %8740 = vmatprep.subr.bf16.mxu0 0
      %8741 = vmatpush1.bf16.msra.mxu0 0
      %8742 = vmatprep.subr.bf16.mxu0 0
      %8743 = vmatpush1.bf16.msra.mxu0 %v8726
      %8744 = vmatprep.subr.bf16.mxu0 0
      %8745 = vmatpush2.bf16.msra.mxu0 0
      %8746 = vmatprep.subr.bf16.mxu0 0
      %8747 = vmatpush2.bf16.msra.mxu0 0
      %8748 = vmatprep.subr.bf16.mxu0 0
      %8749 = vmatpush2.bf16.msra.mxu0 0
      %8750 = vmatprep.subr.bf16.mxu0 0
      %8751 = vmatpush2.bf16.msra.mxu0 0
      %8752 = vmatprep.subr.bf16.mxu0 0
      %8753 = vmatpush2.bf16.msra.mxu0 0
      %8754 = vmatprep.subr.bf16.mxu0 0
      %8755 = vmatpush2.bf16.msra.mxu0 0
      %8756 = vmatprep.subr.bf16.mxu0 0
      %8757 = vmatpush2.bf16.msra.mxu0 0
      %8758 = vmatprep.subr.bf16.mxu0 0
      %8759 = vmatpush2.bf16.msra.mxu0 0
      %8760 = vmatprep.mubr.bf16.mxu0 0
      %8761 = vmatmul.mubr.bf16.gmra.mxu0 %v8714
      %v8762 = vpop.f32.mrf.mxu0
      %v8763 = vadd.f32 0.0, %v8762
      %v8764 = vpop.f32.mrf.mxu0
      %v8765 = vpop.f32.mrf.mxu0
      %v8766 = vadd.f32 0.0, %v8765
      %v8767 = vpop.f32.mrf.mxu0
      %8768 = vmatprep.mubr.bf16.mxu0 0
      %8769 = vmatmul.mubr.bf16.gmra.mxu0 %v8717
      %v8770 = vpop.f32.mrf.mxu0
      %v8771 = vadd.f32 0.0, %v8770
      %v8772 = vpop.f32.mrf.mxu0
      %v8773 = vpop.f32.mrf.mxu0
      %v8774 = vadd.f32 0.0, %v8773
      %v8775 = vpop.f32.mrf.mxu0
      %8776 = vmatprep.mubr.bf16.mxu0 0
      %8777 = vmatmul.mubr.bf16.gmra.mxu0 %v8720
      %v8778 = vpop.f32.mrf.mxu0
      %v8779 = vadd.f32 0.0, %v8778
      %v8780 = vpop.f32.mrf.mxu0
      %v8781 = vpop.f32.mrf.mxu0
      %v8782 = vadd.f32 0.0, %v8781
      %v8783 = vpop.f32.mrf.mxu0
      %8784 = vmatprep.mubr.bf16.mxu0 0
      %8785 = vmatmul.mubr.bf16.gmra.mxu0 %v8723
      %v8786 = vpop.f32.mrf.mxu0
      %v8787 = vadd.f32 0.0, %v8786
      %v8788 = vpop.f32.mrf.mxu0
      %v8789 = vpop.f32.mrf.mxu0
      %v8790 = vadd.f32 0.0, %v8789
      %v8791 = vpop.f32.mrf.mxu0
      %8792 = vdwg.mxu0
      %v8793 = vadd.f32 %v8699, %v8763
      %v8794 = vadd.f32 %v8700, %v8766
      %v8795 = vadd.f32 %v8701, %v8771
      %v8796 = vadd.f32 %v8702, %v8774
      %v8797 = vadd.f32 %v8703, %v8779
      %v8798 = vadd.f32 %v8704, %v8782
      %v8799 = vadd.f32 %v8705, %v8787
      %v8800 = vadd.f32 %v8706, %v8790
      %v8801 = vld [vmem:[%s11] sm:$0x1]
      %v8803 = vlaneseq
      %v8804 = vshrl.u32 %v8803, 7
      %v8805 = vsub.s32 0, %v8804
      %v8806 = vrot.slane %v8801, %v8805
      %v8808 = vadd.f32 %v8793, %v8806
      %v8809 = vadd.f32 %v8794, %v8806
      %v8810 = vadd.f32 %v8795, %v8806
      %v8811 = vadd.f32 %v8796, %v8806
      %v8812 = vadd.f32 %v8797, %v8806
      %v8813 = vadd.f32 %v8798, %v8806
      %v8814 = vadd.f32 %v8799, %v8806
      %v8815 = vadd.f32 %v8800, %v8806
      %v8816 = vxor.u32 %v8808, 2147483648
      %v8817 = vxor.u32 %v8809, 2147483648
      %v8818 = vxor.u32 %v8810, 2147483648
      %v8819 = vxor.u32 %v8811, 2147483648
      %v8820 = vxor.u32 %v8812, 2147483648
      %v8821 = vxor.u32 %v8813, 2147483648
      %v8822 = vxor.u32 %v8814, 2147483648
      %v8823 = vxor.u32 %v8815, 2147483648
      %v8824 = vmul.f32 %v8816, 1.442695
      %v8825 = vpow.pop %v8824
      %v8826 = vmul.f32 %v8817, 1.442695
      %v8827 = vpow.pop %v8826
      %v8828 = vmul.f32 %v8818, 1.442695
      %v8829 = vpow.pop %v8828
      %v8830 = vmul.f32 %v8819, 1.442695
      %v8831 = vpow.pop %v8830
      %v8832 = vmul.f32 %v8820, 1.442695
      %v8833 = vpow.pop %v8832
      %v8834 = vmul.f32 %v8821, 1.442695
      %v8835 = vpow.pop %v8834
      %v8836 = vmul.f32 %v8822, 1.442695
      %v8837 = vpow.pop %v8836
      %v8838 = vmul.f32 %v8823, 1.442695
      %v8839 = vpow.pop %v8838
      %v8840 = vadd.f32 %v8825, 1.0
      %v8841 = vadd.f32 %v8827, 1.0
      %v8842 = vadd.f32 %v8829, 1.0
      %v8843 = vadd.f32 %v8831, 1.0
      %v8844 = vadd.f32 %v8833, 1.0
      %v8845 = vadd.f32 %v8835, 1.0
      %v8846 = vadd.f32 %v8837, 1.0
      %v8847 = vadd.f32 %v8839, 1.0
      %v8848 = vrcp.pop %v8840
      %v8849 = vmul.f32 1.0, %v8848
      %v8850 = vrcp.pop %v8841
      %v8851 = vmul.f32 1.0, %v8850
      %v8852 = vrcp.pop %v8842
      %v8853 = vmul.f32 1.0, %v8852
      %v8854 = vrcp.pop %v8843
      %v8855 = vmul.f32 1.0, %v8854
      %v8856 = vrcp.pop %v8844
      %v8857 = vmul.f32 1.0, %v8856
      %v8858 = vrcp.pop %v8845
      %v8859 = vmul.f32 1.0, %v8858
      %v8860 = vrcp.pop %v8846
      %v8861 = vmul.f32 1.0, %v8860
      %v8862 = vrcp.pop %v8847
      %v8863 = vmul.f32 1.0, %v8862
      %v8864 = vmul.f32 %v8808, %v8849
      %v8865 = vmul.f32 %v8809, %v8851
      %v8866 = vmul.f32 %v8810, %v8853
      %v8867 = vmul.f32 %v8811, %v8855
      %v8868 = vmul.f32 %v8812, %v8857
      %v8869 = vmul.f32 %v8813, %v8859
      %v8870 = vmul.f32 %v8814, %v8861
      %v8871 = vmul.f32 %v8815, %v8863
      %8872 = vst.msk [vmem:[%s468] sm:$0xff] %vm758, %v8864
      %8873 = vst.msk [vmem:[%s468 + $0x8] sm:$0xff] %vm758, %v8865
      %8874 = vst.msk [vmem:[%s468 + $0x10] sm:$0xff] %vm758, %v8866
      %8875 = vst.msk [vmem:[%s468 + $0x18] sm:$0xff] %vm758, %v8867
      %8876 = vst.msk [vmem:[%s468 + $0x20] sm:$0xff] %vm758, %v8868
      %8877 = vst.msk [vmem:[%s468 + $0x28] sm:$0xff] %vm758, %v8869
      %8878 = vst.msk [vmem:[%s468 + $0x30] sm:$0xff] %vm758, %v8870
      %8879 = vst.msk [vmem:[%s468 + $0x38] sm:$0xff] %vm758, %v8871
      %p8880 = scmp.lt.s32.totalorder %s25, 1
      %s8881 = scalar_select %p8880, %s25, 1
      %s8882 = smul.addr %s8881, 8
      %s8883 = smul.addr %s8882, 8
      %s8884 = scalar_lea.vmem %s12, %s8883
      %p8885 = scmp.lt.s32.totalorder %s25, 1
      %s8886 = scalar_select %p8885, %s25, 1
      %s8887 = smul.addr %s8886, 8
      %s8888 = smul.addr %s8887, 8
      %s8889 = scalar_lea.vmem %s13, %s8888
      // Predicated region
      $region69: #{octconv_carafe_hwd_forward.1} parent=67 // pred_check
        %p8890 = pneg %p305
      $region70: #{octconv_carafe_hwd_forward.1} parent=67 // pred_check_branch
        %8892 = sbr.rel (%p8890) target = $region72
      $region71: #{octconv_carafe_hwd_forward.1} parent=67 // pred_region
        _
      $region72: #{octconv_carafe_hwd_forward.1} parent=67 // pred_fallthru
        _
      // Predicated region
      $region73: #{octconv_carafe_hwd_forward.1} parent=67 // pred_check
        %p8893 = pneg %p331
      $region74: #{octconv_carafe_hwd_forward.1} parent=67 // pred_check_branch
        %8895 = sbr.rel (%p8893) target = $region76
      $region75: #{octconv_carafe_hwd_forward.1} parent=67 // pred_region
        _
      $region76: #{octconv_carafe_hwd_forward.1} parent=67 // pred_fallthru
        _
    $region68: #{octconv_carafe_hwd_forward.1} parent=5 // pred_fallthru
      _
    %p8896 = scmp.le.s32.totalorder 2, %s20
    // Predicated region
    $region77: #{octconv_carafe_hwd_forward.1} parent=5 // pred_check
      %p8897 = pneg %p8896
    $region78: #{octconv_carafe_hwd_forward.1} parent=5 // pred_check_branch
      %8899 = sbr.rel (%p8897) target = $region80
    $region79: #{octconv_carafe_hwd_forward.1} parent=5 // pred_region
      %s8900 = ssub.s32 %s20, 2
      // Predicated region
      $region81: #{octconv_carafe_hwd_forward.1} parent=79 // pred_check
        %p8901 = pneg %p311
      $region82: #{octconv_carafe_hwd_forward.1} parent=79 // pred_check_branch
        %8903 = sbr.rel (%p8901) target = $region84
      $region83: #{octconv_carafe_hwd_forward.1} parent=79 // pred_region
        %p8904 = scmp.lt.s32.totalorder %s26, 1
        %s8905 = scalar_select %p8904, %s26, 1
        %s8906 = smul.addr %s8905, 8
        %s8907 = smul.addr %s8906, 8
        %s8908 = scalar_lea.vmem %s12, %s8907
      $region84: #{octconv_carafe_hwd_forward.1} parent=79 // pred_fallthru
        _
      // Predicated region
      $region85: #{octconv_carafe_hwd_forward.1} parent=79 // pred_check
        %p8909 = pneg %p337
      $region86: #{octconv_carafe_hwd_forward.1} parent=79 // pred_check_branch
        %8911 = sbr.rel (%p8909) target = $region88
      $region87: #{octconv_carafe_hwd_forward.1} parent=79 // pred_region
        %p8912 = scmp.lt.s32.totalorder %s26, 1
        %s8913 = scalar_select %p8912, %s26, 1
        %s8914 = smul.addr %s8913, 8
        %s8915 = smul.addr %s8914, 8
        %s8916 = scalar_lea.vmem %s13, %s8915
      $region88: #{octconv_carafe_hwd_forward.1} parent=79 // pred_fallthru
        _
    $region80: #{octconv_carafe_hwd_forward.1} parent=5 // pred_fallthru
      _
  $region6: #{octconv_carafe_hwd_forward.1} parent=0 // loop_footer
    %s24 = sadd.s32 1, %s20
  $region7: #{octconv_carafe_hwd_forward.1} parent=0 // loop_footer_branch
    %19 = sbr.rel target = $region3
  $region8: #{octconv_carafe_hwd_forward.1} parent=0 // loop_exit
    _

</llo_original>
